<compile_context>
chip_gen: v6e
topology: v6e:2x2x1
jax: 0.10.0
libtpu: 0.0.40
codegen_flags: <defaults>
</compile_context>

<pallas_src>
import numpy as np
import jax
import jax.numpy as jnp
from jax.experimental import pallas as pl
from jax.experimental.pallas import tpu as pltpu

# ----------------------------- configuration --------------------------------
B = 2                 # batch
C_IN = 4              # image channels
H_IMG = W_IMG = 16    # image spatial size
PATCH = 4             # patch size (conv kernel = stride = PATCH)
NUM_PATCHES = (H_IMG // PATCH) * (W_IMG // PATCH)   # 16
SEQ = NUM_PATCHES + 1                               # +1 cls token -> 17
D = 64                # embed dim (in_planes)
NUM_HEADS = 4
HEAD_DIM = D // NUM_HEADS
MLP_DIM = 4 * D
NUM_BASE_BLOCKS = 2   # base runs blocks[:-1]; b1/b2 are deepcopies of blocks[-1]
SHIFT_NUM = 5
SHUFFLE_GROUPS = 2
DIVIDE_LENGTH = 4
REARRANGE = True
NUM_BRANCHES = DIVIDE_LENGTH
PATCH_LEN = NUM_PATCHES // DIVIDE_LENGTH            # 4
LOCAL_SEQ = PATCH_LEN + 1                           # 5 (cls + local patches)
G = NUM_BRANCHES * B                                # 8 (branch, batch) groups
R_BASE = B * SEQ                                    # 34 fused base/b1 token rows
R_LOCAL = G * LOCAL_SEQ                             # 40 fused local-branch rows
CPP = C_IN * PATCH * PATCH                          # 48
LN_EPS = 1e-6         # timm ViT LayerNorm eps
BN_EPS = 1e-5         # nn.BatchNorm1d eps
ATTN_SCALE = 1.0 / float(HEAD_DIM) ** 0.5
NEG = -1e9            # additive attention-mask value
VMEM_LIMIT = 32 * 1024 * 1024

BLOCK_KEYS = ("ln1_g", "ln1_b", "wqkv", "bqkv", "wproj", "bproj",
              "ln2_g", "ln2_b", "wfc1", "bfc1", "wfc2", "bfc2")


# --------------------------- in-kernel helpers --------------------------------
def _ln(x, g, b):
    mu = jnp.mean(x, axis=-1, keepdims=True)
    var = jnp.mean(jnp.square(x - mu), axis=-1, keepdims=True)
    return (x - mu) * jax.lax.rsqrt(var + LN_EPS) * g + b


def _gelu(x):
    # TODO(synk): PyTorch/timm ViT uses the exact erf GELU; tanh approximation is used
    # because erf lowering inside Mosaic kernels is not guaranteed.
    return jax.nn.gelu(x, approximate=True)


def _softmax(s):
    s = s - jnp.max(s, axis=-1, keepdims=True)
    e = jnp.exp(s)
    return e / jnp.sum(e, axis=-1, keepdims=True)     # exact division (fidelity)


def _block(x, w, mask):
    """timm ViT block (attn + MLP with residuals) on a flat (rows, D) token stream.

    `mask` is a constant additive block-diagonal (rows, rows) mask keeping attention
    within each (batch / JPM-branch) group, so no per-batch row slicing is needed.
    All intermediates stay in registers; heads are concatenated along lanes."""
    (ln1_g, ln1_b, wqkv, bqkv, wproj, bproj,
     ln2_g, ln2_b, wfc1, bfc1, wfc2, bfc2) = w
    h = _ln(x, ln1_g, ln1_b)
    qkv = jnp.dot(h, wqkv, preferred_element_type=jnp.float32) + bqkv
    heads = []
    for hi in range(NUM_HEADS):
        c0 = hi * HEAD_DIM
        q = qkv[:, c0:c0 + HEAD_DIM] * ATTN_SCALE
        k = qkv[:, D + c0:D + c0 + HEAD_DIM]
        v = qkv[:, 2 * D + c0:2 * D + c0 + HEAD_DIM]
        s = jax.lax.dot_general(q, k, (((1,), (1,)), ((), ())),
                                preferred_element_type=jnp.float32) + mask
        heads.append(jnp.dot(_softmax(s), v, preferred_element_type=jnp.float32))
    attn = jnp.concatenate(heads, axis=-1)                       # register concat
    x = x + jnp.dot(attn, wproj, preferred_element_type=jnp.float32) + bproj
    h2 = _ln(x, ln2_g, ln2_b)
    m = _gelu(jnp.dot(h2, wfc1, preferred_element_type=jnp.float32) + bfc1)
    m = jnp.dot(m, wfc2, preferred_element_type=jnp.float32) + bfc2
    return x + m


# ------------------------------ the fused kernel -------------------------------
def fused_kernel(*refs):
    (xp_ref, pe_w_ref, pe_b_ref, cls_ref, pos_ref,
     sel_ref, mbase_ref, mlocal_ref) = refs[0:8]
    base_w = refs[8:20]                     # stacked (NUM_BASE_BLOCKS, ...) params
    b1_w = refs[20:32]
    b1_ng, b1_nb = refs[32], refs[33]
    b2_w = refs[34:46]
    b2_ng, b2_nb = refs[46], refs[47]
    bn_g, bn_b, bn_m, bn_v = refs[48:52]
    out_ref = refs[52]

    mask_base = mbase_ref[...]              # (R_BASE, R_BASE)  per-batch block diag
    mask_local = mlocal_ref[...]            # (R_LOCAL, R_LOCAL) per-branch block diag

    # --- patch embedding + [cls | patches] + pos assembly ----------------------
    # xp has an all-zero row at every CLS position, so a single matmul lands every
    # patch row in place; the additive term supplies cls+pos[0] / pos[1:]+bias.
    add_seq = jnp.concatenate(
        [cls_ref[...] + pos_ref[0:1, :], pos_ref[1:SEQ, :] + pe_b_ref[...]], axis=0)
    add_all = jnp.concatenate([add_seq] * B, axis=0)             # (R_BASE, D)
    x = jnp.dot(xp_ref[...], pe_w_ref[...],
                preferred_element_type=jnp.float32) + add_all

    # --- base: blocks[:-1] (local_feature=True -> no final LayerNorm) ----------
    for blk in range(NUM_BASE_BLOCKS):
        x = _block(x, tuple(r[blk] for r in base_w), mask_base)

    # --- b1 = deepcopy(last block) + norm; only the CLS rows are kept ----------
    xb1 = _block(x, tuple(r[...] for r in b1_w), mask_base)
    g_cls = jnp.concatenate([xb1[b * SEQ:b * SEQ + 1, :] for b in range(B)], axis=0)
    g_cls = _ln(g_cls, b1_ng[...], b1_nb[...])                    # (B, D) global feat

    # --- JPM: shuffle_unit + token concat + branch stacking as one constant 0/1
    #     selection matmul (gather via the otherwise-idle MXU). Rows 0..G-1 of the
    #     resulting (R_LOCAL, D) stream are the CLS copies, grouped branch-major. --
    lx = jnp.dot(sel_ref[...], x, preferred_element_type=jnp.float32)

    # --- b2 = deepcopy(last block) + norm over all 4 local branches at once -----
    xb2 = _block(lx, tuple(r[...] for r in b2_w), mask_local)
    l_cls = _ln(xb2[0:G, :], b2_ng[...], b2_nb[...])              # (G, D) local feats

    # --- eval-mode BatchNorm1d x5 + /4 scaling + concat: single lane-dense store -
    inv = jax.lax.rsqrt(bn_v[...] + BN_EPS) * bn_g[...]           # (5, D)
    sh = bn_b[...] - bn_m[...] * inv
    pieces = [g_cls * inv[0:1, :] + sh[0:1, :]]
    for k in range(NUM_BRANCHES):
        lk = l_cls[k * B:(k + 1) * B, :]
        pieces.append((lk * inv[k + 1:k + 2, :] + sh[k + 1:k + 2, :]) * 0.25)
    out_ref[...] = jnp.concatenate(pieces, axis=-1)               # (B, 5*D)


# ------------------------------ host-side glue ---------------------------------
def _shuffle_perm(seq, shift, group, begin=1):
    """Token permutation produced by shuffle_unit (static, computed at trace time)."""
    order = list(range(begin - 1 + shift, seq)) + list(range(begin, begin - 1 + shift))
    if len(order) % group != 0:              # PyTorch's try/except padding branch
        order = order + [order[-2]]
    per = len(order) // group
    groups = [order[g * per:(g + 1) * per] for g in range(group)]
    return [groups[g][i] for i in range(per) for g in range(group)]


def build_constants():
    """Constant additive attention masks + JPM selection matrix (host/numpy-built)."""
    bid = np.arange(R_BASE) // SEQ
    mask_base = np.where(bid[:, None] == bid[None, :], 0.0, NEG).astype(np.float32)

    grp = np.concatenate([np.arange(G), np.repeat(np.arange(G), PATCH_LEN)])
    mask_local = np.where(grp[:, None] == grp[None, :], 0.0, NEG).astype(np.float32)

    perm = (_shuffle_perm(SEQ, SHIFT_NUM, SHUFFLE_GROUPS) if REARRANGE
            else list(range(1, SEQ)))
    sel = np.zeros((R_LOCAL, R_BASE), np.float32)
    for g in range(G):
        k, b = g // B, g % B
        sel[g, b * SEQ] = 1.0                                     # CLS token row
        for j in range(PATCH_LEN):
            sel[G + g * PATCH_LEN + j, b * SEQ + perm[k * PATCH_LEN + j]] = 1.0
    return jnp.asarray(mask_base), jnp.asarray(mask_local), jnp.asarray(sel)


def model_forward(x_img, params, consts):
    mask_base, mask_local, sel = consts
    p = PATCH
    # unfold NCHW image into (B, Np, C*p*p) patch rows (Conv2d kernel = stride = p)
    xp = x_img.reshape(B, C_IN, H_IMG // p, p, W_IMG // p, p)
    xp = xp.transpose(0, 2, 4, 1, 3, 5).reshape(B, NUM_PATCHES, CPP)
    # zero row at each CLS slot so one fused matmul produces the whole token stream
    xp = jnp.pad(xp, ((0, 0), (1, 0), (0, 0))).reshape(R_BASE, CPP)

    base_list = [params["base"][k] for k in BLOCK_KEYS]
    b1_list = [params["b1_block"][k] for k in BLOCK_KEYS]
    b2_list = [params["b2_block"][k] for k in BLOCK_KEYS]
    bn = params["bn"]

    return pl.pallas_call(
        fused_kernel,
        out_shape=jax.ShapeDtypeStruct((B, (NUM_BRANCHES + 1) * D), jnp.float32),
        compiler_params=pltpu.CompilerParams(vmem_limit_bytes=VMEM_LIMIT),
    )(xp, params["pe_w"], params["pe_b"], params["cls_token"], params["pos_embed"],
      sel, mask_base, mask_local,
      *base_list,
      *b1_list, params["b1_norm_g"], params["b1_norm_b"],
      *b2_list, params["b2_norm_g"], params["b2_norm_b"],
      bn["gamma"], bn["beta"], bn["mean"], bn["var"])


# ------------------------------ parameters -------------------------------------
def init_block_params(key, d, mlp_dim):
    ks = jax.random.split(key, 4)
    s = 0.02
    f32 = jnp.float32
    return dict(
        ln1_g=jnp.ones((1, d), f32), ln1_b=jnp.zeros((1, d), f32),
        wqkv=jax.random.normal(ks[0], (d, 3 * d), f32) * s,
        bqkv=jnp.zeros((1, 3 * d), f32),
        wproj=jax.random.normal(ks[1], (d, d), f32) * s,
        bproj=jnp.zeros((1, d), f32),
        ln2_g=jnp.ones((1, d), f32), ln2_b=jnp.zeros((1, d), f32),
        wfc1=jax.random.normal(ks[2], (d, mlp_dim), f32) * s,
        bfc1=jnp.zeros((1, mlp_dim), f32),
        wfc2=jax.random.normal(ks[3], (mlp_dim, d), f32) * s,
        bfc2=jnp.zeros((1, d), f32),
    )


def init_params(key):
    ks = jax.random.split(key, 4 + NUM_BASE_BLOCKS)
    s = 0.02
    f32 = jnp.float32
    base_blocks = [init_block_params(ks[3 + i], D, MLP_DIM)
                   for i in range(NUM_BASE_BLOCKS)]
    # Stack base-block params along a leading block axis: the fused kernel receives
    # each parameter tensor exactly once (no per-block re-DMA).
    base = {k: jnp.stack([blk[k] for blk in base_blocks], axis=0) for k in BLOCK_KEYS}
    # b1/b2 are deepcopies of blocks[-1] + base.norm in the PyTorch module; at init
    # both copies hold identical values but are passed as separate parameter sets.
    last_block = init_block_params(ks[3 + NUM_BASE_BLOCKS], D, MLP_DIM)
    norm_g, norm_b = jnp.ones((1, D), f32), jnp.zeros((1, D), f32)
    return {
        "pe_w": jax.random.normal(ks[0], (CPP, D), f32) * s,
        "pe_b": jnp.zeros((1, D), f32),
        "cls_token": jax.random.normal(ks[1], (1, D), f32) * s,
        "pos_embed": jax.random.normal(ks[2], (SEQ, D), f32) * s,
        "base": base,
        "b1_block": dict(last_block), "b1_norm_g": norm_g, "b1_norm_b": norm_b,
        "b2_block": dict(last_block), "b2_norm_g": norm_g, "b2_norm_b": norm_b,
        # BatchNorm1d bottlenecks (weights_init_kaiming -> gamma=1, beta=0; fresh
        # running stats -> mean=0, var=1), stacked [global, local_1..local_4].
        "bn": dict(gamma=jnp.ones((5, D), f32), beta=jnp.zeros((5, D), f32),
                   mean=jnp.zeros((5, D), f32), var=jnp.ones((5, D), f32)),
    }


# ---------------------------------- main ----------------------------------------
if __name__ == "__main__":
    root = jax.random.PRNGKey(0)
    k_param, k_x = jax.random.split(root)
    params = init_params(k_param)
    consts = build_constants()
    x = jax.random.normal(k_x, (B, C_IN, H_IMG, W_IMG), jnp.float32)

    fwd = jax.jit(model_forward)
    out = jax.block_until_ready(fwd(x, params, consts))

    assert out.shape == (B, (NUM_BRANCHES + 1) * D), out.shape
    assert bool(jnp.all(jnp.isfinite(out)))
    print("KERNEL_OK")
</pallas_src>

<mosaic_0001>
module attributes {stable_mosaic.version = 11 : i64} {
  func.func @fused_kernel(%arg0: memref<34x64xf32, #tpu.memory_space<vmem>>, %arg1: memref<64x64xf32, #tpu.memory_space<vmem>>, %arg2: memref<1x64xf32, #tpu.memory_space<vmem>>, %arg3: memref<1x64xf32, #tpu.memory_space<vmem>>, %arg4: memref<17x64xf32, #tpu.memory_space<vmem>>, %arg5: memref<40x34xf32, #tpu.memory_space<vmem>>, %arg6: memref<34x34xf32, #tpu.memory_space<vmem>>, %arg7: memref<40x40xf32, #tpu.memory_space<vmem>>, %arg8: memref<2x1x64xf32, #tpu.memory_space<vmem>>, %arg9: memref<2x1x64xf32, #tpu.memory_space<vmem>>, %arg10: memref<2x64x192xf32, #tpu.memory_space<vmem>>, %arg11: memref<2x1x192xf32, #tpu.memory_space<vmem>>, %arg12: memref<2x64x64xf32, #tpu.memory_space<vmem>>, %arg13: memref<2x1x64xf32, #tpu.memory_space<vmem>>, %arg14: memref<2x1x64xf32, #tpu.memory_space<vmem>>, %arg15: memref<2x1x64xf32, #tpu.memory_space<vmem>>, %arg16: memref<2x64x256xf32, #tpu.memory_space<vmem>>, %arg17: memref<2x1x256xf32, #tpu.memory_space<vmem>>, %arg18: memref<2x256x64xf32, #tpu.memory_space<vmem>>, %arg19: memref<2x1x64xf32, #tpu.memory_space<vmem>>, %arg20: memref<1x64xf32, #tpu.memory_space<vmem>>, %arg21: memref<1x64xf32, #tpu.memory_space<vmem>>, %arg22: memref<64x192xf32, #tpu.memory_space<vmem>>, %arg23: memref<1x192xf32, #tpu.memory_space<vmem>>, %arg24: memref<64x64xf32, #tpu.memory_space<vmem>>, %arg25: memref<1x64xf32, #tpu.memory_space<vmem>>, %arg26: memref<1x64xf32, #tpu.memory_space<vmem>>, %arg27: memref<1x64xf32, #tpu.memory_space<vmem>>, %arg28: memref<64x256xf32, #tpu.memory_space<vmem>>, %arg29: memref<1x256xf32, #tpu.memory_space<vmem>>, %arg30: memref<256x64xf32, #tpu.memory_space<vmem>>, %arg31: memref<1x64xf32, #tpu.memory_space<vmem>>, %arg32: memref<1x64xf32, #tpu.memory_space<vmem>>, %arg33: memref<1x64xf32, #tpu.memory_space<vmem>>, %arg34: memref<1x64xf32, #tpu.memory_space<vmem>>, %arg35: memref<1x64xf32, #tpu.memory_space<vmem>>, %arg36: memref<64x192xf32, #tpu.memory_space<vmem>>, %arg37: memref<1x192xf32, #tpu.memory_space<vmem>>, %arg38: memref<64x64xf32, #tpu.memory_space<vmem>>, %arg39: memref<1x64xf32, #tpu.memory_space<vmem>>, %arg40: memref<1x64xf32, #tpu.memory_space<vmem>>, %arg41: memref<1x64xf32, #tpu.memory_space<vmem>>, %arg42: memref<64x256xf32, #tpu.memory_space<vmem>>, %arg43: memref<1x256xf32, #tpu.memory_space<vmem>>, %arg44: memref<256x64xf32, #tpu.memory_space<vmem>>, %arg45: memref<1x64xf32, #tpu.memory_space<vmem>>, %arg46: memref<1x64xf32, #tpu.memory_space<vmem>>, %arg47: memref<1x64xf32, #tpu.memory_space<vmem>>, %arg48: memref<5x64xf32, #tpu.memory_space<vmem>>, %arg49: memref<5x64xf32, #tpu.memory_space<vmem>>, %arg50: memref<5x64xf32, #tpu.memory_space<vmem>>, %arg51: memref<5x64xf32, #tpu.memory_space<vmem>>, %arg52: memref<2x320xf32, #tpu.memory_space<vmem>>) attributes {dimension_semantics = [], scalar_prefetch = 0 : i64, scratch_operands = 0 : i64, tpu.core_type = #tpu.core_type<tc>} {
    %c0 = arith.constant 0 : index
    %c0_0 = arith.constant 0 : index
    %0 = vector.load %arg6[%c0, %c0_0] : memref<34x34xf32, #tpu.memory_space<vmem>>, vector<34x34xf32>
    %c0_1 = arith.constant 0 : index
    %c0_2 = arith.constant 0 : index
    %1 = vector.load %arg7[%c0_1, %c0_2] : memref<40x40xf32, #tpu.memory_space<vmem>>, vector<40x40xf32>
    %c0_3 = arith.constant 0 : index
    %c0_4 = arith.constant 0 : index
    %2 = vector.load %arg3[%c0_3, %c0_4] : memref<1x64xf32, #tpu.memory_space<vmem>>, vector<1x64xf32>
    %c0_5 = arith.constant 0 : index
    %c0_6 = arith.constant 0 : index
    %3 = vector.load %arg4[%c0_5, %c0_6] : memref<17x64xf32, #tpu.memory_space<vmem>>, vector<1x64xf32>
    %4 = arith.addf %2, %3 : vector<1x64xf32>
    %c1 = arith.constant 1 : index
    %c0_7 = arith.constant 0 : index
    %5 = vector.load %arg4[%c1, %c0_7] : memref<17x64xf32, #tpu.memory_space<vmem>>, vector<16x64xf32>
    %c0_8 = arith.constant 0 : index
    %c0_9 = arith.constant 0 : index
    %6 = vector.load %arg2[%c0_8, %c0_9] : memref<1x64xf32, #tpu.memory_space<vmem>>, vector<1x64xf32>
    %7 = vector.broadcast %6 : vector<1x64xf32> to vector<16x64xf32>
    %8 = arith.addf %5, %7 : vector<16x64xf32>
    %9 = tpu.concatenate %4, %8 in 0 : vector<1x64xf32>, vector<16x64xf32> -> vector<17x64xf32>
    %10 = tpu.concatenate %9, %9 in 0 : vector<17x64xf32>, vector<17x64xf32> -> vector<34x64xf32>
    %c0_10 = arith.constant 0 : index
    %c0_11 = arith.constant 0 : index
    %11 = vector.load %arg0[%c0_10, %c0_11] : memref<34x64xf32, #tpu.memory_space<vmem>>, vector<34x64xf32>
    %c0_12 = arith.constant 0 : index
    %c0_13 = arith.constant 0 : index
    %12 = vector.load %arg1[%c0_12, %c0_13] : memref<64x64xf32, #tpu.memory_space<vmem>>, vector<64x64xf32>
    %cst = arith.constant dense<0.000000e+00> : vector<34x64xf32>
    %13 = tpu.matmul %11, %12, %cst {dimension_numbers = #tpu.dot_dimension_numbers<[1], [0], [0], [1], [0, 0, 1, 1], [], []>} : vector<34x64xf32>, vector<64x64xf32>, vector<34x64xf32> -> vector<34x64xf32>
    %14 = arith.addf %13, %10 : vector<34x64xf32>
    %c0_14 = arith.constant 0 : index
    %c0_15 = arith.constant 0 : index
    %c0_16 = arith.constant 0 : index
    %15 = vector.load %arg8[%c0_14, %c0_15, %c0_16] : memref<2x1x64xf32, #tpu.memory_space<vmem>>, vector<1x1x64xf32>
    %16 = vector.shape_cast %15 : vector<1x1x64xf32> to vector<1x64xf32>
    %c0_17 = arith.constant 0 : index
    %c0_18 = arith.constant 0 : index
    %c0_19 = arith.constant 0 : index
    %17 = vector.load %arg9[%c0_17, %c0_18, %c0_19] : memref<2x1x64xf32, #tpu.memory_space<vmem>>, vector<1x1x64xf32>
    %18 = vector.shape_cast %17 : vector<1x1x64xf32> to vector<1x64xf32>
    %c0_20 = arith.constant 0 : index
    %c0_21 = arith.constant 0 : index
    %c0_22 = arith.constant 0 : index
    %19 = vector.load %arg10[%c0_20, %c0_21, %c0_22] : memref<2x64x192xf32, #tpu.memory_space<vmem>>, vector<1x64x192xf32>
    %20 = vector.shape_cast %19 : vector<1x64x192xf32> to vector<64x192xf32>
    %c0_23 = arith.constant 0 : index
    %c0_24 = arith.constant 0 : index
    %c0_25 = arith.constant 0 : index
    %21 = vector.load %arg11[%c0_23, %c0_24, %c0_25] : memref<2x1x192xf32, #tpu.memory_space<vmem>>, vector<1x1x192xf32>
    %22 = vector.shape_cast %21 : vector<1x1x192xf32> to vector<1x192xf32>
    %c0_26 = arith.constant 0 : index
    %c0_27 = arith.constant 0 : index
    %c0_28 = arith.constant 0 : index
    %23 = vector.load %arg12[%c0_26, %c0_27, %c0_28] : memref<2x64x64xf32, #tpu.memory_space<vmem>>, vector<1x64x64xf32>
    %24 = vector.shape_cast %23 : vector<1x64x64xf32> to vector<64x64xf32>
    %c0_29 = arith.constant 0 : index
    %c0_30 = arith.constant 0 : index
    %c0_31 = arith.constant 0 : index
    %25 = vector.load %arg13[%c0_29, %c0_30, %c0_31] : memref<2x1x64xf32, #tpu.memory_space<vmem>>, vector<1x1x64xf32>
    %26 = vector.shape_cast %25 : vector<1x1x64xf32> to vector<1x64xf32>
    %c0_32 = arith.constant 0 : index
    %c0_33 = arith.constant 0 : index
    %c0_34 = arith.constant 0 : index
    %27 = vector.load %arg14[%c0_32, %c0_33, %c0_34] : memref<2x1x64xf32, #tpu.memory_space<vmem>>, vector<1x1x64xf32>
    %28 = vector.shape_cast %27 : vector<1x1x64xf32> to vector<1x64xf32>
    %c0_35 = arith.constant 0 : index
    %c0_36 = arith.constant 0 : index
    %c0_37 = arith.constant 0 : index
    %29 = vector.load %arg15[%c0_35, %c0_36, %c0_37] : memref<2x1x64xf32, #tpu.memory_space<vmem>>, vector<1x1x64xf32>
    %30 = vector.shape_cast %29 : vector<1x1x64xf32> to vector<1x64xf32>
    %c0_38 = arith.constant 0 : index
    %c0_39 = arith.constant 0 : index
    %c0_40 = arith.constant 0 : index
    %31 = vector.load %arg16[%c0_38, %c0_39, %c0_40] : memref<2x64x256xf32, #tpu.memory_space<vmem>>, vector<1x64x256xf32>
    %32 = vector.shape_cast %31 : vector<1x64x256xf32> to vector<64x256xf32>
    %c0_41 = arith.constant 0 : index
    %c0_42 = arith.constant 0 : index
    %c0_43 = arith.constant 0 : index
    %33 = vector.load %arg17[%c0_41, %c0_42, %c0_43] : memref<2x1x256xf32, #tpu.memory_space<vmem>>, vector<1x1x256xf32>
    %34 = vector.shape_cast %33 : vector<1x1x256xf32> to vector<1x256xf32>
    %c0_44 = arith.constant 0 : index
    %c0_45 = arith.constant 0 : index
    %c0_46 = arith.constant 0 : index
    %35 = vector.load %arg18[%c0_44, %c0_45, %c0_46] : memref<2x256x64xf32, #tpu.memory_space<vmem>>, vector<1x256x64xf32>
    %36 = vector.shape_cast %35 : vector<1x256x64xf32> to vector<256x64xf32>
    %c0_47 = arith.constant 0 : index
    %c0_48 = arith.constant 0 : index
    %c0_49 = arith.constant 0 : index
    %37 = vector.load %arg19[%c0_47, %c0_48, %c0_49] : memref<2x1x64xf32, #tpu.memory_space<vmem>>, vector<1x1x64xf32>
    %38 = vector.shape_cast %37 : vector<1x1x64xf32> to vector<1x64xf32>
    %cst_50 = arith.constant dense<0.000000e+00> : vector<34xf32>
    %39 = vector.multi_reduction <add>, %14, %cst_50 [1] : vector<34x64xf32> to vector<34xf32>
    %40 = vector.shape_cast %39 : vector<34xf32> to vector<34x1xf32>
    %cst_51 = arith.constant 6.400000e+01 : f32
    %41 = vector.broadcast %cst_51 : f32 to vector<34x1xf32>
    %42 = arith.divf %40, %41 : vector<34x1xf32>
    %43 = vector.broadcast %42 : vector<34x1xf32> to vector<34x64xf32>
    %44 = arith.subf %14, %43 : vector<34x64xf32>
    %45 = arith.mulf %44, %44 : vector<34x64xf32>
    %cst_52 = arith.constant dense<0.000000e+00> : vector<34xf32>
    %46 = vector.multi_reduction <add>, %45, %cst_52 [1] : vector<34x64xf32> to vector<34xf32>
    %47 = vector.shape_cast %46 : vector<34xf32> to vector<34x1xf32>
    %cst_53 = arith.constant 6.400000e+01 : f32
    %48 = vector.broadcast %cst_53 : f32 to vector<34x1xf32>
    %49 = arith.divf %47, %48 : vector<34x1xf32>
    %50 = vector.broadcast %42 : vector<34x1xf32> to vector<34x64xf32>
    %51 = arith.subf %14, %50 : vector<34x64xf32>
    %cst_54 = arith.constant 9.99999997E-7 : f32
    %52 = vector.broadcast %cst_54 : f32 to vector<34x1xf32>
    %53 = arith.addf %49, %52 : vector<34x1xf32>
    %54 = math.rsqrt %53 : vector<34x1xf32>
    %55 = vector.broadcast %54 : vector<34x1xf32> to vector<34x64xf32>
    %56 = arith.mulf %51, %55 : vector<34x64xf32>
    %57 = vector.broadcast %16 : vector<1x64xf32> to vector<34x64xf32>
    %58 = arith.mulf %56, %57 : vector<34x64xf32>
    %59 = vector.broadcast %18 : vector<1x64xf32> to vector<34x64xf32>
    %60 = arith.addf %58, %59 : vector<34x64xf32>
    %cst_55 = arith.constant dense<0.000000e+00> : vector<34x192xf32>
    %61 = tpu.matmul %60, %20, %cst_55 {dimension_numbers = #tpu.dot_dimension_numbers<[1], [0], [0], [1], [0, 0, 1, 1], [], []>} : vector<34x64xf32>, vector<64x192xf32>, vector<34x192xf32> -> vector<34x192xf32>
    %62 = vector.broadcast %22 : vector<1x192xf32> to vector<34x192xf32>
    %63 = arith.addf %61, %62 : vector<34x192xf32>
    %64 = vector.extract_strided_slice %63 {offsets = [0, 0], sizes = [34, 16], strides = [1, 1]} : vector<34x192xf32> to vector<34x16xf32>
    %cst_56 = arith.constant 2.500000e-01 : f32
    %65 = vector.broadcast %cst_56 : f32 to vector<34x16xf32>
    %66 = arith.mulf %64, %65 : vector<34x16xf32>
    %67 = vector.extract_strided_slice %63 {offsets = [0, 64], sizes = [34, 16], strides = [1, 1]} : vector<34x192xf32> to vector<34x16xf32>
    %68 = vector.extract_strided_slice %63 {offsets = [0, 128], sizes = [34, 16], strides = [1, 1]} : vector<34x192xf32> to vector<34x16xf32>
    %cst_57 = arith.constant dense<0.000000e+00> : vector<34x34xf32>
    %69 = tpu.matmul %66, %67, %cst_57 {dimension_numbers = #tpu.dot_dimension_numbers<[1], [1], [0], [0], [0, 0, 1, 0], [], []>} : vector<34x16xf32>, vector<34x16xf32>, vector<34x34xf32> -> vector<34x34xf32>
    %70 = arith.addf %69, %0 : vector<34x34xf32>
    %cst_58 = arith.constant dense<0xFF800000> : vector<34xf32>
    %71 = vector.multi_reduction <maximumf>, %70, %cst_58 [1] : vector<34x34xf32> to vector<34xf32>
    %72 = vector.shape_cast %71 : vector<34xf32> to vector<34x1xf32>
    %73 = vector.broadcast %72 : vector<34x1xf32> to vector<34x34xf32>
    %74 = arith.subf %70, %73 : vector<34x34xf32>
    %75 = math.exp %74 : vector<34x34xf32>
    %cst_59 = arith.constant dense<0.000000e+00> : vector<34xf32>
    %76 = vector.multi_reduction <add>, %75, %cst_59 [1] : vector<34x34xf32> to vector<34xf32>
    %77 = vector.shape_cast %76 : vector<34xf32> to vector<34x1xf32>
    %78 = vector.broadcast %77 : vector<34x1xf32> to vector<34x34xf32>
    %79 = arith.divf %75, %78 : vector<34x34xf32>
    %cst_60 = arith.constant dense<0.000000e+00> : vector<34x16xf32>
    %80 = tpu.matmul %79, %68, %cst_60 {dimension_numbers = #tpu.dot_dimension_numbers<[1], [0], [0], [1], [0, 0, 1, 1], [], []>} : vector<34x34xf32>, vector<34x16xf32>, vector<34x16xf32> -> vector<34x16xf32>
    %81 = vector.extract_strided_slice %63 {offsets = [0, 16], sizes = [34, 16], strides = [1, 1]} : vector<34x192xf32> to vector<34x16xf32>
    %cst_61 = arith.constant 2.500000e-01 : f32
    %82 = vector.broadcast %cst_61 : f32 to vector<34x16xf32>
    %83 = arith.mulf %81, %82 : vector<34x16xf32>
    %84 = vector.extract_strided_slice %63 {offsets = [0, 80], sizes = [34, 16], strides = [1, 1]} : vector<34x192xf32> to vector<34x16xf32>
    %85 = vector.extract_strided_slice %63 {offsets = [0, 144], sizes = [34, 16], strides = [1, 1]} : vector<34x192xf32> to vector<34x16xf32>
    %cst_62 = arith.constant dense<0.000000e+00> : vector<34x34xf32>
    %86 = tpu.matmul %83, %84, %cst_62 {dimension_numbers = #tpu.dot_dimension_numbers<[1], [1], [0], [0], [0, 0, 1, 0], [], []>} : vector<34x16xf32>, vector<34x16xf32>, vector<34x34xf32> -> vector<34x34xf32>
    %87 = arith.addf %86, %0 : vector<34x34xf32>
    %cst_63 = arith.constant dense<0xFF800000> : vector<34xf32>
    %88 = vector.multi_reduction <maximumf>, %87, %cst_63 [1] : vector<34x34xf32> to vector<34xf32>
    %89 = vector.shape_cast %88 : vector<34xf32> to vector<34x1xf32>
    %90 = vector.broadcast %89 : vector<34x1xf32> to vector<34x34xf32>
    %91 = arith.subf %87, %90 : vector<34x34xf32>
    %92 = math.exp %91 : vector<34x34xf32>
    %cst_64 = arith.constant dense<0.000000e+00> : vector<34xf32>
    %93 = vector.multi_reduction <add>, %92, %cst_64 [1] : vector<34x34xf32> to vector<34xf32>
    %94 = vector.shape_cast %93 : vector<34xf32> to vector<34x1xf32>
    %95 = vector.broadcast %94 : vector<34x1xf32> to vector<34x34xf32>
    %96 = arith.divf %92, %95 : vector<34x34xf32>
    %cst_65 = arith.constant dense<0.000000e+00> : vector<34x16xf32>
    %97 = tpu.matmul %96, %85, %cst_65 {dimension_numbers = #tpu.dot_dimension_numbers<[1], [0], [0], [1], [0, 0, 1, 1], [], []>} : vector<34x34xf32>, vector<34x16xf32>, vector<34x16xf32> -> vector<34x16xf32>
    %98 = vector.extract_strided_slice %63 {offsets = [0, 32], sizes = [34, 16], strides = [1, 1]} : vector<34x192xf32> to vector<34x16xf32>
    %cst_66 = arith.constant 2.500000e-01 : f32
    %99 = vector.broadcast %cst_66 : f32 to vector<34x16xf32>
    %100 = arith.mulf %98, %99 : vector<34x16xf32>
    %101 = vector.extract_strided_slice %63 {offsets = [0, 96], sizes = [34, 16], strides = [1, 1]} : vector<34x192xf32> to vector<34x16xf32>
    %102 = vector.extract_strided_slice %63 {offsets = [0, 160], sizes = [34, 16], strides = [1, 1]} : vector<34x192xf32> to vector<34x16xf32>
    %cst_67 = arith.constant dense<0.000000e+00> : vector<34x34xf32>
    %103 = tpu.matmul %100, %101, %cst_67 {dimension_numbers = #tpu.dot_dimension_numbers<[1], [1], [0], [0], [0, 0, 1, 0], [], []>} : vector<34x16xf32>, vector<34x16xf32>, vector<34x34xf32> -> vector<34x34xf32>
    %104 = arith.addf %103, %0 : vector<34x34xf32>
    %cst_68 = arith.constant dense<0xFF800000> : vector<34xf32>
    %105 = vector.multi_reduction <maximumf>, %104, %cst_68 [1] : vector<34x34xf32> to vector<34xf32>
    %106 = vector.shape_cast %105 : vector<34xf32> to vector<34x1xf32>
    %107 = vector.broadcast %106 : vector<34x1xf32> to vector<34x34xf32>
    %108 = arith.subf %104, %107 : vector<34x34xf32>
    %109 = math.exp %108 : vector<34x34xf32>
    %cst_69 = arith.constant dense<0.000000e+00> : vector<34xf32>
    %110 = vector.multi_reduction <add>, %109, %cst_69 [1] : vector<34x34xf32> to vector<34xf32>
    %111 = vector.shape_cast %110 : vector<34xf32> to vector<34x1xf32>
    %112 = vector.broadcast %111 : vector<34x1xf32> to vector<34x34xf32>
    %113 = arith.divf %109, %112 : vector<34x34xf32>
    %cst_70 = arith.constant dense<0.000000e+00> : vector<34x16xf32>
    %114 = tpu.matmul %113, %102, %cst_70 {dimension_numbers = #tpu.dot_dimension_numbers<[1], [0], [0], [1], [0, 0, 1, 1], [], []>} : vector<34x34xf32>, vector<34x16xf32>, vector<34x16xf32> -> vector<34x16xf32>
    %115 = vector.extract_strided_slice %63 {offsets = [0, 48], sizes = [34, 16], strides = [1, 1]} : vector<34x192xf32> to vector<34x16xf32>
    %cst_71 = arith.constant 2.500000e-01 : f32
    %116 = vector.broadcast %cst_71 : f32 to vector<34x16xf32>
    %117 = arith.mulf %115, %116 : vector<34x16xf32>
    %118 = vector.extract_strided_slice %63 {offsets = [0, 112], sizes = [34, 16], strides = [1, 1]} : vector<34x192xf32> to vector<34x16xf32>
    %119 = vector.extract_strided_slice %63 {offsets = [0, 176], sizes = [34, 16], strides = [1, 1]} : vector<34x192xf32> to vector<34x16xf32>
    %cst_72 = arith.constant dense<0.000000e+00> : vector<34x34xf32>
    %120 = tpu.matmul %117, %118, %cst_72 {dimension_numbers = #tpu.dot_dimension_numbers<[1], [1], [0], [0], [0, 0, 1, 0], [], []>} : vector<34x16xf32>, vector<34x16xf32>, vector<34x34xf32> -> vector<34x34xf32>
    %121 = arith.addf %120, %0 : vector<34x34xf32>
    %cst_73 = arith.constant dense<0xFF800000> : vector<34xf32>
    %122 = vector.multi_reduction <maximumf>, %121, %cst_73 [1] : vector<34x34xf32> to vector<34xf32>
    %123 = vector.shape_cast %122 : vector<34xf32> to vector<34x1xf32>
    %124 = vector.broadcast %123 : vector<34x1xf32> to vector<34x34xf32>
    %125 = arith.subf %121, %124 : vector<34x34xf32>
    %126 = math.exp %125 : vector<34x34xf32>
    %cst_74 = arith.constant dense<0.000000e+00> : vector<34xf32>
    %127 = vector.multi_reduction <add>, %126, %cst_74 [1] : vector<34x34xf32> to vector<34xf32>
    %128 = vector.shape_cast %127 : vector<34xf32> to vector<34x1xf32>
    %129 = vector.broadcast %128 : vector<34x1xf32> to vector<34x34xf32>
    %130 = arith.divf %126, %129 : vector<34x34xf32>
    %cst_75 = arith.constant dense<0.000000e+00> : vector<34x16xf32>
    %131 = tpu.matmul %130, %119, %cst_75 {dimension_numbers = #tpu.dot_dimension_numbers<[1], [0], [0], [1], [0, 0, 1, 1], [], []>} : vector<34x34xf32>, vector<34x16xf32>, vector<34x16xf32> -> vector<34x16xf32>
    %132 = tpu.concatenate %80, %97, %114, %131 in 1 : vector<34x16xf32>, vector<34x16xf32>, vector<34x16xf32>, vector<34x16xf32> -> vector<34x64xf32>
    %cst_76 = arith.constant dense<0.000000e+00> : vector<34x64xf32>
    %133 = tpu.matmul %132, %24, %cst_76 {dimension_numbers = #tpu.dot_dimension_numbers<[1], [0], [0], [1], [0, 0, 1, 1], [], []>} : vector<34x64xf32>, vector<64x64xf32>, vector<34x64xf32> -> vector<34x64xf32>
    %134 = arith.addf %14, %133 : vector<34x64xf32>
    %135 = vector.broadcast %26 : vector<1x64xf32> to vector<34x64xf32>
    %136 = arith.addf %134, %135 : vector<34x64xf32>
    %cst_77 = arith.constant dense<0.000000e+00> : vector<34xf32>
    %137 = vector.multi_reduction <add>, %136, %cst_77 [1] : vector<34x64xf32> to vector<34xf32>
    %138 = vector.shape_cast %137 : vector<34xf32> to vector<34x1xf32>
    %cst_78 = arith.constant 6.400000e+01 : f32
    %139 = vector.broadcast %cst_78 : f32 to vector<34x1xf32>
    %140 = arith.divf %138, %139 : vector<34x1xf32>
    %141 = vector.broadcast %140 : vector<34x1xf32> to vector<34x64xf32>
    %142 = arith.subf %136, %141 : vector<34x64xf32>
    %143 = arith.mulf %142, %142 : vector<34x64xf32>
    %cst_79 = arith.constant dense<0.000000e+00> : vector<34xf32>
    %144 = vector.multi_reduction <add>, %143, %cst_79 [1] : vector<34x64xf32> to vector<34xf32>
    %145 = vector.shape_cast %144 : vector<34xf32> to vector<34x1xf32>
    %cst_80 = arith.constant 6.400000e+01 : f32
    %146 = vector.broadcast %cst_80 : f32 to vector<34x1xf32>
    %147 = arith.divf %145, %146 : vector<34x1xf32>
    %148 = vector.broadcast %140 : vector<34x1xf32> to vector<34x64xf32>
    %149 = arith.subf %136, %148 : vector<34x64xf32>
    %cst_81 = arith.constant 9.99999997E-7 : f32
    %150 = vector.broadcast %cst_81 : f32 to vector<34x1xf32>
    %151 = arith.addf %147, %150 : vector<34x1xf32>
    %152 = math.rsqrt %151 : vector<34x1xf32>
    %153 = vector.broadcast %152 : vector<34x1xf32> to vector<34x64xf32>
    %154 = arith.mulf %149, %153 : vector<34x64xf32>
    %155 = vector.broadcast %28 : vector<1x64xf32> to vector<34x64xf32>
    %156 = arith.mulf %154, %155 : vector<34x64xf32>
    %157 = vector.broadcast %30 : vector<1x64xf32> to vector<34x64xf32>
    %158 = arith.addf %156, %157 : vector<34x64xf32>
    %cst_82 = arith.constant dense<0.000000e+00> : vector<34x256xf32>
    %159 = tpu.matmul %158, %32, %cst_82 {dimension_numbers = #tpu.dot_dimension_numbers<[1], [0], [0], [1], [0, 0, 1, 1], [], []>} : vector<34x64xf32>, vector<64x256xf32>, vector<34x256xf32> -> vector<34x256xf32>
    %160 = vector.broadcast %34 : vector<1x256xf32> to vector<34x256xf32>
    %161 = arith.addf %159, %160 : vector<34x256xf32>
    %162 = arith.mulf %161, %161 : vector<34x256xf32>
    %163 = arith.mulf %161, %162 : vector<34x256xf32>
    %cst_83 = arith.constant 4.471500e-02 : f32
    %164 = vector.broadcast %cst_83 : f32 to vector<34x256xf32>
    %165 = arith.mulf %164, %163 : vector<34x256xf32>
    %166 = arith.addf %161, %165 : vector<34x256xf32>
    %cst_84 = arith.constant 0.797884583 : f32
    %167 = vector.broadcast %cst_84 : f32 to vector<34x256xf32>
    %168 = arith.mulf %167, %166 : vector<34x256xf32>
    %169 = math.tanh %168 : vector<34x256xf32>
    %cst_85 = arith.constant 1.000000e+00 : f32
    %170 = vector.broadcast %cst_85 : f32 to vector<34x256xf32>
    %171 = arith.addf %170, %169 : vector<34x256xf32>
    %cst_86 = arith.constant 5.000000e-01 : f32
    %172 = vector.broadcast %cst_86 : f32 to vector<34x256xf32>
    %173 = arith.mulf %172, %171 : vector<34x256xf32>
    %174 = arith.mulf %161, %173 : vector<34x256xf32>
    %cst_87 = arith.constant dense<0.000000e+00> : vector<34x64xf32>
    %175 = tpu.matmul %174, %36, %cst_87 {dimension_numbers = #tpu.dot_dimension_numbers<[1], [0], [0], [1], [0, 0, 1, 1], [], []>} : vector<34x256xf32>, vector<256x64xf32>, vector<34x64xf32> -> vector<34x64xf32>
    %176 = vector.broadcast %38 : vector<1x64xf32> to vector<34x64xf32>
    %177 = arith.addf %175, %176 : vector<34x64xf32>
    %178 = arith.addf %136, %177 : vector<34x64xf32>
    %c1_88 = arith.constant 1 : index
    %c0_89 = arith.constant 0 : index
    %c0_90 = arith.constant 0 : index
    %179 = vector.load %arg8[%c1_88, %c0_89, %c0_90] : memref<2x1x64xf32, #tpu.memory_space<vmem>>, vector<1x1x64xf32>
    %180 = vector.shape_cast %179 : vector<1x1x64xf32> to vector<1x64xf32>
    %c1_91 = arith.constant 1 : index
    %c0_92 = arith.constant 0 : index
    %c0_93 = arith.constant 0 : index
    %181 = vector.load %arg9[%c1_91, %c0_92, %c0_93] : memref<2x1x64xf32, #tpu.memory_space<vmem>>, vector<1x1x64xf32>
    %182 = vector.shape_cast %181 : vector<1x1x64xf32> to vector<1x64xf32>
    %c1_94 = arith.constant 1 : index
    %c0_95 = arith.constant 0 : index
    %c0_96 = arith.constant 0 : index
    %183 = vector.load %arg10[%c1_94, %c0_95, %c0_96] : memref<2x64x192xf32, #tpu.memory_space<vmem>>, vector<1x64x192xf32>
    %184 = vector.shape_cast %183 : vector<1x64x192xf32> to vector<64x192xf32>
    %c1_97 = arith.constant 1 : index
    %c0_98 = arith.constant 0 : index
    %c0_99 = arith.constant 0 : index
    %185 = vector.load %arg11[%c1_97, %c0_98, %c0_99] : memref<2x1x192xf32, #tpu.memory_space<vmem>>, vector<1x1x192xf32>
    %186 = vector.shape_cast %185 : vector<1x1x192xf32> to vector<1x192xf32>
    %c1_100 = arith.constant 1 : index
    %c0_101 = arith.constant 0 : index
    %c0_102 = arith.constant 0 : index
    %187 = vector.load %arg12[%c1_100, %c0_101, %c0_102] : memref<2x64x64xf32, #tpu.memory_space<vmem>>, vector<1x64x64xf32>
    %188 = vector.shape_cast %187 : vector<1x64x64xf32> to vector<64x64xf32>
    %c1_103 = arith.constant 1 : index
    %c0_104 = arith.constant 0 : index
    %c0_105 = arith.constant 0 : index
    %189 = vector.load %arg13[%c1_103, %c0_104, %c0_105] : memref<2x1x64xf32, #tpu.memory_space<vmem>>, vector<1x1x64xf32>
    %190 = vector.shape_cast %189 : vector<1x1x64xf32> to vector<1x64xf32>
    %c1_106 = arith.constant 1 : index
    %c0_107 = arith.constant 0 : index
    %c0_108 = arith.constant 0 : index
    %191 = vector.load %arg14[%c1_106, %c0_107, %c0_108] : memref<2x1x64xf32, #tpu.memory_space<vmem>>, vector<1x1x64xf32>
    %192 = vector.shape_cast %191 : vector<1x1x64xf32> to vector<1x64xf32>
    %c1_109 = arith.constant 1 : index
    %c0_110 = arith.constant 0 : index
    %c0_111 = arith.constant 0 : index
    %193 = vector.load %arg15[%c1_109, %c0_110, %c0_111] : memref<2x1x64xf32, #tpu.memory_space<vmem>>, vector<1x1x64xf32>
    %194 = vector.shape_cast %193 : vector<1x1x64xf32> to vector<1x64xf32>
    %c1_112 = arith.constant 1 : index
    %c0_113 = arith.constant 0 : index
    %c0_114 = arith.constant 0 : index
    %195 = vector.load %arg16[%c1_112, %c0_113, %c0_114] : memref<2x64x256xf32, #tpu.memory_space<vmem>>, vector<1x64x256xf32>
    %196 = vector.shape_cast %195 : vector<1x64x256xf32> to vector<64x256xf32>
    %c1_115 = arith.constant 1 : index
    %c0_116 = arith.constant 0 : index
    %c0_117 = arith.constant 0 : index
    %197 = vector.load %arg17[%c1_115, %c0_116, %c0_117] : memref<2x1x256xf32, #tpu.memory_space<vmem>>, vector<1x1x256xf32>
    %198 = vector.shape_cast %197 : vector<1x1x256xf32> to vector<1x256xf32>
    %c1_118 = arith.constant 1 : index
    %c0_119 = arith.constant 0 : index
    %c0_120 = arith.constant 0 : index
    %199 = vector.load %arg18[%c1_118, %c0_119, %c0_120] : memref<2x256x64xf32, #tpu.memory_space<vmem>>, vector<1x256x64xf32>
    %200 = vector.shape_cast %199 : vector<1x256x64xf32> to vector<256x64xf32>
    %c1_121 = arith.constant 1 : index
    %c0_122 = arith.constant 0 : index
    %c0_123 = arith.constant 0 : index
    %201 = vector.load %arg19[%c1_121, %c0_122, %c0_123] : memref<2x1x64xf32, #tpu.memory_space<vmem>>, vector<1x1x64xf32>
    %202 = vector.shape_cast %201 : vector<1x1x64xf32> to vector<1x64xf32>
    %cst_124 = arith.constant dense<0.000000e+00> : vector<34xf32>
    %203 = vector.multi_reduction <add>, %178, %cst_124 [1] : vector<34x64xf32> to vector<34xf32>
    %204 = vector.shape_cast %203 : vector<34xf32> to vector<34x1xf32>
    %cst_125 = arith.constant 6.400000e+01 : f32
    %205 = vector.broadcast %cst_125 : f32 to vector<34x1xf32>
    %206 = arith.divf %204, %205 : vector<34x1xf32>
    %207 = vector.broadcast %206 : vector<34x1xf32> to vector<34x64xf32>
    %208 = arith.subf %178, %207 : vector<34x64xf32>
    %209 = arith.mulf %208, %208 : vector<34x64xf32>
    %cst_126 = arith.constant dense<0.000000e+00> : vector<34xf32>
    %210 = vector.multi_reduction <add>, %209, %cst_126 [1] : vector<34x64xf32> to vector<34xf32>
    %211 = vector.shape_cast %210 : vector<34xf32> to vector<34x1xf32>
    %cst_127 = arith.constant 6.400000e+01 : f32
    %212 = vector.broadcast %cst_127 : f32 to vector<34x1xf32>
    %213 = arith.divf %211, %212 : vector<34x1xf32>
    %214 = vector.broadcast %206 : vector<34x1xf32> to vector<34x64xf32>
    %215 = arith.subf %178, %214 : vector<34x64xf32>
    %cst_128 = arith.constant 9.99999997E-7 : f32
    %216 = vector.broadcast %cst_128 : f32 to vector<34x1xf32>
    %217 = arith.addf %213, %216 : vector<34x1xf32>
    %218 = math.rsqrt %217 : vector<34x1xf32>
    %219 = vector.broadcast %218 : vector<34x1xf32> to vector<34x64xf32>
    %220 = arith.mulf %215, %219 : vector<34x64xf32>
    %221 = vector.broadcast %180 : vector<1x64xf32> to vector<34x64xf32>
    %222 = arith.mulf %220, %221 : vector<34x64xf32>
    %223 = vector.broadcast %182 : vector<1x64xf32> to vector<34x64xf32>
    %224 = arith.addf %222, %223 : vector<34x64xf32>
    %cst_129 = arith.constant dense<0.000000e+00> : vector<34x192xf32>
    %225 = tpu.matmul %224, %184, %cst_129 {dimension_numbers = #tpu.dot_dimension_numbers<[1], [0], [0], [1], [0, 0, 1, 1], [], []>} : vector<34x64xf32>, vector<64x192xf32>, vector<34x192xf32> -> vector<34x192xf32>
    %226 = vector.broadcast %186 : vector<1x192xf32> to vector<34x192xf32>
    %227 = arith.addf %225, %226 : vector<34x192xf32>
    %228 = vector.extract_strided_slice %227 {offsets = [0, 0], sizes = [34, 16], strides = [1, 1]} : vector<34x192xf32> to vector<34x16xf32>
    %cst_130 = arith.constant 2.500000e-01 : f32
    %229 = vector.broadcast %cst_130 : f32 to vector<34x16xf32>
    %230 = arith.mulf %228, %229 : vector<34x16xf32>
    %231 = vector.extract_strided_slice %227 {offsets = [0, 64], sizes = [34, 16], strides = [1, 1]} : vector<34x192xf32> to vector<34x16xf32>
    %232 = vector.extract_strided_slice %227 {offsets = [0, 128], sizes = [34, 16], strides = [1, 1]} : vector<34x192xf32> to vector<34x16xf32>
    %cst_131 = arith.constant dense<0.000000e+00> : vector<34x34xf32>
    %233 = tpu.matmul %230, %231, %cst_131 {dimension_numbers = #tpu.dot_dimension_numbers<[1], [1], [0], [0], [0, 0, 1, 0], [], []>} : vector<34x16xf32>, vector<34x16xf32>, vector<34x34xf32> -> vector<34x34xf32>
    %234 = arith.addf %233, %0 : vector<34x34xf32>
    %cst_132 = arith.constant dense<0xFF800000> : vector<34xf32>
    %235 = vector.multi_reduction <maximumf>, %234, %cst_132 [1] : vector<34x34xf32> to vector<34xf32>
    %236 = vector.shape_cast %235 : vector<34xf32> to vector<34x1xf32>
    %237 = vector.broadcast %236 : vector<34x1xf32> to vector<34x34xf32>
    %238 = arith.subf %234, %237 : vector<34x34xf32>
    %239 = math.exp %238 : vector<34x34xf32>
    %cst_133 = arith.constant dense<0.000000e+00> : vector<34xf32>
    %240 = vector.multi_reduction <add>, %239, %cst_133 [1] : vector<34x34xf32> to vector<34xf32>
    %241 = vector.shape_cast %240 : vector<34xf32> to vector<34x1xf32>
    %242 = vector.broadcast %241 : vector<34x1xf32> to vector<34x34xf32>
    %243 = arith.divf %239, %242 : vector<34x34xf32>
    %cst_134 = arith.constant dense<0.000000e+00> : vector<34x16xf32>
    %244 = tpu.matmul %243, %232, %cst_134 {dimension_numbers = #tpu.dot_dimension_numbers<[1], [0], [0], [1], [0, 0, 1, 1], [], []>} : vector<34x34xf32>, vector<34x16xf32>, vector<34x16xf32> -> vector<34x16xf32>
    %245 = vector.extract_strided_slice %227 {offsets = [0, 16], sizes = [34, 16], strides = [1, 1]} : vector<34x192xf32> to vector<34x16xf32>
    %cst_135 = arith.constant 2.500000e-01 : f32
    %246 = vector.broadcast %cst_135 : f32 to vector<34x16xf32>
    %247 = arith.mulf %245, %246 : vector<34x16xf32>
    %248 = vector.extract_strided_slice %227 {offsets = [0, 80], sizes = [34, 16], strides = [1, 1]} : vector<34x192xf32> to vector<34x16xf32>
    %249 = vector.extract_strided_slice %227 {offsets = [0, 144], sizes = [34, 16], strides = [1, 1]} : vector<34x192xf32> to vector<34x16xf32>
    %cst_136 = arith.constant dense<0.000000e+00> : vector<34x34xf32>
    %250 = tpu.matmul %247, %248, %cst_136 {dimension_numbers = #tpu.dot_dimension_numbers<[1], [1], [0], [0], [0, 0, 1, 0], [], []>} : vector<34x16xf32>, vector<34x16xf32>, vector<34x34xf32> -> vector<34x34xf32>
    %251 = arith.addf %250, %0 : vector<34x34xf32>
    %cst_137 = arith.constant dense<0xFF800000> : vector<34xf32>
    %252 = vector.multi_reduction <maximumf>, %251, %cst_137 [1] : vector<34x34xf32> to vector<34xf32>
    %253 = vector.shape_cast %252 : vector<34xf32> to vector<34x1xf32>
    %254 = vector.broadcast %253 : vector<34x1xf32> to vector<34x34xf32>
    %255 = arith.subf %251, %254 : vector<34x34xf32>
    %256 = math.exp %255 : vector<34x34xf32>
    %cst_138 = arith.constant dense<0.000000e+00> : vector<34xf32>
    %257 = vector.multi_reduction <add>, %256, %cst_138 [1] : vector<34x34xf32> to vector<34xf32>
    %258 = vector.shape_cast %257 : vector<34xf32> to vector<34x1xf32>
    %259 = vector.broadcast %258 : vector<34x1xf32> to vector<34x34xf32>
    %260 = arith.divf %256, %259 : vector<34x34xf32>
    %cst_139 = arith.constant dense<0.000000e+00> : vector<34x16xf32>
    %261 = tpu.matmul %260, %249, %cst_139 {dimension_numbers = #tpu.dot_dimension_numbers<[1], [0], [0], [1], [0, 0, 1, 1], [], []>} : vector<34x34xf32>, vector<34x16xf32>, vector<34x16xf32> -> vector<34x16xf32>
    %262 = vector.extract_strided_slice %227 {offsets = [0, 32], sizes = [34, 16], strides = [1, 1]} : vector<34x192xf32> to vector<34x16xf32>
    %cst_140 = arith.constant 2.500000e-01 : f32
    %263 = vector.broadcast %cst_140 : f32 to vector<34x16xf32>
    %264 = arith.mulf %262, %263 : vector<34x16xf32>
    %265 = vector.extract_strided_slice %227 {offsets = [0, 96], sizes = [34, 16], strides = [1, 1]} : vector<34x192xf32> to vector<34x16xf32>
    %266 = vector.extract_strided_slice %227 {offsets = [0, 160], sizes = [34, 16], strides = [1, 1]} : vector<34x192xf32> to vector<34x16xf32>
    %cst_141 = arith.constant dense<0.000000e+00> : vector<34x34xf32>
    %267 = tpu.matmul %264, %265, %cst_141 {dimension_numbers = #tpu.dot_dimension_numbers<[1], [1], [0], [0], [0, 0, 1, 0], [], []>} : vector<34x16xf32>, vector<34x16xf32>, vector<34x34xf32> -> vector<34x34xf32>
    %268 = arith.addf %267, %0 : vector<34x34xf32>
    %cst_142 = arith.constant dense<0xFF800000> : vector<34xf32>
    %269 = vector.multi_reduction <maximumf>, %268, %cst_142 [1] : vector<34x34xf32> to vector<34xf32>
    %270 = vector.shape_cast %269 : vector<34xf32> to vector<34x1xf32>
    %271 = vector.broadcast %270 : vector<34x1xf32> to vector<34x34xf32>
    %272 = arith.subf %268, %271 : vector<34x34xf32>
    %273 = math.exp %272 : vector<34x34xf32>
    %cst_143 = arith.constant dense<0.000000e+00> : vector<34xf32>
    %274 = vector.multi_reduction <add>, %273, %cst_143 [1] : vector<34x34xf32> to vector<34xf32>
    %275 = vector.shape_cast %274 : vector<34xf32> to vector<34x1xf32>
    %276 = vector.broadcast %275 : vector<34x1xf32> to vector<34x34xf32>
    %277 = arith.divf %273, %276 : vector<34x34xf32>
    %cst_144 = arith.constant dense<0.000000e+00> : vector<34x16xf32>
    %278 = tpu.matmul %277, %266, %cst_144 {dimension_numbers = #tpu.dot_dimension_numbers<[1], [0], [0], [1], [0, 0, 1, 1], [], []>} : vector<34x34xf32>, vector<34x16xf32>, vector<34x16xf32> -> vector<34x16xf32>
    %279 = vector.extract_strided_slice %227 {offsets = [0, 48], sizes = [34, 16], strides = [1, 1]} : vector<34x192xf32> to vector<34x16xf32>
    %cst_145 = arith.constant 2.500000e-01 : f32
    %280 = vector.broadcast %cst_145 : f32 to vector<34x16xf32>
    %281 = arith.mulf %279, %280 : vector<34x16xf32>
    %282 = vector.extract_strided_slice %227 {offsets = [0, 112], sizes = [34, 16], strides = [1, 1]} : vector<34x192xf32> to vector<34x16xf32>
    %283 = vector.extract_strided_slice %227 {offsets = [0, 176], sizes = [34, 16], strides = [1, 1]} : vector<34x192xf32> to vector<34x16xf32>
    %cst_146 = arith.constant dense<0.000000e+00> : vector<34x34xf32>
    %284 = tpu.matmul %281, %282, %cst_146 {dimension_numbers = #tpu.dot_dimension_numbers<[1], [1], [0], [0], [0, 0, 1, 0], [], []>} : vector<34x16xf32>, vector<34x16xf32>, vector<34x34xf32> -> vector<34x34xf32>
    %285 = arith.addf %284, %0 : vector<34x34xf32>
    %cst_147 = arith.constant dense<0xFF800000> : vector<34xf32>
    %286 = vector.multi_reduction <maximumf>, %285, %cst_147 [1] : vector<34x34xf32> to vector<34xf32>
    %287 = vector.shape_cast %286 : vector<34xf32> to vector<34x1xf32>
    %288 = vector.broadcast %287 : vector<34x1xf32> to vector<34x34xf32>
    %289 = arith.subf %285, %288 : vector<34x34xf32>
    %290 = math.exp %289 : vector<34x34xf32>
    %cst_148 = arith.constant dense<0.000000e+00> : vector<34xf32>
    %291 = vector.multi_reduction <add>, %290, %cst_148 [1] : vector<34x34xf32> to vector<34xf32>
    %292 = vector.shape_cast %291 : vector<34xf32> to vector<34x1xf32>
    %293 = vector.broadcast %292 : vector<34x1xf32> to vector<34x34xf32>
    %294 = arith.divf %290, %293 : vector<34x34xf32>
    %cst_149 = arith.constant dense<0.000000e+00> : vector<34x16xf32>
    %295 = tpu.matmul %294, %283, %cst_149 {dimension_numbers = #tpu.dot_dimension_numbers<[1], [0], [0], [1], [0, 0, 1, 1], [], []>} : vector<34x34xf32>, vector<34x16xf32>, vector<34x16xf32> -> vector<34x16xf32>
    %296 = tpu.concatenate %244, %261, %278, %295 in 1 : vector<34x16xf32>, vector<34x16xf32>, vector<34x16xf32>, vector<34x16xf32> -> vector<34x64xf32>
    %cst_150 = arith.constant dense<0.000000e+00> : vector<34x64xf32>
    %297 = tpu.matmul %296, %188, %cst_150 {dimension_numbers = #tpu.dot_dimension_numbers<[1], [0], [0], [1], [0, 0, 1, 1], [], []>} : vector<34x64xf32>, vector<64x64xf32>, vector<34x64xf32> -> vector<34x64xf32>
    %298 = arith.addf %178, %297 : vector<34x64xf32>
    %299 = vector.broadcast %190 : vector<1x64xf32> to vector<34x64xf32>
    %300 = arith.addf %298, %299 : vector<34x64xf32>
    %cst_151 = arith.constant dense<0.000000e+00> : vector<34xf32>
    %301 = vector.multi_reduction <add>, %300, %cst_151 [1] : vector<34x64xf32> to vector<34xf32>
    %302 = vector.shape_cast %301 : vector<34xf32> to vector<34x1xf32>
    %cst_152 = arith.constant 6.400000e+01 : f32
    %303 = vector.broadcast %cst_152 : f32 to vector<34x1xf32>
    %304 = arith.divf %302, %303 : vector<34x1xf32>
    %305 = vector.broadcast %304 : vector<34x1xf32> to vector<34x64xf32>
    %306 = arith.subf %300, %305 : vector<34x64xf32>
    %307 = arith.mulf %306, %306 : vector<34x64xf32>
    %cst_153 = arith.constant dense<0.000000e+00> : vector<34xf32>
    %308 = vector.multi_reduction <add>, %307, %cst_153 [1] : vector<34x64xf32> to vector<34xf32>
    %309 = vector.shape_cast %308 : vector<34xf32> to vector<34x1xf32>
    %cst_154 = arith.constant 6.400000e+01 : f32
    %310 = vector.broadcast %cst_154 : f32 to vector<34x1xf32>
    %311 = arith.divf %309, %310 : vector<34x1xf32>
    %312 = vector.broadcast %304 : vector<34x1xf32> to vector<34x64xf32>
    %313 = arith.subf %300, %312 : vector<34x64xf32>
    %cst_155 = arith.constant 9.99999997E-7 : f32
    %314 = vector.broadcast %cst_155 : f32 to vector<34x1xf32>
    %315 = arith.addf %311, %314 : vector<34x1xf32>
    %316 = math.rsqrt %315 : vector<34x1xf32>
    %317 = vector.broadcast %316 : vector<34x1xf32> to vector<34x64xf32>
    %318 = arith.mulf %313, %317 : vector<34x64xf32>
    %319 = vector.broadcast %192 : vector<1x64xf32> to vector<34x64xf32>
    %320 = arith.mulf %318, %319 : vector<34x64xf32>
    %321 = vector.broadcast %194 : vector<1x64xf32> to vector<34x64xf32>
    %322 = arith.addf %320, %321 : vector<34x64xf32>
    %cst_156 = arith.constant dense<0.000000e+00> : vector<34x256xf32>
    %323 = tpu.matmul %322, %196, %cst_156 {dimension_numbers = #tpu.dot_dimension_numbers<[1], [0], [0], [1], [0, 0, 1, 1], [], []>} : vector<34x64xf32>, vector<64x256xf32>, vector<34x256xf32> -> vector<34x256xf32>
    %324 = vector.broadcast %198 : vector<1x256xf32> to vector<34x256xf32>
    %325 = arith.addf %323, %324 : vector<34x256xf32>
    %326 = arith.mulf %325, %325 : vector<34x256xf32>
    %327 = arith.mulf %325, %326 : vector<34x256xf32>
    %cst_157 = arith.constant 4.471500e-02 : f32
    %328 = vector.broadcast %cst_157 : f32 to vector<34x256xf32>
    %329 = arith.mulf %328, %327 : vector<34x256xf32>
    %330 = arith.addf %325, %329 : vector<34x256xf32>
    %cst_158 = arith.constant 0.797884583 : f32
    %331 = vector.broadcast %cst_158 : f32 to vector<34x256xf32>
    %332 = arith.mulf %331, %330 : vector<34x256xf32>
    %333 = math.tanh %332 : vector<34x256xf32>
    %cst_159 = arith.constant 1.000000e+00 : f32
    %334 = vector.broadcast %cst_159 : f32 to vector<34x256xf32>
    %335 = arith.addf %334, %333 : vector<34x256xf32>
    %cst_160 = arith.constant 5.000000e-01 : f32
    %336 = vector.broadcast %cst_160 : f32 to vector<34x256xf32>
    %337 = arith.mulf %336, %335 : vector<34x256xf32>
    %338 = arith.mulf %325, %337 : vector<34x256xf32>
    %cst_161 = arith.constant dense<0.000000e+00> : vector<34x64xf32>
    %339 = tpu.matmul %338, %200, %cst_161 {dimension_numbers = #tpu.dot_dimension_numbers<[1], [0], [0], [1], [0, 0, 1, 1], [], []>} : vector<34x256xf32>, vector<256x64xf32>, vector<34x64xf32> -> vector<34x64xf32>
    %340 = vector.broadcast %202 : vector<1x64xf32> to vector<34x64xf32>
    %341 = arith.addf %339, %340 : vector<34x64xf32>
    %342 = arith.addf %300, %341 : vector<34x64xf32>
    %c0_162 = arith.constant 0 : index
    %c0_163 = arith.constant 0 : index
    %343 = vector.load %arg20[%c0_162, %c0_163] : memref<1x64xf32, #tpu.memory_space<vmem>>, vector<1x64xf32>
    %c0_164 = arith.constant 0 : index
    %c0_165 = arith.constant 0 : index
    %344 = vector.load %arg21[%c0_164, %c0_165] : memref<1x64xf32, #tpu.memory_space<vmem>>, vector<1x64xf32>
    %c0_166 = arith.constant 0 : index
    %c0_167 = arith.constant 0 : index
    %345 = vector.load %arg22[%c0_166, %c0_167] : memref<64x192xf32, #tpu.memory_space<vmem>>, vector<64x192xf32>
    %c0_168 = arith.constant 0 : index
    %c0_169 = arith.constant 0 : index
    %346 = vector.load %arg23[%c0_168, %c0_169] : memref<1x192xf32, #tpu.memory_space<vmem>>, vector<1x192xf32>
    %c0_170 = arith.constant 0 : index
    %c0_171 = arith.constant 0 : index
    %347 = vector.load %arg24[%c0_170, %c0_171] : memref<64x64xf32, #tpu.memory_space<vmem>>, vector<64x64xf32>
    %c0_172 = arith.constant 0 : index
    %c0_173 = arith.constant 0 : index
    %348 = vector.load %arg25[%c0_172, %c0_173] : memref<1x64xf32, #tpu.memory_space<vmem>>, vector<1x64xf32>
    %c0_174 = arith.constant 0 : index
    %c0_175 = arith.constant 0 : index
    %349 = vector.load %arg26[%c0_174, %c0_175] : memref<1x64xf32, #tpu.memory_space<vmem>>, vector<1x64xf32>
    %c0_176 = arith.constant 0 : index
    %c0_177 = arith.constant 0 : index
    %350 = vector.load %arg27[%c0_176, %c0_177] : memref<1x64xf32, #tpu.memory_space<vmem>>, vector<1x64xf32>
    %c0_178 = arith.constant 0 : index
    %c0_179 = arith.constant 0 : index
    %351 = vector.load %arg28[%c0_178, %c0_179] : memref<64x256xf32, #tpu.memory_space<vmem>>, vector<64x256xf32>
    %c0_180 = arith.constant 0 : index
    %c0_181 = arith.constant 0 : index
    %352 = vector.load %arg29[%c0_180, %c0_181] : memref<1x256xf32, #tpu.memory_space<vmem>>, vector<1x256xf32>
    %c0_182 = arith.constant 0 : index
    %c0_183 = arith.constant 0 : index
    %353 = vector.load %arg30[%c0_182, %c0_183] : memref<256x64xf32, #tpu.memory_space<vmem>>, vector<256x64xf32>
    %c0_184 = arith.constant 0 : index
    %c0_185 = arith.constant 0 : index
    %354 = vector.load %arg31[%c0_184, %c0_185] : memref<1x64xf32, #tpu.memory_space<vmem>>, vector<1x64xf32>
    %cst_186 = arith.constant dense<0.000000e+00> : vector<34xf32>
    %355 = vector.multi_reduction <add>, %342, %cst_186 [1] : vector<34x64xf32> to vector<34xf32>
    %356 = vector.shape_cast %355 : vector<34xf32> to vector<34x1xf32>
    %cst_187 = arith.constant 6.400000e+01 : f32
    %357 = vector.broadcast %cst_187 : f32 to vector<34x1xf32>
    %358 = arith.divf %356, %357 : vector<34x1xf32>
    %359 = vector.broadcast %358 : vector<34x1xf32> to vector<34x64xf32>
    %360 = arith.subf %342, %359 : vector<34x64xf32>
    %361 = arith.mulf %360, %360 : vector<34x64xf32>
    %cst_188 = arith.constant dense<0.000000e+00> : vector<34xf32>
    %362 = vector.multi_reduction <add>, %361, %cst_188 [1] : vector<34x64xf32> to vector<34xf32>
    %363 = vector.shape_cast %362 : vector<34xf32> to vector<34x1xf32>
    %cst_189 = arith.constant 6.400000e+01 : f32
    %364 = vector.broadcast %cst_189 : f32 to vector<34x1xf32>
    %365 = arith.divf %363, %364 : vector<34x1xf32>
    %366 = vector.broadcast %358 : vector<34x1xf32> to vector<34x64xf32>
    %367 = arith.subf %342, %366 : vector<34x64xf32>
    %cst_190 = arith.constant 9.99999997E-7 : f32
    %368 = vector.broadcast %cst_190 : f32 to vector<34x1xf32>
    %369 = arith.addf %365, %368 : vector<34x1xf32>
    %370 = math.rsqrt %369 : vector<34x1xf32>
    %371 = vector.broadcast %370 : vector<34x1xf32> to vector<34x64xf32>
    %372 = arith.mulf %367, %371 : vector<34x64xf32>
    %373 = vector.broadcast %343 : vector<1x64xf32> to vector<34x64xf32>
    %374 = arith.mulf %372, %373 : vector<34x64xf32>
    %375 = vector.broadcast %344 : vector<1x64xf32> to vector<34x64xf32>
    %376 = arith.addf %374, %375 : vector<34x64xf32>
    %cst_191 = arith.constant dense<0.000000e+00> : vector<34x192xf32>
    %377 = tpu.matmul %376, %345, %cst_191 {dimension_numbers = #tpu.dot_dimension_numbers<[1], [0], [0], [1], [0, 0, 1, 1], [], []>} : vector<34x64xf32>, vector<64x192xf32>, vector<34x192xf32> -> vector<34x192xf32>
    %378 = vector.broadcast %346 : vector<1x192xf32> to vector<34x192xf32>
    %379 = arith.addf %377, %378 : vector<34x192xf32>
    %380 = vector.extract_strided_slice %379 {offsets = [0, 0], sizes = [34, 16], strides = [1, 1]} : vector<34x192xf32> to vector<34x16xf32>
    %cst_192 = arith.constant 2.500000e-01 : f32
    %381 = vector.broadcast %cst_192 : f32 to vector<34x16xf32>
    %382 = arith.mulf %380, %381 : vector<34x16xf32>
    %383 = vector.extract_strided_slice %379 {offsets = [0, 64], sizes = [34, 16], strides = [1, 1]} : vector<34x192xf32> to vector<34x16xf32>
    %384 = vector.extract_strided_slice %379 {offsets = [0, 128], sizes = [34, 16], strides = [1, 1]} : vector<34x192xf32> to vector<34x16xf32>
    %cst_193 = arith.constant dense<0.000000e+00> : vector<34x34xf32>
    %385 = tpu.matmul %382, %383, %cst_193 {dimension_numbers = #tpu.dot_dimension_numbers<[1], [1], [0], [0], [0, 0, 1, 0], [], []>} : vector<34x16xf32>, vector<34x16xf32>, vector<34x34xf32> -> vector<34x34xf32>
    %386 = arith.addf %385, %0 : vector<34x34xf32>
    %cst_194 = arith.constant dense<0xFF800000> : vector<34xf32>
    %387 = vector.multi_reduction <maximumf>, %386, %cst_194 [1] : vector<34x34xf32> to vector<34xf32>
    %388 = vector.shape_cast %387 : vector<34xf32> to vector<34x1xf32>
    %389 = vector.broadcast %388 : vector<34x1xf32> to vector<34x34xf32>
    %390 = arith.subf %386, %389 : vector<34x34xf32>
    %391 = math.exp %390 : vector<34x34xf32>
    %cst_195 = arith.constant dense<0.000000e+00> : vector<34xf32>
    %392 = vector.multi_reduction <add>, %391, %cst_195 [1] : vector<34x34xf32> to vector<34xf32>
    %393 = vector.shape_cast %392 : vector<34xf32> to vector<34x1xf32>
    %394 = vector.broadcast %393 : vector<34x1xf32> to vector<34x34xf32>
    %395 = arith.divf %391, %394 : vector<34x34xf32>
    %cst_196 = arith.constant dense<0.000000e+00> : vector<34x16xf32>
    %396 = tpu.matmul %395, %384, %cst_196 {dimension_numbers = #tpu.dot_dimension_numbers<[1], [0], [0], [1], [0, 0, 1, 1], [], []>} : vector<34x34xf32>, vector<34x16xf32>, vector<34x16xf32> -> vector<34x16xf32>
    %397 = vector.extract_strided_slice %379 {offsets = [0, 16], sizes = [34, 16], strides = [1, 1]} : vector<34x192xf32> to vector<34x16xf32>
    %cst_197 = arith.constant 2.500000e-01 : f32
    %398 = vector.broadcast %cst_197 : f32 to vector<34x16xf32>
    %399 = arith.mulf %397, %398 : vector<34x16xf32>
    %400 = vector.extract_strided_slice %379 {offsets = [0, 80], sizes = [34, 16], strides = [1, 1]} : vector<34x192xf32> to vector<34x16xf32>
    %401 = vector.extract_strided_slice %379 {offsets = [0, 144], sizes = [34, 16], strides = [1, 1]} : vector<34x192xf32> to vector<34x16xf32>
    %cst_198 = arith.constant dense<0.000000e+00> : vector<34x34xf32>
    %402 = tpu.matmul %399, %400, %cst_198 {dimension_numbers = #tpu.dot_dimension_numbers<[1], [1], [0], [0], [0, 0, 1, 0], [], []>} : vector<34x16xf32>, vector<34x16xf32>, vector<34x34xf32> -> vector<34x34xf32>
    %403 = arith.addf %402, %0 : vector<34x34xf32>
    %cst_199 = arith.constant dense<0xFF800000> : vector<34xf32>
    %404 = vector.multi_reduction <maximumf>, %403, %cst_199 [1] : vector<34x34xf32> to vector<34xf32>
    %405 = vector.shape_cast %404 : vector<34xf32> to vector<34x1xf32>
    %406 = vector.broadcast %405 : vector<34x1xf32> to vector<34x34xf32>
    %407 = arith.subf %403, %406 : vector<34x34xf32>
    %408 = math.exp %407 : vector<34x34xf32>
    %cst_200 = arith.constant dense<0.000000e+00> : vector<34xf32>
    %409 = vector.multi_reduction <add>, %408, %cst_200 [1] : vector<34x34xf32> to vector<34xf32>
    %410 = vector.shape_cast %409 : vector<34xf32> to vector<34x1xf32>
    %411 = vector.broadcast %410 : vector<34x1xf32> to vector<34x34xf32>
    %412 = arith.divf %408, %411 : vector<34x34xf32>
    %cst_201 = arith.constant dense<0.000000e+00> : vector<34x16xf32>
    %413 = tpu.matmul %412, %401, %cst_201 {dimension_numbers = #tpu.dot_dimension_numbers<[1], [0], [0], [1], [0, 0, 1, 1], [], []>} : vector<34x34xf32>, vector<34x16xf32>, vector<34x16xf32> -> vector<34x16xf32>
    %414 = vector.extract_strided_slice %379 {offsets = [0, 32], sizes = [34, 16], strides = [1, 1]} : vector<34x192xf32> to vector<34x16xf32>
    %cst_202 = arith.constant 2.500000e-01 : f32
    %415 = vector.broadcast %cst_202 : f32 to vector<34x16xf32>
    %416 = arith.mulf %414, %415 : vector<34x16xf32>
    %417 = vector.extract_strided_slice %379 {offsets = [0, 96], sizes = [34, 16], strides = [1, 1]} : vector<34x192xf32> to vector<34x16xf32>
    %418 = vector.extract_strided_slice %379 {offsets = [0, 160], sizes = [34, 16], strides = [1, 1]} : vector<34x192xf32> to vector<34x16xf32>
    %cst_203 = arith.constant dense<0.000000e+00> : vector<34x34xf32>
    %419 = tpu.matmul %416, %417, %cst_203 {dimension_numbers = #tpu.dot_dimension_numbers<[1], [1], [0], [0], [0, 0, 1, 0], [], []>} : vector<34x16xf32>, vector<34x16xf32>, vector<34x34xf32> -> vector<34x34xf32>
    %420 = arith.addf %419, %0 : vector<34x34xf32>
    %cst_204 = arith.constant dense<0xFF800000> : vector<34xf32>
    %421 = vector.multi_reduction <maximumf>, %420, %cst_204 [1] : vector<34x34xf32> to vector<34xf32>
    %422 = vector.shape_cast %421 : vector<34xf32> to vector<34x1xf32>
    %423 = vector.broadcast %422 : vector<34x1xf32> to vector<34x34xf32>
    %424 = arith.subf %420, %423 : vector<34x34xf32>
    %425 = math.exp %424 : vector<34x34xf32>
    %cst_205 = arith.constant dense<0.000000e+00> : vector<34xf32>
    %426 = vector.multi_reduction <add>, %425, %cst_205 [1] : vector<34x34xf32> to vector<34xf32>
    %427 = vector.shape_cast %426 : vector<34xf32> to vector<34x1xf32>
    %428 = vector.broadcast %427 : vector<34x1xf32> to vector<34x34xf32>
    %429 = arith.divf %425, %428 : vector<34x34xf32>
    %cst_206 = arith.constant dense<0.000000e+00> : vector<34x16xf32>
    %430 = tpu.matmul %429, %418, %cst_206 {dimension_numbers = #tpu.dot_dimension_numbers<[1], [0], [0], [1], [0, 0, 1, 1], [], []>} : vector<34x34xf32>, vector<34x16xf32>, vector<34x16xf32> -> vector<34x16xf32>
    %431 = vector.extract_strided_slice %379 {offsets = [0, 48], sizes = [34, 16], strides = [1, 1]} : vector<34x192xf32> to vector<34x16xf32>
    %cst_207 = arith.constant 2.500000e-01 : f32
    %432 = vector.broadcast %cst_207 : f32 to vector<34x16xf32>
    %433 = arith.mulf %431, %432 : vector<34x16xf32>
    %434 = vector.extract_strided_slice %379 {offsets = [0, 112], sizes = [34, 16], strides = [1, 1]} : vector<34x192xf32> to vector<34x16xf32>
    %435 = vector.extract_strided_slice %379 {offsets = [0, 176], sizes = [34, 16], strides = [1, 1]} : vector<34x192xf32> to vector<34x16xf32>
    %cst_208 = arith.constant dense<0.000000e+00> : vector<34x34xf32>
    %436 = tpu.matmul %433, %434, %cst_208 {dimension_numbers = #tpu.dot_dimension_numbers<[1], [1], [0], [0], [0, 0, 1, 0], [], []>} : vector<34x16xf32>, vector<34x16xf32>, vector<34x34xf32> -> vector<34x34xf32>
    %437 = arith.addf %436, %0 : vector<34x34xf32>
    %cst_209 = arith.constant dense<0xFF800000> : vector<34xf32>
    %438 = vector.multi_reduction <maximumf>, %437, %cst_209 [1] : vector<34x34xf32> to vector<34xf32>
    %439 = vector.shape_cast %438 : vector<34xf32> to vector<34x1xf32>
    %440 = vector.broadcast %439 : vector<34x1xf32> to vector<34x34xf32>
    %441 = arith.subf %437, %440 : vector<34x34xf32>
    %442 = math.exp %441 : vector<34x34xf32>
    %cst_210 = arith.constant dense<0.000000e+00> : vector<34xf32>
    %443 = vector.multi_reduction <add>, %442, %cst_210 [1] : vector<34x34xf32> to vector<34xf32>
    %444 = vector.shape_cast %443 : vector<34xf32> to vector<34x1xf32>
    %445 = vector.broadcast %444 : vector<34x1xf32> to vector<34x34xf32>
    %446 = arith.divf %442, %445 : vector<34x34xf32>
    %cst_211 = arith.constant dense<0.000000e+00> : vector<34x16xf32>
    %447 = tpu.matmul %446, %435, %cst_211 {dimension_numbers = #tpu.dot_dimension_numbers<[1], [0], [0], [1], [0, 0, 1, 1], [], []>} : vector<34x34xf32>, vector<34x16xf32>, vector<34x16xf32> -> vector<34x16xf32>
    %448 = tpu.concatenate %396, %413, %430, %447 in 1 : vector<34x16xf32>, vector<34x16xf32>, vector<34x16xf32>, vector<34x16xf32> -> vector<34x64xf32>
    %cst_212 = arith.constant dense<0.000000e+00> : vector<34x64xf32>
    %449 = tpu.matmul %448, %347, %cst_212 {dimension_numbers = #tpu.dot_dimension_numbers<[1], [0], [0], [1], [0, 0, 1, 1], [], []>} : vector<34x64xf32>, vector<64x64xf32>, vector<34x64xf32> -> vector<34x64xf32>
    %450 = arith.addf %342, %449 : vector<34x64xf32>
    %451 = vector.broadcast %348 : vector<1x64xf32> to vector<34x64xf32>
    %452 = arith.addf %450, %451 : vector<34x64xf32>
    %cst_213 = arith.constant dense<0.000000e+00> : vector<34xf32>
    %453 = vector.multi_reduction <add>, %452, %cst_213 [1] : vector<34x64xf32> to vector<34xf32>
    %454 = vector.shape_cast %453 : vector<34xf32> to vector<34x1xf32>
    %cst_214 = arith.constant 6.400000e+01 : f32
    %455 = vector.broadcast %cst_214 : f32 to vector<34x1xf32>
    %456 = arith.divf %454, %455 : vector<34x1xf32>
    %457 = vector.broadcast %456 : vector<34x1xf32> to vector<34x64xf32>
    %458 = arith.subf %452, %457 : vector<34x64xf32>
    %459 = arith.mulf %458, %458 : vector<34x64xf32>
    %cst_215 = arith.constant dense<0.000000e+00> : vector<34xf32>
    %460 = vector.multi_reduction <add>, %459, %cst_215 [1] : vector<34x64xf32> to vector<34xf32>
    %461 = vector.shape_cast %460 : vector<34xf32> to vector<34x1xf32>
    %cst_216 = arith.constant 6.400000e+01 : f32
    %462 = vector.broadcast %cst_216 : f32 to vector<34x1xf32>
    %463 = arith.divf %461, %462 : vector<34x1xf32>
    %464 = vector.broadcast %456 : vector<34x1xf32> to vector<34x64xf32>
    %465 = arith.subf %452, %464 : vector<34x64xf32>
    %cst_217 = arith.constant 9.99999997E-7 : f32
    %466 = vector.broadcast %cst_217 : f32 to vector<34x1xf32>
    %467 = arith.addf %463, %466 : vector<34x1xf32>
    %468 = math.rsqrt %467 : vector<34x1xf32>
    %469 = vector.broadcast %468 : vector<34x1xf32> to vector<34x64xf32>
    %470 = arith.mulf %465, %469 : vector<34x64xf32>
    %471 = vector.broadcast %349 : vector<1x64xf32> to vector<34x64xf32>
    %472 = arith.mulf %470, %471 : vector<34x64xf32>
    %473 = vector.broadcast %350 : vector<1x64xf32> to vector<34x64xf32>
    %474 = arith.addf %472, %473 : vector<34x64xf32>
    %cst_218 = arith.constant dense<0.000000e+00> : vector<34x256xf32>
    %475 = tpu.matmul %474, %351, %cst_218 {dimension_numbers = #tpu.dot_dimension_numbers<[1], [0], [0], [1], [0, 0, 1, 1], [], []>} : vector<34x64xf32>, vector<64x256xf32>, vector<34x256xf32> -> vector<34x256xf32>
    %476 = vector.broadcast %352 : vector<1x256xf32> to vector<34x256xf32>
    %477 = arith.addf %475, %476 : vector<34x256xf32>
    %478 = arith.mulf %477, %477 : vector<34x256xf32>
    %479 = arith.mulf %477, %478 : vector<34x256xf32>
    %cst_219 = arith.constant 4.471500e-02 : f32
    %480 = vector.broadcast %cst_219 : f32 to vector<34x256xf32>
    %481 = arith.mulf %480, %479 : vector<34x256xf32>
    %482 = arith.addf %477, %481 : vector<34x256xf32>
    %cst_220 = arith.constant 0.797884583 : f32
    %483 = vector.broadcast %cst_220 : f32 to vector<34x256xf32>
    %484 = arith.mulf %483, %482 : vector<34x256xf32>
    %485 = math.tanh %484 : vector<34x256xf32>
    %cst_221 = arith.constant 1.000000e+00 : f32
    %486 = vector.broadcast %cst_221 : f32 to vector<34x256xf32>
    %487 = arith.addf %486, %485 : vector<34x256xf32>
    %cst_222 = arith.constant 5.000000e-01 : f32
    %488 = vector.broadcast %cst_222 : f32 to vector<34x256xf32>
    %489 = arith.mulf %488, %487 : vector<34x256xf32>
    %490 = arith.mulf %477, %489 : vector<34x256xf32>
    %cst_223 = arith.constant dense<0.000000e+00> : vector<34x64xf32>
    %491 = tpu.matmul %490, %353, %cst_223 {dimension_numbers = #tpu.dot_dimension_numbers<[1], [0], [0], [1], [0, 0, 1, 1], [], []>} : vector<34x256xf32>, vector<256x64xf32>, vector<34x64xf32> -> vector<34x64xf32>
    %492 = vector.broadcast %354 : vector<1x64xf32> to vector<34x64xf32>
    %493 = arith.addf %491, %492 : vector<34x64xf32>
    %494 = arith.addf %452, %493 : vector<34x64xf32>
    %495 = vector.extract_strided_slice %494 {offsets = [0, 0], sizes = [1, 64], strides = [1, 1]} : vector<34x64xf32> to vector<1x64xf32>
    %496 = vector.extract_strided_slice %494 {offsets = [17, 0], sizes = [1, 64], strides = [1, 1]} : vector<34x64xf32> to vector<1x64xf32>
    %497 = tpu.concatenate %495, %496 in 0 : vector<1x64xf32>, vector<1x64xf32> -> vector<2x64xf32>
    %c0_224 = arith.constant 0 : index
    %c0_225 = arith.constant 0 : index
    %498 = vector.load %arg32[%c0_224, %c0_225] : memref<1x64xf32, #tpu.memory_space<vmem>>, vector<1x64xf32>
    %c0_226 = arith.constant 0 : index
    %c0_227 = arith.constant 0 : index
    %499 = vector.load %arg33[%c0_226, %c0_227] : memref<1x64xf32, #tpu.memory_space<vmem>>, vector<1x64xf32>
    %cst_228 = arith.constant dense<0.000000e+00> : vector<2xf32>
    %500 = vector.multi_reduction <add>, %497, %cst_228 [1] : vector<2x64xf32> to vector<2xf32>
    %501 = vector.shape_cast %500 : vector<2xf32> to vector<2x1xf32>
    %cst_229 = arith.constant 6.400000e+01 : f32
    %502 = vector.broadcast %cst_229 : f32 to vector<2x1xf32>
    %503 = arith.divf %501, %502 : vector<2x1xf32>
    %504 = vector.broadcast %503 : vector<2x1xf32> to vector<2x64xf32>
    %505 = arith.subf %497, %504 : vector<2x64xf32>
    %506 = arith.mulf %505, %505 : vector<2x64xf32>
    %cst_230 = arith.constant dense<0.000000e+00> : vector<2xf32>
    %507 = vector.multi_reduction <add>, %506, %cst_230 [1] : vector<2x64xf32> to vector<2xf32>
    %508 = vector.shape_cast %507 : vector<2xf32> to vector<2x1xf32>
    %cst_231 = arith.constant 6.400000e+01 : f32
    %509 = vector.broadcast %cst_231 : f32 to vector<2x1xf32>
    %510 = arith.divf %508, %509 : vector<2x1xf32>
    %511 = vector.broadcast %503 : vector<2x1xf32> to vector<2x64xf32>
    %512 = arith.subf %497, %511 : vector<2x64xf32>
    %cst_232 = arith.constant 9.99999997E-7 : f32
    %513 = vector.broadcast %cst_232 : f32 to vector<2x1xf32>
    %514 = arith.addf %510, %513 : vector<2x1xf32>
    %515 = math.rsqrt %514 : vector<2x1xf32>
    %516 = vector.broadcast %515 : vector<2x1xf32> to vector<2x64xf32>
    %517 = arith.mulf %512, %516 : vector<2x64xf32>
    %518 = vector.broadcast %498 : vector<1x64xf32> to vector<2x64xf32>
    %519 = arith.mulf %517, %518 : vector<2x64xf32>
    %520 = vector.broadcast %499 : vector<1x64xf32> to vector<2x64xf32>
    %521 = arith.addf %519, %520 : vector<2x64xf32>
    %c0_233 = arith.constant 0 : index
    %c0_234 = arith.constant 0 : index
    %522 = vector.load %arg5[%c0_233, %c0_234] : memref<40x34xf32, #tpu.memory_space<vmem>>, vector<40x34xf32>
    %cst_235 = arith.constant dense<0.000000e+00> : vector<40x64xf32>
    %523 = tpu.matmul %522, %342, %cst_235 {dimension_numbers = #tpu.dot_dimension_numbers<[1], [0], [0], [1], [0, 0, 1, 1], [], []>} : vector<40x34xf32>, vector<34x64xf32>, vector<40x64xf32> -> vector<40x64xf32>
    %c0_236 = arith.constant 0 : index
    %c0_237 = arith.constant 0 : index
    %524 = vector.load %arg34[%c0_236, %c0_237] : memref<1x64xf32, #tpu.memory_space<vmem>>, vector<1x64xf32>
    %c0_238 = arith.constant 0 : index
    %c0_239 = arith.constant 0 : index
    %525 = vector.load %arg35[%c0_238, %c0_239] : memref<1x64xf32, #tpu.memory_space<vmem>>, vector<1x64xf32>
    %c0_240 = arith.constant 0 : index
    %c0_241 = arith.constant 0 : index
    %526 = vector.load %arg36[%c0_240, %c0_241] : memref<64x192xf32, #tpu.memory_space<vmem>>, vector<64x192xf32>
    %c0_242 = arith.constant 0 : index
    %c0_243 = arith.constant 0 : index
    %527 = vector.load %arg37[%c0_242, %c0_243] : memref<1x192xf32, #tpu.memory_space<vmem>>, vector<1x192xf32>
    %c0_244 = arith.constant 0 : index
    %c0_245 = arith.constant 0 : index
    %528 = vector.load %arg38[%c0_244, %c0_245] : memref<64x64xf32, #tpu.memory_space<vmem>>, vector<64x64xf32>
    %c0_246 = arith.constant 0 : index
    %c0_247 = arith.constant 0 : index
    %529 = vector.load %arg39[%c0_246, %c0_247] : memref<1x64xf32, #tpu.memory_space<vmem>>, vector<1x64xf32>
    %c0_248 = arith.constant 0 : index
    %c0_249 = arith.constant 0 : index
    %530 = vector.load %arg40[%c0_248, %c0_249] : memref<1x64xf32, #tpu.memory_space<vmem>>, vector<1x64xf32>
    %c0_250 = arith.constant 0 : index
    %c0_251 = arith.constant 0 : index
    %531 = vector.load %arg41[%c0_250, %c0_251] : memref<1x64xf32, #tpu.memory_space<vmem>>, vector<1x64xf32>
    %c0_252 = arith.constant 0 : index
    %c0_253 = arith.constant 0 : index
    %532 = vector.load %arg42[%c0_252, %c0_253] : memref<64x256xf32, #tpu.memory_space<vmem>>, vector<64x256xf32>
    %c0_254 = arith.constant 0 : index
    %c0_255 = arith.constant 0 : index
    %533 = vector.load %arg43[%c0_254, %c0_255] : memref<1x256xf32, #tpu.memory_space<vmem>>, vector<1x256xf32>
    %c0_256 = arith.constant 0 : index
    %c0_257 = arith.constant 0 : index
    %534 = vector.load %arg44[%c0_256, %c0_257] : memref<256x64xf32, #tpu.memory_space<vmem>>, vector<256x64xf32>
    %c0_258 = arith.constant 0 : index
    %c0_259 = arith.constant 0 : index
    %535 = vector.load %arg45[%c0_258, %c0_259] : memref<1x64xf32, #tpu.memory_space<vmem>>, vector<1x64xf32>
    %cst_260 = arith.constant dense<0.000000e+00> : vector<40xf32>
    %536 = vector.multi_reduction <add>, %523, %cst_260 [1] : vector<40x64xf32> to vector<40xf32>
    %537 = vector.shape_cast %536 : vector<40xf32> to vector<40x1xf32>
    %cst_261 = arith.constant 6.400000e+01 : f32
    %538 = vector.broadcast %cst_261 : f32 to vector<40x1xf32>
    %539 = arith.divf %537, %538 : vector<40x1xf32>
    %540 = vector.broadcast %539 : vector<40x1xf32> to vector<40x64xf32>
    %541 = arith.subf %523, %540 : vector<40x64xf32>
    %542 = arith.mulf %541, %541 : vector<40x64xf32>
    %cst_262 = arith.constant dense<0.000000e+00> : vector<40xf32>
    %543 = vector.multi_reduction <add>, %542, %cst_262 [1] : vector<40x64xf32> to vector<40xf32>
    %544 = vector.shape_cast %543 : vector<40xf32> to vector<40x1xf32>
    %cst_263 = arith.constant 6.400000e+01 : f32
    %545 = vector.broadcast %cst_263 : f32 to vector<40x1xf32>
    %546 = arith.divf %544, %545 : vector<40x1xf32>
    %547 = vector.broadcast %539 : vector<40x1xf32> to vector<40x64xf32>
    %548 = arith.subf %523, %547 : vector<40x64xf32>
    %cst_264 = arith.constant 9.99999997E-7 : f32
    %549 = vector.broadcast %cst_264 : f32 to vector<40x1xf32>
    %550 = arith.addf %546, %549 : vector<40x1xf32>
    %551 = math.rsqrt %550 : vector<40x1xf32>
    %552 = vector.broadcast %551 : vector<40x1xf32> to vector<40x64xf32>
    %553 = arith.mulf %548, %552 : vector<40x64xf32>
    %554 = vector.broadcast %524 : vector<1x64xf32> to vector<40x64xf32>
    %555 = arith.mulf %553, %554 : vector<40x64xf32>
    %556 = vector.broadcast %525 : vector<1x64xf32> to vector<40x64xf32>
    %557 = arith.addf %555, %556 : vector<40x64xf32>
    %cst_265 = arith.constant dense<0.000000e+00> : vector<40x192xf32>
    %558 = tpu.matmul %557, %526, %cst_265 {dimension_numbers = #tpu.dot_dimension_numbers<[1], [0], [0], [1], [0, 0, 1, 1], [], []>} : vector<40x64xf32>, vector<64x192xf32>, vector<40x192xf32> -> vector<40x192xf32>
    %559 = vector.broadcast %527 : vector<1x192xf32> to vector<40x192xf32>
    %560 = arith.addf %558, %559 : vector<40x192xf32>
    %561 = vector.extract_strided_slice %560 {offsets = [0, 0], sizes = [40, 16], strides = [1, 1]} : vector<40x192xf32> to vector<40x16xf32>
    %cst_266 = arith.constant 2.500000e-01 : f32
    %562 = vector.broadcast %cst_266 : f32 to vector<40x16xf32>
    %563 = arith.mulf %561, %562 : vector<40x16xf32>
    %564 = vector.extract_strided_slice %560 {offsets = [0, 64], sizes = [40, 16], strides = [1, 1]} : vector<40x192xf32> to vector<40x16xf32>
    %565 = vector.extract_strided_slice %560 {offsets = [0, 128], sizes = [40, 16], strides = [1, 1]} : vector<40x192xf32> to vector<40x16xf32>
    %cst_267 = arith.constant dense<0.000000e+00> : vector<40x40xf32>
    %566 = tpu.matmul %563, %564, %cst_267 {dimension_numbers = #tpu.dot_dimension_numbers<[1], [1], [0], [0], [0, 0, 1, 0], [], []>} : vector<40x16xf32>, vector<40x16xf32>, vector<40x40xf32> -> vector<40x40xf32>
    %567 = arith.addf %566, %1 : vector<40x40xf32>
    %cst_268 = arith.constant dense<0xFF800000> : vector<40xf32>
    %568 = vector.multi_reduction <maximumf>, %567, %cst_268 [1] : vector<40x40xf32> to vector<40xf32>
    %569 = vector.shape_cast %568 : vector<40xf32> to vector<40x1xf32>
    %570 = vector.broadcast %569 : vector<40x1xf32> to vector<40x40xf32>
    %571 = arith.subf %567, %570 : vector<40x40xf32>
    %572 = math.exp %571 : vector<40x40xf32>
    %cst_269 = arith.constant dense<0.000000e+00> : vector<40xf32>
    %573 = vector.multi_reduction <add>, %572, %cst_269 [1] : vector<40x40xf32> to vector<40xf32>
    %574 = vector.shape_cast %573 : vector<40xf32> to vector<40x1xf32>
    %575 = vector.broadcast %574 : vector<40x1xf32> to vector<40x40xf32>
    %576 = arith.divf %572, %575 : vector<40x40xf32>
    %cst_270 = arith.constant dense<0.000000e+00> : vector<40x16xf32>
    %577 = tpu.matmul %576, %565, %cst_270 {dimension_numbers = #tpu.dot_dimension_numbers<[1], [0], [0], [1], [0, 0, 1, 1], [], []>} : vector<40x40xf32>, vector<40x16xf32>, vector<40x16xf32> -> vector<40x16xf32>
    %578 = vector.extract_strided_slice %560 {offsets = [0, 16], sizes = [40, 16], strides = [1, 1]} : vector<40x192xf32> to vector<40x16xf32>
    %cst_271 = arith.constant 2.500000e-01 : f32
    %579 = vector.broadcast %cst_271 : f32 to vector<40x16xf32>
    %580 = arith.mulf %578, %579 : vector<40x16xf32>
    %581 = vector.extract_strided_slice %560 {offsets = [0, 80], sizes = [40, 16], strides = [1, 1]} : vector<40x192xf32> to vector<40x16xf32>
    %582 = vector.extract_strided_slice %560 {offsets = [0, 144], sizes = [40, 16], strides = [1, 1]} : vector<40x192xf32> to vector<40x16xf32>
    %cst_272 = arith.constant dense<0.000000e+00> : vector<40x40xf32>
    %583 = tpu.matmul %580, %581, %cst_272 {dimension_numbers = #tpu.dot_dimension_numbers<[1], [1], [0], [0], [0, 0, 1, 0], [], []>} : vector<40x16xf32>, vector<40x16xf32>, vector<40x40xf32> -> vector<40x40xf32>
    %584 = arith.addf %583, %1 : vector<40x40xf32>
    %cst_273 = arith.constant dense<0xFF800000> : vector<40xf32>
    %585 = vector.multi_reduction <maximumf>, %584, %cst_273 [1] : vector<40x40xf32> to vector<40xf32>
    %586 = vector.shape_cast %585 : vector<40xf32> to vector<40x1xf32>
    %587 = vector.broadcast %586 : vector<40x1xf32> to vector<40x40xf32>
    %588 = arith.subf %584, %587 : vector<40x40xf32>
    %589 = math.exp %588 : vector<40x40xf32>
    %cst_274 = arith.constant dense<0.000000e+00> : vector<40xf32>
    %590 = vector.multi_reduction <add>, %589, %cst_274 [1] : vector<40x40xf32> to vector<40xf32>
    %591 = vector.shape_cast %590 : vector<40xf32> to vector<40x1xf32>
    %592 = vector.broadcast %591 : vector<40x1xf32> to vector<40x40xf32>
    %593 = arith.divf %589, %592 : vector<40x40xf32>
    %cst_275 = arith.constant dense<0.000000e+00> : vector<40x16xf32>
    %594 = tpu.matmul %593, %582, %cst_275 {dimension_numbers = #tpu.dot_dimension_numbers<[1], [0], [0], [1], [0, 0, 1, 1], [], []>} : vector<40x40xf32>, vector<40x16xf32>, vector<40x16xf32> -> vector<40x16xf32>
    %595 = vector.extract_strided_slice %560 {offsets = [0, 32], sizes = [40, 16], strides = [1, 1]} : vector<40x192xf32> to vector<40x16xf32>
    %cst_276 = arith.constant 2.500000e-01 : f32
    %596 = vector.broadcast %cst_276 : f32 to vector<40x16xf32>
    %597 = arith.mulf %595, %596 : vector<40x16xf32>
    %598 = vector.extract_strided_slice %560 {offsets = [0, 96], sizes = [40, 16], strides = [1, 1]} : vector<40x192xf32> to vector<40x16xf32>
    %599 = vector.extract_strided_slice %560 {offsets = [0, 160], sizes = [40, 16], strides = [1, 1]} : vector<40x192xf32> to vector<40x16xf32>
    %cst_277 = arith.constant dense<0.000000e+00> : vector<40x40xf32>
    %600 = tpu.matmul %597, %598, %cst_277 {dimension_numbers = #tpu.dot_dimension_numbers<[1], [1], [0], [0], [0, 0, 1, 0], [], []>} : vector<40x16xf32>, vector<40x16xf32>, vector<40x40xf32> -> vector<40x40xf32>
    %601 = arith.addf %600, %1 : vector<40x40xf32>
    %cst_278 = arith.constant dense<0xFF800000> : vector<40xf32>
    %602 = vector.multi_reduction <maximumf>, %601, %cst_278 [1] : vector<40x40xf32> to vector<40xf32>
    %603 = vector.shape_cast %602 : vector<40xf32> to vector<40x1xf32>
    %604 = vector.broadcast %603 : vector<40x1xf32> to vector<40x40xf32>
    %605 = arith.subf %601, %604 : vector<40x40xf32>
    %606 = math.exp %605 : vector<40x40xf32>
    %cst_279 = arith.constant dense<0.000000e+00> : vector<40xf32>
    %607 = vector.multi_reduction <add>, %606, %cst_279 [1] : vector<40x40xf32> to vector<40xf32>
    %608 = vector.shape_cast %607 : vector<40xf32> to vector<40x1xf32>
    %609 = vector.broadcast %608 : vector<40x1xf32> to vector<40x40xf32>
    %610 = arith.divf %606, %609 : vector<40x40xf32>
    %cst_280 = arith.constant dense<0.000000e+00> : vector<40x16xf32>
    %611 = tpu.matmul %610, %599, %cst_280 {dimension_numbers = #tpu.dot_dimension_numbers<[1], [0], [0], [1], [0, 0, 1, 1], [], []>} : vector<40x40xf32>, vector<40x16xf32>, vector<40x16xf32> -> vector<40x16xf32>
    %612 = vector.extract_strided_slice %560 {offsets = [0, 48], sizes = [40, 16], strides = [1, 1]} : vector<40x192xf32> to vector<40x16xf32>
    %cst_281 = arith.constant 2.500000e-01 : f32
    %613 = vector.broadcast %cst_281 : f32 to vector<40x16xf32>
    %614 = arith.mulf %612, %613 : vector<40x16xf32>
    %615 = vector.extract_strided_slice %560 {offsets = [0, 112], sizes = [40, 16], strides = [1, 1]} : vector<40x192xf32> to vector<40x16xf32>
    %616 = vector.extract_strided_slice %560 {offsets = [0, 176], sizes = [40, 16], strides = [1, 1]} : vector<40x192xf32> to vector<40x16xf32>
    %cst_282 = arith.constant dense<0.000000e+00> : vector<40x40xf32>
    %617 = tpu.matmul %614, %615, %cst_282 {dimension_numbers = #tpu.dot_dimension_numbers<[1], [1], [0], [0], [0, 0, 1, 0], [], []>} : vector<40x16xf32>, vector<40x16xf32>, vector<40x40xf32> -> vector<40x40xf32>
    %618 = arith.addf %617, %1 : vector<40x40xf32>
    %cst_283 = arith.constant dense<0xFF800000> : vector<40xf32>
    %619 = vector.multi_reduction <maximumf>, %618, %cst_283 [1] : vector<40x40xf32> to vector<40xf32>
    %620 = vector.shape_cast %619 : vector<40xf32> to vector<40x1xf32>
    %621 = vector.broadcast %620 : vector<40x1xf32> to vector<40x40xf32>
    %622 = arith.subf %618, %621 : vector<40x40xf32>
    %623 = math.exp %622 : vector<40x40xf32>
    %cst_284 = arith.constant dense<0.000000e+00> : vector<40xf32>
    %624 = vector.multi_reduction <add>, %623, %cst_284 [1] : vector<40x40xf32> to vector<40xf32>
    %625 = vector.shape_cast %624 : vector<40xf32> to vector<40x1xf32>
    %626 = vector.broadcast %625 : vector<40x1xf32> to vector<40x40xf32>
    %627 = arith.divf %623, %626 : vector<40x40xf32>
    %cst_285 = arith.constant dense<0.000000e+00> : vector<40x16xf32>
    %628 = tpu.matmul %627, %616, %cst_285 {dimension_numbers = #tpu.dot_dimension_numbers<[1], [0], [0], [1], [0, 0, 1, 1], [], []>} : vector<40x40xf32>, vector<40x16xf32>, vector<40x16xf32> -> vector<40x16xf32>
    %629 = tpu.concatenate %577, %594, %611, %628 in 1 : vector<40x16xf32>, vector<40x16xf32>, vector<40x16xf32>, vector<40x16xf32> -> vector<40x64xf32>
    %cst_286 = arith.constant dense<0.000000e+00> : vector<40x64xf32>
    %630 = tpu.matmul %629, %528, %cst_286 {dimension_numbers = #tpu.dot_dimension_numbers<[1], [0], [0], [1], [0, 0, 1, 1], [], []>} : vector<40x64xf32>, vector<64x64xf32>, vector<40x64xf32> -> vector<40x64xf32>
    %631 = arith.addf %523, %630 : vector<40x64xf32>
    %632 = vector.broadcast %529 : vector<1x64xf32> to vector<40x64xf32>
    %633 = arith.addf %631, %632 : vector<40x64xf32>
    %cst_287 = arith.constant dense<0.000000e+00> : vector<40xf32>
    %634 = vector.multi_reduction <add>, %633, %cst_287 [1] : vector<40x64xf32> to vector<40xf32>
    %635 = vector.shape_cast %634 : vector<40xf32> to vector<40x1xf32>
    %cst_288 = arith.constant 6.400000e+01 : f32
    %636 = vector.broadcast %cst_288 : f32 to vector<40x1xf32>
    %637 = arith.divf %635, %636 : vector<40x1xf32>
    %638 = vector.broadcast %637 : vector<40x1xf32> to vector<40x64xf32>
    %639 = arith.subf %633, %638 : vector<40x64xf32>
    %640 = arith.mulf %639, %639 : vector<40x64xf32>
    %cst_289 = arith.constant dense<0.000000e+00> : vector<40xf32>
    %641 = vector.multi_reduction <add>, %640, %cst_289 [1] : vector<40x64xf32> to vector<40xf32>
    %642 = vector.shape_cast %641 : vector<40xf32> to vector<40x1xf32>
    %cst_290 = arith.constant 6.400000e+01 : f32
    %643 = vector.broadcast %cst_290 : f32 to vector<40x1xf32>
    %644 = arith.divf %642, %643 : vector<40x1xf32>
    %645 = vector.broadcast %637 : vector<40x1xf32> to vector<40x64xf32>
    %646 = arith.subf %633, %645 : vector<40x64xf32>
    %cst_291 = arith.constant 9.99999997E-7 : f32
    %647 = vector.broadcast %cst_291 : f32 to vector<40x1xf32>
    %648 = arith.addf %644, %647 : vector<40x1xf32>
    %649 = math.rsqrt %648 : vector<40x1xf32>
    %650 = vector.broadcast %649 : vector<40x1xf32> to vector<40x64xf32>
    %651 = arith.mulf %646, %650 : vector<40x64xf32>
    %652 = vector.broadcast %530 : vector<1x64xf32> to vector<40x64xf32>
    %653 = arith.mulf %651, %652 : vector<40x64xf32>
    %654 = vector.broadcast %531 : vector<1x64xf32> to vector<40x64xf32>
    %655 = arith.addf %653, %654 : vector<40x64xf32>
    %cst_292 = arith.constant dense<0.000000e+00> : vector<40x256xf32>
    %656 = tpu.matmul %655, %532, %cst_292 {dimension_numbers = #tpu.dot_dimension_numbers<[1], [0], [0], [1], [0, 0, 1, 1], [], []>} : vector<40x64xf32>, vector<64x256xf32>, vector<40x256xf32> -> vector<40x256xf32>
    %657 = vector.broadcast %533 : vector<1x256xf32> to vector<40x256xf32>
    %658 = arith.addf %656, %657 : vector<40x256xf32>
    %659 = arith.mulf %658, %658 : vector<40x256xf32>
    %660 = arith.mulf %658, %659 : vector<40x256xf32>
    %cst_293 = arith.constant 4.471500e-02 : f32
    %661 = vector.broadcast %cst_293 : f32 to vector<40x256xf32>
    %662 = arith.mulf %661, %660 : vector<40x256xf32>
    %663 = arith.addf %658, %662 : vector<40x256xf32>
    %cst_294 = arith.constant 0.797884583 : f32
    %664 = vector.broadcast %cst_294 : f32 to vector<40x256xf32>
    %665 = arith.mulf %664, %663 : vector<40x256xf32>
    %666 = math.tanh %665 : vector<40x256xf32>
    %cst_295 = arith.constant 1.000000e+00 : f32
    %667 = vector.broadcast %cst_295 : f32 to vector<40x256xf32>
    %668 = arith.addf %667, %666 : vector<40x256xf32>
    %cst_296 = arith.constant 5.000000e-01 : f32
    %669 = vector.broadcast %cst_296 : f32 to vector<40x256xf32>
    %670 = arith.mulf %669, %668 : vector<40x256xf32>
    %671 = arith.mulf %658, %670 : vector<40x256xf32>
    %cst_297 = arith.constant dense<0.000000e+00> : vector<40x64xf32>
    %672 = tpu.matmul %671, %534, %cst_297 {dimension_numbers = #tpu.dot_dimension_numbers<[1], [0], [0], [1], [0, 0, 1, 1], [], []>} : vector<40x256xf32>, vector<256x64xf32>, vector<40x64xf32> -> vector<40x64xf32>
    %673 = vector.broadcast %535 : vector<1x64xf32> to vector<40x64xf32>
    %674 = arith.addf %672, %673 : vector<40x64xf32>
    %675 = arith.addf %633, %674 : vector<40x64xf32>
    %676 = vector.extract_strided_slice %675 {offsets = [0, 0], sizes = [8, 64], strides = [1, 1]} : vector<40x64xf32> to vector<8x64xf32>
    %c0_298 = arith.constant 0 : index
    %c0_299 = arith.constant 0 : index
    %677 = vector.load %arg46[%c0_298, %c0_299] : memref<1x64xf32, #tpu.memory_space<vmem>>, vector<1x64xf32>
    %c0_300 = arith.constant 0 : index
    %c0_301 = arith.constant 0 : index
    %678 = vector.load %arg47[%c0_300, %c0_301] : memref<1x64xf32, #tpu.memory_space<vmem>>, vector<1x64xf32>
    %cst_302 = arith.constant dense<0.000000e+00> : vector<8xf32>
    %679 = vector.multi_reduction <add>, %676, %cst_302 [1] : vector<8x64xf32> to vector<8xf32>
    %680 = vector.shape_cast %679 : vector<8xf32> to vector<8x1xf32>
    %cst_303 = arith.constant 6.400000e+01 : f32
    %681 = vector.broadcast %cst_303 : f32 to vector<8x1xf32>
    %682 = arith.divf %680, %681 : vector<8x1xf32>
    %683 = vector.broadcast %682 : vector<8x1xf32> to vector<8x64xf32>
    %684 = arith.subf %676, %683 : vector<8x64xf32>
    %685 = arith.mulf %684, %684 : vector<8x64xf32>
    %cst_304 = arith.constant dense<0.000000e+00> : vector<8xf32>
    %686 = vector.multi_reduction <add>, %685, %cst_304 [1] : vector<8x64xf32> to vector<8xf32>
    %687 = vector.shape_cast %686 : vector<8xf32> to vector<8x1xf32>
    %cst_305 = arith.constant 6.400000e+01 : f32
    %688 = vector.broadcast %cst_305 : f32 to vector<8x1xf32>
    %689 = arith.divf %687, %688 : vector<8x1xf32>
    %690 = vector.broadcast %682 : vector<8x1xf32> to vector<8x64xf32>
    %691 = arith.subf %676, %690 : vector<8x64xf32>
    %cst_306 = arith.constant 9.99999997E-7 : f32
    %692 = vector.broadcast %cst_306 : f32 to vector<8x1xf32>
    %693 = arith.addf %689, %692 : vector<8x1xf32>
    %694 = math.rsqrt %693 : vector<8x1xf32>
    %695 = vector.broadcast %694 : vector<8x1xf32> to vector<8x64xf32>
    %696 = arith.mulf %691, %695 : vector<8x64xf32>
    %697 = vector.broadcast %677 : vector<1x64xf32> to vector<8x64xf32>
    %698 = arith.mulf %696, %697 : vector<8x64xf32>
    %699 = vector.broadcast %678 : vector<1x64xf32> to vector<8x64xf32>
    %700 = arith.addf %698, %699 : vector<8x64xf32>
    %c0_307 = arith.constant 0 : index
    %c0_308 = arith.constant 0 : index
    %701 = vector.load %arg51[%c0_307, %c0_308] : memref<5x64xf32, #tpu.memory_space<vmem>>, vector<5x64xf32>
    %cst_309 = arith.constant 9.99999974E-6 : f32
    %702 = vector.broadcast %cst_309 : f32 to vector<5x64xf32>
    %703 = arith.addf %701, %702 : vector<5x64xf32>
    %704 = math.rsqrt %703 : vector<5x64xf32>
    %c0_310 = arith.constant 0 : index
    %c0_311 = arith.constant 0 : index
    %705 = vector.load %arg48[%c0_310, %c0_311] : memref<5x64xf32, #tpu.memory_space<vmem>>, vector<5x64xf32>
    %706 = arith.mulf %704, %705 : vector<5x64xf32>
    %c0_312 = arith.constant 0 : index
    %c0_313 = arith.constant 0 : index
    %707 = vector.load %arg49[%c0_312, %c0_313] : memref<5x64xf32, #tpu.memory_space<vmem>>, vector<5x64xf32>
    %c0_314 = arith.constant 0 : index
    %c0_315 = arith.constant 0 : index
    %708 = vector.load %arg50[%c0_314, %c0_315] : memref<5x64xf32, #tpu.memory_space<vmem>>, vector<5x64xf32>
    %709 = arith.mulf %708, %706 : vector<5x64xf32>
    %710 = arith.subf %707, %709 : vector<5x64xf32>
    %711 = vector.extract_strided_slice %706 {offsets = [0, 0], sizes = [1, 64], strides = [1, 1]} : vector<5x64xf32> to vector<1x64xf32>
    %712 = vector.broadcast %711 : vector<1x64xf32> to vector<2x64xf32>
    %713 = arith.mulf %521, %712 : vector<2x64xf32>
    %714 = vector.extract_strided_slice %710 {offsets = [0, 0], sizes = [1, 64], strides = [1, 1]} : vector<5x64xf32> to vector<1x64xf32>
    %715 = vector.broadcast %714 : vector<1x64xf32> to vector<2x64xf32>
    %716 = arith.addf %713, %715 : vector<2x64xf32>
    %717 = vector.extract_strided_slice %700 {offsets = [0, 0], sizes = [2, 64], strides = [1, 1]} : vector<8x64xf32> to vector<2x64xf32>
    %718 = vector.extract_strided_slice %706 {offsets = [1, 0], sizes = [1, 64], strides = [1, 1]} : vector<5x64xf32> to vector<1x64xf32>
    %719 = vector.broadcast %718 : vector<1x64xf32> to vector<2x64xf32>
    %720 = arith.mulf %717, %719 : vector<2x64xf32>
    %721 = vector.extract_strided_slice %710 {offsets = [1, 0], sizes = [1, 64], strides = [1, 1]} : vector<5x64xf32> to vector<1x64xf32>
    %722 = vector.broadcast %721 : vector<1x64xf32> to vector<2x64xf32>
    %723 = arith.addf %720, %722 : vector<2x64xf32>
    %cst_316 = arith.constant 2.500000e-01 : f32
    %724 = vector.broadcast %cst_316 : f32 to vector<2x64xf32>
    %725 = arith.mulf %723, %724 : vector<2x64xf32>
    %726 = vector.extract_strided_slice %700 {offsets = [2, 0], sizes = [2, 64], strides = [1, 1]} : vector<8x64xf32> to vector<2x64xf32>
    %727 = vector.extract_strided_slice %706 {offsets = [2, 0], sizes = [1, 64], strides = [1, 1]} : vector<5x64xf32> to vector<1x64xf32>
    %728 = vector.broadcast %727 : vector<1x64xf32> to vector<2x64xf32>
    %729 = arith.mulf %726, %728 : vector<2x64xf32>
    %730 = vector.extract_strided_slice %710 {offsets = [2, 0], sizes = [1, 64], strides = [1, 1]} : vector<5x64xf32> to vector<1x64xf32>
    %731 = vector.broadcast %730 : vector<1x64xf32> to vector<2x64xf32>
    %732 = arith.addf %729, %731 : vector<2x64xf32>
    %cst_317 = arith.constant 2.500000e-01 : f32
    %733 = vector.broadcast %cst_317 : f32 to vector<2x64xf32>
    %734 = arith.mulf %732, %733 : vector<2x64xf32>
    %735 = vector.extract_strided_slice %700 {offsets = [4, 0], sizes = [2, 64], strides = [1, 1]} : vector<8x64xf32> to vector<2x64xf32>
    %736 = vector.extract_strided_slice %706 {offsets = [3, 0], sizes = [1, 64], strides = [1, 1]} : vector<5x64xf32> to vector<1x64xf32>
    %737 = vector.broadcast %736 : vector<1x64xf32> to vector<2x64xf32>
    %738 = arith.mulf %735, %737 : vector<2x64xf32>
    %739 = vector.extract_strided_slice %710 {offsets = [3, 0], sizes = [1, 64], strides = [1, 1]} : vector<5x64xf32> to vector<1x64xf32>
    %740 = vector.broadcast %739 : vector<1x64xf32> to vector<2x64xf32>
    %741 = arith.addf %738, %740 : vector<2x64xf32>
    %cst_318 = arith.constant 2.500000e-01 : f32
    %742 = vector.broadcast %cst_318 : f32 to vector<2x64xf32>
    %743 = arith.mulf %741, %742 : vector<2x64xf32>
    %744 = vector.extract_strided_slice %700 {offsets = [6, 0], sizes = [2, 64], strides = [1, 1]} : vector<8x64xf32> to vector<2x64xf32>
    %745 = vector.extract_strided_slice %706 {offsets = [4, 0], sizes = [1, 64], strides = [1, 1]} : vector<5x64xf32> to vector<1x64xf32>
    %746 = vector.broadcast %745 : vector<1x64xf32> to vector<2x64xf32>
    %747 = arith.mulf %744, %746 : vector<2x64xf32>
    %748 = vector.extract_strided_slice %710 {offsets = [4, 0], sizes = [1, 64], strides = [1, 1]} : vector<5x64xf32> to vector<1x64xf32>
    %749 = vector.broadcast %748 : vector<1x64xf32> to vector<2x64xf32>
    %750 = arith.addf %747, %749 : vector<2x64xf32>
    %cst_319 = arith.constant 2.500000e-01 : f32
    %751 = vector.broadcast %cst_319 : f32 to vector<2x64xf32>
    %752 = arith.mulf %750, %751 : vector<2x64xf32>
    %753 = tpu.concatenate %716, %725, %734, %743, %752 in 1 : vector<2x64xf32>, vector<2x64xf32>, vector<2x64xf32>, vector<2x64xf32>, vector<2x64xf32> -> vector<2x320xf32>
    %c0_320 = arith.constant 0 : index
    %c0_321 = arith.constant 0 : index
    %754 = vector.load %arg52[%c0_320, %c0_321] : memref<2x320xf32, #tpu.memory_space<vmem>>, vector<2x320xf32>
    tpu.vector_store %arg52[%c0_320, %c0_321], %753 {strides = array<i32>} : memref<2x320xf32, #tpu.memory_space<vmem>>, vector<2x320xf32>,
    return
  }
}

</mosaic_0001>

<llo_original>
// kernel: model_forward.1
$region0: #{model_forward.1}
  #allocation0 [shape = 'u32[]', space=smem, size = 0x4, offset = 0x4, fixed_abs, tag = 'smem constant byte address 0x4 - core index']
  #allocation1 [shape = 'u32[144,128]{1,0:T(1,128)}', space=vmem, size = 0x12000, scoped, tag = 'internal scratch']
  %s0 = inlined_call_operand.smem [shape: u32[53], index: -1, kind: input, shape index: {}]
  %s1 = sld [smem:[%s0]]
  %s2 = scalar_lea.smem %s0, 1
  %s3 = sld [smem:[%s2]]
  %s4 = scalar_lea.smem %s0, 2
  %s5 = sld [smem:[%s4]]
  %s6 = scalar_lea.smem %s0, 3
  %s7 = sld [smem:[%s6]]
  %s8 = scalar_lea.smem %s0, 4
  %s9 = sld [smem:[%s8]]
  %s10 = scalar_lea.smem %s0, 5
  %s11 = sld [smem:[%s10]]
  %s12 = scalar_lea.smem %s0, 6
  %s13 = sld [smem:[%s12]]
  %s14 = scalar_lea.smem %s0, 7
  %s15 = sld [smem:[%s14]]
  %s16 = scalar_lea.smem %s0, 8
  %s17 = sld [smem:[%s16]]
  %s18 = scalar_lea.smem %s0, 9
  %s19 = sld [smem:[%s18]]
  %s20 = scalar_lea.smem %s0, 10
  %s21 = sld [smem:[%s20]]
  %s22 = scalar_lea.smem %s0, 11
  %s23 = sld [smem:[%s22]]
  %s24 = scalar_lea.smem %s0, 12
  %s25 = sld [smem:[%s24]]
  %s26 = scalar_lea.smem %s0, 13
  %s27 = sld [smem:[%s26]]
  %s28 = scalar_lea.smem %s0, 14
  %s29 = sld [smem:[%s28]]
  %s30 = scalar_lea.smem %s0, 15
  %s31 = sld [smem:[%s30]]
  %s32 = scalar_lea.smem %s0, 16
  %s33 = sld [smem:[%s32]]
  %s34 = scalar_lea.smem %s0, 17
  %s35 = sld [smem:[%s34]]
  %s36 = scalar_lea.smem %s0, 18
  %s37 = sld [smem:[%s36]]
  %s38 = scalar_lea.smem %s0, 19
  %s39 = sld [smem:[%s38]]
  %s40 = scalar_lea.smem %s0, 20
  %s41 = sld [smem:[%s40]]
  %s42 = scalar_lea.smem %s0, 21
  %s43 = sld [smem:[%s42]]
  %s44 = scalar_lea.smem %s0, 22
  %s45 = sld [smem:[%s44]]
  %s46 = scalar_lea.smem %s0, 23
  %s47 = sld [smem:[%s46]]
  %s48 = scalar_lea.smem %s0, 24
  %s49 = sld [smem:[%s48]]
  %s50 = scalar_lea.smem %s0, 25
  %s51 = sld [smem:[%s50]]
  %s52 = scalar_lea.smem %s0, 26
  %s53 = sld [smem:[%s52]]
  %s54 = scalar_lea.smem %s0, 27
  %s55 = sld [smem:[%s54]]
  %s56 = scalar_lea.smem %s0, 28
  %s57 = sld [smem:[%s56]]
  %s58 = scalar_lea.smem %s0, 29
  %s59 = sld [smem:[%s58]]
  %s60 = scalar_lea.smem %s0, 30
  %s61 = sld [smem:[%s60]]
  %s62 = scalar_lea.smem %s0, 31
  %s63 = sld [smem:[%s62]]
  %s64 = scalar_lea.smem %s0, 32
  %s65 = sld [smem:[%s64]]
  %s66 = scalar_lea.smem %s0, 33
  %s67 = sld [smem:[%s66]]
  %s68 = scalar_lea.smem %s0, 34
  %s69 = sld [smem:[%s68]]
  %s70 = scalar_lea.smem %s0, 35
  %s71 = sld [smem:[%s70]]
  %s72 = scalar_lea.smem %s0, 36
  %s73 = sld [smem:[%s72]]
  %s74 = scalar_lea.smem %s0, 37
  %s75 = sld [smem:[%s74]]
  %s76 = scalar_lea.smem %s0, 38
  %s77 = sld [smem:[%s76]]
  %s78 = scalar_lea.smem %s0, 39
  %s79 = sld [smem:[%s78]]
  %s80 = scalar_lea.smem %s0, 40
  %s81 = sld [smem:[%s80]]
  %s82 = scalar_lea.smem %s0, 41
  %s83 = sld [smem:[%s82]]
  %s84 = scalar_lea.smem %s0, 42
  %s85 = sld [smem:[%s84]]
  %s86 = scalar_lea.smem %s0, 43
  %s87 = sld [smem:[%s86]]
  %s88 = scalar_lea.smem %s0, 44
  %s89 = sld [smem:[%s88]]
  %s90 = scalar_lea.smem %s0, 45
  %s91 = sld [smem:[%s90]]
  %s92 = scalar_lea.smem %s0, 46
  %s93 = sld [smem:[%s92]]
  %s94 = scalar_lea.smem %s0, 47
  %s95 = sld [smem:[%s94]]
  %s96 = scalar_lea.smem %s0, 48
  %s97 = sld [smem:[%s96]]
  %s98 = scalar_lea.smem %s0, 49
  %s99 = sld [smem:[%s98]]
  %s100 = scalar_lea.smem %s0, 50
  %s101 = sld [smem:[%s100]]
  %s102 = scalar_lea.smem %s0, 51
  %s103 = sld [smem:[%s102]]
  %s104 = scalar_lea.smem %s0, 52
  %s105 = sld [smem:[%s104]]
  %s106 = sld [smem:[#allocation0]]
  $region262: #{model_forward.1} parent=0
    _
  %s108 = ssub.s32 1, %s106
  %s109 = scalar_select 0, %s108, %s106
  $region1: #{model_forward.1} parent=0
    #allocation2 [shape = 'u8[512]{0}', space=vmem, size = 0x400, scoped, tag = 'input window, operand 31, single buffered']
    #allocation3 [shape = 's32[1]{0}', space=sflag, size = 0x4, scoped, tag = 'scoped memory for model_forward.1']
    #allocation4 [shape = 's32[1]{0}', space=sflag, size = 0x4, scoped, tag = 'scoped memory for model_forward.1']
    #allocation5 [shape = 'u8[512]{0}', space=vmem, size = 0x400, scoped, tag = 'input window, operand 32, single buffered']
    #allocation6 [shape = 's32[1]{0}', space=sflag, size = 0x4, scoped, tag = 'scoped memory for model_forward.1']
    #allocation7 [shape = 'u8[512]{0}', space=vmem, size = 0x400, scoped, tag = 'input window, operand 33, single buffered']
    #allocation8 [shape = 'u8[512]{0}', space=vmem, size = 0x400, scoped, tag = 'input window, operand 34, single buffered']
    #allocation9 [shape = 's32[1]{0}', space=sflag, size = 0x4, scoped, tag = 'scoped memory for model_forward.1']
    #allocation10 [shape = 'u8[512]{0}', space=vmem, size = 0x400, scoped, tag = 'input window, operand 35, single buffered']
    #allocation11 [shape = 'u8[512]{0}', space=vmem, size = 0x400, scoped, tag = 'input window, operand 39, single buffered']
    #allocation12 [shape = 's32[1]{0}', space=sflag, size = 0x4, scoped, tag = 'scoped memory for model_forward.1']
    #allocation13 [shape = 'u8[512]{0}', space=vmem, size = 0x400, scoped, tag = 'input window, operand 40, single buffered']
    #allocation14 [shape = 'u8[512]{0}', space=vmem, size = 0x400, scoped, tag = 'input window, operand 41, single buffered']
    #allocation15 [shape = 's32[1]{0}', space=sflag, size = 0x4, scoped, tag = 'scoped memory for model_forward.1']
    #allocation16 [shape = 'u8[512]{0}', space=vmem, size = 0x400, scoped, tag = 'input window, operand 45, single buffered']
    #allocation17 [shape = 'u8[512]{0}', space=vmem, size = 0x400, scoped, tag = 'input window, operand 46, single buffered']
    #allocation18 [shape = 's32[1]{0}', space=sflag, size = 0x4, scoped, tag = 'scoped memory for model_forward.1']
    #allocation19 [shape = 'u8[512]{0}', space=vmem, size = 0x400, scoped, tag = 'input window, operand 47, single buffered']
    #allocation20 [shape = 'u8[3072]{0}', space=vmem, size = 0xc00, scoped, tag = 'output window, operand 0, single buffered']
    %110 = vsyncpa [#allocation3], 0
    %111 = vsyncpa [#allocation6], 0
    %112 = vsyncpa [#allocation9], 0
    %113 = vsyncpa [#allocation12], 0
    %114 = vsyncpa [#allocation15], 0
    %115 = vsyncpa [#allocation18], 0
    %116 = vsyncpa [#allocation4], 0
    // Predicated region
    $region2: #{model_forward.1} parent=1 // pred_check
      _
    $region3: #{model_forward.1} parent=1 // pred_check_branch
      %118 = sbr.rel (0) target = $region5
    $region4: #{model_forward.1} parent=1 // pred_region
      _
    $region5: #{model_forward.1} parent=1 // pred_fallthru
      _
    // Predicated region
    $region6: #{model_forward.1} parent=1 // pred_check
      _
    $region7: #{model_forward.1} parent=1 // pred_check_branch
      %120 = sbr.rel (0) target = $region9
    $region8: #{model_forward.1} parent=1 // pred_region
      _
    $region9: #{model_forward.1} parent=1 // pred_fallthru
      _
    // Predicated region
    $region10: #{model_forward.1} parent=1 // pred_check
      _
    $region11: #{model_forward.1} parent=1 // pred_check_branch
      %122 = sbr.rel (0) target = $region13
    $region12: #{model_forward.1} parent=1 // pred_region
      _
    $region13: #{model_forward.1} parent=1 // pred_fallthru
      _
    // Predicated region
    $region14: #{model_forward.1} parent=1 // pred_check
      _
    $region15: #{model_forward.1} parent=1 // pred_check_branch
      %124 = sbr.rel (0) target = $region17
    $region16: #{model_forward.1} parent=1 // pred_region
      _
    $region17: #{model_forward.1} parent=1 // pred_fallthru
      _
    // Predicated region
    $region18: #{model_forward.1} parent=1 // pred_check
      _
    $region19: #{model_forward.1} parent=1 // pred_check_branch
      %126 = sbr.rel (0) target = $region21
    $region20: #{model_forward.1} parent=1 // pred_region
      _
    $region21: #{model_forward.1} parent=1 // pred_fallthru
      _
    // Predicated region
    $region22: #{model_forward.1} parent=1 // pred_check
      _
    $region23: #{model_forward.1} parent=1 // pred_check_branch
      %128 = sbr.rel (0) target = $region25
    $region24: #{model_forward.1} parent=1 // pred_region
      _
    $region25: #{model_forward.1} parent=1 // pred_fallthru
      _
    // Predicated region
    $region26: #{model_forward.1} parent=1 // pred_check
      _
    $region27: #{model_forward.1} parent=1 // pred_check_branch
      %130 = sbr.rel (0) target = $region29
    $region28: #{model_forward.1} parent=1 // pred_region
      _
    $region29: #{model_forward.1} parent=1 // pred_fallthru
      _
    // Predicated region
    $region30: #{model_forward.1} parent=1 // pred_check
      _
    $region31: #{model_forward.1} parent=1 // pred_check_branch
      %132 = sbr.rel (0) target = $region33
    $region32: #{model_forward.1} parent=1 // pred_region
      _
    $region33: #{model_forward.1} parent=1 // pred_fallthru
      _
    // Predicated region
    $region34: #{model_forward.1} parent=1 // pred_check
      _
    $region35: #{model_forward.1} parent=1 // pred_check_branch
      %134 = sbr.rel (0) target = $region37
    $region36: #{model_forward.1} parent=1 // pred_region
      _
    $region37: #{model_forward.1} parent=1 // pred_fallthru
      _
    // Predicated region
    $region38: #{model_forward.1} parent=1 // pred_check
      _
    $region39: #{model_forward.1} parent=1 // pred_check_branch
      %136 = sbr.rel (0) target = $region41
    $region40: #{model_forward.1} parent=1 // pred_region
      _
    $region41: #{model_forward.1} parent=1 // pred_fallthru
      _
    // Predicated region
    $region42: #{model_forward.1} parent=1 // pred_check
      _
    $region43: #{model_forward.1} parent=1 // pred_check_branch
      %138 = sbr.rel (0) target = $region45
    $region44: #{model_forward.1} parent=1 // pred_region
      _
    $region45: #{model_forward.1} parent=1 // pred_fallthru
      _
    // Predicated region
    $region46: #{model_forward.1} parent=1 // pred_check
      _
    $region47: #{model_forward.1} parent=1 // pred_check_branch
      %140 = sbr.rel (0) target = $region49
    $region48: #{model_forward.1} parent=1 // pred_region
      _
    $region49: #{model_forward.1} parent=1 // pred_fallthru
      _
    // Predicated region
    $region50: #{model_forward.1} parent=1 // pred_check
      _
    $region51: #{model_forward.1} parent=1 // pred_check_branch
      %142 = sbr.rel (0) target = $region53
    $region52: #{model_forward.1} parent=1 // pred_region
      _
    $region53: #{model_forward.1} parent=1 // pred_fallthru
      _
    // Predicated region
    $region54: #{model_forward.1} parent=1 // pred_check
      _
    $region55: #{model_forward.1} parent=1 // pred_check_branch
      %144 = sbr.rel (0) target = $region57
    $region56: #{model_forward.1} parent=1 // pred_region
      _
    $region57: #{model_forward.1} parent=1 // pred_fallthru
      _
    // Predicated region
    $region58: #{model_forward.1} parent=1 // pred_check
      _
    $region59: #{model_forward.1} parent=1 // pred_check_branch
      %146 = sbr.rel (0) target = $region61
    $region60: #{model_forward.1} parent=1 // pred_region
      _
    $region61: #{model_forward.1} parent=1 // pred_fallthru
      _
    // Predicated region
    $region62: #{model_forward.1} parent=1 // pred_check
      _
    $region63: #{model_forward.1} parent=1 // pred_check_branch
      %148 = sbr.rel (0) target = $region65
    $region64: #{model_forward.1} parent=1 // pred_region
      _
    $region65: #{model_forward.1} parent=1 // pred_fallthru
      _
    // Predicated region
    $region66: #{model_forward.1} parent=1 // pred_check
      _
    $region67: #{model_forward.1} parent=1 // pred_check_branch
      %150 = sbr.rel (0) target = $region69
    $region68: #{model_forward.1} parent=1 // pred_region
      _
    $region69: #{model_forward.1} parent=1 // pred_fallthru
      _
    // Predicated region
    $region70: #{model_forward.1} parent=1 // pred_check
      _
    $region71: #{model_forward.1} parent=1 // pred_check_branch
      %152 = sbr.rel (0) target = $region73
    $region72: #{model_forward.1} parent=1 // pred_region
      _
    $region73: #{model_forward.1} parent=1 // pred_fallthru
      _
    // Predicated region
    $region74: #{model_forward.1} parent=1 // pred_check
      _
    $region75: #{model_forward.1} parent=1 // pred_check_branch
      %154 = sbr.rel (0) target = $region77
    $region76: #{model_forward.1} parent=1 // pred_region
      _
    $region77: #{model_forward.1} parent=1 // pred_fallthru
      _
    // Predicated region
    $region78: #{model_forward.1} parent=1 // pred_check
      _
    $region79: #{model_forward.1} parent=1 // pred_check_branch
      %156 = sbr.rel (0) target = $region81
    $region80: #{model_forward.1} parent=1 // pred_region
      _
    $region81: #{model_forward.1} parent=1 // pred_fallthru
      _
    // Predicated region
    $region82: #{model_forward.1} parent=1 // pred_check
      _
    $region83: #{model_forward.1} parent=1 // pred_check_branch
      %158 = sbr.rel (0) target = $region85
    $region84: #{model_forward.1} parent=1 // pred_region
      _
    $region85: #{model_forward.1} parent=1 // pred_fallthru
      _
    // Predicated region
    $region86: #{model_forward.1} parent=1 // pred_check
      _
    $region87: #{model_forward.1} parent=1 // pred_check_branch
      %160 = sbr.rel (0) target = $region89
    $region88: #{model_forward.1} parent=1 // pred_region
      _
    $region89: #{model_forward.1} parent=1 // pred_fallthru
      _
    // Predicated region
    $region90: #{model_forward.1} parent=1 // pred_check
      _
    $region91: #{model_forward.1} parent=1 // pred_check_branch
      %162 = sbr.rel (0) target = $region93
    $region92: #{model_forward.1} parent=1 // pred_region
      _
    $region93: #{model_forward.1} parent=1 // pred_fallthru
      _
    // Predicated region
    $region94: #{model_forward.1} parent=1 // pred_check
      _
    $region95: #{model_forward.1} parent=1 // pred_check_branch
      %164 = sbr.rel (0) target = $region97
    $region96: #{model_forward.1} parent=1 // pred_region
      _
    $region97: #{model_forward.1} parent=1 // pred_fallthru
      _
    // Predicated region
    $region98: #{model_forward.1} parent=1 // pred_check
      _
    $region99: #{model_forward.1} parent=1 // pred_check_branch
      %166 = sbr.rel (0) target = $region101
    $region100: #{model_forward.1} parent=1 // pred_region
      _
    $region101: #{model_forward.1} parent=1 // pred_fallthru
      _
    // Predicated region
    $region102: #{model_forward.1} parent=1 // pred_check
      _
    $region103: #{model_forward.1} parent=1 // pred_check_branch
      %168 = sbr.rel (0) target = $region105
    $region104: #{model_forward.1} parent=1 // pred_region
      _
    $region105: #{model_forward.1} parent=1 // pred_fallthru
      _
    // Predicated region
    $region106: #{model_forward.1} parent=1 // pred_check
      _
    $region107: #{model_forward.1} parent=1 // pred_check_branch
      %170 = sbr.rel (0) target = $region109
    $region108: #{model_forward.1} parent=1 // pred_region
      _
    $region109: #{model_forward.1} parent=1 // pred_fallthru
      _
    // Predicated region
    $region110: #{model_forward.1} parent=1 // pred_check
      _
    $region111: #{model_forward.1} parent=1 // pred_check_branch
      %172 = sbr.rel (0) target = $region113
    $region112: #{model_forward.1} parent=1 // pred_region
      _
    $region113: #{model_forward.1} parent=1 // pred_fallthru
      _
    // Predicated region
    $region114: #{model_forward.1} parent=1 // pred_check
      _
    $region115: #{model_forward.1} parent=1 // pred_check_branch
      %174 = sbr.rel (0) target = $region117
    $region116: #{model_forward.1} parent=1 // pred_region
      _
    $region117: #{model_forward.1} parent=1 // pred_fallthru
      _
    // Predicated region
    $region118: #{model_forward.1} parent=1 // pred_check
      _
    $region119: #{model_forward.1} parent=1 // pred_check_branch
      %176 = sbr.rel (0) target = $region121
    $region120: #{model_forward.1} parent=1 // pred_region
      _
    $region121: #{model_forward.1} parent=1 // pred_fallthru
      _
    // Predicated region
    $region122: #{model_forward.1} parent=1 // pred_check
      _
    $region123: #{model_forward.1} parent=1 // pred_check_branch
      %178 = sbr.rel (0) target = $region125
    $region124: #{model_forward.1} parent=1 // pred_region
      _
    $region125: #{model_forward.1} parent=1 // pred_fallthru
      _
    // Predicated region
    $region126: #{model_forward.1} parent=1 // pred_check
      _
    $region127: #{model_forward.1} parent=1 // pred_check_branch
      %180 = sbr.rel (0) target = $region129
    $region128: #{model_forward.1} parent=1 // pred_region
      %s182 = ssub.s32 16, 16
      %183 = vsyncadd [#allocation3], %s182
      %s185 = sshll.u32 [#allocation2], 4
      %s186 = int_to_ptr.vmem [resolvable:$true] %s185
      %188 = dma.hbm_to_vmem [thread:$0]  %s63, 16, %s186, [#allocation3]
    $region129: #{model_forward.1} parent=1 // pred_fallthru
      _
    // Predicated region
    $region130: #{model_forward.1} parent=1 // pred_check
      _
    $region131: #{model_forward.1} parent=1 // pred_check_branch
      %190 = sbr.rel (0) target = $region133
    $region132: #{model_forward.1} parent=1 // pred_region
      %s192 = ssub.s32 16, 16
      %193 = vsyncadd [#allocation6], %s192
      %s195 = sshll.u32 [#allocation5], 4
      %s196 = int_to_ptr.vmem [resolvable:$true] %s195
      %198 = dma.hbm_to_vmem [thread:$0]  %s65, 16, %s196, [#allocation6]
    $region133: #{model_forward.1} parent=1 // pred_fallthru
      _
    // Predicated region
    $region134: #{model_forward.1} parent=1 // pred_check
      _
    $region135: #{model_forward.1} parent=1 // pred_check_branch
      %200 = sbr.rel (0) target = $region137
    $region136: #{model_forward.1} parent=1 // pred_region
      %s202 = ssub.s32 16, 16
      %203 = vsyncadd [#allocation6], %s202
      %s205 = sshll.u32 [#allocation7], 4
      %s206 = int_to_ptr.vmem [resolvable:$true] %s205
      %208 = dma.hbm_to_vmem [thread:$0]  %s67, 16, %s206, [#allocation6]
    $region137: #{model_forward.1} parent=1 // pred_fallthru
      _
    // Predicated region
    $region138: #{model_forward.1} parent=1 // pred_check
      _
    $region139: #{model_forward.1} parent=1 // pred_check_branch
      %210 = sbr.rel (0) target = $region141
    $region140: #{model_forward.1} parent=1 // pred_region
      %s212 = ssub.s32 16, 16
      %213 = vsyncadd [#allocation9], %s212
      %s215 = sshll.u32 [#allocation8], 4
      %s216 = int_to_ptr.vmem [resolvable:$true] %s215
      %218 = dma.hbm_to_vmem [thread:$0]  %s69, 16, %s216, [#allocation9]
    $region141: #{model_forward.1} parent=1 // pred_fallthru
      _
    // Predicated region
    $region142: #{model_forward.1} parent=1 // pred_check
      _
    $region143: #{model_forward.1} parent=1 // pred_check_branch
      %220 = sbr.rel (0) target = $region145
    $region144: #{model_forward.1} parent=1 // pred_region
      %s222 = ssub.s32 16, 16
      %223 = vsyncadd [#allocation9], %s222
      %s225 = sshll.u32 [#allocation10], 4
      %s226 = int_to_ptr.vmem [resolvable:$true] %s225
      %228 = dma.hbm_to_vmem [thread:$0]  %s71, 16, %s226, [#allocation9]
    $region145: #{model_forward.1} parent=1 // pred_fallthru
      _
    // Predicated region
    $region146: #{model_forward.1} parent=1 // pred_check
      _
    $region147: #{model_forward.1} parent=1 // pred_check_branch
      %230 = sbr.rel (0) target = $region149
    $region148: #{model_forward.1} parent=1 // pred_region
      _
    $region149: #{model_forward.1} parent=1 // pred_fallthru
      _
    // Predicated region
    $region150: #{model_forward.1} parent=1 // pred_check
      _
    $region151: #{model_forward.1} parent=1 // pred_check_branch
      %232 = sbr.rel (0) target = $region153
    $region152: #{model_forward.1} parent=1 // pred_region
      _
    $region153: #{model_forward.1} parent=1 // pred_fallthru
      _
    // Predicated region
    $region154: #{model_forward.1} parent=1 // pred_check
      _
    $region155: #{model_forward.1} parent=1 // pred_check_branch
      %234 = sbr.rel (0) target = $region157
    $region156: #{model_forward.1} parent=1 // pred_region
      _
    $region157: #{model_forward.1} parent=1 // pred_fallthru
      _
    // Predicated region
    $region158: #{model_forward.1} parent=1 // pred_check
      _
    $region159: #{model_forward.1} parent=1 // pred_check_branch
      %236 = sbr.rel (0) target = $region161
    $region160: #{model_forward.1} parent=1 // pred_region
      %s238 = ssub.s32 16, 16
      %239 = vsyncadd [#allocation12], %s238
      %s241 = sshll.u32 [#allocation11], 4
      %s242 = int_to_ptr.vmem [resolvable:$true] %s241
      %244 = dma.hbm_to_vmem [thread:$0]  %s79, 16, %s242, [#allocation12]
    $region161: #{model_forward.1} parent=1 // pred_fallthru
      _
    // Predicated region
    $region162: #{model_forward.1} parent=1 // pred_check
      _
    $region163: #{model_forward.1} parent=1 // pred_check_branch
      %246 = sbr.rel (0) target = $region165
    $region164: #{model_forward.1} parent=1 // pred_region
      %s248 = ssub.s32 16, 16
      %249 = vsyncadd [#allocation12], %s248
      %s251 = sshll.u32 [#allocation13], 4
      %s252 = int_to_ptr.vmem [resolvable:$true] %s251
      %254 = dma.hbm_to_vmem [thread:$0]  %s81, 16, %s252, [#allocation12]
    $region165: #{model_forward.1} parent=1 // pred_fallthru
      _
    // Predicated region
    $region166: #{model_forward.1} parent=1 // pred_check
      _
    $region167: #{model_forward.1} parent=1 // pred_check_branch
      %256 = sbr.rel (0) target = $region169
    $region168: #{model_forward.1} parent=1 // pred_region
      %s258 = ssub.s32 16, 16
      %259 = vsyncadd [#allocation15], %s258
      %s261 = sshll.u32 [#allocation14], 4
      %s262 = int_to_ptr.vmem [resolvable:$true] %s261
      %264 = dma.hbm_to_vmem [thread:$0]  %s83, 16, %s262, [#allocation15]
    $region169: #{model_forward.1} parent=1 // pred_fallthru
      _
    // Predicated region
    $region170: #{model_forward.1} parent=1 // pred_check
      _
    $region171: #{model_forward.1} parent=1 // pred_check_branch
      %266 = sbr.rel (0) target = $region173
    $region172: #{model_forward.1} parent=1 // pred_region
      _
    $region173: #{model_forward.1} parent=1 // pred_fallthru
      _
    // Predicated region
    $region174: #{model_forward.1} parent=1 // pred_check
      _
    $region175: #{model_forward.1} parent=1 // pred_check_branch
      %268 = sbr.rel (0) target = $region177
    $region176: #{model_forward.1} parent=1 // pred_region
      _
    $region177: #{model_forward.1} parent=1 // pred_fallthru
      _
    // Predicated region
    $region178: #{model_forward.1} parent=1 // pred_check
      _
    $region179: #{model_forward.1} parent=1 // pred_check_branch
      %270 = sbr.rel (0) target = $region181
    $region180: #{model_forward.1} parent=1 // pred_region
      _
    $region181: #{model_forward.1} parent=1 // pred_fallthru
      _
    // Predicated region
    $region182: #{model_forward.1} parent=1 // pred_check
      _
    $region183: #{model_forward.1} parent=1 // pred_check_branch
      %272 = sbr.rel (0) target = $region185
    $region184: #{model_forward.1} parent=1 // pred_region
      %s274 = ssub.s32 16, 16
      %275 = vsyncadd [#allocation15], %s274
      %s277 = sshll.u32 [#allocation16], 4
      %s278 = int_to_ptr.vmem [resolvable:$true] %s277
      %280 = dma.hbm_to_vmem [thread:$0]  %s91, 16, %s278, [#allocation15]
    $region185: #{model_forward.1} parent=1 // pred_fallthru
      _
    // Predicated region
    $region186: #{model_forward.1} parent=1 // pred_check
      _
    $region187: #{model_forward.1} parent=1 // pred_check_branch
      %282 = sbr.rel (0) target = $region189
    $region188: #{model_forward.1} parent=1 // pred_region
      %s284 = ssub.s32 16, 16
      %285 = vsyncadd [#allocation18], %s284
      %s287 = sshll.u32 [#allocation17], 4
      %s288 = int_to_ptr.vmem [resolvable:$true] %s287
      %290 = dma.hbm_to_vmem [thread:$0]  %s93, 16, %s288, [#allocation18]
    $region189: #{model_forward.1} parent=1 // pred_fallthru
      _
    // Predicated region
    $region190: #{model_forward.1} parent=1 // pred_check
      _
    $region191: #{model_forward.1} parent=1 // pred_check_branch
      %292 = sbr.rel (0) target = $region193
    $region192: #{model_forward.1} parent=1 // pred_region
      %s294 = ssub.s32 16, 16
      %295 = vsyncadd [#allocation18], %s294
      %s297 = sshll.u32 [#allocation19], 4
      %s298 = int_to_ptr.vmem [resolvable:$true] %s297
      %300 = dma.hbm_to_vmem [thread:$0]  %s95, 16, %s298, [#allocation18]
    $region193: #{model_forward.1} parent=1 // pred_fallthru
      _
    // Predicated region
    $region194: #{model_forward.1} parent=1 // pred_check
      _
    $region195: #{model_forward.1} parent=1 // pred_check_branch
      %302 = sbr.rel (0) target = $region197
    $region196: #{model_forward.1} parent=1 // pred_region
      _
    $region197: #{model_forward.1} parent=1 // pred_fallthru
      _
    // Predicated region
    $region198: #{model_forward.1} parent=1 // pred_check
      _
    $region199: #{model_forward.1} parent=1 // pred_check_branch
      %304 = sbr.rel (0) target = $region201
    $region200: #{model_forward.1} parent=1 // pred_region
      _
    $region201: #{model_forward.1} parent=1 // pred_fallthru
      _
    // Predicated region
    $region202: #{model_forward.1} parent=1 // pred_check
      _
    $region203: #{model_forward.1} parent=1 // pred_check_branch
      %306 = sbr.rel (0) target = $region205
    $region204: #{model_forward.1} parent=1 // pred_region
      _
    $region205: #{model_forward.1} parent=1 // pred_fallthru
      _
    // Predicated region
    $region206: #{model_forward.1} parent=1 // pred_check
      _
    $region207: #{model_forward.1} parent=1 // pred_check_branch
      %308 = sbr.rel (0) target = $region209
    $region208: #{model_forward.1} parent=1 // pred_region
      _
    $region209: #{model_forward.1} parent=1 // pred_fallthru
      _
    // Predicated region
    $region210: #{model_forward.1} parent=1 // pred_check
      _
    $region211: #{model_forward.1} parent=1 // pred_check_branch
      %310 = sbr.rel (0) target = $region213
    $region212: #{model_forward.1} parent=1 // pred_region
      %311 = dma.done [#allocation3], 16
    $region213: #{model_forward.1} parent=1 // pred_fallthru
      _
    // Predicated region
    $region214: #{model_forward.1} parent=1 // pred_check
      _
    $region215: #{model_forward.1} parent=1 // pred_check_branch
      %313 = sbr.rel (0) target = $region217
    $region216: #{model_forward.1} parent=1 // pred_region
      %314 = dma.done [#allocation6], 16
    $region217: #{model_forward.1} parent=1 // pred_fallthru
      _
    // Predicated region
    $region218: #{model_forward.1} parent=1 // pred_check
      _
    $region219: #{model_forward.1} parent=1 // pred_check_branch
      %316 = sbr.rel (0) target = $region221
    $region220: #{model_forward.1} parent=1 // pred_region
      %317 = dma.done [#allocation6], 16
    $region221: #{model_forward.1} parent=1 // pred_fallthru
      _
    // Predicated region
    $region222: #{model_forward.1} parent=1 // pred_check
      _
    $region223: #{model_forward.1} parent=1 // pred_check_branch
      %319 = sbr.rel (0) target = $region225
    $region224: #{model_forward.1} parent=1 // pred_region
      %320 = dma.done [#allocation9], 16
    $region225: #{model_forward.1} parent=1 // pred_fallthru
      _
    // Predicated region
    $region226: #{model_forward.1} parent=1 // pred_check
      _
    $region227: #{model_forward.1} parent=1 // pred_check_branch
      %322 = sbr.rel (0) target = $region229
    $region228: #{model_forward.1} parent=1 // pred_region
      %323 = dma.done [#allocation9], 16
    $region229: #{model_forward.1} parent=1 // pred_fallthru
      _
    // Predicated region
    $region230: #{model_forward.1} parent=1 // pred_check
      _
    $region231: #{model_forward.1} parent=1 // pred_check_branch
      %325 = sbr.rel (0) target = $region233
    $region232: #{model_forward.1} parent=1 // pred_region
      %326 = dma.done [#allocation12], 16
    $region233: #{model_forward.1} parent=1 // pred_fallthru
      _
    // Predicated region
    $region234: #{model_forward.1} parent=1 // pred_check
      _
    $region235: #{model_forward.1} parent=1 // pred_check_branch
      %328 = sbr.rel (0) target = $region237
    $region236: #{model_forward.1} parent=1 // pred_region
      %329 = dma.done [#allocation12], 16
    $region237: #{model_forward.1} parent=1 // pred_fallthru
      _
    // Predicated region
    $region238: #{model_forward.1} parent=1 // pred_check
      _
    $region239: #{model_forward.1} parent=1 // pred_check_branch
      %331 = sbr.rel (0) target = $region241
    $region240: #{model_forward.1} parent=1 // pred_region
      %332 = dma.done [#allocation15], 16
    $region241: #{model_forward.1} parent=1 // pred_fallthru
      _
    // Predicated region
    $region242: #{model_forward.1} parent=1 // pred_check
      _
    $region243: #{model_forward.1} parent=1 // pred_check_branch
      %334 = sbr.rel (0) target = $region245
    $region244: #{model_forward.1} parent=1 // pred_region
      %335 = dma.done [#allocation15], 16
    $region245: #{model_forward.1} parent=1 // pred_fallthru
      _
    // Predicated region
    $region246: #{model_forward.1} parent=1 // pred_check
      _
    $region247: #{model_forward.1} parent=1 // pred_check_branch
      %337 = sbr.rel (0) target = $region249
    $region248: #{model_forward.1} parent=1 // pred_region
      %338 = dma.done [#allocation18], 16
    $region249: #{model_forward.1} parent=1 // pred_fallthru
      _
    // Predicated region
    $region250: #{model_forward.1} parent=1 // pred_check
      _
    $region251: #{model_forward.1} parent=1 // pred_check_branch
      %340 = sbr.rel (0) target = $region253
    $region252: #{model_forward.1} parent=1 // pred_region
      %341 = dma.done [#allocation18], 16
    $region253: #{model_forward.1} parent=1 // pred_fallthru
      _
    %v342 = vld [vmem:[%s13] sm:$0xff]
    %v343 = vld [vmem:[%s13 + $0x8] sm:$0xff]
    %v344 = vld [vmem:[%s13 + $0x10] sm:$0xff]
    %v345 = vld [vmem:[%s13 + $0x18] sm:$0xff]
    %v346 = vld [vmem:[%s13 + $0x20] sm:$0x3]
    %v347 = vld [vmem:[%s15] sm:$0xff]
    %v348 = vld [vmem:[%s15 + $0x8] sm:$0xff]
    %v349 = vld [vmem:[%s15 + $0x10] sm:$0xff]
    %v350 = vld [vmem:[%s15 + $0x18] sm:$0xff]
    %v351 = vld [vmem:[%s15 + $0x20] sm:$0xff]
    %v352 = vld [vmem:[%s7] sm:$0x1]
    %v353 = vld [vmem:[%s9] sm:$0x1]
    %v354 = vadd.f32 %v352, %v353
    %v355 = vld [vmem:[%s9 + $0x1] sm:$0xff]
    %v356 = vld [vmem:[%s9 + $0x9] sm:$0xff]
    %v357 = vld [vmem:[%s5] sm:$0x1]
    %v359 = vlaneseq
    %v360 = vshrl.u32 %v359, 7
    %v361 = vsub.s32 0, %v360
    %v362 = vrot.slane %v357, %v361
    %v364 = vadd.f32 %v355, %v362
    %v365 = vadd.f32 %v356, %v362
    %vm368 = vcmask 1040384
    %v369 = vrot.slane %v364, 7
    %v370 = vrot.slane %v365, 7
    %v371 = vsel %vm368, %v369, %v370
    %v375 = vsel %vm368, %v354, %v369
    %v377 = vrot.slane %v375, 7
    %v378 = vrot.slane %v371, 7
    %v379 = vsel %vm368, %v377, %v378
    %v380 = vrot.slane %v370, 7
    %v381 = vsel %vm368, %v378, %v380
    %v385 = vsel %vm368, %v370, %v377
    %v386 = vld [vmem:[%s1] sm:$0xff]
    %v387 = vld [vmem:[%s1 + $0x8] sm:$0xff]
    %v388 = vld [vmem:[%s1 + $0x10] sm:$0xff]
    %v389 = vld [vmem:[%s1 + $0x18] sm:$0xff]
    %v390 = vld [vmem:[%s1 + $0x20] sm:$0x3]
    %v391 = vld [vmem:[%s3] sm:$0xff]
    %v392 = vld [vmem:[%s3 + $0x8] sm:$0xff]
    %v393 = vld [vmem:[%s3 + $0x10] sm:$0xff]
    %v394 = vld [vmem:[%s3 + $0x18] sm:$0xff]
    %v395 = vld [vmem:[%s3 + $0x20] sm:$0xff]
    %v396 = vld [vmem:[%s3 + $0x28] sm:$0xff]
    %v397 = vld [vmem:[%s3 + $0x30] sm:$0xff]
    %v398 = vld [vmem:[%s3 + $0x38] sm:$0xff]
    %vm399 = vcmask 523264
    %v401 = vsel %vm399, %v386, 0
    %v404 = vsel %vm399, %v387, 0
    %v407 = vsel %vm399, %v388, 0
    %v410 = vsel %vm399, %v389, 0
    %v413 = vsel %vm399, %v390, 0
    %415 = vmatprep.subr.mxu0 0.0
    %416 = vmatpush1.msra.mxu0 0.0
    %417 = vmatprep.subr.mxu0 0.0
    %418 = vmatpush1.msra.mxu0 0.0
    %419 = vmatprep.subr.mxu0 0.0
    %420 = vmatpush1.msra.mxu0 0.0
    %421 = vmatprep.subr.mxu0 0.0
    %422 = vmatpush1.msra.mxu0 0.0
    %423 = vmatprep.subr.mxu0 0.0
    %424 = vmatpush1.msra.mxu0 0.0
    %425 = vmatprep.subr.mxu0 0.0
    %426 = vmatpush1.msra.mxu0 0.0
    %427 = vmatprep.subr.mxu0 0.0
    %428 = vmatpush1.msra.mxu0 0.0
    %429 = vmatprep.subr.mxu0 0.0
    %430 = vmatpush1.msra.mxu0 0.0
    %431 = vmatprep.subr.mxu0 0.0
    %432 = vmatpush1.msra.mxu0 %v398
    %433 = vmatprep.subr.mxu0 0.0
    %434 = vmatpush1.msra.mxu0 %v397
    %435 = vmatprep.subr.mxu0 0.0
    %436 = vmatpush1.msra.mxu0 %v396
    %437 = vmatprep.subr.mxu0 0.0
    %438 = vmatpush1.msra.mxu0 %v395
    %439 = vmatprep.subr.mxu0 0.0
    %440 = vmatpush1.msra.mxu0 %v394
    %441 = vmatprep.subr.mxu0 0.0
    %442 = vmatpush1.msra.mxu0 %v393
    %443 = vmatprep.subr.mxu0 0.0
    %444 = vmatpush1.msra.mxu0 %v392
    %445 = vmatprep.subr.mxu0 0.0
    %446 = vmatpush1.msra.mxu0 %v391
    %447 = vmatprep.subr.mxu0 0.0
    %448 = vmatpush2.msra.mxu0 0.0
    %449 = vmatprep.subr.mxu0 0.0
    %450 = vmatpush2.msra.mxu0 0.0
    %451 = vmatprep.subr.mxu0 0.0
    %452 = vmatpush2.msra.mxu0 0.0
    %453 = vmatprep.subr.mxu0 0.0
    %454 = vmatpush2.msra.mxu0 0.0
    %455 = vmatprep.subr.mxu0 0.0
    %456 = vmatpush2.msra.mxu0 0.0
    %457 = vmatprep.subr.mxu0 0.0
    %458 = vmatpush2.msra.mxu0 0.0
    %459 = vmatprep.subr.mxu0 0.0
    %460 = vmatpush2.msra.mxu0 0.0
    %461 = vmatprep.subr.mxu0 0.0
    %462 = vmatpush2.msra.mxu0 0.0
    %463 = vmatprep.subr.mxu0 0.0
    %464 = vmatpush2.msra.mxu0 0.0
    %465 = vmatprep.subr.mxu0 0.0
    %466 = vmatpush2.msra.mxu0 0.0
    %467 = vmatprep.subr.mxu0 0.0
    %468 = vmatpush2.msra.mxu0 0.0
    %469 = vmatprep.subr.mxu0 0.0
    %470 = vmatpush2.msra.mxu0 0.0
    %471 = vmatprep.subr.mxu0 0.0
    %472 = vmatpush2.msra.mxu0 0.0
    %473 = vmatprep.subr.mxu0 0.0
    %474 = vmatpush2.msra.mxu0 0.0
    %475 = vmatprep.subr.mxu0 0.0
    %476 = vmatpush2.msra.mxu0 0.0
    %477 = vmatprep.subr.mxu0 0.0
    %478 = vmatpush2.msra.mxu0 0.0
    %479 = vmatprep.mubr.f32.mxu0 0.0
    %480 = vmatmul.mubr.f32.gmra.mxu0 %v401
    %v481 = vpop.f32.mrf.mxu0
    %v482 = vadd.f32 %v375, %v481
    %v483 = vpop.f32.mrf.mxu0
    %484 = vmatprep.mubr.f32.mxu0 0.0
    %485 = vmatmul.mubr.f32.gmra.mxu0 %v404
    %v486 = vpop.f32.mrf.mxu0
    %v487 = vadd.f32 %v371, %v486
    %v488 = vpop.f32.mrf.mxu0
    %489 = vmatprep.mubr.f32.mxu0 0.0
    %490 = vmatmul.mubr.f32.gmra.mxu0 %v407
    %v491 = vpop.f32.mrf.mxu0
    %v492 = vadd.f32 %v385, %v491
    %v493 = vpop.f32.mrf.mxu0
    %494 = vmatprep.mubr.f32.mxu0 0.0
    %495 = vmatmul.mubr.f32.gmra.mxu0 %v410
    %v496 = vpop.f32.mrf.mxu0
    %v497 = vadd.f32 %v379, %v496
    %v498 = vpop.f32.mrf.mxu0
    %499 = vmatprep.mubr.f32.mxu0 0.0
    %500 = vmatmul.mubr.f32.gmra.mxu0 %v413
    %v501 = vpop.f32.mrf.mxu0
    %v502 = vadd.f32 %v381, %v501
    %v503 = vpop.f32.mrf.mxu0
    %504 = vdwg.mxu0
    %v505 = vld [vmem:[%s17] sm:$0x1]
    %v506 = vld [vmem:[%s19] sm:$0x1]
    %v507 = vld [vmem:[%s21] sm:$0xff]
    %v508 = vld [vmem:[%s21 + $0x8] sm:$0xff]
    %v509 = vld [vmem:[%s21 + $0x10] sm:$0xff]
    %v510 = vld [vmem:[%s21 + $0x18] sm:$0xff]
    %v511 = vld [vmem:[%s21 + $0x20] sm:$0xff]
    %v512 = vld [vmem:[%s21 + $0x28] sm:$0xff]
    %v513 = vld [vmem:[%s21 + $0x30] sm:$0xff]
    %v514 = vld [vmem:[%s21 + $0x38] sm:$0xff]
    %v515 = vld [vmem:[%s21 + $0x40] sm:$0xff]
    %v516 = vld [vmem:[%s21 + $0x48] sm:$0xff]
    %v517 = vld [vmem:[%s21 + $0x50] sm:$0xff]
    %v518 = vld [vmem:[%s21 + $0x58] sm:$0xff]
    %v519 = vld [vmem:[%s21 + $0x60] sm:$0xff]
    %v520 = vld [vmem:[%s21 + $0x68] sm:$0xff]
    %v521 = vld [vmem:[%s21 + $0x70] sm:$0xff]
    %v522 = vld [vmem:[%s21 + $0x78] sm:$0xff]
    %v523 = vld [vmem:[%s23] sm:$0x3]
    %v524 = vld [vmem:[%s25] sm:$0xff]
    %v525 = vld [vmem:[%s25 + $0x8] sm:$0xff]
    %v526 = vld [vmem:[%s25 + $0x10] sm:$0xff]
    %v527 = vld [vmem:[%s25 + $0x18] sm:$0xff]
    %v528 = vld [vmem:[%s25 + $0x20] sm:$0xff]
    %v529 = vld [vmem:[%s25 + $0x28] sm:$0xff]
    %v530 = vld [vmem:[%s25 + $0x30] sm:$0xff]
    %v531 = vld [vmem:[%s25 + $0x38] sm:$0xff]
    %v532 = vld [vmem:[%s27] sm:$0x1]
    %v533 = vld [vmem:[%s29] sm:$0x1]
    %v534 = vld [vmem:[%s31] sm:$0x1]
    %v535 = vld [vmem:[%s33] sm:$0xff]
    %v536 = vld [vmem:[%s33 + $0x8] sm:$0xff]
    %v537 = vld [vmem:[%s33 + $0x10] sm:$0xff]
    %v538 = vld [vmem:[%s33 + $0x18] sm:$0xff]
    %v539 = vld [vmem:[%s33 + $0x20] sm:$0xff]
    %v540 = vld [vmem:[%s33 + $0x28] sm:$0xff]
    %v541 = vld [vmem:[%s33 + $0x30] sm:$0xff]
    %v542 = vld [vmem:[%s33 + $0x38] sm:$0xff]
    %v543 = vld [vmem:[%s33 + $0x40] sm:$0xff]
    %v544 = vld [vmem:[%s33 + $0x48] sm:$0xff]
    %v545 = vld [vmem:[%s33 + $0x50] sm:$0xff]
    %v546 = vld [vmem:[%s33 + $0x58] sm:$0xff]
    %v547 = vld [vmem:[%s33 + $0x60] sm:$0xff]
    %v548 = vld [vmem:[%s33 + $0x68] sm:$0xff]
    %v549 = vld [vmem:[%s33 + $0x70] sm:$0xff]
    %v550 = vld [vmem:[%s33 + $0x78] sm:$0xff]
    %v551 = vld [vmem:[%s35] sm:$0x3]
    %v552 = vld [vmem:[%s37] sm:$0xff]
    %v553 = vld [vmem:[%s37 + $0x8] sm:$0xff]
    %v554 = vld [vmem:[%s37 + $0x10] sm:$0xff]
    %v555 = vld [vmem:[%s37 + $0x18] sm:$0xff]
    %v556 = vld [vmem:[%s37 + $0x20] sm:$0xff]
    %v557 = vld [vmem:[%s37 + $0x28] sm:$0xff]
    %v558 = vld [vmem:[%s37 + $0x30] sm:$0xff]
    %v559 = vld [vmem:[%s37 + $0x38] sm:$0xff]
    %v560 = vld [vmem:[%s37 + $0x40] sm:$0xff]
    %v561 = vld [vmem:[%s37 + $0x48] sm:$0xff]
    %v562 = vld [vmem:[%s37 + $0x50] sm:$0xff]
    %v563 = vld [vmem:[%s37 + $0x58] sm:$0xff]
    %v564 = vld [vmem:[%s37 + $0x60] sm:$0xff]
    %v565 = vld [vmem:[%s37 + $0x68] sm:$0xff]
    %v566 = vld [vmem:[%s37 + $0x70] sm:$0xff]
    %v567 = vld [vmem:[%s37 + $0x78] sm:$0xff]
    %v568 = vld [vmem:[%s37 + $0x80] sm:$0xff]
    %v569 = vld [vmem:[%s37 + $0x88] sm:$0xff]
    %v570 = vld [vmem:[%s37 + $0x90] sm:$0xff]
    %v571 = vld [vmem:[%s37 + $0x98] sm:$0xff]
    %v572 = vld [vmem:[%s37 + $0xa0] sm:$0xff]
    %v573 = vld [vmem:[%s37 + $0xa8] sm:$0xff]
    %v574 = vld [vmem:[%s37 + $0xb0] sm:$0xff]
    %v575 = vld [vmem:[%s37 + $0xb8] sm:$0xff]
    %v576 = vld [vmem:[%s37 + $0xc0] sm:$0xff]
    %v577 = vld [vmem:[%s37 + $0xc8] sm:$0xff]
    %v578 = vld [vmem:[%s37 + $0xd0] sm:$0xff]
    %v579 = vld [vmem:[%s37 + $0xd8] sm:$0xff]
    %v580 = vld [vmem:[%s37 + $0xe0] sm:$0xff]
    %v581 = vld [vmem:[%s37 + $0xe8] sm:$0xff]
    %v582 = vld [vmem:[%s37 + $0xf0] sm:$0xff]
    %v583 = vld [vmem:[%s37 + $0xf8] sm:$0xff]
    %v584 = vld [vmem:[%s39] sm:$0x1]
    %v585 = vsel %vm399, %v482, 0.0
    %586 = vadd.xlane.f32.xlu0 %v585
    %v587 = vpop.xlane.xlu0 %586
    %v588 = vsel %vm399, %v487, 0.0
    %589 = vadd.xlane.f32.xlu0 %v588
    %v590 = vpop.xlane.xlu0 %589
    %v591 = vsel %vm399, %v492, 0.0
    %592 = vadd.xlane.f32.xlu0 %v591
    %v593 = vpop.xlane.xlu0 %592
    %v594 = vsel %vm399, %v497, 0.0
    %595 = vadd.xlane.f32.xlu0 %v594
    %v596 = vpop.xlane.xlu0 %595
    %vm597 = vcmask 517120
    %v598 = vsel %vm597, %v502, 0.0
    %599 = vadd.xlane.f32.xlu0 %v598
    %v600 = vpop.xlane.xlu0 %599
    %v601 = vrcp.pop 64.0
    %v602 = vmul.f32 %v587, %v601
    %v603 = vmul.f32 %v590, %v601
    %v604 = vmul.f32 %v593, %v601
    %v605 = vmul.f32 %v596, %v601
    %v606 = vmul.f32 %v600, %v601
    %v607 = vsub.f32 %v482, %v602
    %v608 = vsub.f32 %v487, %v603
    %v609 = vsub.f32 %v492, %v604
    %v610 = vsub.f32 %v497, %v605
    %v611 = vsub.f32 %v502, %v606
    %v612 = vmul.f32 %v607, %v607
    %v613 = vmul.f32 %v608, %v608
    %v614 = vmul.f32 %v609, %v609
    %v615 = vmul.f32 %v610, %v610
    %v616 = vmul.f32 %v611, %v611
    %v617 = vsel %vm399, %v612, 0.0
    %618 = vadd.xlane.f32.xlu0 %v617
    %v619 = vpop.xlane.xlu0 %618
    %v620 = vsel %vm399, %v613, 0.0
    %621 = vadd.xlane.f32.xlu0 %v620
    %v622 = vpop.xlane.xlu0 %621
    %v623 = vsel %vm399, %v614, 0.0
    %624 = vadd.xlane.f32.xlu0 %v623
    %v625 = vpop.xlane.xlu0 %624
    %v626 = vsel %vm399, %v615, 0.0
    %627 = vadd.xlane.f32.xlu0 %v626
    %v628 = vpop.xlane.xlu0 %627
    %v629 = vsel %vm597, %v616, 0.0
    %630 = vadd.xlane.f32.xlu0 %v629
    %v631 = vpop.xlane.xlu0 %630
    %v632 = vmul.f32 %v619, %v601
    %v633 = vmul.f32 %v622, %v601
    %v634 = vmul.f32 %v625, %v601
    %v635 = vmul.f32 %v628, %v601
    %v636 = vmul.f32 %v631, %v601
    %v637 = vadd.f32 %v632, 1e-06
    %v638 = vadd.f32 %v633, 1e-06
    %v639 = vadd.f32 %v634, 1e-06
    %v640 = vadd.f32 %v635, 1e-06
    %v641 = vadd.f32 %v636, 1e-06
    %v642 = vrsqrt.pop %v637
    %v643 = vrsqrt.pop %v638
    %v644 = vrsqrt.pop %v639
    %v645 = vrsqrt.pop %v640
    %v646 = vrsqrt.pop %v641
    %v647 = vmul.f32 %v607, %v642
    %v648 = vmul.f32 %v608, %v643
    %v649 = vmul.f32 %v609, %v644
    %v650 = vmul.f32 %v610, %v645
    %v651 = vmul.f32 %v611, %v646
    %v653 = vlaneseq
    %v654 = vshrl.u32 %v653, 7
    %v655 = vsub.s32 0, %v654
    %v656 = vrot.slane %v505, %v655
    %v658 = vmul.f32 %v647, %v656
    %v659 = vmul.f32 %v648, %v656
    %v660 = vmul.f32 %v649, %v656
    %v661 = vmul.f32 %v650, %v656
    %v662 = vmul.f32 %v651, %v656
    %v664 = vlaneseq
    %v665 = vshrl.u32 %v664, 7
    %v666 = vsub.s32 0, %v665
    %v667 = vrot.slane %v506, %v666
    %v669 = vadd.f32 %v658, %v667
    %v670 = vadd.f32 %v659, %v667
    %v671 = vadd.f32 %v660, %v667
    %v672 = vadd.f32 %v661, %v667
    %v673 = vadd.f32 %v662, %v667
    %v675 = vlaneseq
    %v676 = vshrl.u32 %v675, 7
    %v677 = vsub.s32 0, %v676
    %v678 = vrot.slane %v523, %v677
    %v679 = vlaneseq
    %v680 = vshrl.u32 %v679, 7
    %v681 = vsub.s32 1, %v680
    %v682 = vrot.slane %v523, %v681
    %v686 = vsel %vm399, %v669, 0
    %v689 = vsel %vm399, %v670, 0
    %v692 = vsel %vm399, %v671, 0
    %v695 = vsel %vm399, %v672, 0
    %v698 = vsel %vm399, %v673, 0
    %700 = vmatprep.subr.mxu0 0.0
    %701 = vmatpush1.msra.mxu0 0.0
    %702 = vmatprep.subr.mxu0 0.0
    %703 = vmatpush1.msra.mxu0 0.0
    %704 = vmatprep.subr.mxu0 0.0
    %705 = vmatpush1.msra.mxu0 0.0
    %706 = vmatprep.subr.mxu0 0.0
    %707 = vmatpush1.msra.mxu0 0.0
    %708 = vmatprep.subr.mxu0 0.0
    %709 = vmatpush1.msra.mxu0 0.0
    %710 = vmatprep.subr.mxu0 0.0
    %711 = vmatpush1.msra.mxu0 0.0
    %712 = vmatprep.subr.mxu0 0.0
    %713 = vmatpush1.msra.mxu0 0.0
    %714 = vmatprep.subr.mxu0 0.0
    %715 = vmatpush1.msra.mxu0 0.0
    %716 = vmatprep.subr.mxu0 %v522
    %717 = vmatpush1.msra.mxu0 %v521
    %718 = vmatprep.subr.mxu0 %v520
    %719 = vmatpush1.msra.mxu0 %v519
    %720 = vmatprep.subr.mxu0 %v518
    %721 = vmatpush1.msra.mxu0 %v517
    %722 = vmatprep.subr.mxu0 %v516
    %723 = vmatpush1.msra.mxu0 %v515
    %724 = vmatprep.subr.mxu0 %v514
    %725 = vmatpush1.msra.mxu0 %v513
    %726 = vmatprep.subr.mxu0 %v512
    %727 = vmatpush1.msra.mxu0 %v511
    %728 = vmatprep.subr.mxu0 %v510
    %729 = vmatpush1.msra.mxu0 %v509
    %730 = vmatprep.subr.mxu0 %v508
    %731 = vmatpush1.msra.mxu0 %v507
    %732 = vmatprep.subr.mxu0 0.0
    %733 = vmatpush2.msra.mxu0 0.0
    %734 = vmatprep.subr.mxu0 0.0
    %735 = vmatpush2.msra.mxu0 0.0
    %736 = vmatprep.subr.mxu0 0.0
    %737 = vmatpush2.msra.mxu0 0.0
    %738 = vmatprep.subr.mxu0 0.0
    %739 = vmatpush2.msra.mxu0 0.0
    %740 = vmatprep.subr.mxu0 0.0
    %741 = vmatpush2.msra.mxu0 0.0
    %742 = vmatprep.subr.mxu0 0.0
    %743 = vmatpush2.msra.mxu0 0.0
    %744 = vmatprep.subr.mxu0 0.0
    %745 = vmatpush2.msra.mxu0 0.0
    %746 = vmatprep.subr.mxu0 0.0
    %747 = vmatpush2.msra.mxu0 0.0
    %748 = vmatprep.subr.mxu0 0.0
    %749 = vmatpush2.msra.mxu0 0.0
    %750 = vmatprep.subr.mxu0 0.0
    %751 = vmatpush2.msra.mxu0 0.0
    %752 = vmatprep.subr.mxu0 0.0
    %753 = vmatpush2.msra.mxu0 0.0
    %754 = vmatprep.subr.mxu0 0.0
    %755 = vmatpush2.msra.mxu0 0.0
    %756 = vmatprep.subr.mxu0 0.0
    %757 = vmatpush2.msra.mxu0 0.0
    %758 = vmatprep.subr.mxu0 0.0
    %759 = vmatpush2.msra.mxu0 0.0
    %760 = vmatprep.subr.mxu0 0.0
    %761 = vmatpush2.msra.mxu0 0.0
    %762 = vmatprep.subr.mxu0 0.0
    %763 = vmatpush2.msra.mxu0 0.0
    %764 = vmatprep.mubr.f32.mxu0 0.0
    %765 = vmatmul.mubr.f32.gmra.mxu0 %v686
    %v766 = vpop.f32.mrf.mxu0
    %v767 = vadd.f32 %v678, %v766
    %v768 = vpop.f32.mrf.mxu0
    %v769 = vadd.f32 %v682, %v768
    %770 = vmatprep.mubr.f32.mxu0 0.0
    %771 = vmatmul.mubr.f32.gmra.mxu0 %v689
    %v772 = vpop.f32.mrf.mxu0
    %v773 = vadd.f32 %v678, %v772
    %v774 = vpop.f32.mrf.mxu0
    %v775 = vadd.f32 %v682, %v774
    %776 = vmatprep.mubr.f32.mxu0 0.0
    %777 = vmatmul.mubr.f32.gmra.mxu0 %v692
    %v778 = vpop.f32.mrf.mxu0
    %v779 = vadd.f32 %v678, %v778
    %v780 = vpop.f32.mrf.mxu0
    %v781 = vadd.f32 %v682, %v780
    %782 = vmatprep.mubr.f32.mxu0 0.0
    %783 = vmatmul.mubr.f32.gmra.mxu0 %v695
    %v784 = vpop.f32.mrf.mxu0
    %v785 = vadd.f32 %v678, %v784
    %v786 = vpop.f32.mrf.mxu0
    %v787 = vadd.f32 %v682, %v786
    %788 = vmatprep.mubr.f32.mxu0 0.0
    %789 = vmatmul.mubr.f32.gmra.mxu0 %v698
    %v790 = vpop.f32.mrf.mxu0
    %v791 = vadd.f32 %v678, %v790
    %v792 = vpop.f32.mrf.mxu0
    %v793 = vadd.f32 %v682, %v792
    %794 = vdwg.mxu0
    %v795 = vmul.f32 %v767, 0.25
    %v796 = vmul.f32 %v773, 0.25
    %v797 = vmul.f32 %v779, 0.25
    %v798 = vmul.f32 %v785, 0.25
    %v799 = vmul.f32 %v791, 0.25
    %805 = vrot.lane.b32.xlu0 %v767, 64
    %v806 = vpop.permute.xlu0 %805
    %807 = vrot.lane.b32.xlu0 %v773, 64
    %v808 = vpop.permute.xlu0 %807
    %809 = vrot.lane.b32.xlu0 %v779, 64
    %v810 = vpop.permute.xlu0 %809
    %811 = vrot.lane.b32.xlu0 %v785, 64
    %v812 = vpop.permute.xlu0 %811
    %813 = vrot.lane.b32.xlu0 %v791, 64
    %v814 = vpop.permute.xlu0 %813
    %vm815 = vcmask 130048
    %v817 = vsel %vm815, %v795, 0
    %v820 = vsel %vm815, %v796, 0
    %v823 = vsel %vm815, %v797, 0
    %v826 = vsel %vm815, %v798, 0
    %v829 = vsel %vm815, %v799, 0
    %v831 = vsel %vm815, %v806, 0
    %v833 = vsel %vm815, %v808, 0
    %v835 = vsel %vm815, %v810, 0
    %v837 = vsel %vm815, %v812, 0
    %v839 = vsel %vm815, %v814, 0
    %841 = vmatprep.subr.mxu0 0.0
    %842 = vmatpush1.xpose.msra.mxu0 0.0
    %843 = vmatprep.subr.mxu0 0.0
    %844 = vmatpush1.xpose.msra.mxu0 0.0
    %845 = vmatprep.subr.mxu0 0.0
    %846 = vmatpush1.xpose.msra.mxu0 0.0
    %847 = vmatprep.subr.mxu0 0.0
    %848 = vmatpush1.xpose.msra.mxu0 0.0
    %849 = vmatprep.subr.mxu0 0.0
    %850 = vmatpush1.xpose.msra.mxu0 0.0
    %851 = vmatprep.subr.mxu0 0.0
    %852 = vmatpush1.xpose.msra.mxu0 0.0
    %853 = vmatprep.subr.mxu0 0.0
    %854 = vmatpush1.xpose.msra.mxu0 0.0
    %855 = vmatprep.subr.mxu0 0.0
    %856 = vmatpush1.xpose.msra.mxu0 0.0
    %857 = vmatprep.subr.mxu0 0.0
    %858 = vmatpush1.xpose.msra.mxu0 0.0
    %859 = vmatprep.subr.mxu0 0.0
    %860 = vmatpush1.xpose.msra.mxu0 0.0
    %861 = vmatprep.subr.mxu0 0.0
    %862 = vmatpush1.xpose.msra.mxu0 0.0
    %863 = vmatprep.subr.mxu0 0.0
    %864 = vmatpush1.xpose.msra.mxu0 %v839
    %865 = vmatprep.subr.mxu0 0.0
    %866 = vmatpush1.xpose.msra.mxu0 %v837
    %867 = vmatprep.subr.mxu0 0.0
    %868 = vmatpush1.xpose.msra.mxu0 %v835
    %869 = vmatprep.subr.mxu0 0.0
    %870 = vmatpush1.xpose.msra.mxu0 %v833
    %871 = vmatprep.subr.mxu0 0.0
    %872 = vmatpush1.xpose.msra.mxu0 %v831
    %873 = vmatprep.subr.mxu0 0.0
    %874 = vmatpush2.xpose.msra.mxu0 0.0
    %875 = vmatprep.subr.mxu0 0.0
    %876 = vmatpush2.xpose.msra.mxu0 0.0
    %877 = vmatprep.subr.mxu0 0.0
    %878 = vmatpush2.xpose.msra.mxu0 0.0
    %879 = vmatprep.subr.mxu0 0.0
    %880 = vmatpush2.xpose.msra.mxu0 0.0
    %881 = vmatprep.subr.mxu0 0.0
    %882 = vmatpush2.xpose.msra.mxu0 0.0
    %883 = vmatprep.subr.mxu0 0.0
    %884 = vmatpush2.xpose.msra.mxu0 0.0
    %885 = vmatprep.subr.mxu0 0.0
    %886 = vmatpush2.xpose.msra.mxu0 0.0
    %887 = vmatprep.subr.mxu0 0.0
    %888 = vmatpush2.xpose.msra.mxu0 0.0
    %889 = vmatprep.subr.mxu0 0.0
    %890 = vmatpush2.xpose.msra.mxu0 0.0
    %891 = vmatprep.subr.mxu0 0.0
    %892 = vmatpush2.xpose.msra.mxu0 0.0
    %893 = vmatprep.subr.mxu0 0.0
    %894 = vmatpush2.xpose.msra.mxu0 0.0
    %895 = vmatprep.subr.mxu0 0.0
    %896 = vmatpush2.xpose.msra.mxu0 0.0
    %897 = vmatprep.subr.mxu0 0.0
    %898 = vmatpush2.xpose.msra.mxu0 0.0
    %899 = vmatprep.subr.mxu0 0.0
    %900 = vmatpush2.xpose.msra.mxu0 0.0
    %901 = vmatprep.subr.mxu0 0.0
    %902 = vmatpush2.xpose.msra.mxu0 0.0
    %903 = vmatprep.subr.mxu0 0.0
    %904 = vmatpush2.xpose.msra.mxu0 0.0
    %905 = vmatprep.mubr.f32.mxu0 0.0
    %906 = vmatmul.mubr.f32.gmra.mxu0 %v817
    %v907 = vpop.f32.mrf.mxu0
    %v908 = vadd.f32 %v342, %v907
    %v909 = vpop.f32.mrf.mxu0
    %910 = vmatprep.mubr.f32.mxu0 0.0
    %911 = vmatmul.mubr.f32.gmra.mxu0 %v820
    %v912 = vpop.f32.mrf.mxu0
    %v913 = vadd.f32 %v343, %v912
    %v914 = vpop.f32.mrf.mxu0
    %915 = vmatprep.mubr.f32.mxu0 0.0
    %916 = vmatmul.mubr.f32.gmra.mxu0 %v823
    %v917 = vpop.f32.mrf.mxu0
    %v918 = vadd.f32 %v344, %v917
    %v919 = vpop.f32.mrf.mxu0
    %920 = vmatprep.mubr.f32.mxu0 0.0
    %921 = vmatmul.mubr.f32.gmra.mxu0 %v826
    %v922 = vpop.f32.mrf.mxu0
    %v923 = vadd.f32 %v345, %v922
    %v924 = vpop.f32.mrf.mxu0
    %925 = vmatprep.mubr.f32.mxu0 0.0
    %926 = vmatmul.mubr.f32.gmra.mxu0 %v829
    %v927 = vpop.f32.mrf.mxu0
    %v928 = vadd.f32 %v346, %v927
    %v929 = vpop.f32.mrf.mxu0
    %930 = vdwg.mxu0
    %vm931 = vcmask 277504
    %v932 = vsel %vm931, %v908, -inf
    %933 = vmax.xlane.f32.xlu0 %v932
    %v934 = vpop.xlane.xlu0 %933
    %v935 = vsel %vm931, %v913, -inf
    %936 = vmax.xlane.f32.xlu0 %v935
    %v937 = vpop.xlane.xlu0 %936
    %v938 = vsel %vm931, %v918, -inf
    %939 = vmax.xlane.f32.xlu0 %v938
    %v940 = vpop.xlane.xlu0 %939
    %v941 = vsel %vm931, %v923, -inf
    %942 = vmax.xlane.f32.xlu0 %v941
    %v943 = vpop.xlane.xlu0 %942
    %vm944 = vcmask 271360
    %v945 = vsel %vm944, %v928, -inf
    %946 = vmax.xlane.f32.xlu0 %v945
    %v947 = vpop.xlane.xlu0 %946
    %v948 = vsub.f32 %v908, %v934
    %v949 = vsub.f32 %v913, %v937
    %v950 = vsub.f32 %v918, %v940
    %v951 = vsub.f32 %v923, %v943
    %v952 = vsub.f32 %v928, %v947
    %v953 = vmul.f32 %v948, 1.442695
    %v954 = vpow.pop %v953
    %v955 = vmul.f32 %v949, 1.442695
    %v956 = vpow.pop %v955
    %v957 = vmul.f32 %v950, 1.442695
    %v958 = vpow.pop %v957
    %v959 = vmul.f32 %v951, 1.442695
    %v960 = vpow.pop %v959
    %v961 = vmul.f32 %v952, 1.442695
    %v962 = vpow.pop %v961
    %v963 = vsel %vm931, %v954, 0.0
    %964 = vadd.xlane.f32.xlu0 %v963
    %v965 = vpop.xlane.xlu0 %964
    %v966 = vsel %vm931, %v956, 0.0
    %967 = vadd.xlane.f32.xlu0 %v966
    %v968 = vpop.xlane.xlu0 %967
    %v969 = vsel %vm931, %v958, 0.0
    %970 = vadd.xlane.f32.xlu0 %v969
    %v971 = vpop.xlane.xlu0 %970
    %v972 = vsel %vm931, %v960, 0.0
    %973 = vadd.xlane.f32.xlu0 %v972
    %v974 = vpop.xlane.xlu0 %973
    %v975 = vsel %vm944, %v962, 0.0
    %976 = vadd.xlane.f32.xlu0 %v975
    %v977 = vpop.xlane.xlu0 %976
    %v978 = vrcp.pop %v965
    %v979 = vmul.f32 %v954, %v978
    %v980 = vrcp.pop %v968
    %v981 = vmul.f32 %v956, %v980
    %v982 = vrcp.pop %v971
    %v983 = vmul.f32 %v958, %v982
    %v984 = vrcp.pop %v974
    %v985 = vmul.f32 %v960, %v984
    %v986 = vrcp.pop %v977
    %v987 = vmul.f32 %v962, %v986
    %v989 = vsel %vm931, %v979, 0
    %v992 = vsel %vm931, %v981, 0
    %v995 = vsel %vm931, %v983, 0
    %v998 = vsel %vm931, %v985, 0
    %v1001 = vsel %vm931, %v987, 0
    %vm1003 = vcmask 1041408
    %v1005 = vsel %vm1003, %v793, 0
    %1007 = vmatprep.subr.mxu0 0.0
    %1008 = vmatpush1.msra.mxu0 0.0
    %1009 = vmatprep.subr.mxu0 0.0
    %1010 = vmatpush1.msra.mxu0 0.0
    %1011 = vmatprep.subr.mxu0 0.0
    %1012 = vmatpush1.msra.mxu0 0.0
    %1013 = vmatprep.subr.mxu0 0.0
    %1014 = vmatpush1.msra.mxu0 0.0
    %1015 = vmatprep.subr.mxu0 0.0
    %1016 = vmatpush1.msra.mxu0 0.0
    %1017 = vmatprep.subr.mxu0 0.0
    %1018 = vmatpush1.msra.mxu0 0.0
    %1019 = vmatprep.subr.mxu0 0.0
    %1020 = vmatpush1.msra.mxu0 0.0
    %1021 = vmatprep.subr.mxu0 0.0
    %1022 = vmatpush1.msra.mxu0 0.0
    %1023 = vmatprep.subr.mxu0 0.0
    %1024 = vmatpush1.msra.mxu0 0.0
    %1025 = vmatprep.subr.mxu0 0.0
    %1026 = vmatpush1.msra.mxu0 0.0
    %1027 = vmatprep.subr.mxu0 0.0
    %1028 = vmatpush1.msra.mxu0 0.0
    %1029 = vmatprep.subr.mxu0 0.0
    %1030 = vmatpush1.msra.mxu0 %v1005
    %1031 = vmatprep.subr.mxu0 0.0
    %1032 = vmatpush1.msra.mxu0 %v787
    %1033 = vmatprep.subr.mxu0 0.0
    %1034 = vmatpush1.msra.mxu0 %v781
    %1035 = vmatprep.subr.mxu0 0.0
    %1036 = vmatpush1.msra.mxu0 %v775
    %1037 = vmatprep.subr.mxu0 0.0
    %1038 = vmatpush1.msra.mxu0 %v769
    %1039 = vmatprep.subr.mxu0 0.0
    %1040 = vmatpush2.msra.mxu0 0.0
    %1041 = vmatprep.subr.mxu0 0.0
    %1042 = vmatpush2.msra.mxu0 0.0
    %1043 = vmatprep.subr.mxu0 0.0
    %1044 = vmatpush2.msra.mxu0 0.0
    %1045 = vmatprep.subr.mxu0 0.0
    %1046 = vmatpush2.msra.mxu0 0.0
    %1047 = vmatprep.subr.mxu0 0.0
    %1048 = vmatpush2.msra.mxu0 0.0
    %1049 = vmatprep.subr.mxu0 0.0
    %1050 = vmatpush2.msra.mxu0 0.0
    %1051 = vmatprep.subr.mxu0 0.0
    %1052 = vmatpush2.msra.mxu0 0.0
    %1053 = vmatprep.subr.mxu0 0.0
    %1054 = vmatpush2.msra.mxu0 0.0
    %1055 = vmatprep.subr.mxu0 0.0
    %1056 = vmatpush2.msra.mxu0 0.0
    %1057 = vmatprep.subr.mxu0 0.0
    %1058 = vmatpush2.msra.mxu0 0.0
    %1059 = vmatprep.subr.mxu0 0.0
    %1060 = vmatpush2.msra.mxu0 0.0
    %1061 = vmatprep.subr.mxu0 0.0
    %1062 = vmatpush2.msra.mxu0 0.0
    %1063 = vmatprep.subr.mxu0 0.0
    %1064 = vmatpush2.msra.mxu0 0.0
    %1065 = vmatprep.subr.mxu0 0.0
    %1066 = vmatpush2.msra.mxu0 0.0
    %1067 = vmatprep.subr.mxu0 0.0
    %1068 = vmatpush2.msra.mxu0 0.0
    %1069 = vmatprep.subr.mxu0 0.0
    %1070 = vmatpush2.msra.mxu0 0.0
    %1071 = vmatprep.mubr.f32.mxu0 0.0
    %1072 = vmatmul.mubr.f32.gmra.mxu0 %v989
    %v1073 = vpop.f32.mrf.mxu0
    %v1074 = vadd.f32 0.0, %v1073
    %v1075 = vpop.f32.mrf.mxu0
    %1076 = vmatprep.mubr.f32.mxu0 0.0
    %1077 = vmatmul.mubr.f32.gmra.mxu0 %v992
    %v1078 = vpop.f32.mrf.mxu0
    %v1079 = vadd.f32 0.0, %v1078
    %v1080 = vpop.f32.mrf.mxu0
    %1081 = vmatprep.mubr.f32.mxu0 0.0
    %1082 = vmatmul.mubr.f32.gmra.mxu0 %v995
    %v1083 = vpop.f32.mrf.mxu0
    %v1084 = vadd.f32 0.0, %v1083
    %v1085 = vpop.f32.mrf.mxu0
    %1086 = vmatprep.mubr.f32.mxu0 0.0
    %1087 = vmatmul.mubr.f32.gmra.mxu0 %v998
    %v1088 = vpop.f32.mrf.mxu0
    %v1089 = vadd.f32 0.0, %v1088
    %v1090 = vpop.f32.mrf.mxu0
    %1091 = vmatprep.mubr.f32.mxu0 0.0
    %1092 = vmatmul.mubr.f32.gmra.mxu0 %v1001
    %v1093 = vpop.f32.mrf.mxu0
    %v1094 = vadd.f32 0.0, %v1093
    %v1095 = vpop.f32.mrf.mxu0
    %1096 = vdwg.mxu0
    %1097 = vrot.lane.b32.xlu0 %v795, 112
    %v1098 = vpop.permute.xlu0 %1097
    %1099 = vrot.lane.b32.xlu0 %v796, 112
    %v1100 = vpop.permute.xlu0 %1099
    %1101 = vrot.lane.b32.xlu0 %v797, 112
    %v1102 = vpop.permute.xlu0 %1101
    %1103 = vrot.lane.b32.xlu0 %v798, 112
    %v1104 = vpop.permute.xlu0 %1103
    %1105 = vrot.lane.b32.xlu0 %v799, 112
    %v1106 = vpop.permute.xlu0 %1105
    %1107 = vrot.lane.b32.xlu0 %v767, 48
    %v1108 = vpop.permute.xlu0 %1107
    %1109 = vrot.lane.b32.xlu0 %v773, 48
    %v1110 = vpop.permute.xlu0 %1109
    %1111 = vrot.lane.b32.xlu0 %v779, 48
    %v1112 = vpop.permute.xlu0 %1111
    %1113 = vrot.lane.b32.xlu0 %v785, 48
    %v1114 = vpop.permute.xlu0 %1113
    %1115 = vrot.lane.b32.xlu0 %v791, 48
    %v1116 = vpop.permute.xlu0 %1115
    %v1117 = vsel %vm815, %v1098, 0
    %v1119 = vsel %vm815, %v1100, 0
    %v1121 = vsel %vm815, %v1102, 0
    %v1123 = vsel %vm815, %v1104, 0
    %v1125 = vsel %vm815, %v1106, 0
    %v1127 = vsel %vm815, %v1108, 0
    %v1129 = vsel %vm815, %v1110, 0
    %v1131 = vsel %vm815, %v1112, 0
    %v1133 = vsel %vm815, %v1114, 0
    %v1135 = vsel %vm815, %v1116, 0
    %1137 = vmatprep.subr.mxu0 0.0
    %1138 = vmatpush1.xpose.msra.mxu0 0.0
    %1139 = vmatprep.subr.mxu0 0.0
    %1140 = vmatpush1.xpose.msra.mxu0 0.0
    %1141 = vmatprep.subr.mxu0 0.0
    %1142 = vmatpush1.xpose.msra.mxu0 0.0
    %1143 = vmatprep.subr.mxu0 0.0
    %1144 = vmatpush1.xpose.msra.mxu0 0.0
    %1145 = vmatprep.subr.mxu0 0.0
    %1146 = vmatpush1.xpose.msra.mxu0 0.0
    %1147 = vmatprep.subr.mxu0 0.0
    %1148 = vmatpush1.xpose.msra.mxu0 0.0
    %1149 = vmatprep.subr.mxu0 0.0
    %1150 = vmatpush1.xpose.msra.mxu0 0.0
    %1151 = vmatprep.subr.mxu0 0.0
    %1152 = vmatpush1.xpose.msra.mxu0 0.0
    %1153 = vmatprep.subr.mxu0 0.0
    %1154 = vmatpush1.xpose.msra.mxu0 0.0
    %1155 = vmatprep.subr.mxu0 0.0
    %1156 = vmatpush1.xpose.msra.mxu0 0.0
    %1157 = vmatprep.subr.mxu0 0.0
    %1158 = vmatpush1.xpose.msra.mxu0 0.0
    %1159 = vmatprep.subr.mxu0 0.0
    %1160 = vmatpush1.xpose.msra.mxu0 %v1135
    %1161 = vmatprep.subr.mxu0 0.0
    %1162 = vmatpush1.xpose.msra.mxu0 %v1133
    %1163 = vmatprep.subr.mxu0 0.0
    %1164 = vmatpush1.xpose.msra.mxu0 %v1131
    %1165 = vmatprep.subr.mxu0 0.0
    %1166 = vmatpush1.xpose.msra.mxu0 %v1129
    %1167 = vmatprep.subr.mxu0 0.0
    %1168 = vmatpush1.xpose.msra.mxu0 %v1127
    %1169 = vmatprep.subr.mxu0 0.0
    %1170 = vmatpush2.xpose.msra.mxu0 0.0
    %1171 = vmatprep.subr.mxu0 0.0
    %1172 = vmatpush2.xpose.msra.mxu0 0.0
    %1173 = vmatprep.subr.mxu0 0.0
    %1174 = vmatpush2.xpose.msra.mxu0 0.0
    %1175 = vmatprep.subr.mxu0 0.0
    %1176 = vmatpush2.xpose.msra.mxu0 0.0
    %1177 = vmatprep.subr.mxu0 0.0
    %1178 = vmatpush2.xpose.msra.mxu0 0.0
    %1179 = vmatprep.subr.mxu0 0.0
    %1180 = vmatpush2.xpose.msra.mxu0 0.0
    %1181 = vmatprep.subr.mxu0 0.0
    %1182 = vmatpush2.xpose.msra.mxu0 0.0
    %1183 = vmatprep.subr.mxu0 0.0
    %1184 = vmatpush2.xpose.msra.mxu0 0.0
    %1185 = vmatprep.subr.mxu0 0.0
    %1186 = vmatpush2.xpose.msra.mxu0 0.0
    %1187 = vmatprep.subr.mxu0 0.0
    %1188 = vmatpush2.xpose.msra.mxu0 0.0
    %1189 = vmatprep.subr.mxu0 0.0
    %1190 = vmatpush2.xpose.msra.mxu0 0.0
    %1191 = vmatprep.subr.mxu0 0.0
    %1192 = vmatpush2.xpose.msra.mxu0 0.0
    %1193 = vmatprep.subr.mxu0 0.0
    %1194 = vmatpush2.xpose.msra.mxu0 0.0
    %1195 = vmatprep.subr.mxu0 0.0
    %1196 = vmatpush2.xpose.msra.mxu0 0.0
    %1197 = vmatprep.subr.mxu0 0.0
    %1198 = vmatpush2.xpose.msra.mxu0 0.0
    %1199 = vmatprep.subr.mxu0 0.0
    %1200 = vmatpush2.xpose.msra.mxu0 0.0
    %1201 = vmatprep.mubr.f32.mxu0 0.0
    %1202 = vmatmul.mubr.f32.gmra.mxu0 %v1117
    %v1203 = vpop.f32.mrf.mxu0
    %v1204 = vadd.f32 %v342, %v1203
    %v1205 = vpop.f32.mrf.mxu0
    %1206 = vmatprep.mubr.f32.mxu0 0.0
    %1207 = vmatmul.mubr.f32.gmra.mxu0 %v1119
    %v1208 = vpop.f32.mrf.mxu0
    %v1209 = vadd.f32 %v343, %v1208
    %v1210 = vpop.f32.mrf.mxu0
    %1211 = vmatprep.mubr.f32.mxu0 0.0
    %1212 = vmatmul.mubr.f32.gmra.mxu0 %v1121
    %v1213 = vpop.f32.mrf.mxu0
    %v1214 = vadd.f32 %v344, %v1213
    %v1215 = vpop.f32.mrf.mxu0
    %1216 = vmatprep.mubr.f32.mxu0 0.0
    %1217 = vmatmul.mubr.f32.gmra.mxu0 %v1123
    %v1218 = vpop.f32.mrf.mxu0
    %v1219 = vadd.f32 %v345, %v1218
    %v1220 = vpop.f32.mrf.mxu0
    %1221 = vmatprep.mubr.f32.mxu0 0.0
    %1222 = vmatmul.mubr.f32.gmra.mxu0 %v1125
    %v1223 = vpop.f32.mrf.mxu0
    %v1224 = vadd.f32 %v346, %v1223
    %v1225 = vpop.f32.mrf.mxu0
    %1226 = vdwg.mxu0
    %v1227 = vsel %vm931, %v1204, -inf
    %1228 = vmax.xlane.f32.xlu0 %v1227
    %v1229 = vpop.xlane.xlu0 %1228
    %v1230 = vsel %vm931, %v1209, -inf
    %1231 = vmax.xlane.f32.xlu0 %v1230
    %v1232 = vpop.xlane.xlu0 %1231
    %v1233 = vsel %vm931, %v1214, -inf
    %1234 = vmax.xlane.f32.xlu0 %v1233
    %v1235 = vpop.xlane.xlu0 %1234
    %v1236 = vsel %vm931, %v1219, -inf
    %1237 = vmax.xlane.f32.xlu0 %v1236
    %v1238 = vpop.xlane.xlu0 %1237
    %v1239 = vsel %vm944, %v1224, -inf
    %1240 = vmax.xlane.f32.xlu0 %v1239
    %v1241 = vpop.xlane.xlu0 %1240
    %v1242 = vsub.f32 %v1204, %v1229
    %v1243 = vsub.f32 %v1209, %v1232
    %v1244 = vsub.f32 %v1214, %v1235
    %v1245 = vsub.f32 %v1219, %v1238
    %v1246 = vsub.f32 %v1224, %v1241
    %v1247 = vmul.f32 %v1242, 1.442695
    %v1248 = vpow.pop %v1247
    %v1249 = vmul.f32 %v1243, 1.442695
    %v1250 = vpow.pop %v1249
    %v1251 = vmul.f32 %v1244, 1.442695
    %v1252 = vpow.pop %v1251
    %v1253 = vmul.f32 %v1245, 1.442695
    %v1254 = vpow.pop %v1253
    %v1255 = vmul.f32 %v1246, 1.442695
    %v1256 = vpow.pop %v1255
    %v1257 = vsel %vm931, %v1248, 0.0
    %1258 = vadd.xlane.f32.xlu0 %v1257
    %v1259 = vpop.xlane.xlu0 %1258
    %v1260 = vsel %vm931, %v1250, 0.0
    %1261 = vadd.xlane.f32.xlu0 %v1260
    %v1262 = vpop.xlane.xlu0 %1261
    %v1263 = vsel %vm931, %v1252, 0.0
    %1264 = vadd.xlane.f32.xlu0 %v1263
    %v1265 = vpop.xlane.xlu0 %1264
    %v1266 = vsel %vm931, %v1254, 0.0
    %1267 = vadd.xlane.f32.xlu0 %v1266
    %v1268 = vpop.xlane.xlu0 %1267
    %v1269 = vsel %vm944, %v1256, 0.0
    %1270 = vadd.xlane.f32.xlu0 %v1269
    %v1271 = vpop.xlane.xlu0 %1270
    %v1272 = vrcp.pop %v1259
    %v1273 = vmul.f32 %v1248, %v1272
    %v1274 = vrcp.pop %v1262
    %v1275 = vmul.f32 %v1250, %v1274
    %v1276 = vrcp.pop %v1265
    %v1277 = vmul.f32 %v1252, %v1276
    %v1278 = vrcp.pop %v1268
    %v1279 = vmul.f32 %v1254, %v1278
    %v1280 = vrcp.pop %v1271
    %v1281 = vmul.f32 %v1256, %v1280
    %1286 = vrot.lane.b32.xlu0 %v769, 112
    %v1287 = vpop.permute.xlu0 %1286
    %1288 = vrot.lane.b32.xlu0 %v775, 112
    %v1289 = vpop.permute.xlu0 %1288
    %1290 = vrot.lane.b32.xlu0 %v781, 112
    %v1291 = vpop.permute.xlu0 %1290
    %1292 = vrot.lane.b32.xlu0 %v787, 112
    %v1293 = vpop.permute.xlu0 %1292
    %1294 = vrot.lane.b32.xlu0 %v793, 112
    %v1295 = vpop.permute.xlu0 %1294
    %v1301 = vsel %vm931, %v1273, 0
    %v1304 = vsel %vm931, %v1275, 0
    %v1307 = vsel %vm931, %v1277, 0
    %v1310 = vsel %vm931, %v1279, 0
    %v1313 = vsel %vm931, %v1281, 0
    %v1315 = vsel %vm1003, %v1295, 0
    %1317 = vmatprep.subr.mxu0 0.0
    %1318 = vmatpush1.msra.mxu0 0.0
    %1319 = vmatprep.subr.mxu0 0.0
    %1320 = vmatpush1.msra.mxu0 0.0
    %1321 = vmatprep.subr.mxu0 0.0
    %1322 = vmatpush1.msra.mxu0 0.0
    %1323 = vmatprep.subr.mxu0 0.0
    %1324 = vmatpush1.msra.mxu0 0.0
    %1325 = vmatprep.subr.mxu0 0.0
    %1326 = vmatpush1.msra.mxu0 0.0
    %1327 = vmatprep.subr.mxu0 0.0
    %1328 = vmatpush1.msra.mxu0 0.0
    %1329 = vmatprep.subr.mxu0 0.0
    %1330 = vmatpush1.msra.mxu0 0.0
    %1331 = vmatprep.subr.mxu0 0.0
    %1332 = vmatpush1.msra.mxu0 0.0
    %1333 = vmatprep.subr.mxu0 0.0
    %1334 = vmatpush1.msra.mxu0 0.0
    %1335 = vmatprep.subr.mxu0 0.0
    %1336 = vmatpush1.msra.mxu0 0.0
    %1337 = vmatprep.subr.mxu0 0.0
    %1338 = vmatpush1.msra.mxu0 0.0
    %1339 = vmatprep.subr.mxu0 0.0
    %1340 = vmatpush1.msra.mxu0 %v1315
    %1341 = vmatprep.subr.mxu0 0.0
    %1342 = vmatpush1.msra.mxu0 %v1293
    %1343 = vmatprep.subr.mxu0 0.0
    %1344 = vmatpush1.msra.mxu0 %v1291
    %1345 = vmatprep.subr.mxu0 0.0
    %1346 = vmatpush1.msra.mxu0 %v1289
    %1347 = vmatprep.subr.mxu0 0.0
    %1348 = vmatpush1.msra.mxu0 %v1287
    %1349 = vmatprep.subr.mxu0 0.0
    %1350 = vmatpush2.msra.mxu0 0.0
    %1351 = vmatprep.subr.mxu0 0.0
    %1352 = vmatpush2.msra.mxu0 0.0
    %1353 = vmatprep.subr.mxu0 0.0
    %1354 = vmatpush2.msra.mxu0 0.0
    %1355 = vmatprep.subr.mxu0 0.0
    %1356 = vmatpush2.msra.mxu0 0.0
    %1357 = vmatprep.subr.mxu0 0.0
    %1358 = vmatpush2.msra.mxu0 0.0
    %1359 = vmatprep.subr.mxu0 0.0
    %1360 = vmatpush2.msra.mxu0 0.0
    %1361 = vmatprep.subr.mxu0 0.0
    %1362 = vmatpush2.msra.mxu0 0.0
    %1363 = vmatprep.subr.mxu0 0.0
    %1364 = vmatpush2.msra.mxu0 0.0
    %1365 = vmatprep.subr.mxu0 0.0
    %1366 = vmatpush2.msra.mxu0 0.0
    %1367 = vmatprep.subr.mxu0 0.0
    %1368 = vmatpush2.msra.mxu0 0.0
    %1369 = vmatprep.subr.mxu0 0.0
    %1370 = vmatpush2.msra.mxu0 0.0
    %1371 = vmatprep.subr.mxu0 0.0
    %1372 = vmatpush2.msra.mxu0 0.0
    %1373 = vmatprep.subr.mxu0 0.0
    %1374 = vmatpush2.msra.mxu0 0.0
    %1375 = vmatprep.subr.mxu0 0.0
    %1376 = vmatpush2.msra.mxu0 0.0
    %1377 = vmatprep.subr.mxu0 0.0
    %1378 = vmatpush2.msra.mxu0 0.0
    %1379 = vmatprep.subr.mxu0 0.0
    %1380 = vmatpush2.msra.mxu0 0.0
    %1381 = vmatprep.mubr.f32.mxu0 0.0
    %1382 = vmatmul.mubr.f32.gmra.mxu0 %v1301
    %v1383 = vpop.f32.mrf.mxu0
    %v1384 = vadd.f32 0.0, %v1383
    %v1385 = vpop.f32.mrf.mxu0
    %1386 = vmatprep.mubr.f32.mxu0 0.0
    %1387 = vmatmul.mubr.f32.gmra.mxu0 %v1304
    %v1388 = vpop.f32.mrf.mxu0
    %v1389 = vadd.f32 0.0, %v1388
    %v1390 = vpop.f32.mrf.mxu0
    %1391 = vmatprep.mubr.f32.mxu0 0.0
    %1392 = vmatmul.mubr.f32.gmra.mxu0 %v1307
    %v1393 = vpop.f32.mrf.mxu0
    %v1394 = vadd.f32 0.0, %v1393
    %v1395 = vpop.f32.mrf.mxu0
    %1396 = vmatprep.mubr.f32.mxu0 0.0
    %1397 = vmatmul.mubr.f32.gmra.mxu0 %v1310
    %v1398 = vpop.f32.mrf.mxu0
    %v1399 = vadd.f32 0.0, %v1398
    %v1400 = vpop.f32.mrf.mxu0
    %1401 = vmatprep.mubr.f32.mxu0 0.0
    %1402 = vmatmul.mubr.f32.gmra.mxu0 %v1313
    %v1403 = vpop.f32.mrf.mxu0
    %v1404 = vadd.f32 0.0, %v1403
    %v1405 = vpop.f32.mrf.mxu0
    %1406 = vdwg.mxu0
    %1407 = vrot.lane.b32.xlu0 %v795, 96
    %v1408 = vpop.permute.xlu0 %1407
    %1409 = vrot.lane.b32.xlu0 %v796, 96
    %v1410 = vpop.permute.xlu0 %1409
    %1411 = vrot.lane.b32.xlu0 %v797, 96
    %v1412 = vpop.permute.xlu0 %1411
    %1413 = vrot.lane.b32.xlu0 %v798, 96
    %v1414 = vpop.permute.xlu0 %1413
    %1415 = vrot.lane.b32.xlu0 %v799, 96
    %v1416 = vpop.permute.xlu0 %1415
    %1417 = vrot.lane.b32.xlu0 %v767, 32
    %v1418 = vpop.permute.xlu0 %1417
    %1419 = vrot.lane.b32.xlu0 %v773, 32
    %v1420 = vpop.permute.xlu0 %1419
    %1421 = vrot.lane.b32.xlu0 %v779, 32
    %v1422 = vpop.permute.xlu0 %1421
    %1423 = vrot.lane.b32.xlu0 %v785, 32
    %v1424 = vpop.permute.xlu0 %1423
    %1425 = vrot.lane.b32.xlu0 %v791, 32
    %v1426 = vpop.permute.xlu0 %1425
    %v1427 = vsel %vm815, %v1408, 0
    %v1429 = vsel %vm815, %v1410, 0
    %v1431 = vsel %vm815, %v1412, 0
    %v1433 = vsel %vm815, %v1414, 0
    %v1435 = vsel %vm815, %v1416, 0
    %v1437 = vsel %vm815, %v1418, 0
    %v1439 = vsel %vm815, %v1420, 0
    %v1441 = vsel %vm815, %v1422, 0
    %v1443 = vsel %vm815, %v1424, 0
    %v1445 = vsel %vm815, %v1426, 0
    %1447 = vmatprep.subr.mxu0 0.0
    %1448 = vmatpush1.xpose.msra.mxu0 0.0
    %1449 = vmatprep.subr.mxu0 0.0
    %1450 = vmatpush1.xpose.msra.mxu0 0.0
    %1451 = vmatprep.subr.mxu0 0.0
    %1452 = vmatpush1.xpose.msra.mxu0 0.0
    %1453 = vmatprep.subr.mxu0 0.0
    %1454 = vmatpush1.xpose.msra.mxu0 0.0
    %1455 = vmatprep.subr.mxu0 0.0
    %1456 = vmatpush1.xpose.msra.mxu0 0.0
    %1457 = vmatprep.subr.mxu0 0.0
    %1458 = vmatpush1.xpose.msra.mxu0 0.0
    %1459 = vmatprep.subr.mxu0 0.0
    %1460 = vmatpush1.xpose.msra.mxu0 0.0
    %1461 = vmatprep.subr.mxu0 0.0
    %1462 = vmatpush1.xpose.msra.mxu0 0.0
    %1463 = vmatprep.subr.mxu0 0.0
    %1464 = vmatpush1.xpose.msra.mxu0 0.0
    %1465 = vmatprep.subr.mxu0 0.0
    %1466 = vmatpush1.xpose.msra.mxu0 0.0
    %1467 = vmatprep.subr.mxu0 0.0
    %1468 = vmatpush1.xpose.msra.mxu0 0.0
    %1469 = vmatprep.subr.mxu0 0.0
    %1470 = vmatpush1.xpose.msra.mxu0 %v1445
    %1471 = vmatprep.subr.mxu0 0.0
    %1472 = vmatpush1.xpose.msra.mxu0 %v1443
    %1473 = vmatprep.subr.mxu0 0.0
    %1474 = vmatpush1.xpose.msra.mxu0 %v1441
    %1475 = vmatprep.subr.mxu0 0.0
    %1476 = vmatpush1.xpose.msra.mxu0 %v1439
    %1477 = vmatprep.subr.mxu0 0.0
    %1478 = vmatpush1.xpose.msra.mxu0 %v1437
    %1479 = vmatprep.subr.mxu0 0.0
    %1480 = vmatpush2.xpose.msra.mxu0 0.0
    %1481 = vmatprep.subr.mxu0 0.0
    %1482 = vmatpush2.xpose.msra.mxu0 0.0
    %1483 = vmatprep.subr.mxu0 0.0
    %1484 = vmatpush2.xpose.msra.mxu0 0.0
    %1485 = vmatprep.subr.mxu0 0.0
    %1486 = vmatpush2.xpose.msra.mxu0 0.0
    %1487 = vmatprep.subr.mxu0 0.0
    %1488 = vmatpush2.xpose.msra.mxu0 0.0
    %1489 = vmatprep.subr.mxu0 0.0
    %1490 = vmatpush2.xpose.msra.mxu0 0.0
    %1491 = vmatprep.subr.mxu0 0.0
    %1492 = vmatpush2.xpose.msra.mxu0 0.0
    %1493 = vmatprep.subr.mxu0 0.0
    %1494 = vmatpush2.xpose.msra.mxu0 0.0
    %1495 = vmatprep.subr.mxu0 0.0
    %1496 = vmatpush2.xpose.msra.mxu0 0.0
    %1497 = vmatprep.subr.mxu0 0.0
    %1498 = vmatpush2.xpose.msra.mxu0 0.0
    %1499 = vmatprep.subr.mxu0 0.0
    %1500 = vmatpush2.xpose.msra.mxu0 0.0
    %1501 = vmatprep.subr.mxu0 0.0
    %1502 = vmatpush2.xpose.msra.mxu0 0.0
    %1503 = vmatprep.subr.mxu0 0.0
    %1504 = vmatpush2.xpose.msra.mxu0 0.0
    %1505 = vmatprep.subr.mxu0 0.0
    %1506 = vmatpush2.xpose.msra.mxu0 0.0
    %1507 = vmatprep.subr.mxu0 0.0
    %1508 = vmatpush2.xpose.msra.mxu0 0.0
    %1509 = vmatprep.subr.mxu0 0.0
    %1510 = vmatpush2.xpose.msra.mxu0 0.0
    %1511 = vmatprep.mubr.f32.mxu0 0.0
    %1512 = vmatmul.mubr.f32.gmra.mxu0 %v1427
    %v1513 = vpop.f32.mrf.mxu0
    %v1514 = vadd.f32 %v342, %v1513
    %v1515 = vpop.f32.mrf.mxu0
    %1516 = vmatprep.mubr.f32.mxu0 0.0
    %1517 = vmatmul.mubr.f32.gmra.mxu0 %v1429
    %v1518 = vpop.f32.mrf.mxu0
    %v1519 = vadd.f32 %v343, %v1518
    %v1520 = vpop.f32.mrf.mxu0
    %1521 = vmatprep.mubr.f32.mxu0 0.0
    %1522 = vmatmul.mubr.f32.gmra.mxu0 %v1431
    %v1523 = vpop.f32.mrf.mxu0
    %v1524 = vadd.f32 %v344, %v1523
    %v1525 = vpop.f32.mrf.mxu0
    %1526 = vmatprep.mubr.f32.mxu0 0.0
    %1527 = vmatmul.mubr.f32.gmra.mxu0 %v1433
    %v1528 = vpop.f32.mrf.mxu0
    %v1529 = vadd.f32 %v345, %v1528
    %v1530 = vpop.f32.mrf.mxu0
    %1531 = vmatprep.mubr.f32.mxu0 0.0
    %1532 = vmatmul.mubr.f32.gmra.mxu0 %v1435
    %v1533 = vpop.f32.mrf.mxu0
    %v1534 = vadd.f32 %v346, %v1533
    %v1535 = vpop.f32.mrf.mxu0
    %1536 = vdwg.mxu0
    %v1537 = vsel %vm931, %v1514, -inf
    %1538 = vmax.xlane.f32.xlu0 %v1537
    %v1539 = vpop.xlane.xlu0 %1538
    %v1540 = vsel %vm931, %v1519, -inf
    %1541 = vmax.xlane.f32.xlu0 %v1540
    %v1542 = vpop.xlane.xlu0 %1541
    %v1543 = vsel %vm931, %v1524, -inf
    %1544 = vmax.xlane.f32.xlu0 %v1543
    %v1545 = vpop.xlane.xlu0 %1544
    %v1546 = vsel %vm931, %v1529, -inf
    %1547 = vmax.xlane.f32.xlu0 %v1546
    %v1548 = vpop.xlane.xlu0 %1547
    %v1549 = vsel %vm944, %v1534, -inf
    %1550 = vmax.xlane.f32.xlu0 %v1549
    %v1551 = vpop.xlane.xlu0 %1550
    %v1552 = vsub.f32 %v1514, %v1539
    %v1553 = vsub.f32 %v1519, %v1542
    %v1554 = vsub.f32 %v1524, %v1545
    %v1555 = vsub.f32 %v1529, %v1548
    %v1556 = vsub.f32 %v1534, %v1551
    %v1557 = vmul.f32 %v1552, 1.442695
    %v1558 = vpow.pop %v1557
    %v1559 = vmul.f32 %v1553, 1.442695
    %v1560 = vpow.pop %v1559
    %v1561 = vmul.f32 %v1554, 1.442695
    %v1562 = vpow.pop %v1561
    %v1563 = vmul.f32 %v1555, 1.442695
    %v1564 = vpow.pop %v1563
    %v1565 = vmul.f32 %v1556, 1.442695
    %v1566 = vpow.pop %v1565
    %v1567 = vsel %vm931, %v1558, 0.0
    %1568 = vadd.xlane.f32.xlu0 %v1567
    %v1569 = vpop.xlane.xlu0 %1568
    %v1570 = vsel %vm931, %v1560, 0.0
    %1571 = vadd.xlane.f32.xlu0 %v1570
    %v1572 = vpop.xlane.xlu0 %1571
    %v1573 = vsel %vm931, %v1562, 0.0
    %1574 = vadd.xlane.f32.xlu0 %v1573
    %v1575 = vpop.xlane.xlu0 %1574
    %v1576 = vsel %vm931, %v1564, 0.0
    %1577 = vadd.xlane.f32.xlu0 %v1576
    %v1578 = vpop.xlane.xlu0 %1577
    %v1579 = vsel %vm944, %v1566, 0.0
    %1580 = vadd.xlane.f32.xlu0 %v1579
    %v1581 = vpop.xlane.xlu0 %1580
    %v1582 = vrcp.pop %v1569
    %v1583 = vmul.f32 %v1558, %v1582
    %v1584 = vrcp.pop %v1572
    %v1585 = vmul.f32 %v1560, %v1584
    %v1586 = vrcp.pop %v1575
    %v1587 = vmul.f32 %v1562, %v1586
    %v1588 = vrcp.pop %v1578
    %v1589 = vmul.f32 %v1564, %v1588
    %v1590 = vrcp.pop %v1581
    %v1591 = vmul.f32 %v1566, %v1590
    %1592 = vrot.lane.b32.xlu0 %v769, 96
    %v1593 = vpop.permute.xlu0 %1592
    %1594 = vrot.lane.b32.xlu0 %v775, 96
    %v1595 = vpop.permute.xlu0 %1594
    %1596 = vrot.lane.b32.xlu0 %v781, 96
    %v1597 = vpop.permute.xlu0 %1596
    %1598 = vrot.lane.b32.xlu0 %v787, 96
    %v1599 = vpop.permute.xlu0 %1598
    %1600 = vrot.lane.b32.xlu0 %v793, 96
    %v1601 = vpop.permute.xlu0 %1600
    %v1607 = vsel %vm931, %v1583, 0
    %v1610 = vsel %vm931, %v1585, 0
    %v1613 = vsel %vm931, %v1587, 0
    %v1616 = vsel %vm931, %v1589, 0
    %v1619 = vsel %vm931, %v1591, 0
    %v1621 = vsel %vm1003, %v1601, 0
    %1623 = vmatprep.subr.mxu0 0.0
    %1624 = vmatpush1.msra.mxu0 0.0
    %1625 = vmatprep.subr.mxu0 0.0
    %1626 = vmatpush1.msra.mxu0 0.0
    %1627 = vmatprep.subr.mxu0 0.0
    %1628 = vmatpush1.msra.mxu0 0.0
    %1629 = vmatprep.subr.mxu0 0.0
    %1630 = vmatpush1.msra.mxu0 0.0
    %1631 = vmatprep.subr.mxu0 0.0
    %1632 = vmatpush1.msra.mxu0 0.0
    %1633 = vmatprep.subr.mxu0 0.0
    %1634 = vmatpush1.msra.mxu0 0.0
    %1635 = vmatprep.subr.mxu0 0.0
    %1636 = vmatpush1.msra.mxu0 0.0
    %1637 = vmatprep.subr.mxu0 0.0
    %1638 = vmatpush1.msra.mxu0 0.0
    %1639 = vmatprep.subr.mxu0 0.0
    %1640 = vmatpush1.msra.mxu0 0.0
    %1641 = vmatprep.subr.mxu0 0.0
    %1642 = vmatpush1.msra.mxu0 0.0
    %1643 = vmatprep.subr.mxu0 0.0
    %1644 = vmatpush1.msra.mxu0 0.0
    %1645 = vmatprep.subr.mxu0 0.0
    %1646 = vmatpush1.msra.mxu0 %v1621
    %1647 = vmatprep.subr.mxu0 0.0
    %1648 = vmatpush1.msra.mxu0 %v1599
    %1649 = vmatprep.subr.mxu0 0.0
    %1650 = vmatpush1.msra.mxu0 %v1597
    %1651 = vmatprep.subr.mxu0 0.0
    %1652 = vmatpush1.msra.mxu0 %v1595
    %1653 = vmatprep.subr.mxu0 0.0
    %1654 = vmatpush1.msra.mxu0 %v1593
    %1655 = vmatprep.subr.mxu0 0.0
    %1656 = vmatpush2.msra.mxu0 0.0
    %1657 = vmatprep.subr.mxu0 0.0
    %1658 = vmatpush2.msra.mxu0 0.0
    %1659 = vmatprep.subr.mxu0 0.0
    %1660 = vmatpush2.msra.mxu0 0.0
    %1661 = vmatprep.subr.mxu0 0.0
    %1662 = vmatpush2.msra.mxu0 0.0
    %1663 = vmatprep.subr.mxu0 0.0
    %1664 = vmatpush2.msra.mxu0 0.0
    %1665 = vmatprep.subr.mxu0 0.0
    %1666 = vmatpush2.msra.mxu0 0.0
    %1667 = vmatprep.subr.mxu0 0.0
    %1668 = vmatpush2.msra.mxu0 0.0
    %1669 = vmatprep.subr.mxu0 0.0
    %1670 = vmatpush2.msra.mxu0 0.0
    %1671 = vmatprep.subr.mxu0 0.0
    %1672 = vmatpush2.msra.mxu0 0.0
    %1673 = vmatprep.subr.mxu0 0.0
    %1674 = vmatpush2.msra.mxu0 0.0
    %1675 = vmatprep.subr.mxu0 0.0
    %1676 = vmatpush2.msra.mxu0 0.0
    %1677 = vmatprep.subr.mxu0 0.0
    %1678 = vmatpush2.msra.mxu0 0.0
    %1679 = vmatprep.subr.mxu0 0.0
    %1680 = vmatpush2.msra.mxu0 0.0
    %1681 = vmatprep.subr.mxu0 0.0
    %1682 = vmatpush2.msra.mxu0 0.0
    %1683 = vmatprep.subr.mxu0 0.0
    %1684 = vmatpush2.msra.mxu0 0.0
    %1685 = vmatprep.subr.mxu0 0.0
    %1686 = vmatpush2.msra.mxu0 0.0
    %1687 = vmatprep.mubr.f32.mxu0 0.0
    %1688 = vmatmul.mubr.f32.gmra.mxu0 %v1607
    %v1689 = vpop.f32.mrf.mxu0
    %v1690 = vadd.f32 0.0, %v1689
    %v1691 = vpop.f32.mrf.mxu0
    %1692 = vmatprep.mubr.f32.mxu0 0.0
    %1693 = vmatmul.mubr.f32.gmra.mxu0 %v1610
    %v1694 = vpop.f32.mrf.mxu0
    %v1695 = vadd.f32 0.0, %v1694
    %v1696 = vpop.f32.mrf.mxu0
    %1697 = vmatprep.mubr.f32.mxu0 0.0
    %1698 = vmatmul.mubr.f32.gmra.mxu0 %v1613
    %v1699 = vpop.f32.mrf.mxu0
    %v1700 = vadd.f32 0.0, %v1699
    %v1701 = vpop.f32.mrf.mxu0
    %1702 = vmatprep.mubr.f32.mxu0 0.0
    %1703 = vmatmul.mubr.f32.gmra.mxu0 %v1616
    %v1704 = vpop.f32.mrf.mxu0
    %v1705 = vadd.f32 0.0, %v1704
    %v1706 = vpop.f32.mrf.mxu0
    %1707 = vmatprep.mubr.f32.mxu0 0.0
    %1708 = vmatmul.mubr.f32.gmra.mxu0 %v1619
    %v1709 = vpop.f32.mrf.mxu0
    %v1710 = vadd.f32 0.0, %v1709
    %v1711 = vpop.f32.mrf.mxu0
    %1712 = vdwg.mxu0
    %1713 = vrot.lane.b32.xlu0 %v795, 80
    %v1714 = vpop.permute.xlu0 %1713
    %1715 = vrot.lane.b32.xlu0 %v796, 80
    %v1716 = vpop.permute.xlu0 %1715
    %1717 = vrot.lane.b32.xlu0 %v797, 80
    %v1718 = vpop.permute.xlu0 %1717
    %1719 = vrot.lane.b32.xlu0 %v798, 80
    %v1720 = vpop.permute.xlu0 %1719
    %1721 = vrot.lane.b32.xlu0 %v799, 80
    %v1722 = vpop.permute.xlu0 %1721
    %1723 = vrot.lane.b32.xlu0 %v767, 16
    %v1724 = vpop.permute.xlu0 %1723
    %1725 = vrot.lane.b32.xlu0 %v773, 16
    %v1726 = vpop.permute.xlu0 %1725
    %1727 = vrot.lane.b32.xlu0 %v779, 16
    %v1728 = vpop.permute.xlu0 %1727
    %1729 = vrot.lane.b32.xlu0 %v785, 16
    %v1730 = vpop.permute.xlu0 %1729
    %1731 = vrot.lane.b32.xlu0 %v791, 16
    %v1732 = vpop.permute.xlu0 %1731
    %v1733 = vsel %vm815, %v1714, 0
    %v1735 = vsel %vm815, %v1716, 0
    %v1737 = vsel %vm815, %v1718, 0
    %v1739 = vsel %vm815, %v1720, 0
    %v1741 = vsel %vm815, %v1722, 0
    %v1743 = vsel %vm815, %v1724, 0
    %v1745 = vsel %vm815, %v1726, 0
    %v1747 = vsel %vm815, %v1728, 0
    %v1749 = vsel %vm815, %v1730, 0
    %v1751 = vsel %vm815, %v1732, 0
    %1753 = vmatprep.subr.mxu0 0.0
    %1754 = vmatpush1.xpose.msra.mxu0 0.0
    %1755 = vmatprep.subr.mxu0 0.0
    %1756 = vmatpush1.xpose.msra.mxu0 0.0
    %1757 = vmatprep.subr.mxu0 0.0
    %1758 = vmatpush1.xpose.msra.mxu0 0.0
    %1759 = vmatprep.subr.mxu0 0.0
    %1760 = vmatpush1.xpose.msra.mxu0 0.0
    %1761 = vmatprep.subr.mxu0 0.0
    %1762 = vmatpush1.xpose.msra.mxu0 0.0
    %1763 = vmatprep.subr.mxu0 0.0
    %1764 = vmatpush1.xpose.msra.mxu0 0.0
    %1765 = vmatprep.subr.mxu0 0.0
    %1766 = vmatpush1.xpose.msra.mxu0 0.0
    %1767 = vmatprep.subr.mxu0 0.0
    %1768 = vmatpush1.xpose.msra.mxu0 0.0
    %1769 = vmatprep.subr.mxu0 0.0
    %1770 = vmatpush1.xpose.msra.mxu0 0.0
    %1771 = vmatprep.subr.mxu0 0.0
    %1772 = vmatpush1.xpose.msra.mxu0 0.0
    %1773 = vmatprep.subr.mxu0 0.0
    %1774 = vmatpush1.xpose.msra.mxu0 0.0
    %1775 = vmatprep.subr.mxu0 0.0
    %1776 = vmatpush1.xpose.msra.mxu0 %v1751
    %1777 = vmatprep.subr.mxu0 0.0
    %1778 = vmatpush1.xpose.msra.mxu0 %v1749
    %1779 = vmatprep.subr.mxu0 0.0
    %1780 = vmatpush1.xpose.msra.mxu0 %v1747
    %1781 = vmatprep.subr.mxu0 0.0
    %1782 = vmatpush1.xpose.msra.mxu0 %v1745
    %1783 = vmatprep.subr.mxu0 0.0
    %1784 = vmatpush1.xpose.msra.mxu0 %v1743
    %1785 = vmatprep.subr.mxu0 0.0
    %1786 = vmatpush2.xpose.msra.mxu0 0.0
    %1787 = vmatprep.subr.mxu0 0.0
    %1788 = vmatpush2.xpose.msra.mxu0 0.0
    %1789 = vmatprep.subr.mxu0 0.0
    %1790 = vmatpush2.xpose.msra.mxu0 0.0
    %1791 = vmatprep.subr.mxu0 0.0
    %1792 = vmatpush2.xpose.msra.mxu0 0.0
    %1793 = vmatprep.subr.mxu0 0.0
    %1794 = vmatpush2.xpose.msra.mxu0 0.0
    %1795 = vmatprep.subr.mxu0 0.0
    %1796 = vmatpush2.xpose.msra.mxu0 0.0
    %1797 = vmatprep.subr.mxu0 0.0
    %1798 = vmatpush2.xpose.msra.mxu0 0.0
    %1799 = vmatprep.subr.mxu0 0.0
    %1800 = vmatpush2.xpose.msra.mxu0 0.0
    %1801 = vmatprep.subr.mxu0 0.0
    %1802 = vmatpush2.xpose.msra.mxu0 0.0
    %1803 = vmatprep.subr.mxu0 0.0
    %1804 = vmatpush2.xpose.msra.mxu0 0.0
    %1805 = vmatprep.subr.mxu0 0.0
    %1806 = vmatpush2.xpose.msra.mxu0 0.0
    %1807 = vmatprep.subr.mxu0 0.0
    %1808 = vmatpush2.xpose.msra.mxu0 0.0
    %1809 = vmatprep.subr.mxu0 0.0
    %1810 = vmatpush2.xpose.msra.mxu0 0.0
    %1811 = vmatprep.subr.mxu0 0.0
    %1812 = vmatpush2.xpose.msra.mxu0 0.0
    %1813 = vmatprep.subr.mxu0 0.0
    %1814 = vmatpush2.xpose.msra.mxu0 0.0
    %1815 = vmatprep.subr.mxu0 0.0
    %1816 = vmatpush2.xpose.msra.mxu0 0.0
    %1817 = vmatprep.mubr.f32.mxu0 0.0
    %1818 = vmatmul.mubr.f32.gmra.mxu0 %v1733
    %v1819 = vpop.f32.mrf.mxu0
    %v1820 = vadd.f32 %v342, %v1819
    %v1821 = vpop.f32.mrf.mxu0
    %1822 = vmatprep.mubr.f32.mxu0 0.0
    %1823 = vmatmul.mubr.f32.gmra.mxu0 %v1735
    %v1824 = vpop.f32.mrf.mxu0
    %v1825 = vadd.f32 %v343, %v1824
    %v1826 = vpop.f32.mrf.mxu0
    %1827 = vmatprep.mubr.f32.mxu0 0.0
    %1828 = vmatmul.mubr.f32.gmra.mxu0 %v1737
    %v1829 = vpop.f32.mrf.mxu0
    %v1830 = vadd.f32 %v344, %v1829
    %v1831 = vpop.f32.mrf.mxu0
    %1832 = vmatprep.mubr.f32.mxu0 0.0
    %1833 = vmatmul.mubr.f32.gmra.mxu0 %v1739
    %v1834 = vpop.f32.mrf.mxu0
    %v1835 = vadd.f32 %v345, %v1834
    %v1836 = vpop.f32.mrf.mxu0
    %1837 = vmatprep.mubr.f32.mxu0 0.0
    %1838 = vmatmul.mubr.f32.gmra.mxu0 %v1741
    %v1839 = vpop.f32.mrf.mxu0
    %v1840 = vadd.f32 %v346, %v1839
    %v1841 = vpop.f32.mrf.mxu0
    %1842 = vdwg.mxu0
    %v1843 = vsel %vm931, %v1820, -inf
    %1844 = vmax.xlane.f32.xlu0 %v1843
    %v1845 = vpop.xlane.xlu0 %1844
    %v1846 = vsel %vm931, %v1825, -inf
    %1847 = vmax.xlane.f32.xlu0 %v1846
    %v1848 = vpop.xlane.xlu0 %1847
    %v1849 = vsel %vm931, %v1830, -inf
    %1850 = vmax.xlane.f32.xlu0 %v1849
    %v1851 = vpop.xlane.xlu0 %1850
    %v1852 = vsel %vm931, %v1835, -inf
    %1853 = vmax.xlane.f32.xlu0 %v1852
    %v1854 = vpop.xlane.xlu0 %1853
    %v1855 = vsel %vm944, %v1840, -inf
    %1856 = vmax.xlane.f32.xlu0 %v1855
    %v1857 = vpop.xlane.xlu0 %1856
    %v1858 = vsub.f32 %v1820, %v1845
    %v1859 = vsub.f32 %v1825, %v1848
    %v1860 = vsub.f32 %v1830, %v1851
    %v1861 = vsub.f32 %v1835, %v1854
    %v1862 = vsub.f32 %v1840, %v1857
    %v1863 = vmul.f32 %v1858, 1.442695
    %v1864 = vpow.pop %v1863
    %v1865 = vmul.f32 %v1859, 1.442695
    %v1866 = vpow.pop %v1865
    %v1867 = vmul.f32 %v1860, 1.442695
    %v1868 = vpow.pop %v1867
    %v1869 = vmul.f32 %v1861, 1.442695
    %v1870 = vpow.pop %v1869
    %v1871 = vmul.f32 %v1862, 1.442695
    %v1872 = vpow.pop %v1871
    %v1873 = vsel %vm931, %v1864, 0.0
    %1874 = vadd.xlane.f32.xlu0 %v1873
    %v1875 = vpop.xlane.xlu0 %1874
    %v1876 = vsel %vm931, %v1866, 0.0
    %1877 = vadd.xlane.f32.xlu0 %v1876
    %v1878 = vpop.xlane.xlu0 %1877
    %v1879 = vsel %vm931, %v1868, 0.0
    %1880 = vadd.xlane.f32.xlu0 %v1879
    %v1881 = vpop.xlane.xlu0 %1880
    %v1882 = vsel %vm931, %v1870, 0.0
    %1883 = vadd.xlane.f32.xlu0 %v1882
    %v1884 = vpop.xlane.xlu0 %1883
    %v1885 = vsel %vm944, %v1872, 0.0
    %1886 = vadd.xlane.f32.xlu0 %v1885
    %v1887 = vpop.xlane.xlu0 %1886
    %v1888 = vrcp.pop %v1875
    %v1889 = vmul.f32 %v1864, %v1888
    %v1890 = vrcp.pop %v1878
    %v1891 = vmul.f32 %v1866, %v1890
    %v1892 = vrcp.pop %v1881
    %v1893 = vmul.f32 %v1868, %v1892
    %v1894 = vrcp.pop %v1884
    %v1895 = vmul.f32 %v1870, %v1894
    %v1896 = vrcp.pop %v1887
    %v1897 = vmul.f32 %v1872, %v1896
    %1898 = vrot.lane.b32.xlu0 %v769, 80
    %v1899 = vpop.permute.xlu0 %1898
    %1900 = vrot.lane.b32.xlu0 %v775, 80
    %v1901 = vpop.permute.xlu0 %1900
    %1902 = vrot.lane.b32.xlu0 %v781, 80
    %v1903 = vpop.permute.xlu0 %1902
    %1904 = vrot.lane.b32.xlu0 %v787, 80
    %v1905 = vpop.permute.xlu0 %1904
    %1906 = vrot.lane.b32.xlu0 %v793, 80
    %v1907 = vpop.permute.xlu0 %1906
    %v1913 = vsel %vm931, %v1889, 0
    %v1916 = vsel %vm931, %v1891, 0
    %v1919 = vsel %vm931, %v1893, 0
    %v1922 = vsel %vm931, %v1895, 0
    %v1925 = vsel %vm931, %v1897, 0
    %v1927 = vsel %vm1003, %v1907, 0
    %1929 = vmatprep.subr.mxu0 0.0
    %1930 = vmatpush1.msra.mxu0 0.0
    %1931 = vmatprep.subr.mxu0 0.0
    %1932 = vmatpush1.msra.mxu0 0.0
    %1933 = vmatprep.subr.mxu0 0.0
    %1934 = vmatpush1.msra.mxu0 0.0
    %1935 = vmatprep.subr.mxu0 0.0
    %1936 = vmatpush1.msra.mxu0 0.0
    %1937 = vmatprep.subr.mxu0 0.0
    %1938 = vmatpush1.msra.mxu0 0.0
    %1939 = vmatprep.subr.mxu0 0.0
    %1940 = vmatpush1.msra.mxu0 0.0
    %1941 = vmatprep.subr.mxu0 0.0
    %1942 = vmatpush1.msra.mxu0 0.0
    %1943 = vmatprep.subr.mxu0 0.0
    %1944 = vmatpush1.msra.mxu0 0.0
    %1945 = vmatprep.subr.mxu0 0.0
    %1946 = vmatpush1.msra.mxu0 0.0
    %1947 = vmatprep.subr.mxu0 0.0
    %1948 = vmatpush1.msra.mxu0 0.0
    %1949 = vmatprep.subr.mxu0 0.0
    %1950 = vmatpush1.msra.mxu0 0.0
    %1951 = vmatprep.subr.mxu0 0.0
    %1952 = vmatpush1.msra.mxu0 %v1927
    %1953 = vmatprep.subr.mxu0 0.0
    %1954 = vmatpush1.msra.mxu0 %v1905
    %1955 = vmatprep.subr.mxu0 0.0
    %1956 = vmatpush1.msra.mxu0 %v1903
    %1957 = vmatprep.subr.mxu0 0.0
    %1958 = vmatpush1.msra.mxu0 %v1901
    %1959 = vmatprep.subr.mxu0 0.0
    %1960 = vmatpush1.msra.mxu0 %v1899
    %1961 = vmatprep.subr.mxu0 0.0
    %1962 = vmatpush2.msra.mxu0 0.0
    %1963 = vmatprep.subr.mxu0 0.0
    %1964 = vmatpush2.msra.mxu0 0.0
    %1965 = vmatprep.subr.mxu0 0.0
    %1966 = vmatpush2.msra.mxu0 0.0
    %1967 = vmatprep.subr.mxu0 0.0
    %1968 = vmatpush2.msra.mxu0 0.0
    %1969 = vmatprep.subr.mxu0 0.0
    %1970 = vmatpush2.msra.mxu0 0.0
    %1971 = vmatprep.subr.mxu0 0.0
    %1972 = vmatpush2.msra.mxu0 0.0
    %1973 = vmatprep.subr.mxu0 0.0
    %1974 = vmatpush2.msra.mxu0 0.0
    %1975 = vmatprep.subr.mxu0 0.0
    %1976 = vmatpush2.msra.mxu0 0.0
    %1977 = vmatprep.subr.mxu0 0.0
    %1978 = vmatpush2.msra.mxu0 0.0
    %1979 = vmatprep.subr.mxu0 0.0
    %1980 = vmatpush2.msra.mxu0 0.0
    %1981 = vmatprep.subr.mxu0 0.0
    %1982 = vmatpush2.msra.mxu0 0.0
    %1983 = vmatprep.subr.mxu0 0.0
    %1984 = vmatpush2.msra.mxu0 0.0
    %1985 = vmatprep.subr.mxu0 0.0
    %1986 = vmatpush2.msra.mxu0 0.0
    %1987 = vmatprep.subr.mxu0 0.0
    %1988 = vmatpush2.msra.mxu0 0.0
    %1989 = vmatprep.subr.mxu0 0.0
    %1990 = vmatpush2.msra.mxu0 0.0
    %1991 = vmatprep.subr.mxu0 0.0
    %1992 = vmatpush2.msra.mxu0 0.0
    %1993 = vmatprep.mubr.f32.mxu0 0.0
    %1994 = vmatmul.mubr.f32.gmra.mxu0 %v1913
    %v1995 = vpop.f32.mrf.mxu0
    %v1996 = vadd.f32 0.0, %v1995
    %v1997 = vpop.f32.mrf.mxu0
    %1998 = vmatprep.mubr.f32.mxu0 0.0
    %1999 = vmatmul.mubr.f32.gmra.mxu0 %v1916
    %v2000 = vpop.f32.mrf.mxu0
    %v2001 = vadd.f32 0.0, %v2000
    %v2002 = vpop.f32.mrf.mxu0
    %2003 = vmatprep.mubr.f32.mxu0 0.0
    %2004 = vmatmul.mubr.f32.gmra.mxu0 %v1919
    %v2005 = vpop.f32.mrf.mxu0
    %v2006 = vadd.f32 0.0, %v2005
    %v2007 = vpop.f32.mrf.mxu0
    %2008 = vmatprep.mubr.f32.mxu0 0.0
    %2009 = vmatmul.mubr.f32.gmra.mxu0 %v1922
    %v2010 = vpop.f32.mrf.mxu0
    %v2011 = vadd.f32 0.0, %v2010
    %v2012 = vpop.f32.mrf.mxu0
    %2013 = vmatprep.mubr.f32.mxu0 0.0
    %2014 = vmatmul.mubr.f32.gmra.mxu0 %v1925
    %v2015 = vpop.f32.mrf.mxu0
    %v2016 = vadd.f32 0.0, %v2015
    %v2017 = vpop.f32.mrf.mxu0
    %2018 = vdwg.mxu0
    %2024 = vrot.lane.b32.xlu0 %v1384, 16
    %v2025 = vpop.permute.xlu0 %2024
    %2026 = vrot.lane.b32.xlu0 %v1389, 16
    %v2027 = vpop.permute.xlu0 %2026
    %2028 = vrot.lane.b32.xlu0 %v1394, 16
    %v2029 = vpop.permute.xlu0 %2028
    %2030 = vrot.lane.b32.xlu0 %v1399, 16
    %v2031 = vpop.permute.xlu0 %2030
    %2032 = vrot.lane.b32.xlu0 %v1404, 16
    %v2033 = vpop.permute.xlu0 %2032
    %2044 = vrot.lane.b32.xlu0 %v1690, 32
    %v2045 = vpop.permute.xlu0 %2044
    %2046 = vrot.lane.b32.xlu0 %v1695, 32
    %v2047 = vpop.permute.xlu0 %2046
    %2048 = vrot.lane.b32.xlu0 %v1700, 32
    %v2049 = vpop.permute.xlu0 %2048
    %2050 = vrot.lane.b32.xlu0 %v1705, 32
    %v2051 = vpop.permute.xlu0 %2050
    %2052 = vrot.lane.b32.xlu0 %v1710, 32
    %v2053 = vpop.permute.xlu0 %2052
    %2064 = vrot.lane.b32.xlu0 %v1996, 48
    %v2065 = vpop.permute.xlu0 %2064
    %2066 = vrot.lane.b32.xlu0 %v2001, 48
    %v2067 = vpop.permute.xlu0 %2066
    %2068 = vrot.lane.b32.xlu0 %v2006, 48
    %v2069 = vpop.permute.xlu0 %2068
    %2070 = vrot.lane.b32.xlu0 %v2011, 48
    %v2071 = vpop.permute.xlu0 %2070
    %2072 = vrot.lane.b32.xlu0 %v2016, 48
    %v2073 = vpop.permute.xlu0 %2072
    %v2079 = vsel %vm815, %v1074, %v2025
    %v2080 = vsel %vm815, %v1079, %v2027
    %v2081 = vsel %vm815, %v1084, %v2029
    %v2082 = vsel %vm815, %v1089, %v2031
    %v2083 = vsel %vm815, %v1094, %v2033
    %vm2084 = vcmask 261120
    %v2085 = vsel %vm2084, %v2079, %v2045
    %v2086 = vsel %vm2084, %v2080, %v2047
    %v2087 = vsel %vm2084, %v2081, %v2049
    %v2088 = vsel %vm2084, %v2082, %v2051
    %v2089 = vsel %vm2084, %v2083, %v2053
    %vm2090 = vcmask 392192
    %v2091 = vsel %vm2090, %v2085, %v2065
    %v2092 = vsel %vm2090, %v2086, %v2067
    %v2093 = vsel %vm2090, %v2087, %v2069
    %v2094 = vsel %vm2090, %v2088, %v2071
    %v2095 = vsel %vm2090, %v2089, %v2073
    %v2097 = vsel %vm399, %v2091, 0
    %v2100 = vsel %vm399, %v2092, 0
    %v2103 = vsel %vm399, %v2093, 0
    %v2106 = vsel %vm399, %v2094, 0
    %v2109 = vsel %vm399, %v2095, 0
    %2111 = vmatprep.subr.mxu0 0.0
    %2112 = vmatpush1.msra.mxu0 0.0
    %2113 = vmatprep.subr.mxu0 0.0
    %2114 = vmatpush1.msra.mxu0 0.0
    %2115 = vmatprep.subr.mxu0 0.0
    %2116 = vmatpush1.msra.mxu0 0.0
    %2117 = vmatprep.subr.mxu0 0.0
    %2118 = vmatpush1.msra.mxu0 0.0
    %2119 = vmatprep.subr.mxu0 0.0
    %2120 = vmatpush1.msra.mxu0 0.0
    %2121 = vmatprep.subr.mxu0 0.0
    %2122 = vmatpush1.msra.mxu0 0.0
    %2123 = vmatprep.subr.mxu0 0.0
    %2124 = vmatpush1.msra.mxu0 0.0
    %2125 = vmatprep.subr.mxu0 0.0
    %2126 = vmatpush1.msra.mxu0 0.0
    %2127 = vmatprep.subr.mxu0 0.0
    %2128 = vmatpush1.msra.mxu0 %v531
    %2129 = vmatprep.subr.mxu0 0.0
    %2130 = vmatpush1.msra.mxu0 %v530
    %2131 = vmatprep.subr.mxu0 0.0
    %2132 = vmatpush1.msra.mxu0 %v529
    %2133 = vmatprep.subr.mxu0 0.0
    %2134 = vmatpush1.msra.mxu0 %v528
    %2135 = vmatprep.subr.mxu0 0.0
    %2136 = vmatpush1.msra.mxu0 %v527
    %2137 = vmatprep.subr.mxu0 0.0
    %2138 = vmatpush1.msra.mxu0 %v526
    %2139 = vmatprep.subr.mxu0 0.0
    %2140 = vmatpush1.msra.mxu0 %v525
    %2141 = vmatprep.subr.mxu0 0.0
    %2142 = vmatpush1.msra.mxu0 %v524
    %2143 = vmatprep.subr.mxu0 0.0
    %2144 = vmatpush2.msra.mxu0 0.0
    %2145 = vmatprep.subr.mxu0 0.0
    %2146 = vmatpush2.msra.mxu0 0.0
    %2147 = vmatprep.subr.mxu0 0.0
    %2148 = vmatpush2.msra.mxu0 0.0
    %2149 = vmatprep.subr.mxu0 0.0
    %2150 = vmatpush2.msra.mxu0 0.0
    %2151 = vmatprep.subr.mxu0 0.0
    %2152 = vmatpush2.msra.mxu0 0.0
    %2153 = vmatprep.subr.mxu0 0.0
    %2154 = vmatpush2.msra.mxu0 0.0
    %2155 = vmatprep.subr.mxu0 0.0
    %2156 = vmatpush2.msra.mxu0 0.0
    %2157 = vmatprep.subr.mxu0 0.0
    %2158 = vmatpush2.msra.mxu0 0.0
    %2159 = vmatprep.subr.mxu0 0.0
    %2160 = vmatpush2.msra.mxu0 0.0
    %2161 = vmatprep.subr.mxu0 0.0
    %2162 = vmatpush2.msra.mxu0 0.0
    %2163 = vmatprep.subr.mxu0 0.0
    %2164 = vmatpush2.msra.mxu0 0.0
    %2165 = vmatprep.subr.mxu0 0.0
    %2166 = vmatpush2.msra.mxu0 0.0
    %2167 = vmatprep.subr.mxu0 0.0
    %2168 = vmatpush2.msra.mxu0 0.0
    %2169 = vmatprep.subr.mxu0 0.0
    %2170 = vmatpush2.msra.mxu0 0.0
    %2171 = vmatprep.subr.mxu0 0.0
    %2172 = vmatpush2.msra.mxu0 0.0
    %2173 = vmatprep.subr.mxu0 0.0
    %2174 = vmatpush2.msra.mxu0 0.0
    %2175 = vmatprep.mubr.f32.mxu0 0.0
    %2176 = vmatmul.mubr.f32.gmra.mxu0 %v2097
    %v2177 = vpop.f32.mrf.mxu0
    %v2178 = vadd.f32 0.0, %v2177
    %v2179 = vpop.f32.mrf.mxu0
    %2180 = vmatprep.mubr.f32.mxu0 0.0
    %2181 = vmatmul.mubr.f32.gmra.mxu0 %v2100
    %v2182 = vpop.f32.mrf.mxu0
    %v2183 = vadd.f32 0.0, %v2182
    %v2184 = vpop.f32.mrf.mxu0
    %2185 = vmatprep.mubr.f32.mxu0 0.0
    %2186 = vmatmul.mubr.f32.gmra.mxu0 %v2103
    %v2187 = vpop.f32.mrf.mxu0
    %v2188 = vadd.f32 0.0, %v2187
    %v2189 = vpop.f32.mrf.mxu0
    %2190 = vmatprep.mubr.f32.mxu0 0.0
    %2191 = vmatmul.mubr.f32.gmra.mxu0 %v2106
    %v2192 = vpop.f32.mrf.mxu0
    %v2193 = vadd.f32 0.0, %v2192
    %v2194 = vpop.f32.mrf.mxu0
    %2195 = vmatprep.mubr.f32.mxu0 0.0
    %2196 = vmatmul.mubr.f32.gmra.mxu0 %v2109
    %v2197 = vpop.f32.mrf.mxu0
    %v2198 = vadd.f32 0.0, %v2197
    %v2199 = vpop.f32.mrf.mxu0
    %2200 = vdwg.mxu0
    %v2201 = vadd.f32 %v482, %v2178
    %v2202 = vadd.f32 %v487, %v2183
    %v2203 = vadd.f32 %v492, %v2188
    %v2204 = vadd.f32 %v497, %v2193
    %v2205 = vadd.f32 %v502, %v2198
    %v2207 = vlaneseq
    %v2208 = vshrl.u32 %v2207, 7
    %v2209 = vsub.s32 0, %v2208
    %v2210 = vrot.slane %v532, %v2209
    %v2212 = vadd.f32 %v2201, %v2210
    %v2213 = vadd.f32 %v2202, %v2210
    %v2214 = vadd.f32 %v2203, %v2210
    %v2215 = vadd.f32 %v2204, %v2210
    %v2216 = vadd.f32 %v2205, %v2210
    %v2217 = vsel %vm399, %v2212, 0.0
    %2218 = vadd.xlane.f32.xlu0 %v2217
    %v2219 = vpop.xlane.xlu0 %2218
    %v2220 = vsel %vm399, %v2213, 0.0
    %2221 = vadd.xlane.f32.xlu0 %v2220
    %v2222 = vpop.xlane.xlu0 %2221
    %v2223 = vsel %vm399, %v2214, 0.0
    %2224 = vadd.xlane.f32.xlu0 %v2223
    %v2225 = vpop.xlane.xlu0 %2224
    %v2226 = vsel %vm399, %v2215, 0.0
    %2227 = vadd.xlane.f32.xlu0 %v2226
    %v2228 = vpop.xlane.xlu0 %2227
    %v2229 = vsel %vm597, %v2216, 0.0
    %2230 = vadd.xlane.f32.xlu0 %v2229
    %v2231 = vpop.xlane.xlu0 %2230
    %v2232 = vmul.f32 %v2219, %v601
    %v2233 = vmul.f32 %v2222, %v601
    %v2234 = vmul.f32 %v2225, %v601
    %v2235 = vmul.f32 %v2228, %v601
    %v2236 = vmul.f32 %v2231, %v601
    %v2237 = vsub.f32 %v2212, %v2232
    %v2238 = vsub.f32 %v2213, %v2233
    %v2239 = vsub.f32 %v2214, %v2234
    %v2240 = vsub.f32 %v2215, %v2235
    %v2241 = vsub.f32 %v2216, %v2236
    %v2242 = vmul.f32 %v2237, %v2237
    %v2243 = vmul.f32 %v2238, %v2238
    %v2244 = vmul.f32 %v2239, %v2239
    %v2245 = vmul.f32 %v2240, %v2240
    %v2246 = vmul.f32 %v2241, %v2241
    %v2247 = vsel %vm399, %v2242, 0.0
    %2248 = vadd.xlane.f32.xlu0 %v2247
    %v2249 = vpop.xlane.xlu0 %2248
    %v2250 = vsel %vm399, %v2243, 0.0
    %2251 = vadd.xlane.f32.xlu0 %v2250
    %v2252 = vpop.xlane.xlu0 %2251
    %v2253 = vsel %vm399, %v2244, 0.0
    %2254 = vadd.xlane.f32.xlu0 %v2253
    %v2255 = vpop.xlane.xlu0 %2254
    %v2256 = vsel %vm399, %v2245, 0.0
    %2257 = vadd.xlane.f32.xlu0 %v2256
    %v2258 = vpop.xlane.xlu0 %2257
    %v2259 = vsel %vm597, %v2246, 0.0
    %2260 = vadd.xlane.f32.xlu0 %v2259
    %v2261 = vpop.xlane.xlu0 %2260
    %v2262 = vmul.f32 %v2249, %v601
    %v2263 = vmul.f32 %v2252, %v601
    %v2264 = vmul.f32 %v2255, %v601
    %v2265 = vmul.f32 %v2258, %v601
    %v2266 = vmul.f32 %v2261, %v601
    %v2267 = vadd.f32 %v2262, 1e-06
    %v2268 = vadd.f32 %v2263, 1e-06
    %v2269 = vadd.f32 %v2264, 1e-06
    %v2270 = vadd.f32 %v2265, 1e-06
    %v2271 = vadd.f32 %v2266, 1e-06
    %v2272 = vrsqrt.pop %v2267
    %v2273 = vrsqrt.pop %v2268
    %v2274 = vrsqrt.pop %v2269
    %v2275 = vrsqrt.pop %v2270
    %v2276 = vrsqrt.pop %v2271
    %v2277 = vmul.f32 %v2237, %v2272
    %v2278 = vmul.f32 %v2238, %v2273
    %v2279 = vmul.f32 %v2239, %v2274
    %v2280 = vmul.f32 %v2240, %v2275
    %v2281 = vmul.f32 %v2241, %v2276
    %v2283 = vlaneseq
    %v2284 = vshrl.u32 %v2283, 7
    %v2285 = vsub.s32 0, %v2284
    %v2286 = vrot.slane %v533, %v2285
    %v2288 = vmul.f32 %v2277, %v2286
    %v2289 = vmul.f32 %v2278, %v2286
    %v2290 = vmul.f32 %v2279, %v2286
    %v2291 = vmul.f32 %v2280, %v2286
    %v2292 = vmul.f32 %v2281, %v2286
    %v2294 = vlaneseq
    %v2295 = vshrl.u32 %v2294, 7
    %v2296 = vsub.s32 0, %v2295
    %v2297 = vrot.slane %v534, %v2296
    %v2299 = vadd.f32 %v2288, %v2297
    %v2300 = vadd.f32 %v2289, %v2297
    %v2301 = vadd.f32 %v2290, %v2297
    %v2302 = vadd.f32 %v2291, %v2297
    %v2303 = vadd.f32 %v2292, %v2297
    %v2305 = vlaneseq
    %v2306 = vshrl.u32 %v2305, 7
    %v2307 = vsub.s32 0, %v2306
    %v2308 = vrot.slane %v551, %v2307
    %v2309 = vlaneseq
    %v2310 = vshrl.u32 %v2309, 7
    %v2311 = vsub.s32 1, %v2310
    %v2312 = vrot.slane %v551, %v2311
    %v2316 = vsel %vm399, %v2299, 0
    %v2319 = vsel %vm399, %v2300, 0
    %v2322 = vsel %vm399, %v2301, 0
    %v2325 = vsel %vm399, %v2302, 0
    %v2328 = vsel %vm399, %v2303, 0
    %2330 = vmatprep.subr.mxu0 0.0
    %2331 = vmatpush1.msra.mxu0 0.0
    %2332 = vmatprep.subr.mxu0 0.0
    %2333 = vmatpush1.msra.mxu0 0.0
    %2334 = vmatprep.subr.mxu0 0.0
    %2335 = vmatpush1.msra.mxu0 0.0
    %2336 = vmatprep.subr.mxu0 0.0
    %2337 = vmatpush1.msra.mxu0 0.0
    %2338 = vmatprep.subr.mxu0 0.0
    %2339 = vmatpush1.msra.mxu0 0.0
    %2340 = vmatprep.subr.mxu0 0.0
    %2341 = vmatpush1.msra.mxu0 0.0
    %2342 = vmatprep.subr.mxu0 0.0
    %2343 = vmatpush1.msra.mxu0 0.0
    %2344 = vmatprep.subr.mxu0 0.0
    %2345 = vmatpush1.msra.mxu0 0.0
    %2346 = vmatprep.subr.mxu0 %v550
    %2347 = vmatpush1.msra.mxu0 %v549
    %2348 = vmatprep.subr.mxu0 %v548
    %2349 = vmatpush1.msra.mxu0 %v547
    %2350 = vmatprep.subr.mxu0 %v546
    %2351 = vmatpush1.msra.mxu0 %v545
    %2352 = vmatprep.subr.mxu0 %v544
    %2353 = vmatpush1.msra.mxu0 %v543
    %2354 = vmatprep.subr.mxu0 %v542
    %2355 = vmatpush1.msra.mxu0 %v541
    %2356 = vmatprep.subr.mxu0 %v540
    %2357 = vmatpush1.msra.mxu0 %v539
    %2358 = vmatprep.subr.mxu0 %v538
    %2359 = vmatpush1.msra.mxu0 %v537
    %2360 = vmatprep.subr.mxu0 %v536
    %2361 = vmatpush1.msra.mxu0 %v535
    %2362 = vmatprep.subr.mxu0 0.0
    %2363 = vmatpush2.msra.mxu0 0.0
    %2364 = vmatprep.subr.mxu0 0.0
    %2365 = vmatpush2.msra.mxu0 0.0
    %2366 = vmatprep.subr.mxu0 0.0
    %2367 = vmatpush2.msra.mxu0 0.0
    %2368 = vmatprep.subr.mxu0 0.0
    %2369 = vmatpush2.msra.mxu0 0.0
    %2370 = vmatprep.subr.mxu0 0.0
    %2371 = vmatpush2.msra.mxu0 0.0
    %2372 = vmatprep.subr.mxu0 0.0
    %2373 = vmatpush2.msra.mxu0 0.0
    %2374 = vmatprep.subr.mxu0 0.0
    %2375 = vmatpush2.msra.mxu0 0.0
    %2376 = vmatprep.subr.mxu0 0.0
    %2377 = vmatpush2.msra.mxu0 0.0
    %2378 = vmatprep.subr.mxu0 0.0
    %2379 = vmatpush2.msra.mxu0 0.0
    %2380 = vmatprep.subr.mxu0 0.0
    %2381 = vmatpush2.msra.mxu0 0.0
    %2382 = vmatprep.subr.mxu0 0.0
    %2383 = vmatpush2.msra.mxu0 0.0
    %2384 = vmatprep.subr.mxu0 0.0
    %2385 = vmatpush2.msra.mxu0 0.0
    %2386 = vmatprep.subr.mxu0 0.0
    %2387 = vmatpush2.msra.mxu0 0.0
    %2388 = vmatprep.subr.mxu0 0.0
    %2389 = vmatpush2.msra.mxu0 0.0
    %2390 = vmatprep.subr.mxu0 0.0
    %2391 = vmatpush2.msra.mxu0 0.0
    %2392 = vmatprep.subr.mxu0 0.0
    %2393 = vmatpush2.msra.mxu0 0.0
    %2394 = vmatprep.mubr.f32.mxu0 0.0
    %2395 = vmatmul.mubr.f32.gmra.mxu0 %v2316
    %v2396 = vpop.f32.mrf.mxu0
    %v2397 = vadd.f32 %v2308, %v2396
    %v2398 = vpop.f32.mrf.mxu0
    %v2399 = vadd.f32 %v2312, %v2398
    %2400 = vmatprep.mubr.f32.mxu0 0.0
    %2401 = vmatmul.mubr.f32.gmra.mxu0 %v2319
    %v2402 = vpop.f32.mrf.mxu0
    %v2403 = vadd.f32 %v2308, %v2402
    %v2404 = vpop.f32.mrf.mxu0
    %v2405 = vadd.f32 %v2312, %v2404
    %2406 = vmatprep.mubr.f32.mxu0 0.0
    %2407 = vmatmul.mubr.f32.gmra.mxu0 %v2322
    %v2408 = vpop.f32.mrf.mxu0
    %v2409 = vadd.f32 %v2308, %v2408
    %v2410 = vpop.f32.mrf.mxu0
    %v2411 = vadd.f32 %v2312, %v2410
    %2412 = vmatprep.mubr.f32.mxu0 0.0
    %2413 = vmatmul.mubr.f32.gmra.mxu0 %v2325
    %v2414 = vpop.f32.mrf.mxu0
    %v2415 = vadd.f32 %v2308, %v2414
    %v2416 = vpop.f32.mrf.mxu0
    %v2417 = vadd.f32 %v2312, %v2416
    %2418 = vmatprep.mubr.f32.mxu0 0.0
    %2419 = vmatmul.mubr.f32.gmra.mxu0 %v2328
    %v2420 = vpop.f32.mrf.mxu0
    %v2421 = vadd.f32 %v2308, %v2420
    %v2422 = vpop.f32.mrf.mxu0
    %v2423 = vadd.f32 %v2312, %v2422
    %2424 = vdwg.mxu0
    %v2425 = vmul.f32 %v2397, %v2397
    %v2426 = vmul.f32 %v2399, %v2399
    %v2427 = vmul.f32 %v2403, %v2403
    %v2428 = vmul.f32 %v2405, %v2405
    %v2429 = vmul.f32 %v2409, %v2409
    %v2430 = vmul.f32 %v2411, %v2411
    %v2431 = vmul.f32 %v2415, %v2415
    %v2432 = vmul.f32 %v2417, %v2417
    %v2433 = vmul.f32 %v2421, %v2421
    %v2434 = vmul.f32 %v2423, %v2423
    %v2435 = vmul.f32 %v2397, %v2425
    %v2436 = vmul.f32 %v2399, %v2426
    %v2437 = vmul.f32 %v2403, %v2427
    %v2438 = vmul.f32 %v2405, %v2428
    %v2439 = vmul.f32 %v2409, %v2429
    %v2440 = vmul.f32 %v2411, %v2430
    %v2441 = vmul.f32 %v2415, %v2431
    %v2442 = vmul.f32 %v2417, %v2432
    %v2443 = vmul.f32 %v2421, %v2433
    %v2444 = vmul.f32 %v2423, %v2434
    %v2445 = vmul.f32 %v2435, 0.044715
    %v2446 = vmul.f32 %v2436, 0.044715
    %v2447 = vmul.f32 %v2437, 0.044715
    %v2448 = vmul.f32 %v2438, 0.044715
    %v2449 = vmul.f32 %v2439, 0.044715
    %v2450 = vmul.f32 %v2440, 0.044715
    %v2451 = vmul.f32 %v2441, 0.044715
    %v2452 = vmul.f32 %v2442, 0.044715
    %v2453 = vmul.f32 %v2443, 0.044715
    %v2454 = vmul.f32 %v2444, 0.044715
    %v2455 = vadd.f32 %v2397, %v2445
    %v2456 = vadd.f32 %v2399, %v2446
    %v2457 = vadd.f32 %v2403, %v2447
    %v2458 = vadd.f32 %v2405, %v2448
    %v2459 = vadd.f32 %v2409, %v2449
    %v2460 = vadd.f32 %v2411, %v2450
    %v2461 = vadd.f32 %v2415, %v2451
    %v2462 = vadd.f32 %v2417, %v2452
    %v2463 = vadd.f32 %v2421, %v2453
    %v2464 = vadd.f32 %v2423, %v2454
    %v2465 = vmul.f32 %v2455, 0.7978846
    %v2466 = vmul.f32 %v2456, 0.7978846
    %v2467 = vmul.f32 %v2457, 0.7978846
    %v2468 = vmul.f32 %v2458, 0.7978846
    %v2469 = vmul.f32 %v2459, 0.7978846
    %v2470 = vmul.f32 %v2460, 0.7978846
    %v2471 = vmul.f32 %v2461, 0.7978846
    %v2472 = vmul.f32 %v2462, 0.7978846
    %v2473 = vmul.f32 %v2463, 0.7978846
    %v2474 = vmul.f32 %v2464, 0.7978846
    %v2475 = vtanh.pop %v2465
    %v2476 = vtanh.pop %v2466
    %v2477 = vtanh.pop %v2467
    %v2478 = vtanh.pop %v2468
    %v2479 = vtanh.pop %v2469
    %v2480 = vtanh.pop %v2470
    %v2481 = vtanh.pop %v2471
    %v2482 = vtanh.pop %v2472
    %v2483 = vtanh.pop %v2473
    %v2484 = vtanh.pop %v2474
    %v2485 = vadd.f32 %v2475, 1.0
    %v2486 = vadd.f32 %v2476, 1.0
    %v2487 = vadd.f32 %v2477, 1.0
    %v2488 = vadd.f32 %v2478, 1.0
    %v2489 = vadd.f32 %v2479, 1.0
    %v2490 = vadd.f32 %v2480, 1.0
    %v2491 = vadd.f32 %v2481, 1.0
    %v2492 = vadd.f32 %v2482, 1.0
    %v2493 = vadd.f32 %v2483, 1.0
    %v2494 = vadd.f32 %v2484, 1.0
    %v2495 = vmul.f32 %v2485, 0.5
    %v2496 = vmul.f32 %v2486, 0.5
    %v2497 = vmul.f32 %v2487, 0.5
    %v2498 = vmul.f32 %v2488, 0.5
    %v2499 = vmul.f32 %v2489, 0.5
    %v2500 = vmul.f32 %v2490, 0.5
    %v2501 = vmul.f32 %v2491, 0.5
    %v2502 = vmul.f32 %v2492, 0.5
    %v2503 = vmul.f32 %v2493, 0.5
    %v2504 = vmul.f32 %v2494, 0.5
    %v2505 = vmul.f32 %v2397, %v2495
    %v2506 = vmul.f32 %v2399, %v2496
    %v2507 = vmul.f32 %v2403, %v2497
    %v2508 = vmul.f32 %v2405, %v2498
    %v2509 = vmul.f32 %v2409, %v2499
    %v2510 = vmul.f32 %v2411, %v2500
    %v2511 = vmul.f32 %v2415, %v2501
    %v2512 = vmul.f32 %v2417, %v2502
    %v2513 = vmul.f32 %v2421, %v2503
    %v2514 = vmul.f32 %v2423, %v2504
    %v2516 = vlaneseq
    %v2517 = vshrl.u32 %v2516, 7
    %v2518 = vsub.s32 0, %v2517
    %v2519 = vrot.slane %v584, %v2518
    %2521 = vmatprep.subr.mxu0 0.0
    %2522 = vmatpush1.msra.mxu0 %v567
    %2523 = vmatprep.subr.mxu0 0.0
    %2524 = vmatpush1.msra.mxu0 %v566
    %2525 = vmatprep.subr.mxu0 0.0
    %2526 = vmatpush1.msra.mxu0 %v565
    %2527 = vmatprep.subr.mxu0 0.0
    %2528 = vmatpush1.msra.mxu0 %v564
    %2529 = vmatprep.subr.mxu0 0.0
    %2530 = vmatpush1.msra.mxu0 %v563
    %2531 = vmatprep.subr.mxu0 0.0
    %2532 = vmatpush1.msra.mxu0 %v562
    %2533 = vmatprep.subr.mxu0 0.0
    %2534 = vmatpush1.msra.mxu0 %v561
    %2535 = vmatprep.subr.mxu0 0.0
    %2536 = vmatpush1.msra.mxu0 %v560
    %2537 = vmatprep.subr.mxu0 0.0
    %2538 = vmatpush1.msra.mxu0 %v559
    %2539 = vmatprep.subr.mxu0 0.0
    %2540 = vmatpush1.msra.mxu0 %v558
    %2541 = vmatprep.subr.mxu0 0.0
    %2542 = vmatpush1.msra.mxu0 %v557
    %2543 = vmatprep.subr.mxu0 0.0
    %2544 = vmatpush1.msra.mxu0 %v556
    %2545 = vmatprep.subr.mxu0 0.0
    %2546 = vmatpush1.msra.mxu0 %v555
    %2547 = vmatprep.subr.mxu0 0.0
    %2548 = vmatpush1.msra.mxu0 %v554
    %2549 = vmatprep.subr.mxu0 0.0
    %2550 = vmatpush1.msra.mxu0 %v553
    %2551 = vmatprep.subr.mxu0 0.0
    %2552 = vmatpush1.msra.mxu0 %v552
    %2553 = vmatprep.subr.mxu0 0.0
    %2554 = vmatpush2.msra.mxu0 %v583
    %2555 = vmatprep.subr.mxu0 0.0
    %2556 = vmatpush2.msra.mxu0 %v582
    %2557 = vmatprep.subr.mxu0 0.0
    %2558 = vmatpush2.msra.mxu0 %v581
    %2559 = vmatprep.subr.mxu0 0.0
    %2560 = vmatpush2.msra.mxu0 %v580
    %2561 = vmatprep.subr.mxu0 0.0
    %2562 = vmatpush2.msra.mxu0 %v579
    %2563 = vmatprep.subr.mxu0 0.0
    %2564 = vmatpush2.msra.mxu0 %v578
    %2565 = vmatprep.subr.mxu0 0.0
    %2566 = vmatpush2.msra.mxu0 %v577
    %2567 = vmatprep.subr.mxu0 0.0
    %2568 = vmatpush2.msra.mxu0 %v576
    %2569 = vmatprep.subr.mxu0 0.0
    %2570 = vmatpush2.msra.mxu0 %v575
    %2571 = vmatprep.subr.mxu0 0.0
    %2572 = vmatpush2.msra.mxu0 %v574
    %2573 = vmatprep.subr.mxu0 0.0
    %2574 = vmatpush2.msra.mxu0 %v573
    %2575 = vmatprep.subr.mxu0 0.0
    %2576 = vmatpush2.msra.mxu0 %v572
    %2577 = vmatprep.subr.mxu0 0.0
    %2578 = vmatpush2.msra.mxu0 %v571
    %2579 = vmatprep.subr.mxu0 0.0
    %2580 = vmatpush2.msra.mxu0 %v570
    %2581 = vmatprep.subr.mxu0 0.0
    %2582 = vmatpush2.msra.mxu0 %v569
    %2583 = vmatprep.subr.mxu0 0.0
    %2584 = vmatpush2.msra.mxu0 %v568
    %2585 = vmatprep.mubr.f32.mxu0 %v2506
    %2586 = vmatmul.mubr.f32.gmra.mxu0 %v2505
    %v2587 = vpop.f32.mrf.mxu0
    %v2588 = vadd.f32 %v2519, %v2587
    %v2589 = vpop.f32.mrf.mxu0
    %2590 = vmatprep.mubr.f32.mxu0 %v2508
    %2591 = vmatmul.mubr.f32.gmra.mxu0 %v2507
    %v2592 = vpop.f32.mrf.mxu0
    %v2593 = vadd.f32 %v2519, %v2592
    %v2594 = vpop.f32.mrf.mxu0
    %2595 = vmatprep.mubr.f32.mxu0 %v2510
    %2596 = vmatmul.mubr.f32.gmra.mxu0 %v2509
    %v2597 = vpop.f32.mrf.mxu0
    %v2598 = vadd.f32 %v2519, %v2597
    %v2599 = vpop.f32.mrf.mxu0
    %2600 = vmatprep.mubr.f32.mxu0 %v2512
    %2601 = vmatmul.mubr.f32.gmra.mxu0 %v2511
    %v2602 = vpop.f32.mrf.mxu0
    %v2603 = vadd.f32 %v2519, %v2602
    %v2604 = vpop.f32.mrf.mxu0
    %2605 = vmatprep.mubr.f32.mxu0 %v2514
    %2606 = vmatmul.mubr.f32.gmra.mxu0 %v2513
    %v2607 = vpop.f32.mrf.mxu0
    %v2608 = vadd.f32 %v2519, %v2607
    %v2609 = vpop.f32.mrf.mxu0
    %2610 = vdwg.mxu0
    %v2611 = vadd.f32 %v2212, %v2588
    %v2612 = vadd.f32 %v2213, %v2593
    %v2613 = vadd.f32 %v2214, %v2598
    %v2614 = vadd.f32 %v2215, %v2603
    %v2615 = vadd.f32 %v2216, %v2608
    %s2616 = scalar_lea.vmem %s17, 1
    %v2617 = vld [vmem:[%s2616] sm:$0x1]
    %s2618 = scalar_lea.vmem %s19, 1
    %v2619 = vld [vmem:[%s2618] sm:$0x1]
    %s2620 = scalar_lea.vmem %s21, 128
    %v2621 = vld [vmem:[%s2620] sm:$0xff]
    %v2622 = vld [vmem:[%s2620 + $0x8] sm:$0xff]
    %v2623 = vld [vmem:[%s2620 + $0x10] sm:$0xff]
    %v2624 = vld [vmem:[%s2620 + $0x18] sm:$0xff]
    %v2625 = vld [vmem:[%s2620 + $0x20] sm:$0xff]
    %v2626 = vld [vmem:[%s2620 + $0x28] sm:$0xff]
    %v2627 = vld [vmem:[%s2620 + $0x30] sm:$0xff]
    %v2628 = vld [vmem:[%s2620 + $0x38] sm:$0xff]
    %v2629 = vld [vmem:[%s2620 + $0x40] sm:$0xff]
    %v2630 = vld [vmem:[%s2620 + $0x48] sm:$0xff]
    %v2631 = vld [vmem:[%s2620 + $0x50] sm:$0xff]
    %v2632 = vld [vmem:[%s2620 + $0x58] sm:$0xff]
    %v2633 = vld [vmem:[%s2620 + $0x60] sm:$0xff]
    %v2634 = vld [vmem:[%s2620 + $0x68] sm:$0xff]
    %v2635 = vld [vmem:[%s2620 + $0x70] sm:$0xff]
    %v2636 = vld [vmem:[%s2620 + $0x78] sm:$0xff]
    %s2637 = scalar_lea.vmem %s23, 2
    %v2638 = vld [vmem:[%s2637] sm:$0x3]
    %s2639 = scalar_lea.vmem %s25, 64
    %v2640 = vld [vmem:[%s2639] sm:$0xff]
    %v2641 = vld [vmem:[%s2639 + $0x8] sm:$0xff]
    %v2642 = vld [vmem:[%s2639 + $0x10] sm:$0xff]
    %v2643 = vld [vmem:[%s2639 + $0x18] sm:$0xff]
    %v2644 = vld [vmem:[%s2639 + $0x20] sm:$0xff]
    %v2645 = vld [vmem:[%s2639 + $0x28] sm:$0xff]
    %v2646 = vld [vmem:[%s2639 + $0x30] sm:$0xff]
    %v2647 = vld [vmem:[%s2639 + $0x38] sm:$0xff]
    %s2648 = scalar_lea.vmem %s27, 1
    %v2649 = vld [vmem:[%s2648] sm:$0x1]
    %s2650 = scalar_lea.vmem %s29, 1
    %v2651 = vld [vmem:[%s2650] sm:$0x1]
    %s2652 = scalar_lea.vmem %s31, 1
    %v2653 = vld [vmem:[%s2652] sm:$0x1]
    %s2654 = scalar_lea.vmem %s33, 128
    %v2655 = vld [vmem:[%s2654] sm:$0xff]
    %v2656 = vld [vmem:[%s2654 + $0x8] sm:$0xff]
    %v2657 = vld [vmem:[%s2654 + $0x10] sm:$0xff]
    %v2658 = vld [vmem:[%s2654 + $0x18] sm:$0xff]
    %v2659 = vld [vmem:[%s2654 + $0x20] sm:$0xff]
    %v2660 = vld [vmem:[%s2654 + $0x28] sm:$0xff]
    %v2661 = vld [vmem:[%s2654 + $0x30] sm:$0xff]
    %v2662 = vld [vmem:[%s2654 + $0x38] sm:$0xff]
    %v2663 = vld [vmem:[%s2654 + $0x40] sm:$0xff]
    %v2664 = vld [vmem:[%s2654 + $0x48] sm:$0xff]
    %v2665 = vld [vmem:[%s2654 + $0x50] sm:$0xff]
    %v2666 = vld [vmem:[%s2654 + $0x58] sm:$0xff]
    %v2667 = vld [vmem:[%s2654 + $0x60] sm:$0xff]
    %v2668 = vld [vmem:[%s2654 + $0x68] sm:$0xff]
    %v2669 = vld [vmem:[%s2654 + $0x70] sm:$0xff]
    %v2670 = vld [vmem:[%s2654 + $0x78] sm:$0xff]
    %s2671 = scalar_lea.vmem %s35, 2
    %v2672 = vld [vmem:[%s2671] sm:$0x3]
    %s2673 = scalar_lea.vmem %s37, 256
    %v2674 = vld [vmem:[%s2673] sm:$0xff]
    %v2675 = vld [vmem:[%s2673 + $0x8] sm:$0xff]
    %v2676 = vld [vmem:[%s2673 + $0x10] sm:$0xff]
    %v2677 = vld [vmem:[%s2673 + $0x18] sm:$0xff]
    %v2678 = vld [vmem:[%s2673 + $0x20] sm:$0xff]
    %v2679 = vld [vmem:[%s2673 + $0x28] sm:$0xff]
    %v2680 = vld [vmem:[%s2673 + $0x30] sm:$0xff]
    %v2681 = vld [vmem:[%s2673 + $0x38] sm:$0xff]
    %v2682 = vld [vmem:[%s2673 + $0x40] sm:$0xff]
    %v2683 = vld [vmem:[%s2673 + $0x48] sm:$0xff]
    %v2684 = vld [vmem:[%s2673 + $0x50] sm:$0xff]
    %v2685 = vld [vmem:[%s2673 + $0x58] sm:$0xff]
    %v2686 = vld [vmem:[%s2673 + $0x60] sm:$0xff]
    %v2687 = vld [vmem:[%s2673 + $0x68] sm:$0xff]
    %v2688 = vld [vmem:[%s2673 + $0x70] sm:$0xff]
    %v2689 = vld [vmem:[%s2673 + $0x78] sm:$0xff]
    %v2690 = vld [vmem:[%s2673 + $0x80] sm:$0xff]
    %v2691 = vld [vmem:[%s2673 + $0x88] sm:$0xff]
    %v2692 = vld [vmem:[%s2673 + $0x90] sm:$0xff]
    %v2693 = vld [vmem:[%s2673 + $0x98] sm:$0xff]
    %v2694 = vld [vmem:[%s2673 + $0xa0] sm:$0xff]
    %v2695 = vld [vmem:[%s2673 + $0xa8] sm:$0xff]
    %v2696 = vld [vmem:[%s2673 + $0xb0] sm:$0xff]
    %v2697 = vld [vmem:[%s2673 + $0xb8] sm:$0xff]
    %v2698 = vld [vmem:[%s2673 + $0xc0] sm:$0xff]
    %v2699 = vld [vmem:[%s2673 + $0xc8] sm:$0xff]
    %v2700 = vld [vmem:[%s2673 + $0xd0] sm:$0xff]
    %v2701 = vld [vmem:[%s2673 + $0xd8] sm:$0xff]
    %v2702 = vld [vmem:[%s2673 + $0xe0] sm:$0xff]
    %v2703 = vld [vmem:[%s2673 + $0xe8] sm:$0xff]
    %v2704 = vld [vmem:[%s2673 + $0xf0] sm:$0xff]
    %v2705 = vld [vmem:[%s2673 + $0xf8] sm:$0xff]
    %s2706 = scalar_lea.vmem %s39, 1
    %v2707 = vld [vmem:[%s2706] sm:$0x1]
    %v2708 = vsel %vm399, %v2611, 0.0
    %2709 = vadd.xlane.f32.xlu0 %v2708
    %v2710 = vpop.xlane.xlu0 %2709
    %v2711 = vsel %vm399, %v2612, 0.0
    %2712 = vadd.xlane.f32.xlu0 %v2711
    %v2713 = vpop.xlane.xlu0 %2712
    %v2714 = vsel %vm399, %v2613, 0.0
    %2715 = vadd.xlane.f32.xlu0 %v2714
    %v2716 = vpop.xlane.xlu0 %2715
    %v2717 = vsel %vm399, %v2614, 0.0
    %2718 = vadd.xlane.f32.xlu0 %v2717
    %v2719 = vpop.xlane.xlu0 %2718
    %v2720 = vsel %vm597, %v2615, 0.0
    %2721 = vadd.xlane.f32.xlu0 %v2720
    %v2722 = vpop.xlane.xlu0 %2721
    %v2723 = vmul.f32 %v2710, %v601
    %v2724 = vmul.f32 %v2713, %v601
    %v2725 = vmul.f32 %v2716, %v601
    %v2726 = vmul.f32 %v2719, %v601
    %v2727 = vmul.f32 %v2722, %v601
    %v2728 = vsub.f32 %v2611, %v2723
    %v2729 = vsub.f32 %v2612, %v2724
    %v2730 = vsub.f32 %v2613, %v2725
    %v2731 = vsub.f32 %v2614, %v2726
    %v2732 = vsub.f32 %v2615, %v2727
    %v2733 = vmul.f32 %v2728, %v2728
    %v2734 = vmul.f32 %v2729, %v2729
    %v2735 = vmul.f32 %v2730, %v2730
    %v2736 = vmul.f32 %v2731, %v2731
    %v2737 = vmul.f32 %v2732, %v2732
    %v2738 = vsel %vm399, %v2733, 0.0
    %2739 = vadd.xlane.f32.xlu0 %v2738
    %v2740 = vpop.xlane.xlu0 %2739
    %v2741 = vsel %vm399, %v2734, 0.0
    %2742 = vadd.xlane.f32.xlu0 %v2741
    %v2743 = vpop.xlane.xlu0 %2742
    %v2744 = vsel %vm399, %v2735, 0.0
    %2745 = vadd.xlane.f32.xlu0 %v2744
    %v2746 = vpop.xlane.xlu0 %2745
    %v2747 = vsel %vm399, %v2736, 0.0
    %2748 = vadd.xlane.f32.xlu0 %v2747
    %v2749 = vpop.xlane.xlu0 %2748
    %v2750 = vsel %vm597, %v2737, 0.0
    %2751 = vadd.xlane.f32.xlu0 %v2750
    %v2752 = vpop.xlane.xlu0 %2751
    %v2753 = vmul.f32 %v2740, %v601
    %v2754 = vmul.f32 %v2743, %v601
    %v2755 = vmul.f32 %v2746, %v601
    %v2756 = vmul.f32 %v2749, %v601
    %v2757 = vmul.f32 %v2752, %v601
    %v2758 = vadd.f32 %v2753, 1e-06
    %v2759 = vadd.f32 %v2754, 1e-06
    %v2760 = vadd.f32 %v2755, 1e-06
    %v2761 = vadd.f32 %v2756, 1e-06
    %v2762 = vadd.f32 %v2757, 1e-06
    %v2763 = vrsqrt.pop %v2758
    %v2764 = vrsqrt.pop %v2759
    %v2765 = vrsqrt.pop %v2760
    %v2766 = vrsqrt.pop %v2761
    %v2767 = vrsqrt.pop %v2762
    %v2768 = vmul.f32 %v2728, %v2763
    %v2769 = vmul.f32 %v2729, %v2764
    %v2770 = vmul.f32 %v2730, %v2765
    %v2771 = vmul.f32 %v2731, %v2766
    %v2772 = vmul.f32 %v2732, %v2767
    %v2774 = vlaneseq
    %v2775 = vshrl.u32 %v2774, 7
    %v2776 = vsub.s32 0, %v2775
    %v2777 = vrot.slane %v2617, %v2776
    %v2779 = vmul.f32 %v2768, %v2777
    %v2780 = vmul.f32 %v2769, %v2777
    %v2781 = vmul.f32 %v2770, %v2777
    %v2782 = vmul.f32 %v2771, %v2777
    %v2783 = vmul.f32 %v2772, %v2777
    %v2785 = vlaneseq
    %v2786 = vshrl.u32 %v2785, 7
    %v2787 = vsub.s32 0, %v2786
    %v2788 = vrot.slane %v2619, %v2787
    %v2790 = vadd.f32 %v2779, %v2788
    %v2791 = vadd.f32 %v2780, %v2788
    %v2792 = vadd.f32 %v2781, %v2788
    %v2793 = vadd.f32 %v2782, %v2788
    %v2794 = vadd.f32 %v2783, %v2788
    %v2796 = vlaneseq
    %v2797 = vshrl.u32 %v2796, 7
    %v2798 = vsub.s32 0, %v2797
    %v2799 = vrot.slane %v2638, %v2798
    %v2800 = vlaneseq
    %v2801 = vshrl.u32 %v2800, 7
    %v2802 = vsub.s32 1, %v2801
    %v2803 = vrot.slane %v2638, %v2802
    %v2807 = vsel %vm399, %v2790, 0
    %v2810 = vsel %vm399, %v2791, 0
    %v2813 = vsel %vm399, %v2792, 0
    %v2816 = vsel %vm399, %v2793, 0
    %v2819 = vsel %vm399, %v2794, 0
    %2821 = vmatprep.subr.mxu0 0.0
    %2822 = vmatpush1.msra.mxu0 0.0
    %2823 = vmatprep.subr.mxu0 0.0
    %2824 = vmatpush1.msra.mxu0 0.0
    %2825 = vmatprep.subr.mxu0 0.0
    %2826 = vmatpush1.msra.mxu0 0.0
    %2827 = vmatprep.subr.mxu0 0.0
    %2828 = vmatpush1.msra.mxu0 0.0
    %2829 = vmatprep.subr.mxu0 0.0
    %2830 = vmatpush1.msra.mxu0 0.0
    %2831 = vmatprep.subr.mxu0 0.0
    %2832 = vmatpush1.msra.mxu0 0.0
    %2833 = vmatprep.subr.mxu0 0.0
    %2834 = vmatpush1.msra.mxu0 0.0
    %2835 = vmatprep.subr.mxu0 0.0
    %2836 = vmatpush1.msra.mxu0 0.0
    %2837 = vmatprep.subr.mxu0 %v2636
    %2838 = vmatpush1.msra.mxu0 %v2635
    %2839 = vmatprep.subr.mxu0 %v2634
    %2840 = vmatpush1.msra.mxu0 %v2633
    %2841 = vmatprep.subr.mxu0 %v2632
    %2842 = vmatpush1.msra.mxu0 %v2631
    %2843 = vmatprep.subr.mxu0 %v2630
    %2844 = vmatpush1.msra.mxu0 %v2629
    %2845 = vmatprep.subr.mxu0 %v2628
    %2846 = vmatpush1.msra.mxu0 %v2627
    %2847 = vmatprep.subr.mxu0 %v2626
    %2848 = vmatpush1.msra.mxu0 %v2625
    %2849 = vmatprep.subr.mxu0 %v2624
    %2850 = vmatpush1.msra.mxu0 %v2623
    %2851 = vmatprep.subr.mxu0 %v2622
    %2852 = vmatpush1.msra.mxu0 %v2621
    %2853 = vmatprep.subr.mxu0 0.0
    %2854 = vmatpush2.msra.mxu0 0.0
    %2855 = vmatprep.subr.mxu0 0.0
    %2856 = vmatpush2.msra.mxu0 0.0
    %2857 = vmatprep.subr.mxu0 0.0
    %2858 = vmatpush2.msra.mxu0 0.0
    %2859 = vmatprep.subr.mxu0 0.0
    %2860 = vmatpush2.msra.mxu0 0.0
    %2861 = vmatprep.subr.mxu0 0.0
    %2862 = vmatpush2.msra.mxu0 0.0
    %2863 = vmatprep.subr.mxu0 0.0
    %2864 = vmatpush2.msra.mxu0 0.0
    %2865 = vmatprep.subr.mxu0 0.0
    %2866 = vmatpush2.msra.mxu0 0.0
    %2867 = vmatprep.subr.mxu0 0.0
    %2868 = vmatpush2.msra.mxu0 0.0
    %2869 = vmatprep.subr.mxu0 0.0
    %2870 = vmatpush2.msra.mxu0 0.0
    %2871 = vmatprep.subr.mxu0 0.0
    %2872 = vmatpush2.msra.mxu0 0.0
    %2873 = vmatprep.subr.mxu0 0.0
    %2874 = vmatpush2.msra.mxu0 0.0
    %2875 = vmatprep.subr.mxu0 0.0
    %2876 = vmatpush2.msra.mxu0 0.0
    %2877 = vmatprep.subr.mxu0 0.0
    %2878 = vmatpush2.msra.mxu0 0.0
    %2879 = vmatprep.subr.mxu0 0.0
    %2880 = vmatpush2.msra.mxu0 0.0
    %2881 = vmatprep.subr.mxu0 0.0
    %2882 = vmatpush2.msra.mxu0 0.0
    %2883 = vmatprep.subr.mxu0 0.0
    %2884 = vmatpush2.msra.mxu0 0.0
    %2885 = vmatprep.mubr.f32.mxu0 0.0
    %2886 = vmatmul.mubr.f32.gmra.mxu0 %v2807
    %v2887 = vpop.f32.mrf.mxu0
    %v2888 = vadd.f32 %v2799, %v2887
    %v2889 = vpop.f32.mrf.mxu0
    %v2890 = vadd.f32 %v2803, %v2889
    %2891 = vmatprep.mubr.f32.mxu0 0.0
    %2892 = vmatmul.mubr.f32.gmra.mxu0 %v2810
    %v2893 = vpop.f32.mrf.mxu0
    %v2894 = vadd.f32 %v2799, %v2893
    %v2895 = vpop.f32.mrf.mxu0
    %v2896 = vadd.f32 %v2803, %v2895
    %2897 = vmatprep.mubr.f32.mxu0 0.0
    %2898 = vmatmul.mubr.f32.gmra.mxu0 %v2813
    %v2899 = vpop.f32.mrf.mxu0
    %v2900 = vadd.f32 %v2799, %v2899
    %v2901 = vpop.f32.mrf.mxu0
    %v2902 = vadd.f32 %v2803, %v2901
    %2903 = vmatprep.mubr.f32.mxu0 0.0
    %2904 = vmatmul.mubr.f32.gmra.mxu0 %v2816
    %v2905 = vpop.f32.mrf.mxu0
    %v2906 = vadd.f32 %v2799, %v2905
    %v2907 = vpop.f32.mrf.mxu0
    %v2908 = vadd.f32 %v2803, %v2907
    %2909 = vmatprep.mubr.f32.mxu0 0.0
    %2910 = vmatmul.mubr.f32.gmra.mxu0 %v2819
    %v2911 = vpop.f32.mrf.mxu0
    %v2912 = vadd.f32 %v2799, %v2911
    %v2913 = vpop.f32.mrf.mxu0
    %v2914 = vadd.f32 %v2803, %v2913
    %2915 = vdwg.mxu0
    %v2916 = vmul.f32 %v2888, 0.25
    %v2917 = vmul.f32 %v2894, 0.25
    %v2918 = vmul.f32 %v2900, 0.25
    %v2919 = vmul.f32 %v2906, 0.25
    %v2920 = vmul.f32 %v2912, 0.25
    %2926 = vrot.lane.b32.xlu0 %v2888, 64
    %v2927 = vpop.permute.xlu0 %2926
    %2928 = vrot.lane.b32.xlu0 %v2894, 64
    %v2929 = vpop.permute.xlu0 %2928
    %2930 = vrot.lane.b32.xlu0 %v2900, 64
    %v2931 = vpop.permute.xlu0 %2930
    %2932 = vrot.lane.b32.xlu0 %v2906, 64
    %v2933 = vpop.permute.xlu0 %2932
    %2934 = vrot.lane.b32.xlu0 %v2912, 64
    %v2935 = vpop.permute.xlu0 %2934
    %v2937 = vsel %vm815, %v2916, 0
    %v2940 = vsel %vm815, %v2917, 0
    %v2943 = vsel %vm815, %v2918, 0
    %v2946 = vsel %vm815, %v2919, 0
    %v2949 = vsel %vm815, %v2920, 0
    %v2951 = vsel %vm815, %v2927, 0
    %v2953 = vsel %vm815, %v2929, 0
    %v2955 = vsel %vm815, %v2931, 0
    %v2957 = vsel %vm815, %v2933, 0
    %v2959 = vsel %vm815, %v2935, 0
    %2961 = vmatprep.subr.mxu0 0.0
    %2962 = vmatpush1.xpose.msra.mxu0 0.0
    %2963 = vmatprep.subr.mxu0 0.0
    %2964 = vmatpush1.xpose.msra.mxu0 0.0
    %2965 = vmatprep.subr.mxu0 0.0
    %2966 = vmatpush1.xpose.msra.mxu0 0.0
    %2967 = vmatprep.subr.mxu0 0.0
    %2968 = vmatpush1.xpose.msra.mxu0 0.0
    %2969 = vmatprep.subr.mxu0 0.0
    %2970 = vmatpush1.xpose.msra.mxu0 0.0
    %2971 = vmatprep.subr.mxu0 0.0
    %2972 = vmatpush1.xpose.msra.mxu0 0.0
    %2973 = vmatprep.subr.mxu0 0.0
    %2974 = vmatpush1.xpose.msra.mxu0 0.0
    %2975 = vmatprep.subr.mxu0 0.0
    %2976 = vmatpush1.xpose.msra.mxu0 0.0
    %2977 = vmatprep.subr.mxu0 0.0
    %2978 = vmatpush1.xpose.msra.mxu0 0.0
    %2979 = vmatprep.subr.mxu0 0.0
    %2980 = vmatpush1.xpose.msra.mxu0 0.0
    %2981 = vmatprep.subr.mxu0 0.0
    %2982 = vmatpush1.xpose.msra.mxu0 0.0
    %2983 = vmatprep.subr.mxu0 0.0
    %2984 = vmatpush1.xpose.msra.mxu0 %v2959
    %2985 = vmatprep.subr.mxu0 0.0
    %2986 = vmatpush1.xpose.msra.mxu0 %v2957
    %2987 = vmatprep.subr.mxu0 0.0
    %2988 = vmatpush1.xpose.msra.mxu0 %v2955
    %2989 = vmatprep.subr.mxu0 0.0
    %2990 = vmatpush1.xpose.msra.mxu0 %v2953
    %2991 = vmatprep.subr.mxu0 0.0
    %2992 = vmatpush1.xpose.msra.mxu0 %v2951
    %2993 = vmatprep.subr.mxu0 0.0
    %2994 = vmatpush2.xpose.msra.mxu0 0.0
    %2995 = vmatprep.subr.mxu0 0.0
    %2996 = vmatpush2.xpose.msra.mxu0 0.0
    %2997 = vmatprep.subr.mxu0 0.0
    %2998 = vmatpush2.xpose.msra.mxu0 0.0
    %2999 = vmatprep.subr.mxu0 0.0
    %3000 = vmatpush2.xpose.msra.mxu0 0.0
    %3001 = vmatprep.subr.mxu0 0.0
    %3002 = vmatpush2.xpose.msra.mxu0 0.0
    %3003 = vmatprep.subr.mxu0 0.0
    %3004 = vmatpush2.xpose.msra.mxu0 0.0
    %3005 = vmatprep.subr.mxu0 0.0
    %3006 = vmatpush2.xpose.msra.mxu0 0.0
    %3007 = vmatprep.subr.mxu0 0.0
    %3008 = vmatpush2.xpose.msra.mxu0 0.0
    %3009 = vmatprep.subr.mxu0 0.0
    %3010 = vmatpush2.xpose.msra.mxu0 0.0
    %3011 = vmatprep.subr.mxu0 0.0
    %3012 = vmatpush2.xpose.msra.mxu0 0.0
    %3013 = vmatprep.subr.mxu0 0.0
    %3014 = vmatpush2.xpose.msra.mxu0 0.0
    %3015 = vmatprep.subr.mxu0 0.0
    %3016 = vmatpush2.xpose.msra.mxu0 0.0
    %3017 = vmatprep.subr.mxu0 0.0
    %3018 = vmatpush2.xpose.msra.mxu0 0.0
    %3019 = vmatprep.subr.mxu0 0.0
    %3020 = vmatpush2.xpose.msra.mxu0 0.0
    %3021 = vmatprep.subr.mxu0 0.0
    %3022 = vmatpush2.xpose.msra.mxu0 0.0
    %3023 = vmatprep.subr.mxu0 0.0
    %3024 = vmatpush2.xpose.msra.mxu0 0.0
    %3025 = vmatprep.mubr.f32.mxu0 0.0
    %3026 = vmatmul.mubr.f32.gmra.mxu0 %v2937
    %v3027 = vpop.f32.mrf.mxu0
    %v3028 = vadd.f32 %v342, %v3027
    %v3029 = vpop.f32.mrf.mxu0
    %3030 = vmatprep.mubr.f32.mxu0 0.0
    %3031 = vmatmul.mubr.f32.gmra.mxu0 %v2940
    %v3032 = vpop.f32.mrf.mxu0
    %v3033 = vadd.f32 %v343, %v3032
    %v3034 = vpop.f32.mrf.mxu0
    %3035 = vmatprep.mubr.f32.mxu0 0.0
    %3036 = vmatmul.mubr.f32.gmra.mxu0 %v2943
    %v3037 = vpop.f32.mrf.mxu0
    %v3038 = vadd.f32 %v344, %v3037
    %v3039 = vpop.f32.mrf.mxu0
    %3040 = vmatprep.mubr.f32.mxu0 0.0
    %3041 = vmatmul.mubr.f32.gmra.mxu0 %v2946
    %v3042 = vpop.f32.mrf.mxu0
    %v3043 = vadd.f32 %v345, %v3042
    %v3044 = vpop.f32.mrf.mxu0
    %3045 = vmatprep.mubr.f32.mxu0 0.0
    %3046 = vmatmul.mubr.f32.gmra.mxu0 %v2949
    %v3047 = vpop.f32.mrf.mxu0
    %v3048 = vadd.f32 %v346, %v3047
    %v3049 = vpop.f32.mrf.mxu0
    %3050 = vdwg.mxu0
    %v3051 = vsel %vm931, %v3028, -inf
    %3052 = vmax.xlane.f32.xlu0 %v3051
    %v3053 = vpop.xlane.xlu0 %3052
    %v3054 = vsel %vm931, %v3033, -inf
    %3055 = vmax.xlane.f32.xlu0 %v3054
    %v3056 = vpop.xlane.xlu0 %3055
    %v3057 = vsel %vm931, %v3038, -inf
    %3058 = vmax.xlane.f32.xlu0 %v3057
    %v3059 = vpop.xlane.xlu0 %3058
    %v3060 = vsel %vm931, %v3043, -inf
    %3061 = vmax.xlane.f32.xlu0 %v3060
    %v3062 = vpop.xlane.xlu0 %3061
    %v3063 = vsel %vm944, %v3048, -inf
    %3064 = vmax.xlane.f32.xlu0 %v3063
    %v3065 = vpop.xlane.xlu0 %3064
    %v3066 = vsub.f32 %v3028, %v3053
    %v3067 = vsub.f32 %v3033, %v3056
    %v3068 = vsub.f32 %v3038, %v3059
    %v3069 = vsub.f32 %v3043, %v3062
    %v3070 = vsub.f32 %v3048, %v3065
    %v3071 = vmul.f32 %v3066, 1.442695
    %v3072 = vpow.pop %v3071
    %v3073 = vmul.f32 %v3067, 1.442695
    %v3074 = vpow.pop %v3073
    %v3075 = vmul.f32 %v3068, 1.442695
    %v3076 = vpow.pop %v3075
    %v3077 = vmul.f32 %v3069, 1.442695
    %v3078 = vpow.pop %v3077
    %v3079 = vmul.f32 %v3070, 1.442695
    %v3080 = vpow.pop %v3079
    %v3081 = vsel %vm931, %v3072, 0.0
    %3082 = vadd.xlane.f32.xlu0 %v3081
    %v3083 = vpop.xlane.xlu0 %3082
    %v3084 = vsel %vm931, %v3074, 0.0
    %3085 = vadd.xlane.f32.xlu0 %v3084
    %v3086 = vpop.xlane.xlu0 %3085
    %v3087 = vsel %vm931, %v3076, 0.0
    %3088 = vadd.xlane.f32.xlu0 %v3087
    %v3089 = vpop.xlane.xlu0 %3088
    %v3090 = vsel %vm931, %v3078, 0.0
    %3091 = vadd.xlane.f32.xlu0 %v3090
    %v3092 = vpop.xlane.xlu0 %3091
    %v3093 = vsel %vm944, %v3080, 0.0
    %3094 = vadd.xlane.f32.xlu0 %v3093
    %v3095 = vpop.xlane.xlu0 %3094
    %v3096 = vrcp.pop %v3083
    %v3097 = vmul.f32 %v3072, %v3096
    %v3098 = vrcp.pop %v3086
    %v3099 = vmul.f32 %v3074, %v3098
    %v3100 = vrcp.pop %v3089
    %v3101 = vmul.f32 %v3076, %v3100
    %v3102 = vrcp.pop %v3092
    %v3103 = vmul.f32 %v3078, %v3102
    %v3104 = vrcp.pop %v3095
    %v3105 = vmul.f32 %v3080, %v3104
    %v3107 = vsel %vm931, %v3097, 0
    %v3110 = vsel %vm931, %v3099, 0
    %v3113 = vsel %vm931, %v3101, 0
    %v3116 = vsel %vm931, %v3103, 0
    %v3119 = vsel %vm931, %v3105, 0
    %v3122 = vsel %vm1003, %v2914, 0
    %3124 = vmatprep.subr.mxu0 0.0
    %3125 = vmatpush1.msra.mxu0 0.0
    %3126 = vmatprep.subr.mxu0 0.0
    %3127 = vmatpush1.msra.mxu0 0.0
    %3128 = vmatprep.subr.mxu0 0.0
    %3129 = vmatpush1.msra.mxu0 0.0
    %3130 = vmatprep.subr.mxu0 0.0
    %3131 = vmatpush1.msra.mxu0 0.0
    %3132 = vmatprep.subr.mxu0 0.0
    %3133 = vmatpush1.msra.mxu0 0.0
    %3134 = vmatprep.subr.mxu0 0.0
    %3135 = vmatpush1.msra.mxu0 0.0
    %3136 = vmatprep.subr.mxu0 0.0
    %3137 = vmatpush1.msra.mxu0 0.0
    %3138 = vmatprep.subr.mxu0 0.0
    %3139 = vmatpush1.msra.mxu0 0.0
    %3140 = vmatprep.subr.mxu0 0.0
    %3141 = vmatpush1.msra.mxu0 0.0
    %3142 = vmatprep.subr.mxu0 0.0
    %3143 = vmatpush1.msra.mxu0 0.0
    %3144 = vmatprep.subr.mxu0 0.0
    %3145 = vmatpush1.msra.mxu0 0.0
    %3146 = vmatprep.subr.mxu0 0.0
    %3147 = vmatpush1.msra.mxu0 %v3122
    %3148 = vmatprep.subr.mxu0 0.0
    %3149 = vmatpush1.msra.mxu0 %v2908
    %3150 = vmatprep.subr.mxu0 0.0
    %3151 = vmatpush1.msra.mxu0 %v2902
    %3152 = vmatprep.subr.mxu0 0.0
    %3153 = vmatpush1.msra.mxu0 %v2896
    %3154 = vmatprep.subr.mxu0 0.0
    %3155 = vmatpush1.msra.mxu0 %v2890
    %3156 = vmatprep.subr.mxu0 0.0
    %3157 = vmatpush2.msra.mxu0 0.0
    %3158 = vmatprep.subr.mxu0 0.0
    %3159 = vmatpush2.msra.mxu0 0.0
    %3160 = vmatprep.subr.mxu0 0.0
    %3161 = vmatpush2.msra.mxu0 0.0
    %3162 = vmatprep.subr.mxu0 0.0
    %3163 = vmatpush2.msra.mxu0 0.0
    %3164 = vmatprep.subr.mxu0 0.0
    %3165 = vmatpush2.msra.mxu0 0.0
    %3166 = vmatprep.subr.mxu0 0.0
    %3167 = vmatpush2.msra.mxu0 0.0
    %3168 = vmatprep.subr.mxu0 0.0
    %3169 = vmatpush2.msra.mxu0 0.0
    %3170 = vmatprep.subr.mxu0 0.0
    %3171 = vmatpush2.msra.mxu0 0.0
    %3172 = vmatprep.subr.mxu0 0.0
    %3173 = vmatpush2.msra.mxu0 0.0
    %3174 = vmatprep.subr.mxu0 0.0
    %3175 = vmatpush2.msra.mxu0 0.0
    %3176 = vmatprep.subr.mxu0 0.0
    %3177 = vmatpush2.msra.mxu0 0.0
    %3178 = vmatprep.subr.mxu0 0.0
    %3179 = vmatpush2.msra.mxu0 0.0
    %3180 = vmatprep.subr.mxu0 0.0
    %3181 = vmatpush2.msra.mxu0 0.0
    %3182 = vmatprep.subr.mxu0 0.0
    %3183 = vmatpush2.msra.mxu0 0.0
    %3184 = vmatprep.subr.mxu0 0.0
    %3185 = vmatpush2.msra.mxu0 0.0
    %3186 = vmatprep.subr.mxu0 0.0
    %3187 = vmatpush2.msra.mxu0 0.0
    %3188 = vmatprep.mubr.f32.mxu0 0.0
    %3189 = vmatmul.mubr.f32.gmra.mxu0 %v3107
    %v3190 = vpop.f32.mrf.mxu0
    %v3191 = vadd.f32 0.0, %v3190
    %v3192 = vpop.f32.mrf.mxu0
    %3193 = vmatprep.mubr.f32.mxu0 0.0
    %3194 = vmatmul.mubr.f32.gmra.mxu0 %v3110
    %v3195 = vpop.f32.mrf.mxu0
    %v3196 = vadd.f32 0.0, %v3195
    %v3197 = vpop.f32.mrf.mxu0
    %3198 = vmatprep.mubr.f32.mxu0 0.0
    %3199 = vmatmul.mubr.f32.gmra.mxu0 %v3113
    %v3200 = vpop.f32.mrf.mxu0
    %v3201 = vadd.f32 0.0, %v3200
    %v3202 = vpop.f32.mrf.mxu0
    %3203 = vmatprep.mubr.f32.mxu0 0.0
    %3204 = vmatmul.mubr.f32.gmra.mxu0 %v3116
    %v3205 = vpop.f32.mrf.mxu0
    %v3206 = vadd.f32 0.0, %v3205
    %v3207 = vpop.f32.mrf.mxu0
    %3208 = vmatprep.mubr.f32.mxu0 0.0
    %3209 = vmatmul.mubr.f32.gmra.mxu0 %v3119
    %v3210 = vpop.f32.mrf.mxu0
    %v3211 = vadd.f32 0.0, %v3210
    %v3212 = vpop.f32.mrf.mxu0
    %3213 = vdwg.mxu0
    %3214 = vrot.lane.b32.xlu0 %v2916, 112
    %v3215 = vpop.permute.xlu0 %3214
    %3216 = vrot.lane.b32.xlu0 %v2917, 112
    %v3217 = vpop.permute.xlu0 %3216
    %3218 = vrot.lane.b32.xlu0 %v2918, 112
    %v3219 = vpop.permute.xlu0 %3218
    %3220 = vrot.lane.b32.xlu0 %v2919, 112
    %v3221 = vpop.permute.xlu0 %3220
    %3222 = vrot.lane.b32.xlu0 %v2920, 112
    %v3223 = vpop.permute.xlu0 %3222
    %3224 = vrot.lane.b32.xlu0 %v2888, 48
    %v3225 = vpop.permute.xlu0 %3224
    %3226 = vrot.lane.b32.xlu0 %v2894, 48
    %v3227 = vpop.permute.xlu0 %3226
    %3228 = vrot.lane.b32.xlu0 %v2900, 48
    %v3229 = vpop.permute.xlu0 %3228
    %3230 = vrot.lane.b32.xlu0 %v2906, 48
    %v3231 = vpop.permute.xlu0 %3230
    %3232 = vrot.lane.b32.xlu0 %v2912, 48
    %v3233 = vpop.permute.xlu0 %3232
    %v3234 = vsel %vm815, %v3215, 0
    %v3236 = vsel %vm815, %v3217, 0
    %v3238 = vsel %vm815, %v3219, 0
    %v3240 = vsel %vm815, %v3221, 0
    %v3242 = vsel %vm815, %v3223, 0
    %v3244 = vsel %vm815, %v3225, 0
    %v3246 = vsel %vm815, %v3227, 0
    %v3248 = vsel %vm815, %v3229, 0
    %v3250 = vsel %vm815, %v3231, 0
    %v3252 = vsel %vm815, %v3233, 0
    %3254 = vmatprep.subr.mxu0 0.0
    %3255 = vmatpush1.xpose.msra.mxu0 0.0
    %3256 = vmatprep.subr.mxu0 0.0
    %3257 = vmatpush1.xpose.msra.mxu0 0.0
    %3258 = vmatprep.subr.mxu0 0.0
    %3259 = vmatpush1.xpose.msra.mxu0 0.0
    %3260 = vmatprep.subr.mxu0 0.0
    %3261 = vmatpush1.xpose.msra.mxu0 0.0
    %3262 = vmatprep.subr.mxu0 0.0
    %3263 = vmatpush1.xpose.msra.mxu0 0.0
    %3264 = vmatprep.subr.mxu0 0.0
    %3265 = vmatpush1.xpose.msra.mxu0 0.0
    %3266 = vmatprep.subr.mxu0 0.0
    %3267 = vmatpush1.xpose.msra.mxu0 0.0
    %3268 = vmatprep.subr.mxu0 0.0
    %3269 = vmatpush1.xpose.msra.mxu0 0.0
    %3270 = vmatprep.subr.mxu0 0.0
    %3271 = vmatpush1.xpose.msra.mxu0 0.0
    %3272 = vmatprep.subr.mxu0 0.0
    %3273 = vmatpush1.xpose.msra.mxu0 0.0
    %3274 = vmatprep.subr.mxu0 0.0
    %3275 = vmatpush1.xpose.msra.mxu0 0.0
    %3276 = vmatprep.subr.mxu0 0.0
    %3277 = vmatpush1.xpose.msra.mxu0 %v3252
    %3278 = vmatprep.subr.mxu0 0.0
    %3279 = vmatpush1.xpose.msra.mxu0 %v3250
    %3280 = vmatprep.subr.mxu0 0.0
    %3281 = vmatpush1.xpose.msra.mxu0 %v3248
    %3282 = vmatprep.subr.mxu0 0.0
    %3283 = vmatpush1.xpose.msra.mxu0 %v3246
    %3284 = vmatprep.subr.mxu0 0.0
    %3285 = vmatpush1.xpose.msra.mxu0 %v3244
    %3286 = vmatprep.subr.mxu0 0.0
    %3287 = vmatpush2.xpose.msra.mxu0 0.0
    %3288 = vmatprep.subr.mxu0 0.0
    %3289 = vmatpush2.xpose.msra.mxu0 0.0
    %3290 = vmatprep.subr.mxu0 0.0
    %3291 = vmatpush2.xpose.msra.mxu0 0.0
    %3292 = vmatprep.subr.mxu0 0.0
    %3293 = vmatpush2.xpose.msra.mxu0 0.0
    %3294 = vmatprep.subr.mxu0 0.0
    %3295 = vmatpush2.xpose.msra.mxu0 0.0
    %3296 = vmatprep.subr.mxu0 0.0
    %3297 = vmatpush2.xpose.msra.mxu0 0.0
    %3298 = vmatprep.subr.mxu0 0.0
    %3299 = vmatpush2.xpose.msra.mxu0 0.0
    %3300 = vmatprep.subr.mxu0 0.0
    %3301 = vmatpush2.xpose.msra.mxu0 0.0
    %3302 = vmatprep.subr.mxu0 0.0
    %3303 = vmatpush2.xpose.msra.mxu0 0.0
    %3304 = vmatprep.subr.mxu0 0.0
    %3305 = vmatpush2.xpose.msra.mxu0 0.0
    %3306 = vmatprep.subr.mxu0 0.0
    %3307 = vmatpush2.xpose.msra.mxu0 0.0
    %3308 = vmatprep.subr.mxu0 0.0
    %3309 = vmatpush2.xpose.msra.mxu0 0.0
    %3310 = vmatprep.subr.mxu0 0.0
    %3311 = vmatpush2.xpose.msra.mxu0 0.0
    %3312 = vmatprep.subr.mxu0 0.0
    %3313 = vmatpush2.xpose.msra.mxu0 0.0
    %3314 = vmatprep.subr.mxu0 0.0
    %3315 = vmatpush2.xpose.msra.mxu0 0.0
    %3316 = vmatprep.subr.mxu0 0.0
    %3317 = vmatpush2.xpose.msra.mxu0 0.0
    %3318 = vmatprep.mubr.f32.mxu0 0.0
    %3319 = vmatmul.mubr.f32.gmra.mxu0 %v3234
    %v3320 = vpop.f32.mrf.mxu0
    %v3321 = vadd.f32 %v342, %v3320
    %v3322 = vpop.f32.mrf.mxu0
    %3323 = vmatprep.mubr.f32.mxu0 0.0
    %3324 = vmatmul.mubr.f32.gmra.mxu0 %v3236
    %v3325 = vpop.f32.mrf.mxu0
    %v3326 = vadd.f32 %v343, %v3325
    %v3327 = vpop.f32.mrf.mxu0
    %3328 = vmatprep.mubr.f32.mxu0 0.0
    %3329 = vmatmul.mubr.f32.gmra.mxu0 %v3238
    %v3330 = vpop.f32.mrf.mxu0
    %v3331 = vadd.f32 %v344, %v3330
    %v3332 = vpop.f32.mrf.mxu0
    %3333 = vmatprep.mubr.f32.mxu0 0.0
    %3334 = vmatmul.mubr.f32.gmra.mxu0 %v3240
    %v3335 = vpop.f32.mrf.mxu0
    %v3336 = vadd.f32 %v345, %v3335
    %v3337 = vpop.f32.mrf.mxu0
    %3338 = vmatprep.mubr.f32.mxu0 0.0
    %3339 = vmatmul.mubr.f32.gmra.mxu0 %v3242
    %v3340 = vpop.f32.mrf.mxu0
    %v3341 = vadd.f32 %v346, %v3340
    %v3342 = vpop.f32.mrf.mxu0
    %3343 = vdwg.mxu0
    %v3344 = vsel %vm931, %v3321, -inf
    %3345 = vmax.xlane.f32.xlu0 %v3344
    %v3346 = vpop.xlane.xlu0 %3345
    %v3347 = vsel %vm931, %v3326, -inf
    %3348 = vmax.xlane.f32.xlu0 %v3347
    %v3349 = vpop.xlane.xlu0 %3348
    %v3350 = vsel %vm931, %v3331, -inf
    %3351 = vmax.xlane.f32.xlu0 %v3350
    %v3352 = vpop.xlane.xlu0 %3351
    %v3353 = vsel %vm931, %v3336, -inf
    %3354 = vmax.xlane.f32.xlu0 %v3353
    %v3355 = vpop.xlane.xlu0 %3354
    %v3356 = vsel %vm944, %v3341, -inf
    %3357 = vmax.xlane.f32.xlu0 %v3356
    %v3358 = vpop.xlane.xlu0 %3357
    %v3359 = vsub.f32 %v3321, %v3346
    %v3360 = vsub.f32 %v3326, %v3349
    %v3361 = vsub.f32 %v3331, %v3352
    %v3362 = vsub.f32 %v3336, %v3355
    %v3363 = vsub.f32 %v3341, %v3358
    %v3364 = vmul.f32 %v3359, 1.442695
    %v3365 = vpow.pop %v3364
    %v3366 = vmul.f32 %v3360, 1.442695
    %v3367 = vpow.pop %v3366
    %v3368 = vmul.f32 %v3361, 1.442695
    %v3369 = vpow.pop %v3368
    %v3370 = vmul.f32 %v3362, 1.442695
    %v3371 = vpow.pop %v3370
    %v3372 = vmul.f32 %v3363, 1.442695
    %v3373 = vpow.pop %v3372
    %v3374 = vsel %vm931, %v3365, 0.0
    %3375 = vadd.xlane.f32.xlu0 %v3374
    %v3376 = vpop.xlane.xlu0 %3375
    %v3377 = vsel %vm931, %v3367, 0.0
    %3378 = vadd.xlane.f32.xlu0 %v3377
    %v3379 = vpop.xlane.xlu0 %3378
    %v3380 = vsel %vm931, %v3369, 0.0
    %3381 = vadd.xlane.f32.xlu0 %v3380
    %v3382 = vpop.xlane.xlu0 %3381
    %v3383 = vsel %vm931, %v3371, 0.0
    %3384 = vadd.xlane.f32.xlu0 %v3383
    %v3385 = vpop.xlane.xlu0 %3384
    %v3386 = vsel %vm944, %v3373, 0.0
    %3387 = vadd.xlane.f32.xlu0 %v3386
    %v3388 = vpop.xlane.xlu0 %3387
    %v3389 = vrcp.pop %v3376
    %v3390 = vmul.f32 %v3365, %v3389
    %v3391 = vrcp.pop %v3379
    %v3392 = vmul.f32 %v3367, %v3391
    %v3393 = vrcp.pop %v3382
    %v3394 = vmul.f32 %v3369, %v3393
    %v3395 = vrcp.pop %v3385
    %v3396 = vmul.f32 %v3371, %v3395
    %v3397 = vrcp.pop %v3388
    %v3398 = vmul.f32 %v3373, %v3397
    %3403 = vrot.lane.b32.xlu0 %v2890, 112
    %v3404 = vpop.permute.xlu0 %3403
    %3405 = vrot.lane.b32.xlu0 %v2896, 112
    %v3406 = vpop.permute.xlu0 %3405
    %3407 = vrot.lane.b32.xlu0 %v2902, 112
    %v3408 = vpop.permute.xlu0 %3407
    %3409 = vrot.lane.b32.xlu0 %v2908, 112
    %v3410 = vpop.permute.xlu0 %3409
    %3411 = vrot.lane.b32.xlu0 %v2914, 112
    %v3412 = vpop.permute.xlu0 %3411
    %v3418 = vsel %vm931, %v3390, 0
    %v3421 = vsel %vm931, %v3392, 0
    %v3424 = vsel %vm931, %v3394, 0
    %v3427 = vsel %vm931, %v3396, 0
    %v3430 = vsel %vm931, %v3398, 0
    %v3432 = vsel %vm1003, %v3412, 0
    %3434 = vmatprep.subr.mxu0 0.0
    %3435 = vmatpush1.msra.mxu0 0.0
    %3436 = vmatprep.subr.mxu0 0.0
    %3437 = vmatpush1.msra.mxu0 0.0
    %3438 = vmatprep.subr.mxu0 0.0
    %3439 = vmatpush1.msra.mxu0 0.0
    %3440 = vmatprep.subr.mxu0 0.0
    %3441 = vmatpush1.msra.mxu0 0.0
    %3442 = vmatprep.subr.mxu0 0.0
    %3443 = vmatpush1.msra.mxu0 0.0
    %3444 = vmatprep.subr.mxu0 0.0
    %3445 = vmatpush1.msra.mxu0 0.0
    %3446 = vmatprep.subr.mxu0 0.0
    %3447 = vmatpush1.msra.mxu0 0.0
    %3448 = vmatprep.subr.mxu0 0.0
    %3449 = vmatpush1.msra.mxu0 0.0
    %3450 = vmatprep.subr.mxu0 0.0
    %3451 = vmatpush1.msra.mxu0 0.0
    %3452 = vmatprep.subr.mxu0 0.0
    %3453 = vmatpush1.msra.mxu0 0.0
    %3454 = vmatprep.subr.mxu0 0.0
    %3455 = vmatpush1.msra.mxu0 0.0
    %3456 = vmatprep.subr.mxu0 0.0
    %3457 = vmatpush1.msra.mxu0 %v3432
    %3458 = vmatprep.subr.mxu0 0.0
    %3459 = vmatpush1.msra.mxu0 %v3410
    %3460 = vmatprep.subr.mxu0 0.0
    %3461 = vmatpush1.msra.mxu0 %v3408
    %3462 = vmatprep.subr.mxu0 0.0
    %3463 = vmatpush1.msra.mxu0 %v3406
    %3464 = vmatprep.subr.mxu0 0.0
    %3465 = vmatpush1.msra.mxu0 %v3404
    %3466 = vmatprep.subr.mxu0 0.0
    %3467 = vmatpush2.msra.mxu0 0.0
    %3468 = vmatprep.subr.mxu0 0.0
    %3469 = vmatpush2.msra.mxu0 0.0
    %3470 = vmatprep.subr.mxu0 0.0
    %3471 = vmatpush2.msra.mxu0 0.0
    %3472 = vmatprep.subr.mxu0 0.0
    %3473 = vmatpush2.msra.mxu0 0.0
    %3474 = vmatprep.subr.mxu0 0.0
    %3475 = vmatpush2.msra.mxu0 0.0
    %3476 = vmatprep.subr.mxu0 0.0
    %3477 = vmatpush2.msra.mxu0 0.0
    %3478 = vmatprep.subr.mxu0 0.0
    %3479 = vmatpush2.msra.mxu0 0.0
    %3480 = vmatprep.subr.mxu0 0.0
    %3481 = vmatpush2.msra.mxu0 0.0
    %3482 = vmatprep.subr.mxu0 0.0
    %3483 = vmatpush2.msra.mxu0 0.0
    %3484 = vmatprep.subr.mxu0 0.0
    %3485 = vmatpush2.msra.mxu0 0.0
    %3486 = vmatprep.subr.mxu0 0.0
    %3487 = vmatpush2.msra.mxu0 0.0
    %3488 = vmatprep.subr.mxu0 0.0
    %3489 = vmatpush2.msra.mxu0 0.0
    %3490 = vmatprep.subr.mxu0 0.0
    %3491 = vmatpush2.msra.mxu0 0.0
    %3492 = vmatprep.subr.mxu0 0.0
    %3493 = vmatpush2.msra.mxu0 0.0
    %3494 = vmatprep.subr.mxu0 0.0
    %3495 = vmatpush2.msra.mxu0 0.0
    %3496 = vmatprep.subr.mxu0 0.0
    %3497 = vmatpush2.msra.mxu0 0.0
    %3498 = vmatprep.mubr.f32.mxu0 0.0
    %3499 = vmatmul.mubr.f32.gmra.mxu0 %v3418
    %v3500 = vpop.f32.mrf.mxu0
    %v3501 = vadd.f32 0.0, %v3500
    %v3502 = vpop.f32.mrf.mxu0
    %3503 = vmatprep.mubr.f32.mxu0 0.0
    %3504 = vmatmul.mubr.f32.gmra.mxu0 %v3421
    %v3505 = vpop.f32.mrf.mxu0
    %v3506 = vadd.f32 0.0, %v3505
    %v3507 = vpop.f32.mrf.mxu0
    %3508 = vmatprep.mubr.f32.mxu0 0.0
    %3509 = vmatmul.mubr.f32.gmra.mxu0 %v3424
    %v3510 = vpop.f32.mrf.mxu0
    %v3511 = vadd.f32 0.0, %v3510
    %v3512 = vpop.f32.mrf.mxu0
    %3513 = vmatprep.mubr.f32.mxu0 0.0
    %3514 = vmatmul.mubr.f32.gmra.mxu0 %v3427
    %v3515 = vpop.f32.mrf.mxu0
    %v3516 = vadd.f32 0.0, %v3515
    %v3517 = vpop.f32.mrf.mxu0
    %3518 = vmatprep.mubr.f32.mxu0 0.0
    %3519 = vmatmul.mubr.f32.gmra.mxu0 %v3430
    %v3520 = vpop.f32.mrf.mxu0
    %v3521 = vadd.f32 0.0, %v3520
    %v3522 = vpop.f32.mrf.mxu0
    %3523 = vdwg.mxu0
    %3524 = vrot.lane.b32.xlu0 %v2916, 96
    %v3525 = vpop.permute.xlu0 %3524
    %3526 = vrot.lane.b32.xlu0 %v2917, 96
    %v3527 = vpop.permute.xlu0 %3526
    %3528 = vrot.lane.b32.xlu0 %v2918, 96
    %v3529 = vpop.permute.xlu0 %3528
    %3530 = vrot.lane.b32.xlu0 %v2919, 96
    %v3531 = vpop.permute.xlu0 %3530
    %3532 = vrot.lane.b32.xlu0 %v2920, 96
    %v3533 = vpop.permute.xlu0 %3532
    %3534 = vrot.lane.b32.xlu0 %v2888, 32
    %v3535 = vpop.permute.xlu0 %3534
    %3536 = vrot.lane.b32.xlu0 %v2894, 32
    %v3537 = vpop.permute.xlu0 %3536
    %3538 = vrot.lane.b32.xlu0 %v2900, 32
    %v3539 = vpop.permute.xlu0 %3538
    %3540 = vrot.lane.b32.xlu0 %v2906, 32
    %v3541 = vpop.permute.xlu0 %3540
    %3542 = vrot.lane.b32.xlu0 %v2912, 32
    %v3543 = vpop.permute.xlu0 %3542
    %v3544 = vsel %vm815, %v3525, 0
    %v3546 = vsel %vm815, %v3527, 0
    %v3548 = vsel %vm815, %v3529, 0
    %v3550 = vsel %vm815, %v3531, 0
    %v3552 = vsel %vm815, %v3533, 0
    %v3554 = vsel %vm815, %v3535, 0
    %v3556 = vsel %vm815, %v3537, 0
    %v3558 = vsel %vm815, %v3539, 0
    %v3560 = vsel %vm815, %v3541, 0
    %v3562 = vsel %vm815, %v3543, 0
    %3564 = vmatprep.subr.mxu0 0.0
    %3565 = vmatpush1.xpose.msra.mxu0 0.0
    %3566 = vmatprep.subr.mxu0 0.0
    %3567 = vmatpush1.xpose.msra.mxu0 0.0
    %3568 = vmatprep.subr.mxu0 0.0
    %3569 = vmatpush1.xpose.msra.mxu0 0.0
    %3570 = vmatprep.subr.mxu0 0.0
    %3571 = vmatpush1.xpose.msra.mxu0 0.0
    %3572 = vmatprep.subr.mxu0 0.0
    %3573 = vmatpush1.xpose.msra.mxu0 0.0
    %3574 = vmatprep.subr.mxu0 0.0
    %3575 = vmatpush1.xpose.msra.mxu0 0.0
    %3576 = vmatprep.subr.mxu0 0.0
    %3577 = vmatpush1.xpose.msra.mxu0 0.0
    %3578 = vmatprep.subr.mxu0 0.0
    %3579 = vmatpush1.xpose.msra.mxu0 0.0
    %3580 = vmatprep.subr.mxu0 0.0
    %3581 = vmatpush1.xpose.msra.mxu0 0.0
    %3582 = vmatprep.subr.mxu0 0.0
    %3583 = vmatpush1.xpose.msra.mxu0 0.0
    %3584 = vmatprep.subr.mxu0 0.0
    %3585 = vmatpush1.xpose.msra.mxu0 0.0
    %3586 = vmatprep.subr.mxu0 0.0
    %3587 = vmatpush1.xpose.msra.mxu0 %v3562
    %3588 = vmatprep.subr.mxu0 0.0
    %3589 = vmatpush1.xpose.msra.mxu0 %v3560
    %3590 = vmatprep.subr.mxu0 0.0
    %3591 = vmatpush1.xpose.msra.mxu0 %v3558
    %3592 = vmatprep.subr.mxu0 0.0
    %3593 = vmatpush1.xpose.msra.mxu0 %v3556
    %3594 = vmatprep.subr.mxu0 0.0
    %3595 = vmatpush1.xpose.msra.mxu0 %v3554
    %3596 = vmatprep.subr.mxu0 0.0
    %3597 = vmatpush2.xpose.msra.mxu0 0.0
    %3598 = vmatprep.subr.mxu0 0.0
    %3599 = vmatpush2.xpose.msra.mxu0 0.0
    %3600 = vmatprep.subr.mxu0 0.0
    %3601 = vmatpush2.xpose.msra.mxu0 0.0
    %3602 = vmatprep.subr.mxu0 0.0
    %3603 = vmatpush2.xpose.msra.mxu0 0.0
    %3604 = vmatprep.subr.mxu0 0.0
    %3605 = vmatpush2.xpose.msra.mxu0 0.0
    %3606 = vmatprep.subr.mxu0 0.0
    %3607 = vmatpush2.xpose.msra.mxu0 0.0
    %3608 = vmatprep.subr.mxu0 0.0
    %3609 = vmatpush2.xpose.msra.mxu0 0.0
    %3610 = vmatprep.subr.mxu0 0.0
    %3611 = vmatpush2.xpose.msra.mxu0 0.0
    %3612 = vmatprep.subr.mxu0 0.0
    %3613 = vmatpush2.xpose.msra.mxu0 0.0
    %3614 = vmatprep.subr.mxu0 0.0
    %3615 = vmatpush2.xpose.msra.mxu0 0.0
    %3616 = vmatprep.subr.mxu0 0.0
    %3617 = vmatpush2.xpose.msra.mxu0 0.0
    %3618 = vmatprep.subr.mxu0 0.0
    %3619 = vmatpush2.xpose.msra.mxu0 0.0
    %3620 = vmatprep.subr.mxu0 0.0
    %3621 = vmatpush2.xpose.msra.mxu0 0.0
    %3622 = vmatprep.subr.mxu0 0.0
    %3623 = vmatpush2.xpose.msra.mxu0 0.0
    %3624 = vmatprep.subr.mxu0 0.0
    %3625 = vmatpush2.xpose.msra.mxu0 0.0
    %3626 = vmatprep.subr.mxu0 0.0
    %3627 = vmatpush2.xpose.msra.mxu0 0.0
    %3628 = vmatprep.mubr.f32.mxu0 0.0
    %3629 = vmatmul.mubr.f32.gmra.mxu0 %v3544
    %v3630 = vpop.f32.mrf.mxu0
    %v3631 = vadd.f32 %v342, %v3630
    %v3632 = vpop.f32.mrf.mxu0
    %3633 = vmatprep.mubr.f32.mxu0 0.0
    %3634 = vmatmul.mubr.f32.gmra.mxu0 %v3546
    %v3635 = vpop.f32.mrf.mxu0
    %v3636 = vadd.f32 %v343, %v3635
    %v3637 = vpop.f32.mrf.mxu0
    %3638 = vmatprep.mubr.f32.mxu0 0.0
    %3639 = vmatmul.mubr.f32.gmra.mxu0 %v3548
    %v3640 = vpop.f32.mrf.mxu0
    %v3641 = vadd.f32 %v344, %v3640
    %v3642 = vpop.f32.mrf.mxu0
    %3643 = vmatprep.mubr.f32.mxu0 0.0
    %3644 = vmatmul.mubr.f32.gmra.mxu0 %v3550
    %v3645 = vpop.f32.mrf.mxu0
    %v3646 = vadd.f32 %v345, %v3645
    %v3647 = vpop.f32.mrf.mxu0
    %3648 = vmatprep.mubr.f32.mxu0 0.0
    %3649 = vmatmul.mubr.f32.gmra.mxu0 %v3552
    %v3650 = vpop.f32.mrf.mxu0
    %v3651 = vadd.f32 %v346, %v3650
    %v3652 = vpop.f32.mrf.mxu0
    %3653 = vdwg.mxu0
    %v3654 = vsel %vm931, %v3631, -inf
    %3655 = vmax.xlane.f32.xlu0 %v3654
    %v3656 = vpop.xlane.xlu0 %3655
    %v3657 = vsel %vm931, %v3636, -inf
    %3658 = vmax.xlane.f32.xlu0 %v3657
    %v3659 = vpop.xlane.xlu0 %3658
    %v3660 = vsel %vm931, %v3641, -inf
    %3661 = vmax.xlane.f32.xlu0 %v3660
    %v3662 = vpop.xlane.xlu0 %3661
    %v3663 = vsel %vm931, %v3646, -inf
    %3664 = vmax.xlane.f32.xlu0 %v3663
    %v3665 = vpop.xlane.xlu0 %3664
    %v3666 = vsel %vm944, %v3651, -inf
    %3667 = vmax.xlane.f32.xlu0 %v3666
    %v3668 = vpop.xlane.xlu0 %3667
    %v3669 = vsub.f32 %v3631, %v3656
    %v3670 = vsub.f32 %v3636, %v3659
    %v3671 = vsub.f32 %v3641, %v3662
    %v3672 = vsub.f32 %v3646, %v3665
    %v3673 = vsub.f32 %v3651, %v3668
    %v3674 = vmul.f32 %v3669, 1.442695
    %v3675 = vpow.pop %v3674
    %v3676 = vmul.f32 %v3670, 1.442695
    %v3677 = vpow.pop %v3676
    %v3678 = vmul.f32 %v3671, 1.442695
    %v3679 = vpow.pop %v3678
    %v3680 = vmul.f32 %v3672, 1.442695
    %v3681 = vpow.pop %v3680
    %v3682 = vmul.f32 %v3673, 1.442695
    %v3683 = vpow.pop %v3682
    %v3684 = vsel %vm931, %v3675, 0.0
    %3685 = vadd.xlane.f32.xlu0 %v3684
    %v3686 = vpop.xlane.xlu0 %3685
    %v3687 = vsel %vm931, %v3677, 0.0
    %3688 = vadd.xlane.f32.xlu0 %v3687
    %v3689 = vpop.xlane.xlu0 %3688
    %v3690 = vsel %vm931, %v3679, 0.0
    %3691 = vadd.xlane.f32.xlu0 %v3690
    %v3692 = vpop.xlane.xlu0 %3691
    %v3693 = vsel %vm931, %v3681, 0.0
    %3694 = vadd.xlane.f32.xlu0 %v3693
    %v3695 = vpop.xlane.xlu0 %3694
    %v3696 = vsel %vm944, %v3683, 0.0
    %3697 = vadd.xlane.f32.xlu0 %v3696
    %v3698 = vpop.xlane.xlu0 %3697
    %v3699 = vrcp.pop %v3686
    %v3700 = vmul.f32 %v3675, %v3699
    %v3701 = vrcp.pop %v3689
    %v3702 = vmul.f32 %v3677, %v3701
    %v3703 = vrcp.pop %v3692
    %v3704 = vmul.f32 %v3679, %v3703
    %v3705 = vrcp.pop %v3695
    %v3706 = vmul.f32 %v3681, %v3705
    %v3707 = vrcp.pop %v3698
    %v3708 = vmul.f32 %v3683, %v3707
    %3709 = vrot.lane.b32.xlu0 %v2890, 96
    %v3710 = vpop.permute.xlu0 %3709
    %3711 = vrot.lane.b32.xlu0 %v2896, 96
    %v3712 = vpop.permute.xlu0 %3711
    %3713 = vrot.lane.b32.xlu0 %v2902, 96
    %v3714 = vpop.permute.xlu0 %3713
    %3715 = vrot.lane.b32.xlu0 %v2908, 96
    %v3716 = vpop.permute.xlu0 %3715
    %3717 = vrot.lane.b32.xlu0 %v2914, 96
    %v3718 = vpop.permute.xlu0 %3717
    %v3724 = vsel %vm931, %v3700, 0
    %v3727 = vsel %vm931, %v3702, 0
    %v3730 = vsel %vm931, %v3704, 0
    %v3733 = vsel %vm931, %v3706, 0
    %v3736 = vsel %vm931, %v3708, 0
    %v3738 = vsel %vm1003, %v3718, 0
    %3740 = vmatprep.subr.mxu0 0.0
    %3741 = vmatpush1.msra.mxu0 0.0
    %3742 = vmatprep.subr.mxu0 0.0
    %3743 = vmatpush1.msra.mxu0 0.0
    %3744 = vmatprep.subr.mxu0 0.0
    %3745 = vmatpush1.msra.mxu0 0.0
    %3746 = vmatprep.subr.mxu0 0.0
    %3747 = vmatpush1.msra.mxu0 0.0
    %3748 = vmatprep.subr.mxu0 0.0
    %3749 = vmatpush1.msra.mxu0 0.0
    %3750 = vmatprep.subr.mxu0 0.0
    %3751 = vmatpush1.msra.mxu0 0.0
    %3752 = vmatprep.subr.mxu0 0.0
    %3753 = vmatpush1.msra.mxu0 0.0
    %3754 = vmatprep.subr.mxu0 0.0
    %3755 = vmatpush1.msra.mxu0 0.0
    %3756 = vmatprep.subr.mxu0 0.0
    %3757 = vmatpush1.msra.mxu0 0.0
    %3758 = vmatprep.subr.mxu0 0.0
    %3759 = vmatpush1.msra.mxu0 0.0
    %3760 = vmatprep.subr.mxu0 0.0
    %3761 = vmatpush1.msra.mxu0 0.0
    %3762 = vmatprep.subr.mxu0 0.0
    %3763 = vmatpush1.msra.mxu0 %v3738
    %3764 = vmatprep.subr.mxu0 0.0
    %3765 = vmatpush1.msra.mxu0 %v3716
    %3766 = vmatprep.subr.mxu0 0.0
    %3767 = vmatpush1.msra.mxu0 %v3714
    %3768 = vmatprep.subr.mxu0 0.0
    %3769 = vmatpush1.msra.mxu0 %v3712
    %3770 = vmatprep.subr.mxu0 0.0
    %3771 = vmatpush1.msra.mxu0 %v3710
    %3772 = vmatprep.subr.mxu0 0.0
    %3773 = vmatpush2.msra.mxu0 0.0
    %3774 = vmatprep.subr.mxu0 0.0
    %3775 = vmatpush2.msra.mxu0 0.0
    %3776 = vmatprep.subr.mxu0 0.0
    %3777 = vmatpush2.msra.mxu0 0.0
    %3778 = vmatprep.subr.mxu0 0.0
    %3779 = vmatpush2.msra.mxu0 0.0
    %3780 = vmatprep.subr.mxu0 0.0
    %3781 = vmatpush2.msra.mxu0 0.0
    %3782 = vmatprep.subr.mxu0 0.0
    %3783 = vmatpush2.msra.mxu0 0.0
    %3784 = vmatprep.subr.mxu0 0.0
    %3785 = vmatpush2.msra.mxu0 0.0
    %3786 = vmatprep.subr.mxu0 0.0
    %3787 = vmatpush2.msra.mxu0 0.0
    %3788 = vmatprep.subr.mxu0 0.0
    %3789 = vmatpush2.msra.mxu0 0.0
    %3790 = vmatprep.subr.mxu0 0.0
    %3791 = vmatpush2.msra.mxu0 0.0
    %3792 = vmatprep.subr.mxu0 0.0
    %3793 = vmatpush2.msra.mxu0 0.0
    %3794 = vmatprep.subr.mxu0 0.0
    %3795 = vmatpush2.msra.mxu0 0.0
    %3796 = vmatprep.subr.mxu0 0.0
    %3797 = vmatpush2.msra.mxu0 0.0
    %3798 = vmatprep.subr.mxu0 0.0
    %3799 = vmatpush2.msra.mxu0 0.0
    %3800 = vmatprep.subr.mxu0 0.0
    %3801 = vmatpush2.msra.mxu0 0.0
    %3802 = vmatprep.subr.mxu0 0.0
    %3803 = vmatpush2.msra.mxu0 0.0
    %3804 = vmatprep.mubr.f32.mxu0 0.0
    %3805 = vmatmul.mubr.f32.gmra.mxu0 %v3724
    %v3806 = vpop.f32.mrf.mxu0
    %v3807 = vadd.f32 0.0, %v3806
    %v3808 = vpop.f32.mrf.mxu0
    %3809 = vmatprep.mubr.f32.mxu0 0.0
    %3810 = vmatmul.mubr.f32.gmra.mxu0 %v3727
    %v3811 = vpop.f32.mrf.mxu0
    %v3812 = vadd.f32 0.0, %v3811
    %v3813 = vpop.f32.mrf.mxu0
    %3814 = vmatprep.mubr.f32.mxu0 0.0
    %3815 = vmatmul.mubr.f32.gmra.mxu0 %v3730
    %v3816 = vpop.f32.mrf.mxu0
    %v3817 = vadd.f32 0.0, %v3816
    %v3818 = vpop.f32.mrf.mxu0
    %3819 = vmatprep.mubr.f32.mxu0 0.0
    %3820 = vmatmul.mubr.f32.gmra.mxu0 %v3733
    %v3821 = vpop.f32.mrf.mxu0
    %v3822 = vadd.f32 0.0, %v3821
    %v3823 = vpop.f32.mrf.mxu0
    %3824 = vmatprep.mubr.f32.mxu0 0.0
    %3825 = vmatmul.mubr.f32.gmra.mxu0 %v3736
    %v3826 = vpop.f32.mrf.mxu0
    %v3827 = vadd.f32 0.0, %v3826
    %v3828 = vpop.f32.mrf.mxu0
    %3829 = vdwg.mxu0
    %3830 = vrot.lane.b32.xlu0 %v2916, 80
    %v3831 = vpop.permute.xlu0 %3830
    %3832 = vrot.lane.b32.xlu0 %v2917, 80
    %v3833 = vpop.permute.xlu0 %3832
    %3834 = vrot.lane.b32.xlu0 %v2918, 80
    %v3835 = vpop.permute.xlu0 %3834
    %3836 = vrot.lane.b32.xlu0 %v2919, 80
    %v3837 = vpop.permute.xlu0 %3836
    %3838 = vrot.lane.b32.xlu0 %v2920, 80
    %v3839 = vpop.permute.xlu0 %3838
    %3840 = vrot.lane.b32.xlu0 %v2888, 16
    %v3841 = vpop.permute.xlu0 %3840
    %3842 = vrot.lane.b32.xlu0 %v2894, 16
    %v3843 = vpop.permute.xlu0 %3842
    %3844 = vrot.lane.b32.xlu0 %v2900, 16
    %v3845 = vpop.permute.xlu0 %3844
    %3846 = vrot.lane.b32.xlu0 %v2906, 16
    %v3847 = vpop.permute.xlu0 %3846
    %3848 = vrot.lane.b32.xlu0 %v2912, 16
    %v3849 = vpop.permute.xlu0 %3848
    %v3850 = vsel %vm815, %v3831, 0
    %v3852 = vsel %vm815, %v3833, 0
    %v3854 = vsel %vm815, %v3835, 0
    %v3856 = vsel %vm815, %v3837, 0
    %v3858 = vsel %vm815, %v3839, 0
    %v3860 = vsel %vm815, %v3841, 0
    %v3862 = vsel %vm815, %v3843, 0
    %v3864 = vsel %vm815, %v3845, 0
    %v3866 = vsel %vm815, %v3847, 0
    %v3868 = vsel %vm815, %v3849, 0
    %3870 = vmatprep.subr.mxu0 0.0
    %3871 = vmatpush1.xpose.msra.mxu0 0.0
    %3872 = vmatprep.subr.mxu0 0.0
    %3873 = vmatpush1.xpose.msra.mxu0 0.0
    %3874 = vmatprep.subr.mxu0 0.0
    %3875 = vmatpush1.xpose.msra.mxu0 0.0
    %3876 = vmatprep.subr.mxu0 0.0
    %3877 = vmatpush1.xpose.msra.mxu0 0.0
    %3878 = vmatprep.subr.mxu0 0.0
    %3879 = vmatpush1.xpose.msra.mxu0 0.0
    %3880 = vmatprep.subr.mxu0 0.0
    %3881 = vmatpush1.xpose.msra.mxu0 0.0
    %3882 = vmatprep.subr.mxu0 0.0
    %3883 = vmatpush1.xpose.msra.mxu0 0.0
    %3884 = vmatprep.subr.mxu0 0.0
    %3885 = vmatpush1.xpose.msra.mxu0 0.0
    %3886 = vmatprep.subr.mxu0 0.0
    %3887 = vmatpush1.xpose.msra.mxu0 0.0
    %3888 = vmatprep.subr.mxu0 0.0
    %3889 = vmatpush1.xpose.msra.mxu0 0.0
    %3890 = vmatprep.subr.mxu0 0.0
    %3891 = vmatpush1.xpose.msra.mxu0 0.0
    %3892 = vmatprep.subr.mxu0 0.0
    %3893 = vmatpush1.xpose.msra.mxu0 %v3868
    %3894 = vmatprep.subr.mxu0 0.0
    %3895 = vmatpush1.xpose.msra.mxu0 %v3866
    %3896 = vmatprep.subr.mxu0 0.0
    %3897 = vmatpush1.xpose.msra.mxu0 %v3864
    %3898 = vmatprep.subr.mxu0 0.0
    %3899 = vmatpush1.xpose.msra.mxu0 %v3862
    %3900 = vmatprep.subr.mxu0 0.0
    %3901 = vmatpush1.xpose.msra.mxu0 %v3860
    %3902 = vmatprep.subr.mxu0 0.0
    %3903 = vmatpush2.xpose.msra.mxu0 0.0
    %3904 = vmatprep.subr.mxu0 0.0
    %3905 = vmatpush2.xpose.msra.mxu0 0.0
    %3906 = vmatprep.subr.mxu0 0.0
    %3907 = vmatpush2.xpose.msra.mxu0 0.0
    %3908 = vmatprep.subr.mxu0 0.0
    %3909 = vmatpush2.xpose.msra.mxu0 0.0
    %3910 = vmatprep.subr.mxu0 0.0
    %3911 = vmatpush2.xpose.msra.mxu0 0.0
    %3912 = vmatprep.subr.mxu0 0.0
    %3913 = vmatpush2.xpose.msra.mxu0 0.0
    %3914 = vmatprep.subr.mxu0 0.0
    %3915 = vmatpush2.xpose.msra.mxu0 0.0
    %3916 = vmatprep.subr.mxu0 0.0
    %3917 = vmatpush2.xpose.msra.mxu0 0.0
    %3918 = vmatprep.subr.mxu0 0.0
    %3919 = vmatpush2.xpose.msra.mxu0 0.0
    %3920 = vmatprep.subr.mxu0 0.0
    %3921 = vmatpush2.xpose.msra.mxu0 0.0
    %3922 = vmatprep.subr.mxu0 0.0
    %3923 = vmatpush2.xpose.msra.mxu0 0.0
    %3924 = vmatprep.subr.mxu0 0.0
    %3925 = vmatpush2.xpose.msra.mxu0 0.0
    %3926 = vmatprep.subr.mxu0 0.0
    %3927 = vmatpush2.xpose.msra.mxu0 0.0
    %3928 = vmatprep.subr.mxu0 0.0
    %3929 = vmatpush2.xpose.msra.mxu0 0.0
    %3930 = vmatprep.subr.mxu0 0.0
    %3931 = vmatpush2.xpose.msra.mxu0 0.0
    %3932 = vmatprep.subr.mxu0 0.0
    %3933 = vmatpush2.xpose.msra.mxu0 0.0
    %3934 = vmatprep.mubr.f32.mxu0 0.0
    %3935 = vmatmul.mubr.f32.gmra.mxu0 %v3850
    %v3936 = vpop.f32.mrf.mxu0
    %v3937 = vadd.f32 %v342, %v3936
    %v3938 = vpop.f32.mrf.mxu0
    %3939 = vmatprep.mubr.f32.mxu0 0.0
    %3940 = vmatmul.mubr.f32.gmra.mxu0 %v3852
    %v3941 = vpop.f32.mrf.mxu0
    %v3942 = vadd.f32 %v343, %v3941
    %v3943 = vpop.f32.mrf.mxu0
    %3944 = vmatprep.mubr.f32.mxu0 0.0
    %3945 = vmatmul.mubr.f32.gmra.mxu0 %v3854
    %v3946 = vpop.f32.mrf.mxu0
    %v3947 = vadd.f32 %v344, %v3946
    %v3948 = vpop.f32.mrf.mxu0
    %3949 = vmatprep.mubr.f32.mxu0 0.0
    %3950 = vmatmul.mubr.f32.gmra.mxu0 %v3856
    %v3951 = vpop.f32.mrf.mxu0
    %v3952 = vadd.f32 %v345, %v3951
    %v3953 = vpop.f32.mrf.mxu0
    %3954 = vmatprep.mubr.f32.mxu0 0.0
    %3955 = vmatmul.mubr.f32.gmra.mxu0 %v3858
    %v3956 = vpop.f32.mrf.mxu0
    %v3957 = vadd.f32 %v346, %v3956
    %v3958 = vpop.f32.mrf.mxu0
    %3959 = vdwg.mxu0
    %v3960 = vsel %vm931, %v3937, -inf
    %3961 = vmax.xlane.f32.xlu0 %v3960
    %v3962 = vpop.xlane.xlu0 %3961
    %v3963 = vsel %vm931, %v3942, -inf
    %3964 = vmax.xlane.f32.xlu0 %v3963
    %v3965 = vpop.xlane.xlu0 %3964
    %v3966 = vsel %vm931, %v3947, -inf
    %3967 = vmax.xlane.f32.xlu0 %v3966
    %v3968 = vpop.xlane.xlu0 %3967
    %v3969 = vsel %vm931, %v3952, -inf
    %3970 = vmax.xlane.f32.xlu0 %v3969
    %v3971 = vpop.xlane.xlu0 %3970
    %v3972 = vsel %vm944, %v3957, -inf
    %3973 = vmax.xlane.f32.xlu0 %v3972
    %v3974 = vpop.xlane.xlu0 %3973
    %v3975 = vsub.f32 %v3937, %v3962
    %v3976 = vsub.f32 %v3942, %v3965
    %v3977 = vsub.f32 %v3947, %v3968
    %v3978 = vsub.f32 %v3952, %v3971
    %v3979 = vsub.f32 %v3957, %v3974
    %v3980 = vmul.f32 %v3975, 1.442695
    %v3981 = vpow.pop %v3980
    %v3982 = vmul.f32 %v3976, 1.442695
    %v3983 = vpow.pop %v3982
    %v3984 = vmul.f32 %v3977, 1.442695
    %v3985 = vpow.pop %v3984
    %v3986 = vmul.f32 %v3978, 1.442695
    %v3987 = vpow.pop %v3986
    %v3988 = vmul.f32 %v3979, 1.442695
    %v3989 = vpow.pop %v3988
    %v3990 = vsel %vm931, %v3981, 0.0
    %3991 = vadd.xlane.f32.xlu0 %v3990
    %v3992 = vpop.xlane.xlu0 %3991
    %v3993 = vsel %vm931, %v3983, 0.0
    %3994 = vadd.xlane.f32.xlu0 %v3993
    %v3995 = vpop.xlane.xlu0 %3994
    %v3996 = vsel %vm931, %v3985, 0.0
    %3997 = vadd.xlane.f32.xlu0 %v3996
    %v3998 = vpop.xlane.xlu0 %3997
    %v3999 = vsel %vm931, %v3987, 0.0
    %4000 = vadd.xlane.f32.xlu0 %v3999
    %v4001 = vpop.xlane.xlu0 %4000
    %v4002 = vsel %vm944, %v3989, 0.0
    %4003 = vadd.xlane.f32.xlu0 %v4002
    %v4004 = vpop.xlane.xlu0 %4003
    %v4005 = vrcp.pop %v3992
    %v4006 = vmul.f32 %v3981, %v4005
    %v4007 = vrcp.pop %v3995
    %v4008 = vmul.f32 %v3983, %v4007
    %v4009 = vrcp.pop %v3998
    %v4010 = vmul.f32 %v3985, %v4009
    %v4011 = vrcp.pop %v4001
    %v4012 = vmul.f32 %v3987, %v4011
    %v4013 = vrcp.pop %v4004
    %v4014 = vmul.f32 %v3989, %v4013
    %4015 = vrot.lane.b32.xlu0 %v2890, 80
    %v4016 = vpop.permute.xlu0 %4015
    %4017 = vrot.lane.b32.xlu0 %v2896, 80
    %v4018 = vpop.permute.xlu0 %4017
    %4019 = vrot.lane.b32.xlu0 %v2902, 80
    %v4020 = vpop.permute.xlu0 %4019
    %4021 = vrot.lane.b32.xlu0 %v2908, 80
    %v4022 = vpop.permute.xlu0 %4021
    %4023 = vrot.lane.b32.xlu0 %v2914, 80
    %v4024 = vpop.permute.xlu0 %4023
    %v4030 = vsel %vm931, %v4006, 0
    %v4033 = vsel %vm931, %v4008, 0
    %v4036 = vsel %vm931, %v4010, 0
    %v4039 = vsel %vm931, %v4012, 0
    %v4042 = vsel %vm931, %v4014, 0
    %v4044 = vsel %vm1003, %v4024, 0
    %4046 = vmatprep.subr.mxu0 0.0
    %4047 = vmatpush1.msra.mxu0 0.0
    %4048 = vmatprep.subr.mxu0 0.0
    %4049 = vmatpush1.msra.mxu0 0.0
    %4050 = vmatprep.subr.mxu0 0.0
    %4051 = vmatpush1.msra.mxu0 0.0
    %4052 = vmatprep.subr.mxu0 0.0
    %4053 = vmatpush1.msra.mxu0 0.0
    %4054 = vmatprep.subr.mxu0 0.0
    %4055 = vmatpush1.msra.mxu0 0.0
    %4056 = vmatprep.subr.mxu0 0.0
    %4057 = vmatpush1.msra.mxu0 0.0
    %4058 = vmatprep.subr.mxu0 0.0
    %4059 = vmatpush1.msra.mxu0 0.0
    %4060 = vmatprep.subr.mxu0 0.0
    %4061 = vmatpush1.msra.mxu0 0.0
    %4062 = vmatprep.subr.mxu0 0.0
    %4063 = vmatpush1.msra.mxu0 0.0
    %4064 = vmatprep.subr.mxu0 0.0
    %4065 = vmatpush1.msra.mxu0 0.0
    %4066 = vmatprep.subr.mxu0 0.0
    %4067 = vmatpush1.msra.mxu0 0.0
    %4068 = vmatprep.subr.mxu0 0.0
    %4069 = vmatpush1.msra.mxu0 %v4044
    %4070 = vmatprep.subr.mxu0 0.0
    %4071 = vmatpush1.msra.mxu0 %v4022
    %4072 = vmatprep.subr.mxu0 0.0
    %4073 = vmatpush1.msra.mxu0 %v4020
    %4074 = vmatprep.subr.mxu0 0.0
    %4075 = vmatpush1.msra.mxu0 %v4018
    %4076 = vmatprep.subr.mxu0 0.0
    %4077 = vmatpush1.msra.mxu0 %v4016
    %4078 = vmatprep.subr.mxu0 0.0
    %4079 = vmatpush2.msra.mxu0 0.0
    %4080 = vmatprep.subr.mxu0 0.0
    %4081 = vmatpush2.msra.mxu0 0.0
    %4082 = vmatprep.subr.mxu0 0.0
    %4083 = vmatpush2.msra.mxu0 0.0
    %4084 = vmatprep.subr.mxu0 0.0
    %4085 = vmatpush2.msra.mxu0 0.0
    %4086 = vmatprep.subr.mxu0 0.0
    %4087 = vmatpush2.msra.mxu0 0.0
    %4088 = vmatprep.subr.mxu0 0.0
    %4089 = vmatpush2.msra.mxu0 0.0
    %4090 = vmatprep.subr.mxu0 0.0
    %4091 = vmatpush2.msra.mxu0 0.0
    %4092 = vmatprep.subr.mxu0 0.0
    %4093 = vmatpush2.msra.mxu0 0.0
    %4094 = vmatprep.subr.mxu0 0.0
    %4095 = vmatpush2.msra.mxu0 0.0
    %4096 = vmatprep.subr.mxu0 0.0
    %4097 = vmatpush2.msra.mxu0 0.0
    %4098 = vmatprep.subr.mxu0 0.0
    %4099 = vmatpush2.msra.mxu0 0.0
    %4100 = vmatprep.subr.mxu0 0.0
    %4101 = vmatpush2.msra.mxu0 0.0
    %4102 = vmatprep.subr.mxu0 0.0
    %4103 = vmatpush2.msra.mxu0 0.0
    %4104 = vmatprep.subr.mxu0 0.0
    %4105 = vmatpush2.msra.mxu0 0.0
    %4106 = vmatprep.subr.mxu0 0.0
    %4107 = vmatpush2.msra.mxu0 0.0
    %4108 = vmatprep.subr.mxu0 0.0
    %4109 = vmatpush2.msra.mxu0 0.0
    %4110 = vmatprep.mubr.f32.mxu0 0.0
    %4111 = vmatmul.mubr.f32.gmra.mxu0 %v4030
    %v4112 = vpop.f32.mrf.mxu0
    %v4113 = vadd.f32 0.0, %v4112
    %v4114 = vpop.f32.mrf.mxu0
    %4115 = vmatprep.mubr.f32.mxu0 0.0
    %4116 = vmatmul.mubr.f32.gmra.mxu0 %v4033
    %v4117 = vpop.f32.mrf.mxu0
    %v4118 = vadd.f32 0.0, %v4117
    %v4119 = vpop.f32.mrf.mxu0
    %4120 = vmatprep.mubr.f32.mxu0 0.0
    %4121 = vmatmul.mubr.f32.gmra.mxu0 %v4036
    %v4122 = vpop.f32.mrf.mxu0
    %v4123 = vadd.f32 0.0, %v4122
    %v4124 = vpop.f32.mrf.mxu0
    %4125 = vmatprep.mubr.f32.mxu0 0.0
    %4126 = vmatmul.mubr.f32.gmra.mxu0 %v4039
    %v4127 = vpop.f32.mrf.mxu0
    %v4128 = vadd.f32 0.0, %v4127
    %v4129 = vpop.f32.mrf.mxu0
    %4130 = vmatprep.mubr.f32.mxu0 0.0
    %4131 = vmatmul.mubr.f32.gmra.mxu0 %v4042
    %v4132 = vpop.f32.mrf.mxu0
    %v4133 = vadd.f32 0.0, %v4132
    %v4134 = vpop.f32.mrf.mxu0
    %4135 = vdwg.mxu0
    %4141 = vrot.lane.b32.xlu0 %v3501, 16
    %v4142 = vpop.permute.xlu0 %4141
    %4143 = vrot.lane.b32.xlu0 %v3506, 16
    %v4144 = vpop.permute.xlu0 %4143
    %4145 = vrot.lane.b32.xlu0 %v3511, 16
    %v4146 = vpop.permute.xlu0 %4145
    %4147 = vrot.lane.b32.xlu0 %v3516, 16
    %v4148 = vpop.permute.xlu0 %4147
    %4149 = vrot.lane.b32.xlu0 %v3521, 16
    %v4150 = vpop.permute.xlu0 %4149
    %4161 = vrot.lane.b32.xlu0 %v3807, 32
    %v4162 = vpop.permute.xlu0 %4161
    %4163 = vrot.lane.b32.xlu0 %v3812, 32
    %v4164 = vpop.permute.xlu0 %4163
    %4165 = vrot.lane.b32.xlu0 %v3817, 32
    %v4166 = vpop.permute.xlu0 %4165
    %4167 = vrot.lane.b32.xlu0 %v3822, 32
    %v4168 = vpop.permute.xlu0 %4167
    %4169 = vrot.lane.b32.xlu0 %v3827, 32
    %v4170 = vpop.permute.xlu0 %4169
    %4181 = vrot.lane.b32.xlu0 %v4113, 48
    %v4182 = vpop.permute.xlu0 %4181
    %4183 = vrot.lane.b32.xlu0 %v4118, 48
    %v4184 = vpop.permute.xlu0 %4183
    %4185 = vrot.lane.b32.xlu0 %v4123, 48
    %v4186 = vpop.permute.xlu0 %4185
    %4187 = vrot.lane.b32.xlu0 %v4128, 48
    %v4188 = vpop.permute.xlu0 %4187
    %4189 = vrot.lane.b32.xlu0 %v4133, 48
    %v4190 = vpop.permute.xlu0 %4189
    %v4196 = vsel %vm815, %v3191, %v4142
    %v4197 = vsel %vm815, %v3196, %v4144
    %v4198 = vsel %vm815, %v3201, %v4146
    %v4199 = vsel %vm815, %v3206, %v4148
    %v4200 = vsel %vm815, %v3211, %v4150
    %v4201 = vsel %vm2084, %v4196, %v4162
    %v4202 = vsel %vm2084, %v4197, %v4164
    %v4203 = vsel %vm2084, %v4198, %v4166
    %v4204 = vsel %vm2084, %v4199, %v4168
    %v4205 = vsel %vm2084, %v4200, %v4170
    %v4206 = vsel %vm2090, %v4201, %v4182
    %v4207 = vsel %vm2090, %v4202, %v4184
    %v4208 = vsel %vm2090, %v4203, %v4186
    %v4209 = vsel %vm2090, %v4204, %v4188
    %v4210 = vsel %vm2090, %v4205, %v4190
    %v4212 = vsel %vm399, %v4206, 0
    %v4215 = vsel %vm399, %v4207, 0
    %v4218 = vsel %vm399, %v4208, 0
    %v4221 = vsel %vm399, %v4209, 0
    %v4224 = vsel %vm399, %v4210, 0
    %4226 = vmatprep.subr.mxu0 0.0
    %4227 = vmatpush1.msra.mxu0 0.0
    %4228 = vmatprep.subr.mxu0 0.0
    %4229 = vmatpush1.msra.mxu0 0.0
    %4230 = vmatprep.subr.mxu0 0.0
    %4231 = vmatpush1.msra.mxu0 0.0
    %4232 = vmatprep.subr.mxu0 0.0
    %4233 = vmatpush1.msra.mxu0 0.0
    %4234 = vmatprep.subr.mxu0 0.0
    %4235 = vmatpush1.msra.mxu0 0.0
    %4236 = vmatprep.subr.mxu0 0.0
    %4237 = vmatpush1.msra.mxu0 0.0
    %4238 = vmatprep.subr.mxu0 0.0
    %4239 = vmatpush1.msra.mxu0 0.0
    %4240 = vmatprep.subr.mxu0 0.0
    %4241 = vmatpush1.msra.mxu0 0.0
    %4242 = vmatprep.subr.mxu0 0.0
    %4243 = vmatpush1.msra.mxu0 %v2647
    %4244 = vmatprep.subr.mxu0 0.0
    %4245 = vmatpush1.msra.mxu0 %v2646
    %4246 = vmatprep.subr.mxu0 0.0
    %4247 = vmatpush1.msra.mxu0 %v2645
    %4248 = vmatprep.subr.mxu0 0.0
    %4249 = vmatpush1.msra.mxu0 %v2644
    %4250 = vmatprep.subr.mxu0 0.0
    %4251 = vmatpush1.msra.mxu0 %v2643
    %4252 = vmatprep.subr.mxu0 0.0
    %4253 = vmatpush1.msra.mxu0 %v2642
    %4254 = vmatprep.subr.mxu0 0.0
    %4255 = vmatpush1.msra.mxu0 %v2641
    %4256 = vmatprep.subr.mxu0 0.0
    %4257 = vmatpush1.msra.mxu0 %v2640
    %4258 = vmatprep.subr.mxu0 0.0
    %4259 = vmatpush2.msra.mxu0 0.0
    %4260 = vmatprep.subr.mxu0 0.0
    %4261 = vmatpush2.msra.mxu0 0.0
    %4262 = vmatprep.subr.mxu0 0.0
    %4263 = vmatpush2.msra.mxu0 0.0
    %4264 = vmatprep.subr.mxu0 0.0
    %4265 = vmatpush2.msra.mxu0 0.0
    %4266 = vmatprep.subr.mxu0 0.0
    %4267 = vmatpush2.msra.mxu0 0.0
    %4268 = vmatprep.subr.mxu0 0.0
    %4269 = vmatpush2.msra.mxu0 0.0
    %4270 = vmatprep.subr.mxu0 0.0
    %4271 = vmatpush2.msra.mxu0 0.0
    %4272 = vmatprep.subr.mxu0 0.0
    %4273 = vmatpush2.msra.mxu0 0.0
    %4274 = vmatprep.subr.mxu0 0.0
    %4275 = vmatpush2.msra.mxu0 0.0
    %4276 = vmatprep.subr.mxu0 0.0
    %4277 = vmatpush2.msra.mxu0 0.0
    %4278 = vmatprep.subr.mxu0 0.0
    %4279 = vmatpush2.msra.mxu0 0.0
    %4280 = vmatprep.subr.mxu0 0.0
    %4281 = vmatpush2.msra.mxu0 0.0
    %4282 = vmatprep.subr.mxu0 0.0
    %4283 = vmatpush2.msra.mxu0 0.0
    %4284 = vmatprep.subr.mxu0 0.0
    %4285 = vmatpush2.msra.mxu0 0.0
    %4286 = vmatprep.subr.mxu0 0.0
    %4287 = vmatpush2.msra.mxu0 0.0
    %4288 = vmatprep.subr.mxu0 0.0
    %4289 = vmatpush2.msra.mxu0 0.0
    %4290 = vmatprep.mubr.f32.mxu0 0.0
    %4291 = vmatmul.mubr.f32.gmra.mxu0 %v4212
    %v4292 = vpop.f32.mrf.mxu0
    %v4293 = vadd.f32 0.0, %v4292
    %v4294 = vpop.f32.mrf.mxu0
    %4295 = vmatprep.mubr.f32.mxu0 0.0
    %4296 = vmatmul.mubr.f32.gmra.mxu0 %v4215
    %v4297 = vpop.f32.mrf.mxu0
    %v4298 = vadd.f32 0.0, %v4297
    %v4299 = vpop.f32.mrf.mxu0
    %4300 = vmatprep.mubr.f32.mxu0 0.0
    %4301 = vmatmul.mubr.f32.gmra.mxu0 %v4218
    %v4302 = vpop.f32.mrf.mxu0
    %v4303 = vadd.f32 0.0, %v4302
    %v4304 = vpop.f32.mrf.mxu0
    %4305 = vmatprep.mubr.f32.mxu0 0.0
    %4306 = vmatmul.mubr.f32.gmra.mxu0 %v4221
    %v4307 = vpop.f32.mrf.mxu0
    %v4308 = vadd.f32 0.0, %v4307
    %v4309 = vpop.f32.mrf.mxu0
    %4310 = vmatprep.mubr.f32.mxu0 0.0
    %4311 = vmatmul.mubr.f32.gmra.mxu0 %v4224
    %v4312 = vpop.f32.mrf.mxu0
    %v4313 = vadd.f32 0.0, %v4312
    %v4314 = vpop.f32.mrf.mxu0
    %4315 = vdwg.mxu0
    %v4316 = vadd.f32 %v2611, %v4293
    %v4317 = vadd.f32 %v2612, %v4298
    %v4318 = vadd.f32 %v2613, %v4303
    %v4319 = vadd.f32 %v2614, %v4308
    %v4320 = vadd.f32 %v2615, %v4313
    %v4322 = vlaneseq
    %v4323 = vshrl.u32 %v4322, 7
    %v4324 = vsub.s32 0, %v4323
    %v4325 = vrot.slane %v2649, %v4324
    %v4327 = vadd.f32 %v4316, %v4325
    %v4328 = vadd.f32 %v4317, %v4325
    %v4329 = vadd.f32 %v4318, %v4325
    %v4330 = vadd.f32 %v4319, %v4325
    %v4331 = vadd.f32 %v4320, %v4325
    %v4332 = vsel %vm399, %v4327, 0.0
    %4333 = vadd.xlane.f32.xlu0 %v4332
    %v4334 = vpop.xlane.xlu0 %4333
    %v4335 = vsel %vm399, %v4328, 0.0
    %4336 = vadd.xlane.f32.xlu0 %v4335
    %v4337 = vpop.xlane.xlu0 %4336
    %v4338 = vsel %vm399, %v4329, 0.0
    %4339 = vadd.xlane.f32.xlu0 %v4338
    %v4340 = vpop.xlane.xlu0 %4339
    %v4341 = vsel %vm399, %v4330, 0.0
    %4342 = vadd.xlane.f32.xlu0 %v4341
    %v4343 = vpop.xlane.xlu0 %4342
    %v4344 = vsel %vm597, %v4331, 0.0
    %4345 = vadd.xlane.f32.xlu0 %v4344
    %v4346 = vpop.xlane.xlu0 %4345
    %v4347 = vmul.f32 %v4334, %v601
    %v4348 = vmul.f32 %v4337, %v601
    %v4349 = vmul.f32 %v4340, %v601
    %v4350 = vmul.f32 %v4343, %v601
    %v4351 = vmul.f32 %v4346, %v601
    %v4352 = vsub.f32 %v4327, %v4347
    %v4353 = vsub.f32 %v4328, %v4348
    %v4354 = vsub.f32 %v4329, %v4349
    %v4355 = vsub.f32 %v4330, %v4350
    %v4356 = vsub.f32 %v4331, %v4351
    %v4357 = vmul.f32 %v4352, %v4352
    %v4358 = vmul.f32 %v4353, %v4353
    %v4359 = vmul.f32 %v4354, %v4354
    %v4360 = vmul.f32 %v4355, %v4355
    %v4361 = vmul.f32 %v4356, %v4356
    %v4362 = vsel %vm399, %v4357, 0.0
    %4363 = vadd.xlane.f32.xlu0 %v4362
    %v4364 = vpop.xlane.xlu0 %4363
    %v4365 = vsel %vm399, %v4358, 0.0
    %4366 = vadd.xlane.f32.xlu0 %v4365
    %v4367 = vpop.xlane.xlu0 %4366
    %v4368 = vsel %vm399, %v4359, 0.0
    %4369 = vadd.xlane.f32.xlu0 %v4368
    %v4370 = vpop.xlane.xlu0 %4369
    %v4371 = vsel %vm399, %v4360, 0.0
    %4372 = vadd.xlane.f32.xlu0 %v4371
    %v4373 = vpop.xlane.xlu0 %4372
    %v4374 = vsel %vm597, %v4361, 0.0
    %4375 = vadd.xlane.f32.xlu0 %v4374
    %v4376 = vpop.xlane.xlu0 %4375
    %v4377 = vmul.f32 %v4364, %v601
    %v4378 = vmul.f32 %v4367, %v601
    %v4379 = vmul.f32 %v4370, %v601
    %v4380 = vmul.f32 %v4373, %v601
    %v4381 = vmul.f32 %v4376, %v601
    %v4382 = vadd.f32 %v4377, 1e-06
    %v4383 = vadd.f32 %v4378, 1e-06
    %v4384 = vadd.f32 %v4379, 1e-06
    %v4385 = vadd.f32 %v4380, 1e-06
    %v4386 = vadd.f32 %v4381, 1e-06
    %v4387 = vrsqrt.pop %v4382
    %v4388 = vrsqrt.pop %v4383
    %v4389 = vrsqrt.pop %v4384
    %v4390 = vrsqrt.pop %v4385
    %v4391 = vrsqrt.pop %v4386
    %v4392 = vmul.f32 %v4352, %v4387
    %v4393 = vmul.f32 %v4353, %v4388
    %v4394 = vmul.f32 %v4354, %v4389
    %v4395 = vmul.f32 %v4355, %v4390
    %v4396 = vmul.f32 %v4356, %v4391
    %v4398 = vlaneseq
    %v4399 = vshrl.u32 %v4398, 7
    %v4400 = vsub.s32 0, %v4399
    %v4401 = vrot.slane %v2651, %v4400
    %v4403 = vmul.f32 %v4392, %v4401
    %v4404 = vmul.f32 %v4393, %v4401
    %v4405 = vmul.f32 %v4394, %v4401
    %v4406 = vmul.f32 %v4395, %v4401
    %v4407 = vmul.f32 %v4396, %v4401
    %v4409 = vlaneseq
    %v4410 = vshrl.u32 %v4409, 7
    %v4411 = vsub.s32 0, %v4410
    %v4412 = vrot.slane %v2653, %v4411
    %v4414 = vadd.f32 %v4403, %v4412
    %v4415 = vadd.f32 %v4404, %v4412
    %v4416 = vadd.f32 %v4405, %v4412
    %v4417 = vadd.f32 %v4406, %v4412
    %v4418 = vadd.f32 %v4407, %v4412
    %v4420 = vlaneseq
    %v4421 = vshrl.u32 %v4420, 7
    %v4422 = vsub.s32 0, %v4421
    %v4423 = vrot.slane %v2672, %v4422
    %v4424 = vlaneseq
    %v4425 = vshrl.u32 %v4424, 7
    %v4426 = vsub.s32 1, %v4425
    %v4427 = vrot.slane %v2672, %v4426
    %v4431 = vsel %vm399, %v4414, 0
    %v4434 = vsel %vm399, %v4415, 0
    %v4437 = vsel %vm399, %v4416, 0
    %v4440 = vsel %vm399, %v4417, 0
    %v4443 = vsel %vm399, %v4418, 0
    %4445 = vmatprep.subr.mxu0 0.0
    %4446 = vmatpush1.msra.mxu0 0.0
    %4447 = vmatprep.subr.mxu0 0.0
    %4448 = vmatpush1.msra.mxu0 0.0
    %4449 = vmatprep.subr.mxu0 0.0
    %4450 = vmatpush1.msra.mxu0 0.0
    %4451 = vmatprep.subr.mxu0 0.0
    %4452 = vmatpush1.msra.mxu0 0.0
    %4453 = vmatprep.subr.mxu0 0.0
    %4454 = vmatpush1.msra.mxu0 0.0
    %4455 = vmatprep.subr.mxu0 0.0
    %4456 = vmatpush1.msra.mxu0 0.0
    %4457 = vmatprep.subr.mxu0 0.0
    %4458 = vmatpush1.msra.mxu0 0.0
    %4459 = vmatprep.subr.mxu0 0.0
    %4460 = vmatpush1.msra.mxu0 0.0
    %4461 = vmatprep.subr.mxu0 %v2670
    %4462 = vmatpush1.msra.mxu0 %v2669
    %4463 = vmatprep.subr.mxu0 %v2668
    %4464 = vmatpush1.msra.mxu0 %v2667
    %4465 = vmatprep.subr.mxu0 %v2666
    %4466 = vmatpush1.msra.mxu0 %v2665
    %4467 = vmatprep.subr.mxu0 %v2664
    %4468 = vmatpush1.msra.mxu0 %v2663
    %4469 = vmatprep.subr.mxu0 %v2662
    %4470 = vmatpush1.msra.mxu0 %v2661
    %4471 = vmatprep.subr.mxu0 %v2660
    %4472 = vmatpush1.msra.mxu0 %v2659
    %4473 = vmatprep.subr.mxu0 %v2658
    %4474 = vmatpush1.msra.mxu0 %v2657
    %4475 = vmatprep.subr.mxu0 %v2656
    %4476 = vmatpush1.msra.mxu0 %v2655
    %4477 = vmatprep.subr.mxu0 0.0
    %4478 = vmatpush2.msra.mxu0 0.0
    %4479 = vmatprep.subr.mxu0 0.0
    %4480 = vmatpush2.msra.mxu0 0.0
    %4481 = vmatprep.subr.mxu0 0.0
    %4482 = vmatpush2.msra.mxu0 0.0
    %4483 = vmatprep.subr.mxu0 0.0
    %4484 = vmatpush2.msra.mxu0 0.0
    %4485 = vmatprep.subr.mxu0 0.0
    %4486 = vmatpush2.msra.mxu0 0.0
    %4487 = vmatprep.subr.mxu0 0.0
    %4488 = vmatpush2.msra.mxu0 0.0
    %4489 = vmatprep.subr.mxu0 0.0
    %4490 = vmatpush2.msra.mxu0 0.0
    %4491 = vmatprep.subr.mxu0 0.0
    %4492 = vmatpush2.msra.mxu0 0.0
    %4493 = vmatprep.subr.mxu0 0.0
    %4494 = vmatpush2.msra.mxu0 0.0
    %4495 = vmatprep.subr.mxu0 0.0
    %4496 = vmatpush2.msra.mxu0 0.0
    %4497 = vmatprep.subr.mxu0 0.0
    %4498 = vmatpush2.msra.mxu0 0.0
    %4499 = vmatprep.subr.mxu0 0.0
    %4500 = vmatpush2.msra.mxu0 0.0
    %4501 = vmatprep.subr.mxu0 0.0
    %4502 = vmatpush2.msra.mxu0 0.0
    %4503 = vmatprep.subr.mxu0 0.0
    %4504 = vmatpush2.msra.mxu0 0.0
    %4505 = vmatprep.subr.mxu0 0.0
    %4506 = vmatpush2.msra.mxu0 0.0
    %4507 = vmatprep.subr.mxu0 0.0
    %4508 = vmatpush2.msra.mxu0 0.0
    %4509 = vmatprep.mubr.f32.mxu0 0.0
    %4510 = vmatmul.mubr.f32.gmra.mxu0 %v4431
    %v4511 = vpop.f32.mrf.mxu0
    %v4512 = vadd.f32 %v4423, %v4511
    %v4513 = vpop.f32.mrf.mxu0
    %v4514 = vadd.f32 %v4427, %v4513
    %4515 = vmatprep.mubr.f32.mxu0 0.0
    %4516 = vmatmul.mubr.f32.gmra.mxu0 %v4434
    %v4517 = vpop.f32.mrf.mxu0
    %v4518 = vadd.f32 %v4423, %v4517
    %v4519 = vpop.f32.mrf.mxu0
    %v4520 = vadd.f32 %v4427, %v4519
    %4521 = vmatprep.mubr.f32.mxu0 0.0
    %4522 = vmatmul.mubr.f32.gmra.mxu0 %v4437
    %v4523 = vpop.f32.mrf.mxu0
    %v4524 = vadd.f32 %v4423, %v4523
    %v4525 = vpop.f32.mrf.mxu0
    %v4526 = vadd.f32 %v4427, %v4525
    %4527 = vmatprep.mubr.f32.mxu0 0.0
    %4528 = vmatmul.mubr.f32.gmra.mxu0 %v4440
    %v4529 = vpop.f32.mrf.mxu0
    %v4530 = vadd.f32 %v4423, %v4529
    %v4531 = vpop.f32.mrf.mxu0
    %v4532 = vadd.f32 %v4427, %v4531
    %4533 = vmatprep.mubr.f32.mxu0 0.0
    %4534 = vmatmul.mubr.f32.gmra.mxu0 %v4443
    %v4535 = vpop.f32.mrf.mxu0
    %v4536 = vadd.f32 %v4423, %v4535
    %v4537 = vpop.f32.mrf.mxu0
    %v4538 = vadd.f32 %v4427, %v4537
    %4539 = vdwg.mxu0
    %v4540 = vmul.f32 %v4512, %v4512
    %v4541 = vmul.f32 %v4514, %v4514
    %v4542 = vmul.f32 %v4518, %v4518
    %v4543 = vmul.f32 %v4520, %v4520
    %v4544 = vmul.f32 %v4524, %v4524
    %v4545 = vmul.f32 %v4526, %v4526
    %v4546 = vmul.f32 %v4530, %v4530
    %v4547 = vmul.f32 %v4532, %v4532
    %v4548 = vmul.f32 %v4536, %v4536
    %v4549 = vmul.f32 %v4538, %v4538
    %v4550 = vmul.f32 %v4512, %v4540
    %v4551 = vmul.f32 %v4514, %v4541
    %v4552 = vmul.f32 %v4518, %v4542
    %v4553 = vmul.f32 %v4520, %v4543
    %v4554 = vmul.f32 %v4524, %v4544
    %v4555 = vmul.f32 %v4526, %v4545
    %v4556 = vmul.f32 %v4530, %v4546
    %v4557 = vmul.f32 %v4532, %v4547
    %v4558 = vmul.f32 %v4536, %v4548
    %v4559 = vmul.f32 %v4538, %v4549
    %v4560 = vmul.f32 %v4550, 0.044715
    %v4561 = vmul.f32 %v4551, 0.044715
    %v4562 = vmul.f32 %v4552, 0.044715
    %v4563 = vmul.f32 %v4553, 0.044715
    %v4564 = vmul.f32 %v4554, 0.044715
    %v4565 = vmul.f32 %v4555, 0.044715
    %v4566 = vmul.f32 %v4556, 0.044715
    %v4567 = vmul.f32 %v4557, 0.044715
    %v4568 = vmul.f32 %v4558, 0.044715
    %v4569 = vmul.f32 %v4559, 0.044715
    %v4570 = vadd.f32 %v4512, %v4560
    %v4571 = vadd.f32 %v4514, %v4561
    %v4572 = vadd.f32 %v4518, %v4562
    %v4573 = vadd.f32 %v4520, %v4563
    %v4574 = vadd.f32 %v4524, %v4564
    %v4575 = vadd.f32 %v4526, %v4565
    %v4576 = vadd.f32 %v4530, %v4566
    %v4577 = vadd.f32 %v4532, %v4567
    %v4578 = vadd.f32 %v4536, %v4568
    %v4579 = vadd.f32 %v4538, %v4569
    %v4580 = vmul.f32 %v4570, 0.7978846
    %v4581 = vmul.f32 %v4571, 0.7978846
    %v4582 = vmul.f32 %v4572, 0.7978846
    %v4583 = vmul.f32 %v4573, 0.7978846
    %v4584 = vmul.f32 %v4574, 0.7978846
    %v4585 = vmul.f32 %v4575, 0.7978846
    %v4586 = vmul.f32 %v4576, 0.7978846
    %v4587 = vmul.f32 %v4577, 0.7978846
    %v4588 = vmul.f32 %v4578, 0.7978846
    %v4589 = vmul.f32 %v4579, 0.7978846
    %v4590 = vtanh.pop %v4580
    %v4591 = vtanh.pop %v4581
    %v4592 = vtanh.pop %v4582
    %v4593 = vtanh.pop %v4583
    %v4594 = vtanh.pop %v4584
    %v4595 = vtanh.pop %v4585
    %v4596 = vtanh.pop %v4586
    %v4597 = vtanh.pop %v4587
    %v4598 = vtanh.pop %v4588
    %v4599 = vtanh.pop %v4589
    %v4600 = vadd.f32 %v4590, 1.0
    %v4601 = vadd.f32 %v4591, 1.0
    %v4602 = vadd.f32 %v4592, 1.0
    %v4603 = vadd.f32 %v4593, 1.0
    %v4604 = vadd.f32 %v4594, 1.0
    %v4605 = vadd.f32 %v4595, 1.0
    %v4606 = vadd.f32 %v4596, 1.0
    %v4607 = vadd.f32 %v4597, 1.0
    %v4608 = vadd.f32 %v4598, 1.0
    %v4609 = vadd.f32 %v4599, 1.0
    %v4610 = vmul.f32 %v4600, 0.5
    %v4611 = vmul.f32 %v4601, 0.5
    %v4612 = vmul.f32 %v4602, 0.5
    %v4613 = vmul.f32 %v4603, 0.5
    %v4614 = vmul.f32 %v4604, 0.5
    %v4615 = vmul.f32 %v4605, 0.5
    %v4616 = vmul.f32 %v4606, 0.5
    %v4617 = vmul.f32 %v4607, 0.5
    %v4618 = vmul.f32 %v4608, 0.5
    %v4619 = vmul.f32 %v4609, 0.5
    %v4620 = vmul.f32 %v4512, %v4610
    %v4621 = vmul.f32 %v4514, %v4611
    %v4622 = vmul.f32 %v4518, %v4612
    %v4623 = vmul.f32 %v4520, %v4613
    %v4624 = vmul.f32 %v4524, %v4614
    %v4625 = vmul.f32 %v4526, %v4615
    %v4626 = vmul.f32 %v4530, %v4616
    %v4627 = vmul.f32 %v4532, %v4617
    %v4628 = vmul.f32 %v4536, %v4618
    %v4629 = vmul.f32 %v4538, %v4619
    %v4631 = vlaneseq
    %v4632 = vshrl.u32 %v4631, 7
    %v4633 = vsub.s32 0, %v4632
    %v4634 = vrot.slane %v2707, %v4633
    %4636 = vmatprep.subr.mxu0 0.0
    %4637 = vmatpush1.msra.mxu0 %v2689
    %4638 = vmatprep.subr.mxu0 0.0
    %4639 = vmatpush1.msra.mxu0 %v2688
    %4640 = vmatprep.subr.mxu0 0.0
    %4641 = vmatpush1.msra.mxu0 %v2687
    %4642 = vmatprep.subr.mxu0 0.0
    %4643 = vmatpush1.msra.mxu0 %v2686
    %4644 = vmatprep.subr.mxu0 0.0
    %4645 = vmatpush1.msra.mxu0 %v2685
    %4646 = vmatprep.subr.mxu0 0.0
    %4647 = vmatpush1.msra.mxu0 %v2684
    %4648 = vmatprep.subr.mxu0 0.0
    %4649 = vmatpush1.msra.mxu0 %v2683
    %4650 = vmatprep.subr.mxu0 0.0
    %4651 = vmatpush1.msra.mxu0 %v2682
    %4652 = vmatprep.subr.mxu0 0.0
    %4653 = vmatpush1.msra.mxu0 %v2681
    %4654 = vmatprep.subr.mxu0 0.0
    %4655 = vmatpush1.msra.mxu0 %v2680
    %4656 = vmatprep.subr.mxu0 0.0
    %4657 = vmatpush1.msra.mxu0 %v2679
    %4658 = vmatprep.subr.mxu0 0.0
    %4659 = vmatpush1.msra.mxu0 %v2678
    %4660 = vmatprep.subr.mxu0 0.0
    %4661 = vmatpush1.msra.mxu0 %v2677
    %4662 = vmatprep.subr.mxu0 0.0
    %4663 = vmatpush1.msra.mxu0 %v2676
    %4664 = vmatprep.subr.mxu0 0.0
    %4665 = vmatpush1.msra.mxu0 %v2675
    %4666 = vmatprep.subr.mxu0 0.0
    %4667 = vmatpush1.msra.mxu0 %v2674
    %4668 = vmatprep.subr.mxu0 0.0
    %4669 = vmatpush2.msra.mxu0 %v2705
    %4670 = vmatprep.subr.mxu0 0.0
    %4671 = vmatpush2.msra.mxu0 %v2704
    %4672 = vmatprep.subr.mxu0 0.0
    %4673 = vmatpush2.msra.mxu0 %v2703
    %4674 = vmatprep.subr.mxu0 0.0
    %4675 = vmatpush2.msra.mxu0 %v2702
    %4676 = vmatprep.subr.mxu0 0.0
    %4677 = vmatpush2.msra.mxu0 %v2701
    %4678 = vmatprep.subr.mxu0 0.0
    %4679 = vmatpush2.msra.mxu0 %v2700
    %4680 = vmatprep.subr.mxu0 0.0
    %4681 = vmatpush2.msra.mxu0 %v2699
    %4682 = vmatprep.subr.mxu0 0.0
    %4683 = vmatpush2.msra.mxu0 %v2698
    %4684 = vmatprep.subr.mxu0 0.0
    %4685 = vmatpush2.msra.mxu0 %v2697
    %4686 = vmatprep.subr.mxu0 0.0
    %4687 = vmatpush2.msra.mxu0 %v2696
    %4688 = vmatprep.subr.mxu0 0.0
    %4689 = vmatpush2.msra.mxu0 %v2695
    %4690 = vmatprep.subr.mxu0 0.0
    %4691 = vmatpush2.msra.mxu0 %v2694
    %4692 = vmatprep.subr.mxu0 0.0
    %4693 = vmatpush2.msra.mxu0 %v2693
    %4694 = vmatprep.subr.mxu0 0.0
    %4695 = vmatpush2.msra.mxu0 %v2692
    %4696 = vmatprep.subr.mxu0 0.0
    %4697 = vmatpush2.msra.mxu0 %v2691
    %4698 = vmatprep.subr.mxu0 0.0
    %4699 = vmatpush2.msra.mxu0 %v2690
    %4700 = vmatprep.mubr.f32.mxu0 %v4621
    %4701 = vmatmul.mubr.f32.gmra.mxu0 %v4620
    %v4702 = vpop.f32.mrf.mxu0
    %v4703 = vadd.f32 %v4634, %v4702
    %v4704 = vpop.f32.mrf.mxu0
    %4705 = vmatprep.mubr.f32.mxu0 %v4623
    %4706 = vmatmul.mubr.f32.gmra.mxu0 %v4622
    %v4707 = vpop.f32.mrf.mxu0
    %v4708 = vadd.f32 %v4634, %v4707
    %v4709 = vpop.f32.mrf.mxu0
    %4710 = vmatprep.mubr.f32.mxu0 %v4625
    %4711 = vmatmul.mubr.f32.gmra.mxu0 %v4624
    %v4712 = vpop.f32.mrf.mxu0
    %v4713 = vadd.f32 %v4634, %v4712
    %v4714 = vpop.f32.mrf.mxu0
    %4715 = vmatprep.mubr.f32.mxu0 %v4627
    %4716 = vmatmul.mubr.f32.gmra.mxu0 %v4626
    %v4717 = vpop.f32.mrf.mxu0
    %v4718 = vadd.f32 %v4634, %v4717
    %v4719 = vpop.f32.mrf.mxu0
    %4720 = vmatprep.mubr.f32.mxu0 %v4629
    %4721 = vmatmul.mubr.f32.gmra.mxu0 %v4628
    %v4722 = vpop.f32.mrf.mxu0
    %v4723 = vadd.f32 %v4634, %v4722
    %v4724 = vpop.f32.mrf.mxu0
    %4725 = vdwg.mxu0
    %v4726 = vadd.f32 %v4327, %v4703
    %v4727 = vadd.f32 %v4328, %v4708
    %v4728 = vadd.f32 %v4329, %v4713
    %v4729 = vadd.f32 %v4330, %v4718
    %v4730 = vadd.f32 %v4331, %v4723
    %v4731 = vld [vmem:[%s41] sm:$0x1]
    %v4732 = vld [vmem:[%s43] sm:$0x1]
    %v4733 = vld [vmem:[%s45] sm:$0xff]
    %v4734 = vld [vmem:[%s45 + $0x8] sm:$0xff]
    %v4735 = vld [vmem:[%s45 + $0x10] sm:$0xff]
    %v4736 = vld [vmem:[%s45 + $0x18] sm:$0xff]
    %v4737 = vld [vmem:[%s45 + $0x20] sm:$0xff]
    %v4738 = vld [vmem:[%s45 + $0x28] sm:$0xff]
    %v4739 = vld [vmem:[%s45 + $0x30] sm:$0xff]
    %v4740 = vld [vmem:[%s45 + $0x38] sm:$0xff]
    %v4741 = vld [vmem:[%s45 + $0x40] sm:$0xff]
    %v4742 = vld [vmem:[%s45 + $0x48] sm:$0xff]
    %v4743 = vld [vmem:[%s45 + $0x50] sm:$0xff]
    %v4744 = vld [vmem:[%s45 + $0x58] sm:$0xff]
    %v4745 = vld [vmem:[%s45 + $0x60] sm:$0xff]
    %v4746 = vld [vmem:[%s45 + $0x68] sm:$0xff]
    %v4747 = vld [vmem:[%s45 + $0x70] sm:$0xff]
    %v4748 = vld [vmem:[%s45 + $0x78] sm:$0xff]
    %v4749 = vld [vmem:[%s47] sm:$0x3]
    %v4750 = vld [vmem:[%s49] sm:$0xff]
    %v4751 = vld [vmem:[%s49 + $0x8] sm:$0xff]
    %v4752 = vld [vmem:[%s49 + $0x10] sm:$0xff]
    %v4753 = vld [vmem:[%s49 + $0x18] sm:$0xff]
    %v4754 = vld [vmem:[%s49 + $0x20] sm:$0xff]
    %v4755 = vld [vmem:[%s49 + $0x28] sm:$0xff]
    %v4756 = vld [vmem:[%s49 + $0x30] sm:$0xff]
    %v4757 = vld [vmem:[%s49 + $0x38] sm:$0xff]
    %v4758 = vld [vmem:[%s51] sm:$0x1]
    %v4759 = vld [vmem:[%s53] sm:$0x1]
    %v4760 = vld [vmem:[%s55] sm:$0x1]
    %v4761 = vld [vmem:[%s57] sm:$0xff]
    %v4762 = vld [vmem:[%s57 + $0x8] sm:$0xff]
    %v4763 = vld [vmem:[%s57 + $0x10] sm:$0xff]
    %v4764 = vld [vmem:[%s57 + $0x18] sm:$0xff]
    %v4765 = vld [vmem:[%s57 + $0x20] sm:$0xff]
    %v4766 = vld [vmem:[%s57 + $0x28] sm:$0xff]
    %v4767 = vld [vmem:[%s57 + $0x30] sm:$0xff]
    %v4768 = vld [vmem:[%s57 + $0x38] sm:$0xff]
    %v4769 = vld [vmem:[%s57 + $0x40] sm:$0xff]
    %v4770 = vld [vmem:[%s57 + $0x48] sm:$0xff]
    %v4771 = vld [vmem:[%s57 + $0x50] sm:$0xff]
    %v4772 = vld [vmem:[%s57 + $0x58] sm:$0xff]
    %v4773 = vld [vmem:[%s57 + $0x60] sm:$0xff]
    %v4774 = vld [vmem:[%s57 + $0x68] sm:$0xff]
    %v4775 = vld [vmem:[%s57 + $0x70] sm:$0xff]
    %v4776 = vld [vmem:[%s57 + $0x78] sm:$0xff]
    %v4777 = vld [vmem:[%s59] sm:$0x3]
    %v4778 = vld [vmem:[%s61] sm:$0xff]
    %v4779 = vld [vmem:[%s61 + $0x8] sm:$0xff]
    %v4780 = vld [vmem:[%s61 + $0x10] sm:$0xff]
    %v4781 = vld [vmem:[%s61 + $0x18] sm:$0xff]
    %v4782 = vld [vmem:[%s61 + $0x20] sm:$0xff]
    %v4783 = vld [vmem:[%s61 + $0x28] sm:$0xff]
    %v4784 = vld [vmem:[%s61 + $0x30] sm:$0xff]
    %v4785 = vld [vmem:[%s61 + $0x38] sm:$0xff]
    %v4786 = vld [vmem:[%s61 + $0x40] sm:$0xff]
    %v4787 = vld [vmem:[%s61 + $0x48] sm:$0xff]
    %v4788 = vld [vmem:[%s61 + $0x50] sm:$0xff]
    %v4789 = vld [vmem:[%s61 + $0x58] sm:$0xff]
    %v4790 = vld [vmem:[%s61 + $0x60] sm:$0xff]
    %v4791 = vld [vmem:[%s61 + $0x68] sm:$0xff]
    %v4792 = vld [vmem:[%s61 + $0x70] sm:$0xff]
    %v4793 = vld [vmem:[%s61 + $0x78] sm:$0xff]
    %v4794 = vld [vmem:[%s61 + $0x80] sm:$0xff]
    %v4795 = vld [vmem:[%s61 + $0x88] sm:$0xff]
    %v4796 = vld [vmem:[%s61 + $0x90] sm:$0xff]
    %v4797 = vld [vmem:[%s61 + $0x98] sm:$0xff]
    %v4798 = vld [vmem:[%s61 + $0xa0] sm:$0xff]
    %v4799 = vld [vmem:[%s61 + $0xa8] sm:$0xff]
    %v4800 = vld [vmem:[%s61 + $0xb0] sm:$0xff]
    %v4801 = vld [vmem:[%s61 + $0xb8] sm:$0xff]
    %v4802 = vld [vmem:[%s61 + $0xc0] sm:$0xff]
    %v4803 = vld [vmem:[%s61 + $0xc8] sm:$0xff]
    %v4804 = vld [vmem:[%s61 + $0xd0] sm:$0xff]
    %v4805 = vld [vmem:[%s61 + $0xd8] sm:$0xff]
    %v4806 = vld [vmem:[%s61 + $0xe0] sm:$0xff]
    %v4807 = vld [vmem:[%s61 + $0xe8] sm:$0xff]
    %v4808 = vld [vmem:[%s61 + $0xf0] sm:$0xff]
    %v4809 = vld [vmem:[%s61 + $0xf8] sm:$0xff]
    %v4810 = vld [vmem:[#allocation2] sm:$0x1]
    %v4811 = vsel %vm399, %v4726, 0.0
    %4812 = vadd.xlane.f32.xlu0 %v4811
    %v4813 = vpop.xlane.xlu0 %4812
    %v4814 = vsel %vm399, %v4727, 0.0
    %4815 = vadd.xlane.f32.xlu0 %v4814
    %v4816 = vpop.xlane.xlu0 %4815
    %v4817 = vsel %vm399, %v4728, 0.0
    %4818 = vadd.xlane.f32.xlu0 %v4817
    %v4819 = vpop.xlane.xlu0 %4818
    %v4820 = vsel %vm399, %v4729, 0.0
    %4821 = vadd.xlane.f32.xlu0 %v4820
    %v4822 = vpop.xlane.xlu0 %4821
    %v4823 = vsel %vm597, %v4730, 0.0
    %4824 = vadd.xlane.f32.xlu0 %v4823
    %v4825 = vpop.xlane.xlu0 %4824
    %v4826 = vmul.f32 %v4813, %v601
    %v4827 = vmul.f32 %v4816, %v601
    %v4828 = vmul.f32 %v4819, %v601
    %v4829 = vmul.f32 %v4822, %v601
    %v4830 = vmul.f32 %v4825, %v601
    %v4831 = vsub.f32 %v4726, %v4826
    %v4832 = vsub.f32 %v4727, %v4827
    %v4833 = vsub.f32 %v4728, %v4828
    %v4834 = vsub.f32 %v4729, %v4829
    %v4835 = vsub.f32 %v4730, %v4830
    %v4836 = vmul.f32 %v4831, %v4831
    %v4837 = vmul.f32 %v4832, %v4832
    %v4838 = vmul.f32 %v4833, %v4833
    %v4839 = vmul.f32 %v4834, %v4834
    %v4840 = vmul.f32 %v4835, %v4835
    %v4841 = vsel %vm399, %v4836, 0.0
    %4842 = vadd.xlane.f32.xlu0 %v4841
    %v4843 = vpop.xlane.xlu0 %4842
    %v4844 = vsel %vm399, %v4837, 0.0
    %4845 = vadd.xlane.f32.xlu0 %v4844
    %v4846 = vpop.xlane.xlu0 %4845
    %v4847 = vsel %vm399, %v4838, 0.0
    %4848 = vadd.xlane.f32.xlu0 %v4847
    %v4849 = vpop.xlane.xlu0 %4848
    %v4850 = vsel %vm399, %v4839, 0.0
    %4851 = vadd.xlane.f32.xlu0 %v4850
    %v4852 = vpop.xlane.xlu0 %4851
    %v4853 = vsel %vm597, %v4840, 0.0
    %4854 = vadd.xlane.f32.xlu0 %v4853
    %v4855 = vpop.xlane.xlu0 %4854
    %v4856 = vmul.f32 %v4843, %v601
    %v4857 = vmul.f32 %v4846, %v601
    %v4858 = vmul.f32 %v4849, %v601
    %v4859 = vmul.f32 %v4852, %v601
    %v4860 = vmul.f32 %v4855, %v601
    %v4861 = vadd.f32 %v4856, 1e-06
    %v4862 = vadd.f32 %v4857, 1e-06
    %v4863 = vadd.f32 %v4858, 1e-06
    %v4864 = vadd.f32 %v4859, 1e-06
    %v4865 = vadd.f32 %v4860, 1e-06
    %v4866 = vrsqrt.pop %v4861
    %v4867 = vrsqrt.pop %v4862
    %v4868 = vrsqrt.pop %v4863
    %v4869 = vrsqrt.pop %v4864
    %v4870 = vrsqrt.pop %v4865
    %v4871 = vmul.f32 %v4831, %v4866
    %v4872 = vmul.f32 %v4832, %v4867
    %v4873 = vmul.f32 %v4833, %v4868
    %v4874 = vmul.f32 %v4834, %v4869
    %v4875 = vmul.f32 %v4835, %v4870
    %v4877 = vlaneseq
    %v4878 = vshrl.u32 %v4877, 7
    %v4879 = vsub.s32 0, %v4878
    %v4880 = vrot.slane %v4731, %v4879
    %v4882 = vmul.f32 %v4871, %v4880
    %v4883 = vmul.f32 %v4872, %v4880
    %v4884 = vmul.f32 %v4873, %v4880
    %v4885 = vmul.f32 %v4874, %v4880
    %v4886 = vmul.f32 %v4875, %v4880
    %v4888 = vlaneseq
    %v4889 = vshrl.u32 %v4888, 7
    %v4890 = vsub.s32 0, %v4889
    %v4891 = vrot.slane %v4732, %v4890
    %v4893 = vadd.f32 %v4882, %v4891
    %v4894 = vadd.f32 %v4883, %v4891
    %v4895 = vadd.f32 %v4884, %v4891
    %v4896 = vadd.f32 %v4885, %v4891
    %v4897 = vadd.f32 %v4886, %v4891
    %v4899 = vlaneseq
    %v4900 = vshrl.u32 %v4899, 7
    %v4901 = vsub.s32 0, %v4900
    %v4902 = vrot.slane %v4749, %v4901
    %v4903 = vlaneseq
    %v4904 = vshrl.u32 %v4903, 7
    %v4905 = vsub.s32 1, %v4904
    %v4906 = vrot.slane %v4749, %v4905
    %v4910 = vsel %vm399, %v4893, 0
    %v4913 = vsel %vm399, %v4894, 0
    %v4916 = vsel %vm399, %v4895, 0
    %v4919 = vsel %vm399, %v4896, 0
    %v4922 = vsel %vm399, %v4897, 0
    %4924 = vmatprep.subr.mxu0 0.0
    %4925 = vmatpush1.msra.mxu0 0.0
    %4926 = vmatprep.subr.mxu0 0.0
    %4927 = vmatpush1.msra.mxu0 0.0
    %4928 = vmatprep.subr.mxu0 0.0
    %4929 = vmatpush1.msra.mxu0 0.0
    %4930 = vmatprep.subr.mxu0 0.0
    %4931 = vmatpush1.msra.mxu0 0.0
    %4932 = vmatprep.subr.mxu0 0.0
    %4933 = vmatpush1.msra.mxu0 0.0
    %4934 = vmatprep.subr.mxu0 0.0
    %4935 = vmatpush1.msra.mxu0 0.0
    %4936 = vmatprep.subr.mxu0 0.0
    %4937 = vmatpush1.msra.mxu0 0.0
    %4938 = vmatprep.subr.mxu0 0.0
    %4939 = vmatpush1.msra.mxu0 0.0
    %4940 = vmatprep.subr.mxu0 %v4748
    %4941 = vmatpush1.msra.mxu0 %v4747
    %4942 = vmatprep.subr.mxu0 %v4746
    %4943 = vmatpush1.msra.mxu0 %v4745
    %4944 = vmatprep.subr.mxu0 %v4744
    %4945 = vmatpush1.msra.mxu0 %v4743
    %4946 = vmatprep.subr.mxu0 %v4742
    %4947 = vmatpush1.msra.mxu0 %v4741
    %4948 = vmatprep.subr.mxu0 %v4740
    %4949 = vmatpush1.msra.mxu0 %v4739
    %4950 = vmatprep.subr.mxu0 %v4738
    %4951 = vmatpush1.msra.mxu0 %v4737
    %4952 = vmatprep.subr.mxu0 %v4736
    %4953 = vmatpush1.msra.mxu0 %v4735
    %4954 = vmatprep.subr.mxu0 %v4734
    %4955 = vmatpush1.msra.mxu0 %v4733
    %4956 = vmatprep.subr.mxu0 0.0
    %4957 = vmatpush2.msra.mxu0 0.0
    %4958 = vmatprep.subr.mxu0 0.0
    %4959 = vmatpush2.msra.mxu0 0.0
    %4960 = vmatprep.subr.mxu0 0.0
    %4961 = vmatpush2.msra.mxu0 0.0
    %4962 = vmatprep.subr.mxu0 0.0
    %4963 = vmatpush2.msra.mxu0 0.0
    %4964 = vmatprep.subr.mxu0 0.0
    %4965 = vmatpush2.msra.mxu0 0.0
    %4966 = vmatprep.subr.mxu0 0.0
    %4967 = vmatpush2.msra.mxu0 0.0
    %4968 = vmatprep.subr.mxu0 0.0
    %4969 = vmatpush2.msra.mxu0 0.0
    %4970 = vmatprep.subr.mxu0 0.0
    %4971 = vmatpush2.msra.mxu0 0.0
    %4972 = vmatprep.subr.mxu0 0.0
    %4973 = vmatpush2.msra.mxu0 0.0
    %4974 = vmatprep.subr.mxu0 0.0
    %4975 = vmatpush2.msra.mxu0 0.0
    %4976 = vmatprep.subr.mxu0 0.0
    %4977 = vmatpush2.msra.mxu0 0.0
    %4978 = vmatprep.subr.mxu0 0.0
    %4979 = vmatpush2.msra.mxu0 0.0
    %4980 = vmatprep.subr.mxu0 0.0
    %4981 = vmatpush2.msra.mxu0 0.0
    %4982 = vmatprep.subr.mxu0 0.0
    %4983 = vmatpush2.msra.mxu0 0.0
    %4984 = vmatprep.subr.mxu0 0.0
    %4985 = vmatpush2.msra.mxu0 0.0
    %4986 = vmatprep.subr.mxu0 0.0
    %4987 = vmatpush2.msra.mxu0 0.0
    %4988 = vmatprep.mubr.f32.mxu0 0.0
    %4989 = vmatmul.mubr.f32.gmra.mxu0 %v4910
    %v4990 = vpop.f32.mrf.mxu0
    %v4991 = vadd.f32 %v4902, %v4990
    %v4992 = vpop.f32.mrf.mxu0
    %v4993 = vadd.f32 %v4906, %v4992
    %4994 = vmatprep.mubr.f32.mxu0 0.0
    %4995 = vmatmul.mubr.f32.gmra.mxu0 %v4913
    %v4996 = vpop.f32.mrf.mxu0
    %v4997 = vadd.f32 %v4902, %v4996
    %v4998 = vpop.f32.mrf.mxu0
    %v4999 = vadd.f32 %v4906, %v4998
    %5000 = vmatprep.mubr.f32.mxu0 0.0
    %5001 = vmatmul.mubr.f32.gmra.mxu0 %v4916
    %v5002 = vpop.f32.mrf.mxu0
    %v5003 = vadd.f32 %v4902, %v5002
    %v5004 = vpop.f32.mrf.mxu0
    %v5005 = vadd.f32 %v4906, %v5004
    %5006 = vmatprep.mubr.f32.mxu0 0.0
    %5007 = vmatmul.mubr.f32.gmra.mxu0 %v4919
    %v5008 = vpop.f32.mrf.mxu0
    %v5009 = vadd.f32 %v4902, %v5008
    %v5010 = vpop.f32.mrf.mxu0
    %v5011 = vadd.f32 %v4906, %v5010
    %5012 = vmatprep.mubr.f32.mxu0 0.0
    %5013 = vmatmul.mubr.f32.gmra.mxu0 %v4922
    %v5014 = vpop.f32.mrf.mxu0
    %v5015 = vadd.f32 %v4902, %v5014
    %v5016 = vpop.f32.mrf.mxu0
    %v5017 = vadd.f32 %v4906, %v5016
    %5018 = vdwg.mxu0
    %v5019 = vmul.f32 %v4991, 0.25
    %v5020 = vmul.f32 %v4997, 0.25
    %v5021 = vmul.f32 %v5003, 0.25
    %v5022 = vmul.f32 %v5009, 0.25
    %v5023 = vmul.f32 %v5015, 0.25
    %5029 = vrot.lane.b32.xlu0 %v4991, 64
    %v5030 = vpop.permute.xlu0 %5029
    %5031 = vrot.lane.b32.xlu0 %v4997, 64
    %v5032 = vpop.permute.xlu0 %5031
    %5033 = vrot.lane.b32.xlu0 %v5003, 64
    %v5034 = vpop.permute.xlu0 %5033
    %5035 = vrot.lane.b32.xlu0 %v5009, 64
    %v5036 = vpop.permute.xlu0 %5035
    %5037 = vrot.lane.b32.xlu0 %v5015, 64
    %v5038 = vpop.permute.xlu0 %5037
    %v5040 = vsel %vm815, %v5019, 0
    %v5043 = vsel %vm815, %v5020, 0
    %v5046 = vsel %vm815, %v5021, 0
    %v5049 = vsel %vm815, %v5022, 0
    %v5052 = vsel %vm815, %v5023, 0
    %v5054 = vsel %vm815, %v5030, 0
    %v5056 = vsel %vm815, %v5032, 0
    %v5058 = vsel %vm815, %v5034, 0
    %v5060 = vsel %vm815, %v5036, 0
    %v5062 = vsel %vm815, %v5038, 0
    %5064 = vmatprep.subr.mxu0 0.0
    %5065 = vmatpush1.xpose.msra.mxu0 0.0
    %5066 = vmatprep.subr.mxu0 0.0
    %5067 = vmatpush1.xpose.msra.mxu0 0.0
    %5068 = vmatprep.subr.mxu0 0.0
    %5069 = vmatpush1.xpose.msra.mxu0 0.0
    %5070 = vmatprep.subr.mxu0 0.0
    %5071 = vmatpush1.xpose.msra.mxu0 0.0
    %5072 = vmatprep.subr.mxu0 0.0
    %5073 = vmatpush1.xpose.msra.mxu0 0.0
    %5074 = vmatprep.subr.mxu0 0.0
    %5075 = vmatpush1.xpose.msra.mxu0 0.0
    %5076 = vmatprep.subr.mxu0 0.0
    %5077 = vmatpush1.xpose.msra.mxu0 0.0
    %5078 = vmatprep.subr.mxu0 0.0
    %5079 = vmatpush1.xpose.msra.mxu0 0.0
    %5080 = vmatprep.subr.mxu0 0.0
    %5081 = vmatpush1.xpose.msra.mxu0 0.0
    %5082 = vmatprep.subr.mxu0 0.0
    %5083 = vmatpush1.xpose.msra.mxu0 0.0
    %5084 = vmatprep.subr.mxu0 0.0
    %5085 = vmatpush1.xpose.msra.mxu0 0.0
    %5086 = vmatprep.subr.mxu0 0.0
    %5087 = vmatpush1.xpose.msra.mxu0 %v5062
    %5088 = vmatprep.subr.mxu0 0.0
    %5089 = vmatpush1.xpose.msra.mxu0 %v5060
    %5090 = vmatprep.subr.mxu0 0.0
    %5091 = vmatpush1.xpose.msra.mxu0 %v5058
    %5092 = vmatprep.subr.mxu0 0.0
    %5093 = vmatpush1.xpose.msra.mxu0 %v5056
    %5094 = vmatprep.subr.mxu0 0.0
    %5095 = vmatpush1.xpose.msra.mxu0 %v5054
    %5096 = vmatprep.subr.mxu0 0.0
    %5097 = vmatpush2.xpose.msra.mxu0 0.0
    %5098 = vmatprep.subr.mxu0 0.0
    %5099 = vmatpush2.xpose.msra.mxu0 0.0
    %5100 = vmatprep.subr.mxu0 0.0
    %5101 = vmatpush2.xpose.msra.mxu0 0.0
    %5102 = vmatprep.subr.mxu0 0.0
    %5103 = vmatpush2.xpose.msra.mxu0 0.0
    %5104 = vmatprep.subr.mxu0 0.0
    %5105 = vmatpush2.xpose.msra.mxu0 0.0
    %5106 = vmatprep.subr.mxu0 0.0
    %5107 = vmatpush2.xpose.msra.mxu0 0.0
    %5108 = vmatprep.subr.mxu0 0.0
    %5109 = vmatpush2.xpose.msra.mxu0 0.0
    %5110 = vmatprep.subr.mxu0 0.0
    %5111 = vmatpush2.xpose.msra.mxu0 0.0
    %5112 = vmatprep.subr.mxu0 0.0
    %5113 = vmatpush2.xpose.msra.mxu0 0.0
    %5114 = vmatprep.subr.mxu0 0.0
    %5115 = vmatpush2.xpose.msra.mxu0 0.0
    %5116 = vmatprep.subr.mxu0 0.0
    %5117 = vmatpush2.xpose.msra.mxu0 0.0
    %5118 = vmatprep.subr.mxu0 0.0
    %5119 = vmatpush2.xpose.msra.mxu0 0.0
    %5120 = vmatprep.subr.mxu0 0.0
    %5121 = vmatpush2.xpose.msra.mxu0 0.0
    %5122 = vmatprep.subr.mxu0 0.0
    %5123 = vmatpush2.xpose.msra.mxu0 0.0
    %5124 = vmatprep.subr.mxu0 0.0
    %5125 = vmatpush2.xpose.msra.mxu0 0.0
    %5126 = vmatprep.subr.mxu0 0.0
    %5127 = vmatpush2.xpose.msra.mxu0 0.0
    %5128 = vmatprep.mubr.f32.mxu0 0.0
    %5129 = vmatmul.mubr.f32.gmra.mxu0 %v5040
    %v5130 = vpop.f32.mrf.mxu0
    %v5131 = vadd.f32 %v342, %v5130
    %v5132 = vpop.f32.mrf.mxu0
    %5133 = vmatprep.mubr.f32.mxu0 0.0
    %5134 = vmatmul.mubr.f32.gmra.mxu0 %v5043
    %v5135 = vpop.f32.mrf.mxu0
    %v5136 = vadd.f32 %v343, %v5135
    %v5137 = vpop.f32.mrf.mxu0
    %5138 = vmatprep.mubr.f32.mxu0 0.0
    %5139 = vmatmul.mubr.f32.gmra.mxu0 %v5046
    %v5140 = vpop.f32.mrf.mxu0
    %v5141 = vadd.f32 %v344, %v5140
    %v5142 = vpop.f32.mrf.mxu0
    %5143 = vmatprep.mubr.f32.mxu0 0.0
    %5144 = vmatmul.mubr.f32.gmra.mxu0 %v5049
    %v5145 = vpop.f32.mrf.mxu0
    %v5146 = vadd.f32 %v345, %v5145
    %v5147 = vpop.f32.mrf.mxu0
    %5148 = vmatprep.mubr.f32.mxu0 0.0
    %5149 = vmatmul.mubr.f32.gmra.mxu0 %v5052
    %v5150 = vpop.f32.mrf.mxu0
    %v5151 = vadd.f32 %v346, %v5150
    %v5152 = vpop.f32.mrf.mxu0
    %5153 = vdwg.mxu0
    %v5154 = vsel %vm931, %v5131, -inf
    %5155 = vmax.xlane.f32.xlu0 %v5154
    %v5156 = vpop.xlane.xlu0 %5155
    %v5157 = vsel %vm931, %v5136, -inf
    %5158 = vmax.xlane.f32.xlu0 %v5157
    %v5159 = vpop.xlane.xlu0 %5158
    %v5160 = vsel %vm931, %v5141, -inf
    %5161 = vmax.xlane.f32.xlu0 %v5160
    %v5162 = vpop.xlane.xlu0 %5161
    %v5163 = vsel %vm931, %v5146, -inf
    %5164 = vmax.xlane.f32.xlu0 %v5163
    %v5165 = vpop.xlane.xlu0 %5164
    %v5166 = vsel %vm944, %v5151, -inf
    %5167 = vmax.xlane.f32.xlu0 %v5166
    %v5168 = vpop.xlane.xlu0 %5167
    %v5169 = vsub.f32 %v5131, %v5156
    %v5170 = vsub.f32 %v5136, %v5159
    %v5171 = vsub.f32 %v5141, %v5162
    %v5172 = vsub.f32 %v5146, %v5165
    %v5173 = vsub.f32 %v5151, %v5168
    %v5174 = vmul.f32 %v5169, 1.442695
    %v5175 = vpow.pop %v5174
    %v5176 = vmul.f32 %v5170, 1.442695
    %v5177 = vpow.pop %v5176
    %v5178 = vmul.f32 %v5171, 1.442695
    %v5179 = vpow.pop %v5178
    %v5180 = vmul.f32 %v5172, 1.442695
    %v5181 = vpow.pop %v5180
    %v5182 = vmul.f32 %v5173, 1.442695
    %v5183 = vpow.pop %v5182
    %v5184 = vsel %vm931, %v5175, 0.0
    %5185 = vadd.xlane.f32.xlu0 %v5184
    %v5186 = vpop.xlane.xlu0 %5185
    %v5187 = vsel %vm931, %v5177, 0.0
    %5188 = vadd.xlane.f32.xlu0 %v5187
    %v5189 = vpop.xlane.xlu0 %5188
    %v5190 = vsel %vm931, %v5179, 0.0
    %5191 = vadd.xlane.f32.xlu0 %v5190
    %v5192 = vpop.xlane.xlu0 %5191
    %v5193 = vsel %vm931, %v5181, 0.0
    %5194 = vadd.xlane.f32.xlu0 %v5193
    %v5195 = vpop.xlane.xlu0 %5194
    %v5196 = vsel %vm944, %v5183, 0.0
    %5197 = vadd.xlane.f32.xlu0 %v5196
    %v5198 = vpop.xlane.xlu0 %5197
    %v5199 = vrcp.pop %v5186
    %v5200 = vmul.f32 %v5175, %v5199
    %v5201 = vrcp.pop %v5189
    %v5202 = vmul.f32 %v5177, %v5201
    %v5203 = vrcp.pop %v5192
    %v5204 = vmul.f32 %v5179, %v5203
    %v5205 = vrcp.pop %v5195
    %v5206 = vmul.f32 %v5181, %v5205
    %v5207 = vrcp.pop %v5198
    %v5208 = vmul.f32 %v5183, %v5207
    %v5210 = vsel %vm931, %v5200, 0
    %v5213 = vsel %vm931, %v5202, 0
    %v5216 = vsel %vm931, %v5204, 0
    %v5219 = vsel %vm931, %v5206, 0
    %v5222 = vsel %vm931, %v5208, 0
    %v5225 = vsel %vm1003, %v5017, 0
    %5227 = vmatprep.subr.mxu0 0.0
    %5228 = vmatpush1.msra.mxu0 0.0
    %5229 = vmatprep.subr.mxu0 0.0
    %5230 = vmatpush1.msra.mxu0 0.0
    %5231 = vmatprep.subr.mxu0 0.0
    %5232 = vmatpush1.msra.mxu0 0.0
    %5233 = vmatprep.subr.mxu0 0.0
    %5234 = vmatpush1.msra.mxu0 0.0
    %5235 = vmatprep.subr.mxu0 0.0
    %5236 = vmatpush1.msra.mxu0 0.0
    %5237 = vmatprep.subr.mxu0 0.0
    %5238 = vmatpush1.msra.mxu0 0.0
    %5239 = vmatprep.subr.mxu0 0.0
    %5240 = vmatpush1.msra.mxu0 0.0
    %5241 = vmatprep.subr.mxu0 0.0
    %5242 = vmatpush1.msra.mxu0 0.0
    %5243 = vmatprep.subr.mxu0 0.0
    %5244 = vmatpush1.msra.mxu0 0.0
    %5245 = vmatprep.subr.mxu0 0.0
    %5246 = vmatpush1.msra.mxu0 0.0
    %5247 = vmatprep.subr.mxu0 0.0
    %5248 = vmatpush1.msra.mxu0 0.0
    %5249 = vmatprep.subr.mxu0 0.0
    %5250 = vmatpush1.msra.mxu0 %v5225
    %5251 = vmatprep.subr.mxu0 0.0
    %5252 = vmatpush1.msra.mxu0 %v5011
    %5253 = vmatprep.subr.mxu0 0.0
    %5254 = vmatpush1.msra.mxu0 %v5005
    %5255 = vmatprep.subr.mxu0 0.0
    %5256 = vmatpush1.msra.mxu0 %v4999
    %5257 = vmatprep.subr.mxu0 0.0
    %5258 = vmatpush1.msra.mxu0 %v4993
    %5259 = vmatprep.subr.mxu0 0.0
    %5260 = vmatpush2.msra.mxu0 0.0
    %5261 = vmatprep.subr.mxu0 0.0
    %5262 = vmatpush2.msra.mxu0 0.0
    %5263 = vmatprep.subr.mxu0 0.0
    %5264 = vmatpush2.msra.mxu0 0.0
    %5265 = vmatprep.subr.mxu0 0.0
    %5266 = vmatpush2.msra.mxu0 0.0
    %5267 = vmatprep.subr.mxu0 0.0
    %5268 = vmatpush2.msra.mxu0 0.0
    %5269 = vmatprep.subr.mxu0 0.0
    %5270 = vmatpush2.msra.mxu0 0.0
    %5271 = vmatprep.subr.mxu0 0.0
    %5272 = vmatpush2.msra.mxu0 0.0
    %5273 = vmatprep.subr.mxu0 0.0
    %5274 = vmatpush2.msra.mxu0 0.0
    %5275 = vmatprep.subr.mxu0 0.0
    %5276 = vmatpush2.msra.mxu0 0.0
    %5277 = vmatprep.subr.mxu0 0.0
    %5278 = vmatpush2.msra.mxu0 0.0
    %5279 = vmatprep.subr.mxu0 0.0
    %5280 = vmatpush2.msra.mxu0 0.0
    %5281 = vmatprep.subr.mxu0 0.0
    %5282 = vmatpush2.msra.mxu0 0.0
    %5283 = vmatprep.subr.mxu0 0.0
    %5284 = vmatpush2.msra.mxu0 0.0
    %5285 = vmatprep.subr.mxu0 0.0
    %5286 = vmatpush2.msra.mxu0 0.0
    %5287 = vmatprep.subr.mxu0 0.0
    %5288 = vmatpush2.msra.mxu0 0.0
    %5289 = vmatprep.subr.mxu0 0.0
    %5290 = vmatpush2.msra.mxu0 0.0
    %5291 = vmatprep.mubr.f32.mxu0 0.0
    %5292 = vmatmul.mubr.f32.gmra.mxu0 %v5210
    %v5293 = vpop.f32.mrf.mxu0
    %v5294 = vadd.f32 0.0, %v5293
    %v5295 = vpop.f32.mrf.mxu0
    %5296 = vmatprep.mubr.f32.mxu0 0.0
    %5297 = vmatmul.mubr.f32.gmra.mxu0 %v5213
    %v5298 = vpop.f32.mrf.mxu0
    %v5299 = vadd.f32 0.0, %v5298
    %v5300 = vpop.f32.mrf.mxu0
    %5301 = vmatprep.mubr.f32.mxu0 0.0
    %5302 = vmatmul.mubr.f32.gmra.mxu0 %v5216
    %v5303 = vpop.f32.mrf.mxu0
    %v5304 = vadd.f32 0.0, %v5303
    %v5305 = vpop.f32.mrf.mxu0
    %5306 = vmatprep.mubr.f32.mxu0 0.0
    %5307 = vmatmul.mubr.f32.gmra.mxu0 %v5219
    %v5308 = vpop.f32.mrf.mxu0
    %v5309 = vadd.f32 0.0, %v5308
    %v5310 = vpop.f32.mrf.mxu0
    %5311 = vmatprep.mubr.f32.mxu0 0.0
    %5312 = vmatmul.mubr.f32.gmra.mxu0 %v5222
    %v5313 = vpop.f32.mrf.mxu0
    %v5314 = vadd.f32 0.0, %v5313
    %v5315 = vpop.f32.mrf.mxu0
    %5316 = vdwg.mxu0
    %5317 = vrot.lane.b32.xlu0 %v5019, 112
    %v5318 = vpop.permute.xlu0 %5317
    %5319 = vrot.lane.b32.xlu0 %v5020, 112
    %v5320 = vpop.permute.xlu0 %5319
    %5321 = vrot.lane.b32.xlu0 %v5021, 112
    %v5322 = vpop.permute.xlu0 %5321
    %5323 = vrot.lane.b32.xlu0 %v5022, 112
    %v5324 = vpop.permute.xlu0 %5323
    %5325 = vrot.lane.b32.xlu0 %v5023, 112
    %v5326 = vpop.permute.xlu0 %5325
    %5327 = vrot.lane.b32.xlu0 %v4991, 48
    %v5328 = vpop.permute.xlu0 %5327
    %5329 = vrot.lane.b32.xlu0 %v4997, 48
    %v5330 = vpop.permute.xlu0 %5329
    %5331 = vrot.lane.b32.xlu0 %v5003, 48
    %v5332 = vpop.permute.xlu0 %5331
    %5333 = vrot.lane.b32.xlu0 %v5009, 48
    %v5334 = vpop.permute.xlu0 %5333
    %5335 = vrot.lane.b32.xlu0 %v5015, 48
    %v5336 = vpop.permute.xlu0 %5335
    %v5337 = vsel %vm815, %v5318, 0
    %v5339 = vsel %vm815, %v5320, 0
    %v5341 = vsel %vm815, %v5322, 0
    %v5343 = vsel %vm815, %v5324, 0
    %v5345 = vsel %vm815, %v5326, 0
    %v5347 = vsel %vm815, %v5328, 0
    %v5349 = vsel %vm815, %v5330, 0
    %v5351 = vsel %vm815, %v5332, 0
    %v5353 = vsel %vm815, %v5334, 0
    %v5355 = vsel %vm815, %v5336, 0
    %5357 = vmatprep.subr.mxu0 0.0
    %5358 = vmatpush1.xpose.msra.mxu0 0.0
    %5359 = vmatprep.subr.mxu0 0.0
    %5360 = vmatpush1.xpose.msra.mxu0 0.0
    %5361 = vmatprep.subr.mxu0 0.0
    %5362 = vmatpush1.xpose.msra.mxu0 0.0
    %5363 = vmatprep.subr.mxu0 0.0
    %5364 = vmatpush1.xpose.msra.mxu0 0.0
    %5365 = vmatprep.subr.mxu0 0.0
    %5366 = vmatpush1.xpose.msra.mxu0 0.0
    %5367 = vmatprep.subr.mxu0 0.0
    %5368 = vmatpush1.xpose.msra.mxu0 0.0
    %5369 = vmatprep.subr.mxu0 0.0
    %5370 = vmatpush1.xpose.msra.mxu0 0.0
    %5371 = vmatprep.subr.mxu0 0.0
    %5372 = vmatpush1.xpose.msra.mxu0 0.0
    %5373 = vmatprep.subr.mxu0 0.0
    %5374 = vmatpush1.xpose.msra.mxu0 0.0
    %5375 = vmatprep.subr.mxu0 0.0
    %5376 = vmatpush1.xpose.msra.mxu0 0.0
    %5377 = vmatprep.subr.mxu0 0.0
    %5378 = vmatpush1.xpose.msra.mxu0 0.0
    %5379 = vmatprep.subr.mxu0 0.0
    %5380 = vmatpush1.xpose.msra.mxu0 %v5355
    %5381 = vmatprep.subr.mxu0 0.0
    %5382 = vmatpush1.xpose.msra.mxu0 %v5353
    %5383 = vmatprep.subr.mxu0 0.0
    %5384 = vmatpush1.xpose.msra.mxu0 %v5351
    %5385 = vmatprep.subr.mxu0 0.0
    %5386 = vmatpush1.xpose.msra.mxu0 %v5349
    %5387 = vmatprep.subr.mxu0 0.0
    %5388 = vmatpush1.xpose.msra.mxu0 %v5347
    %5389 = vmatprep.subr.mxu0 0.0
    %5390 = vmatpush2.xpose.msra.mxu0 0.0
    %5391 = vmatprep.subr.mxu0 0.0
    %5392 = vmatpush2.xpose.msra.mxu0 0.0
    %5393 = vmatprep.subr.mxu0 0.0
    %5394 = vmatpush2.xpose.msra.mxu0 0.0
    %5395 = vmatprep.subr.mxu0 0.0
    %5396 = vmatpush2.xpose.msra.mxu0 0.0
    %5397 = vmatprep.subr.mxu0 0.0
    %5398 = vmatpush2.xpose.msra.mxu0 0.0
    %5399 = vmatprep.subr.mxu0 0.0
    %5400 = vmatpush2.xpose.msra.mxu0 0.0
    %5401 = vmatprep.subr.mxu0 0.0
    %5402 = vmatpush2.xpose.msra.mxu0 0.0
    %5403 = vmatprep.subr.mxu0 0.0
    %5404 = vmatpush2.xpose.msra.mxu0 0.0
    %5405 = vmatprep.subr.mxu0 0.0
    %5406 = vmatpush2.xpose.msra.mxu0 0.0
    %5407 = vmatprep.subr.mxu0 0.0
    %5408 = vmatpush2.xpose.msra.mxu0 0.0
    %5409 = vmatprep.subr.mxu0 0.0
    %5410 = vmatpush2.xpose.msra.mxu0 0.0
    %5411 = vmatprep.subr.mxu0 0.0
    %5412 = vmatpush2.xpose.msra.mxu0 0.0
    %5413 = vmatprep.subr.mxu0 0.0
    %5414 = vmatpush2.xpose.msra.mxu0 0.0
    %5415 = vmatprep.subr.mxu0 0.0
    %5416 = vmatpush2.xpose.msra.mxu0 0.0
    %5417 = vmatprep.subr.mxu0 0.0
    %5418 = vmatpush2.xpose.msra.mxu0 0.0
    %5419 = vmatprep.subr.mxu0 0.0
    %5420 = vmatpush2.xpose.msra.mxu0 0.0
    %5421 = vmatprep.mubr.f32.mxu0 0.0
    %5422 = vmatmul.mubr.f32.gmra.mxu0 %v5337
    %v5423 = vpop.f32.mrf.mxu0
    %v5424 = vadd.f32 %v342, %v5423
    %v5425 = vpop.f32.mrf.mxu0
    %5426 = vmatprep.mubr.f32.mxu0 0.0
    %5427 = vmatmul.mubr.f32.gmra.mxu0 %v5339
    %v5428 = vpop.f32.mrf.mxu0
    %v5429 = vadd.f32 %v343, %v5428
    %v5430 = vpop.f32.mrf.mxu0
    %5431 = vmatprep.mubr.f32.mxu0 0.0
    %5432 = vmatmul.mubr.f32.gmra.mxu0 %v5341
    %v5433 = vpop.f32.mrf.mxu0
    %v5434 = vadd.f32 %v344, %v5433
    %v5435 = vpop.f32.mrf.mxu0
    %5436 = vmatprep.mubr.f32.mxu0 0.0
    %5437 = vmatmul.mubr.f32.gmra.mxu0 %v5343
    %v5438 = vpop.f32.mrf.mxu0
    %v5439 = vadd.f32 %v345, %v5438
    %v5440 = vpop.f32.mrf.mxu0
    %5441 = vmatprep.mubr.f32.mxu0 0.0
    %5442 = vmatmul.mubr.f32.gmra.mxu0 %v5345
    %v5443 = vpop.f32.mrf.mxu0
    %v5444 = vadd.f32 %v346, %v5443
    %v5445 = vpop.f32.mrf.mxu0
    %5446 = vdwg.mxu0
    %v5447 = vsel %vm931, %v5424, -inf
    %5448 = vmax.xlane.f32.xlu0 %v5447
    %v5449 = vpop.xlane.xlu0 %5448
    %v5450 = vsel %vm931, %v5429, -inf
    %5451 = vmax.xlane.f32.xlu0 %v5450
    %v5452 = vpop.xlane.xlu0 %5451
    %v5453 = vsel %vm931, %v5434, -inf
    %5454 = vmax.xlane.f32.xlu0 %v5453
    %v5455 = vpop.xlane.xlu0 %5454
    %v5456 = vsel %vm931, %v5439, -inf
    %5457 = vmax.xlane.f32.xlu0 %v5456
    %v5458 = vpop.xlane.xlu0 %5457
    %v5459 = vsel %vm944, %v5444, -inf
    %5460 = vmax.xlane.f32.xlu0 %v5459
    %v5461 = vpop.xlane.xlu0 %5460
    %v5462 = vsub.f32 %v5424, %v5449
    %v5463 = vsub.f32 %v5429, %v5452
    %v5464 = vsub.f32 %v5434, %v5455
    %v5465 = vsub.f32 %v5439, %v5458
    %v5466 = vsub.f32 %v5444, %v5461
    %v5467 = vmul.f32 %v5462, 1.442695
    %v5468 = vpow.pop %v5467
    %v5469 = vmul.f32 %v5463, 1.442695
    %v5470 = vpow.pop %v5469
    %v5471 = vmul.f32 %v5464, 1.442695
    %v5472 = vpow.pop %v5471
    %v5473 = vmul.f32 %v5465, 1.442695
    %v5474 = vpow.pop %v5473
    %v5475 = vmul.f32 %v5466, 1.442695
    %v5476 = vpow.pop %v5475
    %v5477 = vsel %vm931, %v5468, 0.0
    %5478 = vadd.xlane.f32.xlu0 %v5477
    %v5479 = vpop.xlane.xlu0 %5478
    %v5480 = vsel %vm931, %v5470, 0.0
    %5481 = vadd.xlane.f32.xlu0 %v5480
    %v5482 = vpop.xlane.xlu0 %5481
    %v5483 = vsel %vm931, %v5472, 0.0
    %5484 = vadd.xlane.f32.xlu0 %v5483
    %v5485 = vpop.xlane.xlu0 %5484
    %v5486 = vsel %vm931, %v5474, 0.0
    %5487 = vadd.xlane.f32.xlu0 %v5486
    %v5488 = vpop.xlane.xlu0 %5487
    %v5489 = vsel %vm944, %v5476, 0.0
    %5490 = vadd.xlane.f32.xlu0 %v5489
    %v5491 = vpop.xlane.xlu0 %5490
    %v5492 = vrcp.pop %v5479
    %v5493 = vmul.f32 %v5468, %v5492
    %v5494 = vrcp.pop %v5482
    %v5495 = vmul.f32 %v5470, %v5494
    %v5496 = vrcp.pop %v5485
    %v5497 = vmul.f32 %v5472, %v5496
    %v5498 = vrcp.pop %v5488
    %v5499 = vmul.f32 %v5474, %v5498
    %v5500 = vrcp.pop %v5491
    %v5501 = vmul.f32 %v5476, %v5500
    %5506 = vrot.lane.b32.xlu0 %v4993, 112
    %v5507 = vpop.permute.xlu0 %5506
    %5508 = vrot.lane.b32.xlu0 %v4999, 112
    %v5509 = vpop.permute.xlu0 %5508
    %5510 = vrot.lane.b32.xlu0 %v5005, 112
    %v5511 = vpop.permute.xlu0 %5510
    %5512 = vrot.lane.b32.xlu0 %v5011, 112
    %v5513 = vpop.permute.xlu0 %5512
    %5514 = vrot.lane.b32.xlu0 %v5017, 112
    %v5515 = vpop.permute.xlu0 %5514
    %v5521 = vsel %vm931, %v5493, 0
    %v5524 = vsel %vm931, %v5495, 0
    %v5527 = vsel %vm931, %v5497, 0
    %v5530 = vsel %vm931, %v5499, 0
    %v5533 = vsel %vm931, %v5501, 0
    %v5535 = vsel %vm1003, %v5515, 0
    %5537 = vmatprep.subr.mxu0 0.0
    %5538 = vmatpush1.msra.mxu0 0.0
    %5539 = vmatprep.subr.mxu0 0.0
    %5540 = vmatpush1.msra.mxu0 0.0
    %5541 = vmatprep.subr.mxu0 0.0
    %5542 = vmatpush1.msra.mxu0 0.0
    %5543 = vmatprep.subr.mxu0 0.0
    %5544 = vmatpush1.msra.mxu0 0.0
    %5545 = vmatprep.subr.mxu0 0.0
    %5546 = vmatpush1.msra.mxu0 0.0
    %5547 = vmatprep.subr.mxu0 0.0
    %5548 = vmatpush1.msra.mxu0 0.0
    %5549 = vmatprep.subr.mxu0 0.0
    %5550 = vmatpush1.msra.mxu0 0.0
    %5551 = vmatprep.subr.mxu0 0.0
    %5552 = vmatpush1.msra.mxu0 0.0
    %5553 = vmatprep.subr.mxu0 0.0
    %5554 = vmatpush1.msra.mxu0 0.0
    %5555 = vmatprep.subr.mxu0 0.0
    %5556 = vmatpush1.msra.mxu0 0.0
    %5557 = vmatprep.subr.mxu0 0.0
    %5558 = vmatpush1.msra.mxu0 0.0
    %5559 = vmatprep.subr.mxu0 0.0
    %5560 = vmatpush1.msra.mxu0 %v5535
    %5561 = vmatprep.subr.mxu0 0.0
    %5562 = vmatpush1.msra.mxu0 %v5513
    %5563 = vmatprep.subr.mxu0 0.0
    %5564 = vmatpush1.msra.mxu0 %v5511
    %5565 = vmatprep.subr.mxu0 0.0
    %5566 = vmatpush1.msra.mxu0 %v5509
    %5567 = vmatprep.subr.mxu0 0.0
    %5568 = vmatpush1.msra.mxu0 %v5507
    %5569 = vmatprep.subr.mxu0 0.0
    %5570 = vmatpush2.msra.mxu0 0.0
    %5571 = vmatprep.subr.mxu0 0.0
    %5572 = vmatpush2.msra.mxu0 0.0
    %5573 = vmatprep.subr.mxu0 0.0
    %5574 = vmatpush2.msra.mxu0 0.0
    %5575 = vmatprep.subr.mxu0 0.0
    %5576 = vmatpush2.msra.mxu0 0.0
    %5577 = vmatprep.subr.mxu0 0.0
    %5578 = vmatpush2.msra.mxu0 0.0
    %5579 = vmatprep.subr.mxu0 0.0
    %5580 = vmatpush2.msra.mxu0 0.0
    %5581 = vmatprep.subr.mxu0 0.0
    %5582 = vmatpush2.msra.mxu0 0.0
    %5583 = vmatprep.subr.mxu0 0.0
    %5584 = vmatpush2.msra.mxu0 0.0
    %5585 = vmatprep.subr.mxu0 0.0
    %5586 = vmatpush2.msra.mxu0 0.0
    %5587 = vmatprep.subr.mxu0 0.0
    %5588 = vmatpush2.msra.mxu0 0.0
    %5589 = vmatprep.subr.mxu0 0.0
    %5590 = vmatpush2.msra.mxu0 0.0
    %5591 = vmatprep.subr.mxu0 0.0
    %5592 = vmatpush2.msra.mxu0 0.0
    %5593 = vmatprep.subr.mxu0 0.0
    %5594 = vmatpush2.msra.mxu0 0.0
    %5595 = vmatprep.subr.mxu0 0.0
    %5596 = vmatpush2.msra.mxu0 0.0
    %5597 = vmatprep.subr.mxu0 0.0
    %5598 = vmatpush2.msra.mxu0 0.0
    %5599 = vmatprep.subr.mxu0 0.0
    %5600 = vmatpush2.msra.mxu0 0.0
    %5601 = vmatprep.mubr.f32.mxu0 0.0
    %5602 = vmatmul.mubr.f32.gmra.mxu0 %v5521
    %v5603 = vpop.f32.mrf.mxu0
    %v5604 = vadd.f32 0.0, %v5603
    %v5605 = vpop.f32.mrf.mxu0
    %5606 = vmatprep.mubr.f32.mxu0 0.0
    %5607 = vmatmul.mubr.f32.gmra.mxu0 %v5524
    %v5608 = vpop.f32.mrf.mxu0
    %v5609 = vadd.f32 0.0, %v5608
    %v5610 = vpop.f32.mrf.mxu0
    %5611 = vmatprep.mubr.f32.mxu0 0.0
    %5612 = vmatmul.mubr.f32.gmra.mxu0 %v5527
    %v5613 = vpop.f32.mrf.mxu0
    %v5614 = vadd.f32 0.0, %v5613
    %v5615 = vpop.f32.mrf.mxu0
    %5616 = vmatprep.mubr.f32.mxu0 0.0
    %5617 = vmatmul.mubr.f32.gmra.mxu0 %v5530
    %v5618 = vpop.f32.mrf.mxu0
    %v5619 = vadd.f32 0.0, %v5618
    %v5620 = vpop.f32.mrf.mxu0
    %5621 = vmatprep.mubr.f32.mxu0 0.0
    %5622 = vmatmul.mubr.f32.gmra.mxu0 %v5533
    %v5623 = vpop.f32.mrf.mxu0
    %v5624 = vadd.f32 0.0, %v5623
    %v5625 = vpop.f32.mrf.mxu0
    %5626 = vdwg.mxu0
    %5627 = vrot.lane.b32.xlu0 %v5019, 96
    %v5628 = vpop.permute.xlu0 %5627
    %5629 = vrot.lane.b32.xlu0 %v5020, 96
    %v5630 = vpop.permute.xlu0 %5629
    %5631 = vrot.lane.b32.xlu0 %v5021, 96
    %v5632 = vpop.permute.xlu0 %5631
    %5633 = vrot.lane.b32.xlu0 %v5022, 96
    %v5634 = vpop.permute.xlu0 %5633
    %5635 = vrot.lane.b32.xlu0 %v5023, 96
    %v5636 = vpop.permute.xlu0 %5635
    %5637 = vrot.lane.b32.xlu0 %v4991, 32
    %v5638 = vpop.permute.xlu0 %5637
    %5639 = vrot.lane.b32.xlu0 %v4997, 32
    %v5640 = vpop.permute.xlu0 %5639
    %5641 = vrot.lane.b32.xlu0 %v5003, 32
    %v5642 = vpop.permute.xlu0 %5641
    %5643 = vrot.lane.b32.xlu0 %v5009, 32
    %v5644 = vpop.permute.xlu0 %5643
    %5645 = vrot.lane.b32.xlu0 %v5015, 32
    %v5646 = vpop.permute.xlu0 %5645
    %v5647 = vsel %vm815, %v5628, 0
    %v5649 = vsel %vm815, %v5630, 0
    %v5651 = vsel %vm815, %v5632, 0
    %v5653 = vsel %vm815, %v5634, 0
    %v5655 = vsel %vm815, %v5636, 0
    %v5657 = vsel %vm815, %v5638, 0
    %v5659 = vsel %vm815, %v5640, 0
    %v5661 = vsel %vm815, %v5642, 0
    %v5663 = vsel %vm815, %v5644, 0
    %v5665 = vsel %vm815, %v5646, 0
    %5667 = vmatprep.subr.mxu0 0.0
    %5668 = vmatpush1.xpose.msra.mxu0 0.0
    %5669 = vmatprep.subr.mxu0 0.0
    %5670 = vmatpush1.xpose.msra.mxu0 0.0
    %5671 = vmatprep.subr.mxu0 0.0
    %5672 = vmatpush1.xpose.msra.mxu0 0.0
    %5673 = vmatprep.subr.mxu0 0.0
    %5674 = vmatpush1.xpose.msra.mxu0 0.0
    %5675 = vmatprep.subr.mxu0 0.0
    %5676 = vmatpush1.xpose.msra.mxu0 0.0
    %5677 = vmatprep.subr.mxu0 0.0
    %5678 = vmatpush1.xpose.msra.mxu0 0.0
    %5679 = vmatprep.subr.mxu0 0.0
    %5680 = vmatpush1.xpose.msra.mxu0 0.0
    %5681 = vmatprep.subr.mxu0 0.0
    %5682 = vmatpush1.xpose.msra.mxu0 0.0
    %5683 = vmatprep.subr.mxu0 0.0
    %5684 = vmatpush1.xpose.msra.mxu0 0.0
    %5685 = vmatprep.subr.mxu0 0.0
    %5686 = vmatpush1.xpose.msra.mxu0 0.0
    %5687 = vmatprep.subr.mxu0 0.0
    %5688 = vmatpush1.xpose.msra.mxu0 0.0
    %5689 = vmatprep.subr.mxu0 0.0
    %5690 = vmatpush1.xpose.msra.mxu0 %v5665
    %5691 = vmatprep.subr.mxu0 0.0
    %5692 = vmatpush1.xpose.msra.mxu0 %v5663
    %5693 = vmatprep.subr.mxu0 0.0
    %5694 = vmatpush1.xpose.msra.mxu0 %v5661
    %5695 = vmatprep.subr.mxu0 0.0
    %5696 = vmatpush1.xpose.msra.mxu0 %v5659
    %5697 = vmatprep.subr.mxu0 0.0
    %5698 = vmatpush1.xpose.msra.mxu0 %v5657
    %5699 = vmatprep.subr.mxu0 0.0
    %5700 = vmatpush2.xpose.msra.mxu0 0.0
    %5701 = vmatprep.subr.mxu0 0.0
    %5702 = vmatpush2.xpose.msra.mxu0 0.0
    %5703 = vmatprep.subr.mxu0 0.0
    %5704 = vmatpush2.xpose.msra.mxu0 0.0
    %5705 = vmatprep.subr.mxu0 0.0
    %5706 = vmatpush2.xpose.msra.mxu0 0.0
    %5707 = vmatprep.subr.mxu0 0.0
    %5708 = vmatpush2.xpose.msra.mxu0 0.0
    %5709 = vmatprep.subr.mxu0 0.0
    %5710 = vmatpush2.xpose.msra.mxu0 0.0
    %5711 = vmatprep.subr.mxu0 0.0
    %5712 = vmatpush2.xpose.msra.mxu0 0.0
    %5713 = vmatprep.subr.mxu0 0.0
    %5714 = vmatpush2.xpose.msra.mxu0 0.0
    %5715 = vmatprep.subr.mxu0 0.0
    %5716 = vmatpush2.xpose.msra.mxu0 0.0
    %5717 = vmatprep.subr.mxu0 0.0
    %5718 = vmatpush2.xpose.msra.mxu0 0.0
    %5719 = vmatprep.subr.mxu0 0.0
    %5720 = vmatpush2.xpose.msra.mxu0 0.0
    %5721 = vmatprep.subr.mxu0 0.0
    %5722 = vmatpush2.xpose.msra.mxu0 0.0
    %5723 = vmatprep.subr.mxu0 0.0
    %5724 = vmatpush2.xpose.msra.mxu0 0.0
    %5725 = vmatprep.subr.mxu0 0.0
    %5726 = vmatpush2.xpose.msra.mxu0 0.0
    %5727 = vmatprep.subr.mxu0 0.0
    %5728 = vmatpush2.xpose.msra.mxu0 0.0
    %5729 = vmatprep.subr.mxu0 0.0
    %5730 = vmatpush2.xpose.msra.mxu0 0.0
    %5731 = vmatprep.mubr.f32.mxu0 0.0
    %5732 = vmatmul.mubr.f32.gmra.mxu0 %v5647
    %v5733 = vpop.f32.mrf.mxu0
    %v5734 = vadd.f32 %v342, %v5733
    %v5735 = vpop.f32.mrf.mxu0
    %5736 = vmatprep.mubr.f32.mxu0 0.0
    %5737 = vmatmul.mubr.f32.gmra.mxu0 %v5649
    %v5738 = vpop.f32.mrf.mxu0
    %v5739 = vadd.f32 %v343, %v5738
    %v5740 = vpop.f32.mrf.mxu0
    %5741 = vmatprep.mubr.f32.mxu0 0.0
    %5742 = vmatmul.mubr.f32.gmra.mxu0 %v5651
    %v5743 = vpop.f32.mrf.mxu0
    %v5744 = vadd.f32 %v344, %v5743
    %v5745 = vpop.f32.mrf.mxu0
    %5746 = vmatprep.mubr.f32.mxu0 0.0
    %5747 = vmatmul.mubr.f32.gmra.mxu0 %v5653
    %v5748 = vpop.f32.mrf.mxu0
    %v5749 = vadd.f32 %v345, %v5748
    %v5750 = vpop.f32.mrf.mxu0
    %5751 = vmatprep.mubr.f32.mxu0 0.0
    %5752 = vmatmul.mubr.f32.gmra.mxu0 %v5655
    %v5753 = vpop.f32.mrf.mxu0
    %v5754 = vadd.f32 %v346, %v5753
    %v5755 = vpop.f32.mrf.mxu0
    %5756 = vdwg.mxu0
    %v5757 = vsel %vm931, %v5734, -inf
    %5758 = vmax.xlane.f32.xlu0 %v5757
    %v5759 = vpop.xlane.xlu0 %5758
    %v5760 = vsel %vm931, %v5739, -inf
    %5761 = vmax.xlane.f32.xlu0 %v5760
    %v5762 = vpop.xlane.xlu0 %5761
    %v5763 = vsel %vm931, %v5744, -inf
    %5764 = vmax.xlane.f32.xlu0 %v5763
    %v5765 = vpop.xlane.xlu0 %5764
    %v5766 = vsel %vm931, %v5749, -inf
    %5767 = vmax.xlane.f32.xlu0 %v5766
    %v5768 = vpop.xlane.xlu0 %5767
    %v5769 = vsel %vm944, %v5754, -inf
    %5770 = vmax.xlane.f32.xlu0 %v5769
    %v5771 = vpop.xlane.xlu0 %5770
    %v5772 = vsub.f32 %v5734, %v5759
    %v5773 = vsub.f32 %v5739, %v5762
    %v5774 = vsub.f32 %v5744, %v5765
    %v5775 = vsub.f32 %v5749, %v5768
    %v5776 = vsub.f32 %v5754, %v5771
    %v5777 = vmul.f32 %v5772, 1.442695
    %v5778 = vpow.pop %v5777
    %v5779 = vmul.f32 %v5773, 1.442695
    %v5780 = vpow.pop %v5779
    %v5781 = vmul.f32 %v5774, 1.442695
    %v5782 = vpow.pop %v5781
    %v5783 = vmul.f32 %v5775, 1.442695
    %v5784 = vpow.pop %v5783
    %v5785 = vmul.f32 %v5776, 1.442695
    %v5786 = vpow.pop %v5785
    %v5787 = vsel %vm931, %v5778, 0.0
    %5788 = vadd.xlane.f32.xlu0 %v5787
    %v5789 = vpop.xlane.xlu0 %5788
    %v5790 = vsel %vm931, %v5780, 0.0
    %5791 = vadd.xlane.f32.xlu0 %v5790
    %v5792 = vpop.xlane.xlu0 %5791
    %v5793 = vsel %vm931, %v5782, 0.0
    %5794 = vadd.xlane.f32.xlu0 %v5793
    %v5795 = vpop.xlane.xlu0 %5794
    %v5796 = vsel %vm931, %v5784, 0.0
    %5797 = vadd.xlane.f32.xlu0 %v5796
    %v5798 = vpop.xlane.xlu0 %5797
    %v5799 = vsel %vm944, %v5786, 0.0
    %5800 = vadd.xlane.f32.xlu0 %v5799
    %v5801 = vpop.xlane.xlu0 %5800
    %v5802 = vrcp.pop %v5789
    %v5803 = vmul.f32 %v5778, %v5802
    %v5804 = vrcp.pop %v5792
    %v5805 = vmul.f32 %v5780, %v5804
    %v5806 = vrcp.pop %v5795
    %v5807 = vmul.f32 %v5782, %v5806
    %v5808 = vrcp.pop %v5798
    %v5809 = vmul.f32 %v5784, %v5808
    %v5810 = vrcp.pop %v5801
    %v5811 = vmul.f32 %v5786, %v5810
    %5812 = vrot.lane.b32.xlu0 %v4993, 96
    %v5813 = vpop.permute.xlu0 %5812
    %5814 = vrot.lane.b32.xlu0 %v4999, 96
    %v5815 = vpop.permute.xlu0 %5814
    %5816 = vrot.lane.b32.xlu0 %v5005, 96
    %v5817 = vpop.permute.xlu0 %5816
    %5818 = vrot.lane.b32.xlu0 %v5011, 96
    %v5819 = vpop.permute.xlu0 %5818
    %5820 = vrot.lane.b32.xlu0 %v5017, 96
    %v5821 = vpop.permute.xlu0 %5820
    %v5827 = vsel %vm931, %v5803, 0
    %v5830 = vsel %vm931, %v5805, 0
    %v5833 = vsel %vm931, %v5807, 0
    %v5836 = vsel %vm931, %v5809, 0
    %v5839 = vsel %vm931, %v5811, 0
    %v5841 = vsel %vm1003, %v5821, 0
    %5843 = vmatprep.subr.mxu0 0.0
    %5844 = vmatpush1.msra.mxu0 0.0
    %5845 = vmatprep.subr.mxu0 0.0
    %5846 = vmatpush1.msra.mxu0 0.0
    %5847 = vmatprep.subr.mxu0 0.0
    %5848 = vmatpush1.msra.mxu0 0.0
    %5849 = vmatprep.subr.mxu0 0.0
    %5850 = vmatpush1.msra.mxu0 0.0
    %5851 = vmatprep.subr.mxu0 0.0
    %5852 = vmatpush1.msra.mxu0 0.0
    %5853 = vmatprep.subr.mxu0 0.0
    %5854 = vmatpush1.msra.mxu0 0.0
    %5855 = vmatprep.subr.mxu0 0.0
    %5856 = vmatpush1.msra.mxu0 0.0
    %5857 = vmatprep.subr.mxu0 0.0
    %5858 = vmatpush1.msra.mxu0 0.0
    %5859 = vmatprep.subr.mxu0 0.0
    %5860 = vmatpush1.msra.mxu0 0.0
    %5861 = vmatprep.subr.mxu0 0.0
    %5862 = vmatpush1.msra.mxu0 0.0
    %5863 = vmatprep.subr.mxu0 0.0
    %5864 = vmatpush1.msra.mxu0 0.0
    %5865 = vmatprep.subr.mxu0 0.0
    %5866 = vmatpush1.msra.mxu0 %v5841
    %5867 = vmatprep.subr.mxu0 0.0
    %5868 = vmatpush1.msra.mxu0 %v5819
    %5869 = vmatprep.subr.mxu0 0.0
    %5870 = vmatpush1.msra.mxu0 %v5817
    %5871 = vmatprep.subr.mxu0 0.0
    %5872 = vmatpush1.msra.mxu0 %v5815
    %5873 = vmatprep.subr.mxu0 0.0
    %5874 = vmatpush1.msra.mxu0 %v5813
    %5875 = vmatprep.subr.mxu0 0.0
    %5876 = vmatpush2.msra.mxu0 0.0
    %5877 = vmatprep.subr.mxu0 0.0
    %5878 = vmatpush2.msra.mxu0 0.0
    %5879 = vmatprep.subr.mxu0 0.0
    %5880 = vmatpush2.msra.mxu0 0.0
    %5881 = vmatprep.subr.mxu0 0.0
    %5882 = vmatpush2.msra.mxu0 0.0
    %5883 = vmatprep.subr.mxu0 0.0
    %5884 = vmatpush2.msra.mxu0 0.0
    %5885 = vmatprep.subr.mxu0 0.0
    %5886 = vmatpush2.msra.mxu0 0.0
    %5887 = vmatprep.subr.mxu0 0.0
    %5888 = vmatpush2.msra.mxu0 0.0
    %5889 = vmatprep.subr.mxu0 0.0
    %5890 = vmatpush2.msra.mxu0 0.0
    %5891 = vmatprep.subr.mxu0 0.0
    %5892 = vmatpush2.msra.mxu0 0.0
    %5893 = vmatprep.subr.mxu0 0.0
    %5894 = vmatpush2.msra.mxu0 0.0
    %5895 = vmatprep.subr.mxu0 0.0
    %5896 = vmatpush2.msra.mxu0 0.0
    %5897 = vmatprep.subr.mxu0 0.0
    %5898 = vmatpush2.msra.mxu0 0.0
    %5899 = vmatprep.subr.mxu0 0.0
    %5900 = vmatpush2.msra.mxu0 0.0
    %5901 = vmatprep.subr.mxu0 0.0
    %5902 = vmatpush2.msra.mxu0 0.0
    %5903 = vmatprep.subr.mxu0 0.0
    %5904 = vmatpush2.msra.mxu0 0.0
    %5905 = vmatprep.subr.mxu0 0.0
    %5906 = vmatpush2.msra.mxu0 0.0
    %5907 = vmatprep.mubr.f32.mxu0 0.0
    %5908 = vmatmul.mubr.f32.gmra.mxu0 %v5827
    %v5909 = vpop.f32.mrf.mxu0
    %v5910 = vadd.f32 0.0, %v5909
    %v5911 = vpop.f32.mrf.mxu0
    %5912 = vmatprep.mubr.f32.mxu0 0.0
    %5913 = vmatmul.mubr.f32.gmra.mxu0 %v5830
    %v5914 = vpop.f32.mrf.mxu0
    %v5915 = vadd.f32 0.0, %v5914
    %v5916 = vpop.f32.mrf.mxu0
    %5917 = vmatprep.mubr.f32.mxu0 0.0
    %5918 = vmatmul.mubr.f32.gmra.mxu0 %v5833
    %v5919 = vpop.f32.mrf.mxu0
    %v5920 = vadd.f32 0.0, %v5919
    %v5921 = vpop.f32.mrf.mxu0
    %5922 = vmatprep.mubr.f32.mxu0 0.0
    %5923 = vmatmul.mubr.f32.gmra.mxu0 %v5836
    %v5924 = vpop.f32.mrf.mxu0
    %v5925 = vadd.f32 0.0, %v5924
    %v5926 = vpop.f32.mrf.mxu0
    %5927 = vmatprep.mubr.f32.mxu0 0.0
    %5928 = vmatmul.mubr.f32.gmra.mxu0 %v5839
    %v5929 = vpop.f32.mrf.mxu0
    %v5930 = vadd.f32 0.0, %v5929
    %v5931 = vpop.f32.mrf.mxu0
    %5932 = vdwg.mxu0
    %5933 = vrot.lane.b32.xlu0 %v5019, 80
    %v5934 = vpop.permute.xlu0 %5933
    %5935 = vrot.lane.b32.xlu0 %v5020, 80
    %v5936 = vpop.permute.xlu0 %5935
    %5937 = vrot.lane.b32.xlu0 %v5021, 80
    %v5938 = vpop.permute.xlu0 %5937
    %5939 = vrot.lane.b32.xlu0 %v5022, 80
    %v5940 = vpop.permute.xlu0 %5939
    %5941 = vrot.lane.b32.xlu0 %v5023, 80
    %v5942 = vpop.permute.xlu0 %5941
    %5943 = vrot.lane.b32.xlu0 %v4991, 16
    %v5944 = vpop.permute.xlu0 %5943
    %5945 = vrot.lane.b32.xlu0 %v4997, 16
    %v5946 = vpop.permute.xlu0 %5945
    %5947 = vrot.lane.b32.xlu0 %v5003, 16
    %v5948 = vpop.permute.xlu0 %5947
    %5949 = vrot.lane.b32.xlu0 %v5009, 16
    %v5950 = vpop.permute.xlu0 %5949
    %5951 = vrot.lane.b32.xlu0 %v5015, 16
    %v5952 = vpop.permute.xlu0 %5951
    %v5953 = vsel %vm815, %v5934, 0
    %v5955 = vsel %vm815, %v5936, 0
    %v5957 = vsel %vm815, %v5938, 0
    %v5959 = vsel %vm815, %v5940, 0
    %v5961 = vsel %vm815, %v5942, 0
    %v5963 = vsel %vm815, %v5944, 0
    %v5965 = vsel %vm815, %v5946, 0
    %v5967 = vsel %vm815, %v5948, 0
    %v5969 = vsel %vm815, %v5950, 0
    %v5971 = vsel %vm815, %v5952, 0
    %5973 = vmatprep.subr.mxu0 0.0
    %5974 = vmatpush1.xpose.msra.mxu0 0.0
    %5975 = vmatprep.subr.mxu0 0.0
    %5976 = vmatpush1.xpose.msra.mxu0 0.0
    %5977 = vmatprep.subr.mxu0 0.0
    %5978 = vmatpush1.xpose.msra.mxu0 0.0
    %5979 = vmatprep.subr.mxu0 0.0
    %5980 = vmatpush1.xpose.msra.mxu0 0.0
    %5981 = vmatprep.subr.mxu0 0.0
    %5982 = vmatpush1.xpose.msra.mxu0 0.0
    %5983 = vmatprep.subr.mxu0 0.0
    %5984 = vmatpush1.xpose.msra.mxu0 0.0
    %5985 = vmatprep.subr.mxu0 0.0
    %5986 = vmatpush1.xpose.msra.mxu0 0.0
    %5987 = vmatprep.subr.mxu0 0.0
    %5988 = vmatpush1.xpose.msra.mxu0 0.0
    %5989 = vmatprep.subr.mxu0 0.0
    %5990 = vmatpush1.xpose.msra.mxu0 0.0
    %5991 = vmatprep.subr.mxu0 0.0
    %5992 = vmatpush1.xpose.msra.mxu0 0.0
    %5993 = vmatprep.subr.mxu0 0.0
    %5994 = vmatpush1.xpose.msra.mxu0 0.0
    %5995 = vmatprep.subr.mxu0 0.0
    %5996 = vmatpush1.xpose.msra.mxu0 %v5971
    %5997 = vmatprep.subr.mxu0 0.0
    %5998 = vmatpush1.xpose.msra.mxu0 %v5969
    %5999 = vmatprep.subr.mxu0 0.0
    %6000 = vmatpush1.xpose.msra.mxu0 %v5967
    %6001 = vmatprep.subr.mxu0 0.0
    %6002 = vmatpush1.xpose.msra.mxu0 %v5965
    %6003 = vmatprep.subr.mxu0 0.0
    %6004 = vmatpush1.xpose.msra.mxu0 %v5963
    %6005 = vmatprep.subr.mxu0 0.0
    %6006 = vmatpush2.xpose.msra.mxu0 0.0
    %6007 = vmatprep.subr.mxu0 0.0
    %6008 = vmatpush2.xpose.msra.mxu0 0.0
    %6009 = vmatprep.subr.mxu0 0.0
    %6010 = vmatpush2.xpose.msra.mxu0 0.0
    %6011 = vmatprep.subr.mxu0 0.0
    %6012 = vmatpush2.xpose.msra.mxu0 0.0
    %6013 = vmatprep.subr.mxu0 0.0
    %6014 = vmatpush2.xpose.msra.mxu0 0.0
    %6015 = vmatprep.subr.mxu0 0.0
    %6016 = vmatpush2.xpose.msra.mxu0 0.0
    %6017 = vmatprep.subr.mxu0 0.0
    %6018 = vmatpush2.xpose.msra.mxu0 0.0
    %6019 = vmatprep.subr.mxu0 0.0
    %6020 = vmatpush2.xpose.msra.mxu0 0.0
    %6021 = vmatprep.subr.mxu0 0.0
    %6022 = vmatpush2.xpose.msra.mxu0 0.0
    %6023 = vmatprep.subr.mxu0 0.0
    %6024 = vmatpush2.xpose.msra.mxu0 0.0
    %6025 = vmatprep.subr.mxu0 0.0
    %6026 = vmatpush2.xpose.msra.mxu0 0.0
    %6027 = vmatprep.subr.mxu0 0.0
    %6028 = vmatpush2.xpose.msra.mxu0 0.0
    %6029 = vmatprep.subr.mxu0 0.0
    %6030 = vmatpush2.xpose.msra.mxu0 0.0
    %6031 = vmatprep.subr.mxu0 0.0
    %6032 = vmatpush2.xpose.msra.mxu0 0.0
    %6033 = vmatprep.subr.mxu0 0.0
    %6034 = vmatpush2.xpose.msra.mxu0 0.0
    %6035 = vmatprep.subr.mxu0 0.0
    %6036 = vmatpush2.xpose.msra.mxu0 0.0
    %6037 = vmatprep.mubr.f32.mxu0 0.0
    %6038 = vmatmul.mubr.f32.gmra.mxu0 %v5953
    %v6039 = vpop.f32.mrf.mxu0
    %v6040 = vadd.f32 %v342, %v6039
    %v6041 = vpop.f32.mrf.mxu0
    %6042 = vmatprep.mubr.f32.mxu0 0.0
    %6043 = vmatmul.mubr.f32.gmra.mxu0 %v5955
    %v6044 = vpop.f32.mrf.mxu0
    %v6045 = vadd.f32 %v343, %v6044
    %v6046 = vpop.f32.mrf.mxu0
    %6047 = vmatprep.mubr.f32.mxu0 0.0
    %6048 = vmatmul.mubr.f32.gmra.mxu0 %v5957
    %v6049 = vpop.f32.mrf.mxu0
    %v6050 = vadd.f32 %v344, %v6049
    %v6051 = vpop.f32.mrf.mxu0
    %6052 = vmatprep.mubr.f32.mxu0 0.0
    %6053 = vmatmul.mubr.f32.gmra.mxu0 %v5959
    %v6054 = vpop.f32.mrf.mxu0
    %v6055 = vadd.f32 %v345, %v6054
    %v6056 = vpop.f32.mrf.mxu0
    %6057 = vmatprep.mubr.f32.mxu0 0.0
    %6058 = vmatmul.mubr.f32.gmra.mxu0 %v5961
    %v6059 = vpop.f32.mrf.mxu0
    %v6060 = vadd.f32 %v346, %v6059
    %v6061 = vpop.f32.mrf.mxu0
    %6062 = vdwg.mxu0
    %v6063 = vsel %vm931, %v6040, -inf
    %6064 = vmax.xlane.f32.xlu0 %v6063
    %v6065 = vpop.xlane.xlu0 %6064
    %v6066 = vsel %vm931, %v6045, -inf
    %6067 = vmax.xlane.f32.xlu0 %v6066
    %v6068 = vpop.xlane.xlu0 %6067
    %v6069 = vsel %vm931, %v6050, -inf
    %6070 = vmax.xlane.f32.xlu0 %v6069
    %v6071 = vpop.xlane.xlu0 %6070
    %v6072 = vsel %vm931, %v6055, -inf
    %6073 = vmax.xlane.f32.xlu0 %v6072
    %v6074 = vpop.xlane.xlu0 %6073
    %v6075 = vsel %vm944, %v6060, -inf
    %6076 = vmax.xlane.f32.xlu0 %v6075
    %v6077 = vpop.xlane.xlu0 %6076
    %v6078 = vsub.f32 %v6040, %v6065
    %v6079 = vsub.f32 %v6045, %v6068
    %v6080 = vsub.f32 %v6050, %v6071
    %v6081 = vsub.f32 %v6055, %v6074
    %v6082 = vsub.f32 %v6060, %v6077
    %v6083 = vmul.f32 %v6078, 1.442695
    %v6084 = vpow.pop %v6083
    %v6085 = vmul.f32 %v6079, 1.442695
    %v6086 = vpow.pop %v6085
    %v6087 = vmul.f32 %v6080, 1.442695
    %v6088 = vpow.pop %v6087
    %v6089 = vmul.f32 %v6081, 1.442695
    %v6090 = vpow.pop %v6089
    %v6091 = vmul.f32 %v6082, 1.442695
    %v6092 = vpow.pop %v6091
    %v6093 = vsel %vm931, %v6084, 0.0
    %6094 = vadd.xlane.f32.xlu0 %v6093
    %v6095 = vpop.xlane.xlu0 %6094
    %v6096 = vsel %vm931, %v6086, 0.0
    %6097 = vadd.xlane.f32.xlu0 %v6096
    %v6098 = vpop.xlane.xlu0 %6097
    %v6099 = vsel %vm931, %v6088, 0.0
    %6100 = vadd.xlane.f32.xlu0 %v6099
    %v6101 = vpop.xlane.xlu0 %6100
    %v6102 = vsel %vm931, %v6090, 0.0
    %6103 = vadd.xlane.f32.xlu0 %v6102
    %v6104 = vpop.xlane.xlu0 %6103
    %v6105 = vsel %vm944, %v6092, 0.0
    %6106 = vadd.xlane.f32.xlu0 %v6105
    %v6107 = vpop.xlane.xlu0 %6106
    %v6108 = vrcp.pop %v6095
    %v6109 = vmul.f32 %v6084, %v6108
    %v6110 = vrcp.pop %v6098
    %v6111 = vmul.f32 %v6086, %v6110
    %v6112 = vrcp.pop %v6101
    %v6113 = vmul.f32 %v6088, %v6112
    %v6114 = vrcp.pop %v6104
    %v6115 = vmul.f32 %v6090, %v6114
    %v6116 = vrcp.pop %v6107
    %v6117 = vmul.f32 %v6092, %v6116
    %6118 = vrot.lane.b32.xlu0 %v4993, 80
    %v6119 = vpop.permute.xlu0 %6118
    %6120 = vrot.lane.b32.xlu0 %v4999, 80
    %v6121 = vpop.permute.xlu0 %6120
    %6122 = vrot.lane.b32.xlu0 %v5005, 80
    %v6123 = vpop.permute.xlu0 %6122
    %6124 = vrot.lane.b32.xlu0 %v5011, 80
    %v6125 = vpop.permute.xlu0 %6124
    %6126 = vrot.lane.b32.xlu0 %v5017, 80
    %v6127 = vpop.permute.xlu0 %6126
    %v6133 = vsel %vm931, %v6109, 0
    %v6136 = vsel %vm931, %v6111, 0
    %v6139 = vsel %vm931, %v6113, 0
    %v6142 = vsel %vm931, %v6115, 0
    %v6145 = vsel %vm931, %v6117, 0
    %v6147 = vsel %vm1003, %v6127, 0
    %6149 = vmatprep.subr.mxu0 0.0
    %6150 = vmatpush1.msra.mxu0 0.0
    %6151 = vmatprep.subr.mxu0 0.0
    %6152 = vmatpush1.msra.mxu0 0.0
    %6153 = vmatprep.subr.mxu0 0.0
    %6154 = vmatpush1.msra.mxu0 0.0
    %6155 = vmatprep.subr.mxu0 0.0
    %6156 = vmatpush1.msra.mxu0 0.0
    %6157 = vmatprep.subr.mxu0 0.0
    %6158 = vmatpush1.msra.mxu0 0.0
    %6159 = vmatprep.subr.mxu0 0.0
    %6160 = vmatpush1.msra.mxu0 0.0
    %6161 = vmatprep.subr.mxu0 0.0
    %6162 = vmatpush1.msra.mxu0 0.0
    %6163 = vmatprep.subr.mxu0 0.0
    %6164 = vmatpush1.msra.mxu0 0.0
    %6165 = vmatprep.subr.mxu0 0.0
    %6166 = vmatpush1.msra.mxu0 0.0
    %6167 = vmatprep.subr.mxu0 0.0
    %6168 = vmatpush1.msra.mxu0 0.0
    %6169 = vmatprep.subr.mxu0 0.0
    %6170 = vmatpush1.msra.mxu0 0.0
    %6171 = vmatprep.subr.mxu0 0.0
    %6172 = vmatpush1.msra.mxu0 %v6147
    %6173 = vmatprep.subr.mxu0 0.0
    %6174 = vmatpush1.msra.mxu0 %v6125
    %6175 = vmatprep.subr.mxu0 0.0
    %6176 = vmatpush1.msra.mxu0 %v6123
    %6177 = vmatprep.subr.mxu0 0.0
    %6178 = vmatpush1.msra.mxu0 %v6121
    %6179 = vmatprep.subr.mxu0 0.0
    %6180 = vmatpush1.msra.mxu0 %v6119
    %6181 = vmatprep.subr.mxu0 0.0
    %6182 = vmatpush2.msra.mxu0 0.0
    %6183 = vmatprep.subr.mxu0 0.0
    %6184 = vmatpush2.msra.mxu0 0.0
    %6185 = vmatprep.subr.mxu0 0.0
    %6186 = vmatpush2.msra.mxu0 0.0
    %6187 = vmatprep.subr.mxu0 0.0
    %6188 = vmatpush2.msra.mxu0 0.0
    %6189 = vmatprep.subr.mxu0 0.0
    %6190 = vmatpush2.msra.mxu0 0.0
    %6191 = vmatprep.subr.mxu0 0.0
    %6192 = vmatpush2.msra.mxu0 0.0
    %6193 = vmatprep.subr.mxu0 0.0
    %6194 = vmatpush2.msra.mxu0 0.0
    %6195 = vmatprep.subr.mxu0 0.0
    %6196 = vmatpush2.msra.mxu0 0.0
    %6197 = vmatprep.subr.mxu0 0.0
    %6198 = vmatpush2.msra.mxu0 0.0
    %6199 = vmatprep.subr.mxu0 0.0
    %6200 = vmatpush2.msra.mxu0 0.0
    %6201 = vmatprep.subr.mxu0 0.0
    %6202 = vmatpush2.msra.mxu0 0.0
    %6203 = vmatprep.subr.mxu0 0.0
    %6204 = vmatpush2.msra.mxu0 0.0
    %6205 = vmatprep.subr.mxu0 0.0
    %6206 = vmatpush2.msra.mxu0 0.0
    %6207 = vmatprep.subr.mxu0 0.0
    %6208 = vmatpush2.msra.mxu0 0.0
    %6209 = vmatprep.subr.mxu0 0.0
    %6210 = vmatpush2.msra.mxu0 0.0
    %6211 = vmatprep.subr.mxu0 0.0
    %6212 = vmatpush2.msra.mxu0 0.0
    %6213 = vmatprep.mubr.f32.mxu0 0.0
    %6214 = vmatmul.mubr.f32.gmra.mxu0 %v6133
    %v6215 = vpop.f32.mrf.mxu0
    %v6216 = vadd.f32 0.0, %v6215
    %v6217 = vpop.f32.mrf.mxu0
    %6218 = vmatprep.mubr.f32.mxu0 0.0
    %6219 = vmatmul.mubr.f32.gmra.mxu0 %v6136
    %v6220 = vpop.f32.mrf.mxu0
    %v6221 = vadd.f32 0.0, %v6220
    %v6222 = vpop.f32.mrf.mxu0
    %6223 = vmatprep.mubr.f32.mxu0 0.0
    %6224 = vmatmul.mubr.f32.gmra.mxu0 %v6139
    %v6225 = vpop.f32.mrf.mxu0
    %v6226 = vadd.f32 0.0, %v6225
    %v6227 = vpop.f32.mrf.mxu0
    %6228 = vmatprep.mubr.f32.mxu0 0.0
    %6229 = vmatmul.mubr.f32.gmra.mxu0 %v6142
    %v6230 = vpop.f32.mrf.mxu0
    %v6231 = vadd.f32 0.0, %v6230
    %v6232 = vpop.f32.mrf.mxu0
    %6233 = vmatprep.mubr.f32.mxu0 0.0
    %6234 = vmatmul.mubr.f32.gmra.mxu0 %v6145
    %v6235 = vpop.f32.mrf.mxu0
    %v6236 = vadd.f32 0.0, %v6235
    %v6237 = vpop.f32.mrf.mxu0
    %6238 = vdwg.mxu0
    %6244 = vrot.lane.b32.xlu0 %v5604, 16
    %v6245 = vpop.permute.xlu0 %6244
    %6246 = vrot.lane.b32.xlu0 %v5609, 16
    %v6247 = vpop.permute.xlu0 %6246
    %6248 = vrot.lane.b32.xlu0 %v5614, 16
    %v6249 = vpop.permute.xlu0 %6248
    %6250 = vrot.lane.b32.xlu0 %v5619, 16
    %v6251 = vpop.permute.xlu0 %6250
    %6252 = vrot.lane.b32.xlu0 %v5624, 16
    %v6253 = vpop.permute.xlu0 %6252
    %6264 = vrot.lane.b32.xlu0 %v5910, 32
    %v6265 = vpop.permute.xlu0 %6264
    %6266 = vrot.lane.b32.xlu0 %v5915, 32
    %v6267 = vpop.permute.xlu0 %6266
    %6268 = vrot.lane.b32.xlu0 %v5920, 32
    %v6269 = vpop.permute.xlu0 %6268
    %6270 = vrot.lane.b32.xlu0 %v5925, 32
    %v6271 = vpop.permute.xlu0 %6270
    %6272 = vrot.lane.b32.xlu0 %v5930, 32
    %v6273 = vpop.permute.xlu0 %6272
    %6284 = vrot.lane.b32.xlu0 %v6216, 48
    %v6285 = vpop.permute.xlu0 %6284
    %6286 = vrot.lane.b32.xlu0 %v6221, 48
    %v6287 = vpop.permute.xlu0 %6286
    %6288 = vrot.lane.b32.xlu0 %v6226, 48
    %v6289 = vpop.permute.xlu0 %6288
    %6290 = vrot.lane.b32.xlu0 %v6231, 48
    %v6291 = vpop.permute.xlu0 %6290
    %6292 = vrot.lane.b32.xlu0 %v6236, 48
    %v6293 = vpop.permute.xlu0 %6292
    %v6299 = vsel %vm815, %v5294, %v6245
    %v6300 = vsel %vm815, %v5299, %v6247
    %v6301 = vsel %vm815, %v5304, %v6249
    %v6302 = vsel %vm815, %v5309, %v6251
    %v6303 = vsel %vm815, %v5314, %v6253
    %v6304 = vsel %vm2084, %v6299, %v6265
    %v6305 = vsel %vm2084, %v6300, %v6267
    %v6306 = vsel %vm2084, %v6301, %v6269
    %v6307 = vsel %vm2084, %v6302, %v6271
    %v6308 = vsel %vm2084, %v6303, %v6273
    %v6309 = vsel %vm2090, %v6304, %v6285
    %v6310 = vsel %vm2090, %v6305, %v6287
    %v6311 = vsel %vm2090, %v6306, %v6289
    %v6312 = vsel %vm2090, %v6307, %v6291
    %v6313 = vsel %vm2090, %v6308, %v6293
    %v6315 = vsel %vm399, %v6309, 0
    %v6318 = vsel %vm399, %v6310, 0
    %v6321 = vsel %vm399, %v6311, 0
    %v6324 = vsel %vm399, %v6312, 0
    %v6327 = vsel %vm399, %v6313, 0
    %6329 = vmatprep.subr.mxu0 0.0
    %6330 = vmatpush1.msra.mxu0 0.0
    %6331 = vmatprep.subr.mxu0 0.0
    %6332 = vmatpush1.msra.mxu0 0.0
    %6333 = vmatprep.subr.mxu0 0.0
    %6334 = vmatpush1.msra.mxu0 0.0
    %6335 = vmatprep.subr.mxu0 0.0
    %6336 = vmatpush1.msra.mxu0 0.0
    %6337 = vmatprep.subr.mxu0 0.0
    %6338 = vmatpush1.msra.mxu0 0.0
    %6339 = vmatprep.subr.mxu0 0.0
    %6340 = vmatpush1.msra.mxu0 0.0
    %6341 = vmatprep.subr.mxu0 0.0
    %6342 = vmatpush1.msra.mxu0 0.0
    %6343 = vmatprep.subr.mxu0 0.0
    %6344 = vmatpush1.msra.mxu0 0.0
    %6345 = vmatprep.subr.mxu0 0.0
    %6346 = vmatpush1.msra.mxu0 %v4757
    %6347 = vmatprep.subr.mxu0 0.0
    %6348 = vmatpush1.msra.mxu0 %v4756
    %6349 = vmatprep.subr.mxu0 0.0
    %6350 = vmatpush1.msra.mxu0 %v4755
    %6351 = vmatprep.subr.mxu0 0.0
    %6352 = vmatpush1.msra.mxu0 %v4754
    %6353 = vmatprep.subr.mxu0 0.0
    %6354 = vmatpush1.msra.mxu0 %v4753
    %6355 = vmatprep.subr.mxu0 0.0
    %6356 = vmatpush1.msra.mxu0 %v4752
    %6357 = vmatprep.subr.mxu0 0.0
    %6358 = vmatpush1.msra.mxu0 %v4751
    %6359 = vmatprep.subr.mxu0 0.0
    %6360 = vmatpush1.msra.mxu0 %v4750
    %6361 = vmatprep.subr.mxu0 0.0
    %6362 = vmatpush2.msra.mxu0 0.0
    %6363 = vmatprep.subr.mxu0 0.0
    %6364 = vmatpush2.msra.mxu0 0.0
    %6365 = vmatprep.subr.mxu0 0.0
    %6366 = vmatpush2.msra.mxu0 0.0
    %6367 = vmatprep.subr.mxu0 0.0
    %6368 = vmatpush2.msra.mxu0 0.0
    %6369 = vmatprep.subr.mxu0 0.0
    %6370 = vmatpush2.msra.mxu0 0.0
    %6371 = vmatprep.subr.mxu0 0.0
    %6372 = vmatpush2.msra.mxu0 0.0
    %6373 = vmatprep.subr.mxu0 0.0
    %6374 = vmatpush2.msra.mxu0 0.0
    %6375 = vmatprep.subr.mxu0 0.0
    %6376 = vmatpush2.msra.mxu0 0.0
    %6377 = vmatprep.subr.mxu0 0.0
    %6378 = vmatpush2.msra.mxu0 0.0
    %6379 = vmatprep.subr.mxu0 0.0
    %6380 = vmatpush2.msra.mxu0 0.0
    %6381 = vmatprep.subr.mxu0 0.0
    %6382 = vmatpush2.msra.mxu0 0.0
    %6383 = vmatprep.subr.mxu0 0.0
    %6384 = vmatpush2.msra.mxu0 0.0
    %6385 = vmatprep.subr.mxu0 0.0
    %6386 = vmatpush2.msra.mxu0 0.0
    %6387 = vmatprep.subr.mxu0 0.0
    %6388 = vmatpush2.msra.mxu0 0.0
    %6389 = vmatprep.subr.mxu0 0.0
    %6390 = vmatpush2.msra.mxu0 0.0
    %6391 = vmatprep.subr.mxu0 0.0
    %6392 = vmatpush2.msra.mxu0 0.0
    %6393 = vmatprep.mubr.f32.mxu0 0.0
    %6394 = vmatmul.mubr.f32.gmra.mxu0 %v6315
    %v6395 = vpop.f32.mrf.mxu0
    %v6396 = vadd.f32 0.0, %v6395
    %v6397 = vpop.f32.mrf.mxu0
    %6398 = vmatprep.mubr.f32.mxu0 0.0
    %6399 = vmatmul.mubr.f32.gmra.mxu0 %v6318
    %v6400 = vpop.f32.mrf.mxu0
    %v6401 = vadd.f32 0.0, %v6400
    %v6402 = vpop.f32.mrf.mxu0
    %6403 = vmatprep.mubr.f32.mxu0 0.0
    %6404 = vmatmul.mubr.f32.gmra.mxu0 %v6321
    %v6405 = vpop.f32.mrf.mxu0
    %v6406 = vadd.f32 0.0, %v6405
    %v6407 = vpop.f32.mrf.mxu0
    %6408 = vmatprep.mubr.f32.mxu0 0.0
    %6409 = vmatmul.mubr.f32.gmra.mxu0 %v6324
    %v6410 = vpop.f32.mrf.mxu0
    %v6411 = vadd.f32 0.0, %v6410
    %v6412 = vpop.f32.mrf.mxu0
    %6413 = vmatprep.mubr.f32.mxu0 0.0
    %6414 = vmatmul.mubr.f32.gmra.mxu0 %v6327
    %v6415 = vpop.f32.mrf.mxu0
    %v6416 = vadd.f32 0.0, %v6415
    %v6417 = vpop.f32.mrf.mxu0
    %6418 = vdwg.mxu0
    %v6419 = vadd.f32 %v4726, %v6396
    %v6420 = vadd.f32 %v4727, %v6401
    %v6421 = vadd.f32 %v4728, %v6406
    %v6422 = vadd.f32 %v4729, %v6411
    %v6423 = vadd.f32 %v4730, %v6416
    %v6425 = vlaneseq
    %v6426 = vshrl.u32 %v6425, 7
    %v6427 = vsub.s32 0, %v6426
    %v6428 = vrot.slane %v4758, %v6427
    %v6430 = vadd.f32 %v6419, %v6428
    %v6431 = vadd.f32 %v6420, %v6428
    %v6432 = vadd.f32 %v6421, %v6428
    %v6433 = vadd.f32 %v6422, %v6428
    %v6434 = vadd.f32 %v6423, %v6428
    %v6435 = vsel %vm399, %v6430, 0.0
    %6436 = vadd.xlane.f32.xlu0 %v6435
    %v6437 = vpop.xlane.xlu0 %6436
    %v6438 = vsel %vm399, %v6431, 0.0
    %6439 = vadd.xlane.f32.xlu0 %v6438
    %v6440 = vpop.xlane.xlu0 %6439
    %v6441 = vsel %vm399, %v6432, 0.0
    %6442 = vadd.xlane.f32.xlu0 %v6441
    %v6443 = vpop.xlane.xlu0 %6442
    %v6444 = vsel %vm399, %v6433, 0.0
    %6445 = vadd.xlane.f32.xlu0 %v6444
    %v6446 = vpop.xlane.xlu0 %6445
    %v6447 = vsel %vm597, %v6434, 0.0
    %6448 = vadd.xlane.f32.xlu0 %v6447
    %v6449 = vpop.xlane.xlu0 %6448
    %v6450 = vmul.f32 %v6437, %v601
    %v6451 = vmul.f32 %v6440, %v601
    %v6452 = vmul.f32 %v6443, %v601
    %v6453 = vmul.f32 %v6446, %v601
    %v6454 = vmul.f32 %v6449, %v601
    %v6455 = vsub.f32 %v6430, %v6450
    %v6456 = vsub.f32 %v6431, %v6451
    %v6457 = vsub.f32 %v6432, %v6452
    %v6458 = vsub.f32 %v6433, %v6453
    %v6459 = vsub.f32 %v6434, %v6454
    %v6460 = vmul.f32 %v6455, %v6455
    %v6461 = vmul.f32 %v6456, %v6456
    %v6462 = vmul.f32 %v6457, %v6457
    %v6463 = vmul.f32 %v6458, %v6458
    %v6464 = vmul.f32 %v6459, %v6459
    %v6465 = vsel %vm399, %v6460, 0.0
    %6466 = vadd.xlane.f32.xlu0 %v6465
    %v6467 = vpop.xlane.xlu0 %6466
    %v6468 = vsel %vm399, %v6461, 0.0
    %6469 = vadd.xlane.f32.xlu0 %v6468
    %v6470 = vpop.xlane.xlu0 %6469
    %v6471 = vsel %vm399, %v6462, 0.0
    %6472 = vadd.xlane.f32.xlu0 %v6471
    %v6473 = vpop.xlane.xlu0 %6472
    %v6474 = vsel %vm399, %v6463, 0.0
    %6475 = vadd.xlane.f32.xlu0 %v6474
    %v6476 = vpop.xlane.xlu0 %6475
    %v6477 = vsel %vm597, %v6464, 0.0
    %6478 = vadd.xlane.f32.xlu0 %v6477
    %v6479 = vpop.xlane.xlu0 %6478
    %v6480 = vmul.f32 %v6467, %v601
    %v6481 = vmul.f32 %v6470, %v601
    %v6482 = vmul.f32 %v6473, %v601
    %v6483 = vmul.f32 %v6476, %v601
    %v6484 = vmul.f32 %v6479, %v601
    %v6485 = vadd.f32 %v6480, 1e-06
    %v6486 = vadd.f32 %v6481, 1e-06
    %v6487 = vadd.f32 %v6482, 1e-06
    %v6488 = vadd.f32 %v6483, 1e-06
    %v6489 = vadd.f32 %v6484, 1e-06
    %v6490 = vrsqrt.pop %v6485
    %v6491 = vrsqrt.pop %v6486
    %v6492 = vrsqrt.pop %v6487
    %v6493 = vrsqrt.pop %v6488
    %v6494 = vrsqrt.pop %v6489
    %v6495 = vmul.f32 %v6455, %v6490
    %v6496 = vmul.f32 %v6456, %v6491
    %v6497 = vmul.f32 %v6457, %v6492
    %v6498 = vmul.f32 %v6458, %v6493
    %v6499 = vmul.f32 %v6459, %v6494
    %v6501 = vlaneseq
    %v6502 = vshrl.u32 %v6501, 7
    %v6503 = vsub.s32 0, %v6502
    %v6504 = vrot.slane %v4759, %v6503
    %v6506 = vmul.f32 %v6495, %v6504
    %v6507 = vmul.f32 %v6496, %v6504
    %v6508 = vmul.f32 %v6497, %v6504
    %v6509 = vmul.f32 %v6498, %v6504
    %v6510 = vmul.f32 %v6499, %v6504
    %v6512 = vlaneseq
    %v6513 = vshrl.u32 %v6512, 7
    %v6514 = vsub.s32 0, %v6513
    %v6515 = vrot.slane %v4760, %v6514
    %v6517 = vadd.f32 %v6506, %v6515
    %v6518 = vadd.f32 %v6507, %v6515
    %v6519 = vadd.f32 %v6508, %v6515
    %v6520 = vadd.f32 %v6509, %v6515
    %v6521 = vadd.f32 %v6510, %v6515
    %v6523 = vlaneseq
    %v6524 = vshrl.u32 %v6523, 7
    %v6525 = vsub.s32 0, %v6524
    %v6526 = vrot.slane %v4777, %v6525
    %v6527 = vlaneseq
    %v6528 = vshrl.u32 %v6527, 7
    %v6529 = vsub.s32 1, %v6528
    %v6530 = vrot.slane %v4777, %v6529
    %v6534 = vsel %vm399, %v6517, 0
    %v6537 = vsel %vm399, %v6518, 0
    %v6540 = vsel %vm399, %v6519, 0
    %v6543 = vsel %vm399, %v6520, 0
    %v6546 = vsel %vm399, %v6521, 0
    %6548 = vmatprep.subr.mxu0 0.0
    %6549 = vmatpush1.msra.mxu0 0.0
    %6550 = vmatprep.subr.mxu0 0.0
    %6551 = vmatpush1.msra.mxu0 0.0
    %6552 = vmatprep.subr.mxu0 0.0
    %6553 = vmatpush1.msra.mxu0 0.0
    %6554 = vmatprep.subr.mxu0 0.0
    %6555 = vmatpush1.msra.mxu0 0.0
    %6556 = vmatprep.subr.mxu0 0.0
    %6557 = vmatpush1.msra.mxu0 0.0
    %6558 = vmatprep.subr.mxu0 0.0
    %6559 = vmatpush1.msra.mxu0 0.0
    %6560 = vmatprep.subr.mxu0 0.0
    %6561 = vmatpush1.msra.mxu0 0.0
    %6562 = vmatprep.subr.mxu0 0.0
    %6563 = vmatpush1.msra.mxu0 0.0
    %6564 = vmatprep.subr.mxu0 %v4776
    %6565 = vmatpush1.msra.mxu0 %v4775
    %6566 = vmatprep.subr.mxu0 %v4774
    %6567 = vmatpush1.msra.mxu0 %v4773
    %6568 = vmatprep.subr.mxu0 %v4772
    %6569 = vmatpush1.msra.mxu0 %v4771
    %6570 = vmatprep.subr.mxu0 %v4770
    %6571 = vmatpush1.msra.mxu0 %v4769
    %6572 = vmatprep.subr.mxu0 %v4768
    %6573 = vmatpush1.msra.mxu0 %v4767
    %6574 = vmatprep.subr.mxu0 %v4766
    %6575 = vmatpush1.msra.mxu0 %v4765
    %6576 = vmatprep.subr.mxu0 %v4764
    %6577 = vmatpush1.msra.mxu0 %v4763
    %6578 = vmatprep.subr.mxu0 %v4762
    %6579 = vmatpush1.msra.mxu0 %v4761
    %6580 = vmatprep.subr.mxu0 0.0
    %6581 = vmatpush2.msra.mxu0 0.0
    %6582 = vmatprep.subr.mxu0 0.0
    %6583 = vmatpush2.msra.mxu0 0.0
    %6584 = vmatprep.subr.mxu0 0.0
    %6585 = vmatpush2.msra.mxu0 0.0
    %6586 = vmatprep.subr.mxu0 0.0
    %6587 = vmatpush2.msra.mxu0 0.0
    %6588 = vmatprep.subr.mxu0 0.0
    %6589 = vmatpush2.msra.mxu0 0.0
    %6590 = vmatprep.subr.mxu0 0.0
    %6591 = vmatpush2.msra.mxu0 0.0
    %6592 = vmatprep.subr.mxu0 0.0
    %6593 = vmatpush2.msra.mxu0 0.0
    %6594 = vmatprep.subr.mxu0 0.0
    %6595 = vmatpush2.msra.mxu0 0.0
    %6596 = vmatprep.subr.mxu0 0.0
    %6597 = vmatpush2.msra.mxu0 0.0
    %6598 = vmatprep.subr.mxu0 0.0
    %6599 = vmatpush2.msra.mxu0 0.0
    %6600 = vmatprep.subr.mxu0 0.0
    %6601 = vmatpush2.msra.mxu0 0.0
    %6602 = vmatprep.subr.mxu0 0.0
    %6603 = vmatpush2.msra.mxu0 0.0
    %6604 = vmatprep.subr.mxu0 0.0
    %6605 = vmatpush2.msra.mxu0 0.0
    %6606 = vmatprep.subr.mxu0 0.0
    %6607 = vmatpush2.msra.mxu0 0.0
    %6608 = vmatprep.subr.mxu0 0.0
    %6609 = vmatpush2.msra.mxu0 0.0
    %6610 = vmatprep.subr.mxu0 0.0
    %6611 = vmatpush2.msra.mxu0 0.0
    %6612 = vmatprep.mubr.f32.mxu0 0.0
    %6613 = vmatmul.mubr.f32.gmra.mxu0 %v6534
    %v6614 = vpop.f32.mrf.mxu0
    %v6615 = vadd.f32 %v6526, %v6614
    %v6616 = vpop.f32.mrf.mxu0
    %v6617 = vadd.f32 %v6530, %v6616
    %6618 = vmatprep.mubr.f32.mxu0 0.0
    %6619 = vmatmul.mubr.f32.gmra.mxu0 %v6537
    %v6620 = vpop.f32.mrf.mxu0
    %v6621 = vadd.f32 %v6526, %v6620
    %v6622 = vpop.f32.mrf.mxu0
    %v6623 = vadd.f32 %v6530, %v6622
    %6624 = vmatprep.mubr.f32.mxu0 0.0
    %6625 = vmatmul.mubr.f32.gmra.mxu0 %v6540
    %v6626 = vpop.f32.mrf.mxu0
    %v6627 = vadd.f32 %v6526, %v6626
    %v6628 = vpop.f32.mrf.mxu0
    %v6629 = vadd.f32 %v6530, %v6628
    %6630 = vmatprep.mubr.f32.mxu0 0.0
    %6631 = vmatmul.mubr.f32.gmra.mxu0 %v6543
    %v6632 = vpop.f32.mrf.mxu0
    %v6633 = vadd.f32 %v6526, %v6632
    %v6634 = vpop.f32.mrf.mxu0
    %v6635 = vadd.f32 %v6530, %v6634
    %6636 = vmatprep.mubr.f32.mxu0 0.0
    %6637 = vmatmul.mubr.f32.gmra.mxu0 %v6546
    %v6638 = vpop.f32.mrf.mxu0
    %v6639 = vadd.f32 %v6526, %v6638
    %v6640 = vpop.f32.mrf.mxu0
    %v6641 = vadd.f32 %v6530, %v6640
    %6642 = vdwg.mxu0
    %v6643 = vmul.f32 %v6615, %v6615
    %v6644 = vmul.f32 %v6617, %v6617
    %v6645 = vmul.f32 %v6621, %v6621
    %v6646 = vmul.f32 %v6623, %v6623
    %v6647 = vmul.f32 %v6627, %v6627
    %v6648 = vmul.f32 %v6629, %v6629
    %v6649 = vmul.f32 %v6633, %v6633
    %v6650 = vmul.f32 %v6635, %v6635
    %v6651 = vmul.f32 %v6639, %v6639
    %v6652 = vmul.f32 %v6641, %v6641
    %v6653 = vmul.f32 %v6615, %v6643
    %v6654 = vmul.f32 %v6617, %v6644
    %v6655 = vmul.f32 %v6621, %v6645
    %v6656 = vmul.f32 %v6623, %v6646
    %v6657 = vmul.f32 %v6627, %v6647
    %v6658 = vmul.f32 %v6629, %v6648
    %v6659 = vmul.f32 %v6633, %v6649
    %v6660 = vmul.f32 %v6635, %v6650
    %v6661 = vmul.f32 %v6639, %v6651
    %v6662 = vmul.f32 %v6641, %v6652
    %v6663 = vmul.f32 %v6653, 0.044715
    %v6664 = vmul.f32 %v6654, 0.044715
    %v6665 = vmul.f32 %v6655, 0.044715
    %v6666 = vmul.f32 %v6656, 0.044715
    %v6667 = vmul.f32 %v6657, 0.044715
    %v6668 = vmul.f32 %v6658, 0.044715
    %v6669 = vmul.f32 %v6659, 0.044715
    %v6670 = vmul.f32 %v6660, 0.044715
    %v6671 = vmul.f32 %v6661, 0.044715
    %v6672 = vmul.f32 %v6662, 0.044715
    %v6673 = vadd.f32 %v6615, %v6663
    %v6674 = vadd.f32 %v6617, %v6664
    %v6675 = vadd.f32 %v6621, %v6665
    %v6676 = vadd.f32 %v6623, %v6666
    %v6677 = vadd.f32 %v6627, %v6667
    %v6678 = vadd.f32 %v6629, %v6668
    %v6679 = vadd.f32 %v6633, %v6669
    %v6680 = vadd.f32 %v6635, %v6670
    %v6681 = vadd.f32 %v6639, %v6671
    %v6682 = vadd.f32 %v6641, %v6672
    %v6683 = vmul.f32 %v6673, 0.7978846
    %v6684 = vmul.f32 %v6674, 0.7978846
    %v6685 = vmul.f32 %v6675, 0.7978846
    %v6686 = vmul.f32 %v6676, 0.7978846
    %v6687 = vmul.f32 %v6677, 0.7978846
    %v6688 = vmul.f32 %v6678, 0.7978846
    %v6689 = vmul.f32 %v6679, 0.7978846
    %v6690 = vmul.f32 %v6680, 0.7978846
    %v6691 = vmul.f32 %v6681, 0.7978846
    %v6692 = vmul.f32 %v6682, 0.7978846
    %v6693 = vtanh.pop %v6683
    %v6694 = vtanh.pop %v6684
    %v6695 = vtanh.pop %v6685
    %v6696 = vtanh.pop %v6686
    %v6697 = vtanh.pop %v6687
    %v6698 = vtanh.pop %v6688
    %v6699 = vtanh.pop %v6689
    %v6700 = vtanh.pop %v6690
    %v6701 = vtanh.pop %v6691
    %v6702 = vtanh.pop %v6692
    %v6703 = vadd.f32 %v6693, 1.0
    %v6704 = vadd.f32 %v6694, 1.0
    %v6705 = vadd.f32 %v6695, 1.0
    %v6706 = vadd.f32 %v6696, 1.0
    %v6707 = vadd.f32 %v6697, 1.0
    %v6708 = vadd.f32 %v6698, 1.0
    %v6709 = vadd.f32 %v6699, 1.0
    %v6710 = vadd.f32 %v6700, 1.0
    %v6711 = vadd.f32 %v6701, 1.0
    %v6712 = vadd.f32 %v6702, 1.0
    %v6713 = vmul.f32 %v6703, 0.5
    %v6714 = vmul.f32 %v6704, 0.5
    %v6715 = vmul.f32 %v6705, 0.5
    %v6716 = vmul.f32 %v6706, 0.5
    %v6717 = vmul.f32 %v6707, 0.5
    %v6718 = vmul.f32 %v6708, 0.5
    %v6719 = vmul.f32 %v6709, 0.5
    %v6720 = vmul.f32 %v6710, 0.5
    %v6721 = vmul.f32 %v6711, 0.5
    %v6722 = vmul.f32 %v6712, 0.5
    %v6723 = vmul.f32 %v6615, %v6713
    %v6724 = vmul.f32 %v6617, %v6714
    %v6725 = vmul.f32 %v6621, %v6715
    %v6726 = vmul.f32 %v6623, %v6716
    %v6727 = vmul.f32 %v6627, %v6717
    %v6728 = vmul.f32 %v6629, %v6718
    %v6729 = vmul.f32 %v6633, %v6719
    %v6730 = vmul.f32 %v6635, %v6720
    %v6731 = vmul.f32 %v6639, %v6721
    %v6732 = vmul.f32 %v6641, %v6722
    %v6734 = vlaneseq
    %v6735 = vshrl.u32 %v6734, 7
    %v6736 = vsub.s32 0, %v6735
    %v6737 = vrot.slane %v4810, %v6736
    %6739 = vmatprep.subr.mxu0 0.0
    %6740 = vmatpush1.msra.mxu0 %v4793
    %6741 = vmatprep.subr.mxu0 0.0
    %6742 = vmatpush1.msra.mxu0 %v4792
    %6743 = vmatprep.subr.mxu0 0.0
    %6744 = vmatpush1.msra.mxu0 %v4791
    %6745 = vmatprep.subr.mxu0 0.0
    %6746 = vmatpush1.msra.mxu0 %v4790
    %6747 = vmatprep.subr.mxu0 0.0
    %6748 = vmatpush1.msra.mxu0 %v4789
    %6749 = vmatprep.subr.mxu0 0.0
    %6750 = vmatpush1.msra.mxu0 %v4788
    %6751 = vmatprep.subr.mxu0 0.0
    %6752 = vmatpush1.msra.mxu0 %v4787
    %6753 = vmatprep.subr.mxu0 0.0
    %6754 = vmatpush1.msra.mxu0 %v4786
    %6755 = vmatprep.subr.mxu0 0.0
    %6756 = vmatpush1.msra.mxu0 %v4785
    %6757 = vmatprep.subr.mxu0 0.0
    %6758 = vmatpush1.msra.mxu0 %v4784
    %6759 = vmatprep.subr.mxu0 0.0
    %6760 = vmatpush1.msra.mxu0 %v4783
    %6761 = vmatprep.subr.mxu0 0.0
    %6762 = vmatpush1.msra.mxu0 %v4782
    %6763 = vmatprep.subr.mxu0 0.0
    %6764 = vmatpush1.msra.mxu0 %v4781
    %6765 = vmatprep.subr.mxu0 0.0
    %6766 = vmatpush1.msra.mxu0 %v4780
    %6767 = vmatprep.subr.mxu0 0.0
    %6768 = vmatpush1.msra.mxu0 %v4779
    %6769 = vmatprep.subr.mxu0 0.0
    %6770 = vmatpush1.msra.mxu0 %v4778
    %6771 = vmatprep.subr.mxu0 0.0
    %6772 = vmatpush2.msra.mxu0 %v4809
    %6773 = vmatprep.subr.mxu0 0.0
    %6774 = vmatpush2.msra.mxu0 %v4808
    %6775 = vmatprep.subr.mxu0 0.0
    %6776 = vmatpush2.msra.mxu0 %v4807
    %6777 = vmatprep.subr.mxu0 0.0
    %6778 = vmatpush2.msra.mxu0 %v4806
    %6779 = vmatprep.subr.mxu0 0.0
    %6780 = vmatpush2.msra.mxu0 %v4805
    %6781 = vmatprep.subr.mxu0 0.0
    %6782 = vmatpush2.msra.mxu0 %v4804
    %6783 = vmatprep.subr.mxu0 0.0
    %6784 = vmatpush2.msra.mxu0 %v4803
    %6785 = vmatprep.subr.mxu0 0.0
    %6786 = vmatpush2.msra.mxu0 %v4802
    %6787 = vmatprep.subr.mxu0 0.0
    %6788 = vmatpush2.msra.mxu0 %v4801
    %6789 = vmatprep.subr.mxu0 0.0
    %6790 = vmatpush2.msra.mxu0 %v4800
    %6791 = vmatprep.subr.mxu0 0.0
    %6792 = vmatpush2.msra.mxu0 %v4799
    %6793 = vmatprep.subr.mxu0 0.0
    %6794 = vmatpush2.msra.mxu0 %v4798
    %6795 = vmatprep.subr.mxu0 0.0
    %6796 = vmatpush2.msra.mxu0 %v4797
    %6797 = vmatprep.subr.mxu0 0.0
    %6798 = vmatpush2.msra.mxu0 %v4796
    %6799 = vmatprep.subr.mxu0 0.0
    %6800 = vmatpush2.msra.mxu0 %v4795
    %6801 = vmatprep.subr.mxu0 0.0
    %6802 = vmatpush2.msra.mxu0 %v4794
    %6803 = vmatprep.mubr.f32.mxu0 %v6724
    %6804 = vmatmul.mubr.f32.gmra.mxu0 %v6723
    %v6805 = vpop.f32.mrf.mxu0
    %v6806 = vadd.f32 %v6737, %v6805
    %v6807 = vpop.f32.mrf.mxu0
    %6808 = vmatprep.mubr.f32.mxu0 %v6726
    %6809 = vmatmul.mubr.f32.gmra.mxu0 %v6725
    %v6810 = vpop.f32.mrf.mxu0
    %v6811 = vpop.f32.mrf.mxu0
    %6812 = vmatprep.mubr.f32.mxu0 %v6728
    %6813 = vmatmul.mubr.f32.gmra.mxu0 %v6727
    %v6814 = vpop.f32.mrf.mxu0
    %v6815 = vadd.f32 %v6737, %v6814
    %v6816 = vpop.f32.mrf.mxu0
    %6817 = vmatprep.mubr.f32.mxu0 %v6730
    %6818 = vmatmul.mubr.f32.gmra.mxu0 %v6729
    %v6819 = vpop.f32.mrf.mxu0
    %v6820 = vpop.f32.mrf.mxu0
    %6821 = vmatprep.mubr.f32.mxu0 %v6732
    %6822 = vmatmul.mubr.f32.gmra.mxu0 %v6731
    %v6823 = vpop.f32.mrf.mxu0
    %v6824 = vpop.f32.mrf.mxu0
    %6825 = vdwg.mxu0
    %v6826 = vadd.f32 %v6430, %v6806
    %v6827 = vadd.f32 %v6432, %v6815
    %v6828 = vsel %vm368, %v6826, %v6827
    %v6829 = vld [vmem:[#allocation5] sm:$0x1]
    %v6830 = vld [vmem:[#allocation7] sm:$0x1]
    %v6831 = vsel %vm597, %v6828, 0.0
    %6832 = vadd.xlane.f32.xlu0 %v6831
    %v6833 = vpop.xlane.xlu0 %6832
    %v6834 = vmul.f32 %v6833, %v601
    %v6835 = vsub.f32 %v6828, %v6834
    %v6836 = vmul.f32 %v6835, %v6835
    %v6837 = vsel %vm597, %v6836, 0.0
    %6838 = vadd.xlane.f32.xlu0 %v6837
    %v6839 = vpop.xlane.xlu0 %6838
    %v6840 = vmul.f32 %v6839, %v601
    %v6841 = vadd.f32 %v6840, 1e-06
    %v6842 = vrsqrt.pop %v6841
    %v6843 = vmul.f32 %v6835, %v6842
    %v6845 = vlaneseq
    %v6846 = vshrl.u32 %v6845, 7
    %v6847 = vsub.s32 0, %v6846
    %v6848 = vrot.slane %v6829, %v6847
    %v6850 = vmul.f32 %v6843, %v6848
    %v6852 = vlaneseq
    %v6853 = vshrl.u32 %v6852, 7
    %v6854 = vsub.s32 0, %v6853
    %v6855 = vrot.slane %v6830, %v6854
    %v6857 = vadd.f32 %v6850, %v6855
    %v6858 = vld [vmem:[%s11] sm:$0xff]
    %v6859 = vld [vmem:[%s11 + $0x8] sm:$0xff]
    %v6860 = vld [vmem:[%s11 + $0x10] sm:$0xff]
    %v6861 = vld [vmem:[%s11 + $0x18] sm:$0xff]
    %v6862 = vld [vmem:[%s11 + $0x20] sm:$0xff]
    %v6864 = vsel %vm931, %v6858, 0
    %v6867 = vsel %vm931, %v6859, 0
    %v6870 = vsel %vm931, %v6860, 0
    %v6873 = vsel %vm931, %v6861, 0
    %v6876 = vsel %vm931, %v6862, 0
    %v6879 = vsel %vm1003, %v4730, 0
    %6881 = vmatprep.subr.mxu0 0.0
    %6882 = vmatpush1.msra.mxu0 0.0
    %6883 = vmatprep.subr.mxu0 0.0
    %6884 = vmatpush1.msra.mxu0 0.0
    %6885 = vmatprep.subr.mxu0 0.0
    %6886 = vmatpush1.msra.mxu0 0.0
    %6887 = vmatprep.subr.mxu0 0.0
    %6888 = vmatpush1.msra.mxu0 0.0
    %6889 = vmatprep.subr.mxu0 0.0
    %6890 = vmatpush1.msra.mxu0 0.0
    %6891 = vmatprep.subr.mxu0 0.0
    %6892 = vmatpush1.msra.mxu0 0.0
    %6893 = vmatprep.subr.mxu0 0.0
    %6894 = vmatpush1.msra.mxu0 0.0
    %6895 = vmatprep.subr.mxu0 0.0
    %6896 = vmatpush1.msra.mxu0 0.0
    %6897 = vmatprep.subr.mxu0 0.0
    %6898 = vmatpush1.msra.mxu0 0.0
    %6899 = vmatprep.subr.mxu0 0.0
    %6900 = vmatpush1.msra.mxu0 0.0
    %6901 = vmatprep.subr.mxu0 0.0
    %6902 = vmatpush1.msra.mxu0 0.0
    %6903 = vmatprep.subr.mxu0 0.0
    %6904 = vmatpush1.msra.mxu0 %v6879
    %6905 = vmatprep.subr.mxu0 0.0
    %6906 = vmatpush1.msra.mxu0 %v4729
    %6907 = vmatprep.subr.mxu0 0.0
    %6908 = vmatpush1.msra.mxu0 %v4728
    %6909 = vmatprep.subr.mxu0 0.0
    %6910 = vmatpush1.msra.mxu0 %v4727
    %6911 = vmatprep.subr.mxu0 0.0
    %6912 = vmatpush1.msra.mxu0 %v4726
    %6913 = vmatprep.subr.mxu0 0.0
    %6914 = vmatpush2.msra.mxu0 0.0
    %6915 = vmatprep.subr.mxu0 0.0
    %6916 = vmatpush2.msra.mxu0 0.0
    %6917 = vmatprep.subr.mxu0 0.0
    %6918 = vmatpush2.msra.mxu0 0.0
    %6919 = vmatprep.subr.mxu0 0.0
    %6920 = vmatpush2.msra.mxu0 0.0
    %6921 = vmatprep.subr.mxu0 0.0
    %6922 = vmatpush2.msra.mxu0 0.0
    %6923 = vmatprep.subr.mxu0 0.0
    %6924 = vmatpush2.msra.mxu0 0.0
    %6925 = vmatprep.subr.mxu0 0.0
    %6926 = vmatpush2.msra.mxu0 0.0
    %6927 = vmatprep.subr.mxu0 0.0
    %6928 = vmatpush2.msra.mxu0 0.0
    %6929 = vmatprep.subr.mxu0 0.0
    %6930 = vmatpush2.msra.mxu0 0.0
    %6931 = vmatprep.subr.mxu0 0.0
    %6932 = vmatpush2.msra.mxu0 0.0
    %6933 = vmatprep.subr.mxu0 0.0
    %6934 = vmatpush2.msra.mxu0 0.0
    %6935 = vmatprep.subr.mxu0 0.0
    %6936 = vmatpush2.msra.mxu0 0.0
    %6937 = vmatprep.subr.mxu0 0.0
    %6938 = vmatpush2.msra.mxu0 0.0
    %6939 = vmatprep.subr.mxu0 0.0
    %6940 = vmatpush2.msra.mxu0 0.0
    %6941 = vmatprep.subr.mxu0 0.0
    %6942 = vmatpush2.msra.mxu0 0.0
    %6943 = vmatprep.subr.mxu0 0.0
    %6944 = vmatpush2.msra.mxu0 0.0
    %6945 = vmatprep.mubr.f32.mxu0 0.0
    %6946 = vmatmul.mubr.f32.gmra.mxu0 %v6864
    %v6947 = vpop.f32.mrf.mxu0
    %v6948 = vadd.f32 0.0, %v6947
    %v6949 = vpop.f32.mrf.mxu0
    %6950 = vmatprep.mubr.f32.mxu0 0.0
    %6951 = vmatmul.mubr.f32.gmra.mxu0 %v6867
    %v6952 = vpop.f32.mrf.mxu0
    %v6953 = vadd.f32 0.0, %v6952
    %v6954 = vpop.f32.mrf.mxu0
    %6955 = vmatprep.mubr.f32.mxu0 0.0
    %6956 = vmatmul.mubr.f32.gmra.mxu0 %v6870
    %v6957 = vpop.f32.mrf.mxu0
    %v6958 = vadd.f32 0.0, %v6957
    %v6959 = vpop.f32.mrf.mxu0
    %6960 = vmatprep.mubr.f32.mxu0 0.0
    %6961 = vmatmul.mubr.f32.gmra.mxu0 %v6873
    %v6962 = vpop.f32.mrf.mxu0
    %v6963 = vadd.f32 0.0, %v6962
    %v6964 = vpop.f32.mrf.mxu0
    %6965 = vmatprep.mubr.f32.mxu0 0.0
    %6966 = vmatmul.mubr.f32.gmra.mxu0 %v6876
    %v6967 = vpop.f32.mrf.mxu0
    %v6968 = vadd.f32 0.0, %v6967
    %v6969 = vpop.f32.mrf.mxu0
    %6970 = vdwg.mxu0
    %v6971 = vld [vmem:[#allocation8] sm:$0x1]
    %v6972 = vld [vmem:[#allocation10] sm:$0x1]
    %v6973 = vld [vmem:[%s73] sm:$0xff]
    %v6974 = vld [vmem:[%s73 + $0x8] sm:$0xff]
    %v6975 = vld [vmem:[%s73 + $0x10] sm:$0xff]
    %v6976 = vld [vmem:[%s73 + $0x18] sm:$0xff]
    %v6977 = vld [vmem:[%s73 + $0x20] sm:$0xff]
    %v6978 = vld [vmem:[%s73 + $0x28] sm:$0xff]
    %v6979 = vld [vmem:[%s73 + $0x30] sm:$0xff]
    %v6980 = vld [vmem:[%s73 + $0x38] sm:$0xff]
    %v6981 = vld [vmem:[%s73 + $0x40] sm:$0xff]
    %v6982 = vld [vmem:[%s73 + $0x48] sm:$0xff]
    %v6983 = vld [vmem:[%s73 + $0x50] sm:$0xff]
    %v6984 = vld [vmem:[%s73 + $0x58] sm:$0xff]
    %v6985 = vld [vmem:[%s73 + $0x60] sm:$0xff]
    %v6986 = vld [vmem:[%s73 + $0x68] sm:$0xff]
    %v6987 = vld [vmem:[%s73 + $0x70] sm:$0xff]
    %v6988 = vld [vmem:[%s73 + $0x78] sm:$0xff]
    %v6989 = vld [vmem:[%s75] sm:$0x3]
    %v6990 = vld [vmem:[%s77] sm:$0xff]
    %v6991 = vld [vmem:[%s77 + $0x8] sm:$0xff]
    %v6992 = vld [vmem:[%s77 + $0x10] sm:$0xff]
    %v6993 = vld [vmem:[%s77 + $0x18] sm:$0xff]
    %v6994 = vld [vmem:[%s77 + $0x20] sm:$0xff]
    %v6995 = vld [vmem:[%s77 + $0x28] sm:$0xff]
    %v6996 = vld [vmem:[%s77 + $0x30] sm:$0xff]
    %v6997 = vld [vmem:[%s77 + $0x38] sm:$0xff]
    %v6998 = vld [vmem:[#allocation11] sm:$0x1]
    %v6999 = vld [vmem:[#allocation13] sm:$0x1]
    %v7000 = vld [vmem:[#allocation14] sm:$0x1]
    %v7001 = vld [vmem:[%s85] sm:$0xff]
    %v7002 = vld [vmem:[%s85 + $0x8] sm:$0xff]
    %v7003 = vld [vmem:[%s85 + $0x10] sm:$0xff]
    %v7004 = vld [vmem:[%s85 + $0x18] sm:$0xff]
    %v7005 = vld [vmem:[%s85 + $0x20] sm:$0xff]
    %v7006 = vld [vmem:[%s85 + $0x28] sm:$0xff]
    %v7007 = vld [vmem:[%s85 + $0x30] sm:$0xff]
    %v7008 = vld [vmem:[%s85 + $0x38] sm:$0xff]
    %v7009 = vld [vmem:[%s85 + $0x40] sm:$0xff]
    %v7010 = vld [vmem:[%s85 + $0x48] sm:$0xff]
    %v7011 = vld [vmem:[%s85 + $0x50] sm:$0xff]
    %v7012 = vld [vmem:[%s85 + $0x58] sm:$0xff]
    %v7013 = vld [vmem:[%s85 + $0x60] sm:$0xff]
    %v7014 = vld [vmem:[%s85 + $0x68] sm:$0xff]
    %v7015 = vld [vmem:[%s85 + $0x70] sm:$0xff]
    %v7016 = vld [vmem:[%s85 + $0x78] sm:$0xff]
    %v7017 = vld [vmem:[%s87] sm:$0x3]
    %v7018 = vld [vmem:[%s89] sm:$0xff]
    %v7019 = vld [vmem:[%s89 + $0x8] sm:$0xff]
    %v7020 = vld [vmem:[%s89 + $0x10] sm:$0xff]
    %v7021 = vld [vmem:[%s89 + $0x18] sm:$0xff]
    %v7022 = vld [vmem:[%s89 + $0x20] sm:$0xff]
    %v7023 = vld [vmem:[%s89 + $0x28] sm:$0xff]
    %v7024 = vld [vmem:[%s89 + $0x30] sm:$0xff]
    %v7025 = vld [vmem:[%s89 + $0x38] sm:$0xff]
    %v7026 = vld [vmem:[%s89 + $0x40] sm:$0xff]
    %v7027 = vld [vmem:[%s89 + $0x48] sm:$0xff]
    %v7028 = vld [vmem:[%s89 + $0x50] sm:$0xff]
    %v7029 = vld [vmem:[%s89 + $0x58] sm:$0xff]
    %v7030 = vld [vmem:[%s89 + $0x60] sm:$0xff]
    %v7031 = vld [vmem:[%s89 + $0x68] sm:$0xff]
    %v7032 = vld [vmem:[%s89 + $0x70] sm:$0xff]
    %v7033 = vld [vmem:[%s89 + $0x78] sm:$0xff]
    %v7034 = vld [vmem:[%s89 + $0x80] sm:$0xff]
    %v7035 = vld [vmem:[%s89 + $0x88] sm:$0xff]
    %v7036 = vld [vmem:[%s89 + $0x90] sm:$0xff]
    %v7037 = vld [vmem:[%s89 + $0x98] sm:$0xff]
    %v7038 = vld [vmem:[%s89 + $0xa0] sm:$0xff]
    %v7039 = vld [vmem:[%s89 + $0xa8] sm:$0xff]
    %v7040 = vld [vmem:[%s89 + $0xb0] sm:$0xff]
    %v7041 = vld [vmem:[%s89 + $0xb8] sm:$0xff]
    %v7042 = vld [vmem:[%s89 + $0xc0] sm:$0xff]
    %v7043 = vld [vmem:[%s89 + $0xc8] sm:$0xff]
    %v7044 = vld [vmem:[%s89 + $0xd0] sm:$0xff]
    %v7045 = vld [vmem:[%s89 + $0xd8] sm:$0xff]
    %v7046 = vld [vmem:[%s89 + $0xe0] sm:$0xff]
    %v7047 = vld [vmem:[%s89 + $0xe8] sm:$0xff]
    %v7048 = vld [vmem:[%s89 + $0xf0] sm:$0xff]
    %v7049 = vld [vmem:[%s89 + $0xf8] sm:$0xff]
    %v7050 = vld [vmem:[#allocation16] sm:$0x1]
    %v7051 = vsel %vm399, %v6948, 0.0
    %7052 = vadd.xlane.f32.xlu0 %v7051
    %v7053 = vpop.xlane.xlu0 %7052
    %v7054 = vsel %vm399, %v6953, 0.0
    %7055 = vadd.xlane.f32.xlu0 %v7054
    %v7056 = vpop.xlane.xlu0 %7055
    %v7057 = vsel %vm399, %v6958, 0.0
    %7058 = vadd.xlane.f32.xlu0 %v7057
    %v7059 = vpop.xlane.xlu0 %7058
    %v7060 = vsel %vm399, %v6963, 0.0
    %7061 = vadd.xlane.f32.xlu0 %v7060
    %v7062 = vpop.xlane.xlu0 %7061
    %v7063 = vsel %vm399, %v6968, 0.0
    %7064 = vadd.xlane.f32.xlu0 %v7063
    %v7065 = vpop.xlane.xlu0 %7064
    %v7066 = vmul.f32 %v7053, %v601
    %v7067 = vmul.f32 %v7056, %v601
    %v7068 = vmul.f32 %v7059, %v601
    %v7069 = vmul.f32 %v7062, %v601
    %v7070 = vmul.f32 %v7065, %v601
    %v7071 = vsub.f32 %v6948, %v7066
    %v7072 = vsub.f32 %v6953, %v7067
    %v7073 = vsub.f32 %v6958, %v7068
    %v7074 = vsub.f32 %v6963, %v7069
    %v7075 = vsub.f32 %v6968, %v7070
    %v7076 = vmul.f32 %v7071, %v7071
    %v7077 = vmul.f32 %v7072, %v7072
    %v7078 = vmul.f32 %v7073, %v7073
    %v7079 = vmul.f32 %v7074, %v7074
    %v7080 = vmul.f32 %v7075, %v7075
    %v7081 = vsel %vm399, %v7076, 0.0
    %7082 = vadd.xlane.f32.xlu0 %v7081
    %v7083 = vpop.xlane.xlu0 %7082
    %v7084 = vsel %vm399, %v7077, 0.0
    %7085 = vadd.xlane.f32.xlu0 %v7084
    %v7086 = vpop.xlane.xlu0 %7085
    %v7087 = vsel %vm399, %v7078, 0.0
    %7088 = vadd.xlane.f32.xlu0 %v7087
    %v7089 = vpop.xlane.xlu0 %7088
    %v7090 = vsel %vm399, %v7079, 0.0
    %7091 = vadd.xlane.f32.xlu0 %v7090
    %v7092 = vpop.xlane.xlu0 %7091
    %v7093 = vsel %vm399, %v7080, 0.0
    %7094 = vadd.xlane.f32.xlu0 %v7093
    %v7095 = vpop.xlane.xlu0 %7094
    %v7096 = vmul.f32 %v7083, %v601
    %v7097 = vmul.f32 %v7086, %v601
    %v7098 = vmul.f32 %v7089, %v601
    %v7099 = vmul.f32 %v7092, %v601
    %v7100 = vmul.f32 %v7095, %v601
    %v7101 = vadd.f32 %v7096, 1e-06
    %v7102 = vadd.f32 %v7097, 1e-06
    %v7103 = vadd.f32 %v7098, 1e-06
    %v7104 = vadd.f32 %v7099, 1e-06
    %v7105 = vadd.f32 %v7100, 1e-06
    %v7106 = vrsqrt.pop %v7101
    %v7107 = vrsqrt.pop %v7102
    %v7108 = vrsqrt.pop %v7103
    %v7109 = vrsqrt.pop %v7104
    %v7110 = vrsqrt.pop %v7105
    %v7111 = vmul.f32 %v7071, %v7106
    %v7112 = vmul.f32 %v7072, %v7107
    %v7113 = vmul.f32 %v7073, %v7108
    %v7114 = vmul.f32 %v7074, %v7109
    %v7115 = vmul.f32 %v7075, %v7110
    %v7117 = vlaneseq
    %v7118 = vshrl.u32 %v7117, 7
    %v7119 = vsub.s32 0, %v7118
    %v7120 = vrot.slane %v6971, %v7119
    %v7122 = vmul.f32 %v7111, %v7120
    %v7123 = vmul.f32 %v7112, %v7120
    %v7124 = vmul.f32 %v7113, %v7120
    %v7125 = vmul.f32 %v7114, %v7120
    %v7126 = vmul.f32 %v7115, %v7120
    %v7128 = vlaneseq
    %v7129 = vshrl.u32 %v7128, 7
    %v7130 = vsub.s32 0, %v7129
    %v7131 = vrot.slane %v6972, %v7130
    %v7133 = vadd.f32 %v7122, %v7131
    %v7134 = vadd.f32 %v7123, %v7131
    %v7135 = vadd.f32 %v7124, %v7131
    %v7136 = vadd.f32 %v7125, %v7131
    %v7137 = vadd.f32 %v7126, %v7131
    %v7139 = vlaneseq
    %v7140 = vshrl.u32 %v7139, 7
    %v7141 = vsub.s32 0, %v7140
    %v7142 = vrot.slane %v6989, %v7141
    %v7143 = vlaneseq
    %v7144 = vshrl.u32 %v7143, 7
    %v7145 = vsub.s32 1, %v7144
    %v7146 = vrot.slane %v6989, %v7145
    %v7150 = vsel %vm399, %v7133, 0
    %v7153 = vsel %vm399, %v7134, 0
    %v7156 = vsel %vm399, %v7135, 0
    %v7159 = vsel %vm399, %v7136, 0
    %v7162 = vsel %vm399, %v7137, 0
    %7164 = vmatprep.subr.mxu0 0.0
    %7165 = vmatpush1.msra.mxu0 0.0
    %7166 = vmatprep.subr.mxu0 0.0
    %7167 = vmatpush1.msra.mxu0 0.0
    %7168 = vmatprep.subr.mxu0 0.0
    %7169 = vmatpush1.msra.mxu0 0.0
    %7170 = vmatprep.subr.mxu0 0.0
    %7171 = vmatpush1.msra.mxu0 0.0
    %7172 = vmatprep.subr.mxu0 0.0
    %7173 = vmatpush1.msra.mxu0 0.0
    %7174 = vmatprep.subr.mxu0 0.0
    %7175 = vmatpush1.msra.mxu0 0.0
    %7176 = vmatprep.subr.mxu0 0.0
    %7177 = vmatpush1.msra.mxu0 0.0
    %7178 = vmatprep.subr.mxu0 0.0
    %7179 = vmatpush1.msra.mxu0 0.0
    %7180 = vmatprep.subr.mxu0 %v6988
    %7181 = vmatpush1.msra.mxu0 %v6987
    %7182 = vmatprep.subr.mxu0 %v6986
    %7183 = vmatpush1.msra.mxu0 %v6985
    %7184 = vmatprep.subr.mxu0 %v6984
    %7185 = vmatpush1.msra.mxu0 %v6983
    %7186 = vmatprep.subr.mxu0 %v6982
    %7187 = vmatpush1.msra.mxu0 %v6981
    %7188 = vmatprep.subr.mxu0 %v6980
    %7189 = vmatpush1.msra.mxu0 %v6979
    %7190 = vmatprep.subr.mxu0 %v6978
    %7191 = vmatpush1.msra.mxu0 %v6977
    %7192 = vmatprep.subr.mxu0 %v6976
    %7193 = vmatpush1.msra.mxu0 %v6975
    %7194 = vmatprep.subr.mxu0 %v6974
    %7195 = vmatpush1.msra.mxu0 %v6973
    %7196 = vmatprep.subr.mxu0 0.0
    %7197 = vmatpush2.msra.mxu0 0.0
    %7198 = vmatprep.subr.mxu0 0.0
    %7199 = vmatpush2.msra.mxu0 0.0
    %7200 = vmatprep.subr.mxu0 0.0
    %7201 = vmatpush2.msra.mxu0 0.0
    %7202 = vmatprep.subr.mxu0 0.0
    %7203 = vmatpush2.msra.mxu0 0.0
    %7204 = vmatprep.subr.mxu0 0.0
    %7205 = vmatpush2.msra.mxu0 0.0
    %7206 = vmatprep.subr.mxu0 0.0
    %7207 = vmatpush2.msra.mxu0 0.0
    %7208 = vmatprep.subr.mxu0 0.0
    %7209 = vmatpush2.msra.mxu0 0.0
    %7210 = vmatprep.subr.mxu0 0.0
    %7211 = vmatpush2.msra.mxu0 0.0
    %7212 = vmatprep.subr.mxu0 0.0
    %7213 = vmatpush2.msra.mxu0 0.0
    %7214 = vmatprep.subr.mxu0 0.0
    %7215 = vmatpush2.msra.mxu0 0.0
    %7216 = vmatprep.subr.mxu0 0.0
    %7217 = vmatpush2.msra.mxu0 0.0
    %7218 = vmatprep.subr.mxu0 0.0
    %7219 = vmatpush2.msra.mxu0 0.0
    %7220 = vmatprep.subr.mxu0 0.0
    %7221 = vmatpush2.msra.mxu0 0.0
    %7222 = vmatprep.subr.mxu0 0.0
    %7223 = vmatpush2.msra.mxu0 0.0
    %7224 = vmatprep.subr.mxu0 0.0
    %7225 = vmatpush2.msra.mxu0 0.0
    %7226 = vmatprep.subr.mxu0 0.0
    %7227 = vmatpush2.msra.mxu0 0.0
    %7228 = vmatprep.mubr.f32.mxu0 0.0
    %7229 = vmatmul.mubr.f32.gmra.mxu0 %v7150
    %v7230 = vpop.f32.mrf.mxu0
    %v7231 = vadd.f32 %v7142, %v7230
    %v7232 = vpop.f32.mrf.mxu0
    %v7233 = vadd.f32 %v7146, %v7232
    %7234 = vmatprep.mubr.f32.mxu0 0.0
    %7235 = vmatmul.mubr.f32.gmra.mxu0 %v7153
    %v7236 = vpop.f32.mrf.mxu0
    %v7237 = vadd.f32 %v7142, %v7236
    %v7238 = vpop.f32.mrf.mxu0
    %v7239 = vadd.f32 %v7146, %v7238
    %7240 = vmatprep.mubr.f32.mxu0 0.0
    %7241 = vmatmul.mubr.f32.gmra.mxu0 %v7156
    %v7242 = vpop.f32.mrf.mxu0
    %v7243 = vadd.f32 %v7142, %v7242
    %v7244 = vpop.f32.mrf.mxu0
    %v7245 = vadd.f32 %v7146, %v7244
    %7246 = vmatprep.mubr.f32.mxu0 0.0
    %7247 = vmatmul.mubr.f32.gmra.mxu0 %v7159
    %v7248 = vpop.f32.mrf.mxu0
    %v7249 = vadd.f32 %v7142, %v7248
    %v7250 = vpop.f32.mrf.mxu0
    %v7251 = vadd.f32 %v7146, %v7250
    %7252 = vmatprep.mubr.f32.mxu0 0.0
    %7253 = vmatmul.mubr.f32.gmra.mxu0 %v7162
    %v7254 = vpop.f32.mrf.mxu0
    %v7255 = vadd.f32 %v7142, %v7254
    %v7256 = vpop.f32.mrf.mxu0
    %v7257 = vadd.f32 %v7146, %v7256
    %7258 = vdwg.mxu0
    %v7259 = vmul.f32 %v7231, 0.25
    %v7260 = vmul.f32 %v7237, 0.25
    %v7261 = vmul.f32 %v7243, 0.25
    %v7262 = vmul.f32 %v7249, 0.25
    %v7263 = vmul.f32 %v7255, 0.25
    %7269 = vrot.lane.b32.xlu0 %v7231, 64
    %v7270 = vpop.permute.xlu0 %7269
    %7271 = vrot.lane.b32.xlu0 %v7237, 64
    %v7272 = vpop.permute.xlu0 %7271
    %7273 = vrot.lane.b32.xlu0 %v7243, 64
    %v7274 = vpop.permute.xlu0 %7273
    %7275 = vrot.lane.b32.xlu0 %v7249, 64
    %v7276 = vpop.permute.xlu0 %7275
    %7277 = vrot.lane.b32.xlu0 %v7255, 64
    %v7278 = vpop.permute.xlu0 %7277
    %v7280 = vsel %vm815, %v7259, 0
    %v7283 = vsel %vm815, %v7260, 0
    %v7286 = vsel %vm815, %v7261, 0
    %v7289 = vsel %vm815, %v7262, 0
    %v7292 = vsel %vm815, %v7263, 0
    %v7294 = vsel %vm815, %v7270, 0
    %v7296 = vsel %vm815, %v7272, 0
    %v7298 = vsel %vm815, %v7274, 0
    %v7300 = vsel %vm815, %v7276, 0
    %v7302 = vsel %vm815, %v7278, 0
    %7304 = vmatprep.subr.mxu0 0.0
    %7305 = vmatpush1.xpose.msra.mxu0 0.0
    %7306 = vmatprep.subr.mxu0 0.0
    %7307 = vmatpush1.xpose.msra.mxu0 0.0
    %7308 = vmatprep.subr.mxu0 0.0
    %7309 = vmatpush1.xpose.msra.mxu0 0.0
    %7310 = vmatprep.subr.mxu0 0.0
    %7311 = vmatpush1.xpose.msra.mxu0 0.0
    %7312 = vmatprep.subr.mxu0 0.0
    %7313 = vmatpush1.xpose.msra.mxu0 0.0
    %7314 = vmatprep.subr.mxu0 0.0
    %7315 = vmatpush1.xpose.msra.mxu0 0.0
    %7316 = vmatprep.subr.mxu0 0.0
    %7317 = vmatpush1.xpose.msra.mxu0 0.0
    %7318 = vmatprep.subr.mxu0 0.0
    %7319 = vmatpush1.xpose.msra.mxu0 0.0
    %7320 = vmatprep.subr.mxu0 0.0
    %7321 = vmatpush1.xpose.msra.mxu0 0.0
    %7322 = vmatprep.subr.mxu0 0.0
    %7323 = vmatpush1.xpose.msra.mxu0 0.0
    %7324 = vmatprep.subr.mxu0 0.0
    %7325 = vmatpush1.xpose.msra.mxu0 0.0
    %7326 = vmatprep.subr.mxu0 0.0
    %7327 = vmatpush1.xpose.msra.mxu0 %v7302
    %7328 = vmatprep.subr.mxu0 0.0
    %7329 = vmatpush1.xpose.msra.mxu0 %v7300
    %7330 = vmatprep.subr.mxu0 0.0
    %7331 = vmatpush1.xpose.msra.mxu0 %v7298
    %7332 = vmatprep.subr.mxu0 0.0
    %7333 = vmatpush1.xpose.msra.mxu0 %v7296
    %7334 = vmatprep.subr.mxu0 0.0
    %7335 = vmatpush1.xpose.msra.mxu0 %v7294
    %7336 = vmatprep.subr.mxu0 0.0
    %7337 = vmatpush2.xpose.msra.mxu0 0.0
    %7338 = vmatprep.subr.mxu0 0.0
    %7339 = vmatpush2.xpose.msra.mxu0 0.0
    %7340 = vmatprep.subr.mxu0 0.0
    %7341 = vmatpush2.xpose.msra.mxu0 0.0
    %7342 = vmatprep.subr.mxu0 0.0
    %7343 = vmatpush2.xpose.msra.mxu0 0.0
    %7344 = vmatprep.subr.mxu0 0.0
    %7345 = vmatpush2.xpose.msra.mxu0 0.0
    %7346 = vmatprep.subr.mxu0 0.0
    %7347 = vmatpush2.xpose.msra.mxu0 0.0
    %7348 = vmatprep.subr.mxu0 0.0
    %7349 = vmatpush2.xpose.msra.mxu0 0.0
    %7350 = vmatprep.subr.mxu0 0.0
    %7351 = vmatpush2.xpose.msra.mxu0 0.0
    %7352 = vmatprep.subr.mxu0 0.0
    %7353 = vmatpush2.xpose.msra.mxu0 0.0
    %7354 = vmatprep.subr.mxu0 0.0
    %7355 = vmatpush2.xpose.msra.mxu0 0.0
    %7356 = vmatprep.subr.mxu0 0.0
    %7357 = vmatpush2.xpose.msra.mxu0 0.0
    %7358 = vmatprep.subr.mxu0 0.0
    %7359 = vmatpush2.xpose.msra.mxu0 0.0
    %7360 = vmatprep.subr.mxu0 0.0
    %7361 = vmatpush2.xpose.msra.mxu0 0.0
    %7362 = vmatprep.subr.mxu0 0.0
    %7363 = vmatpush2.xpose.msra.mxu0 0.0
    %7364 = vmatprep.subr.mxu0 0.0
    %7365 = vmatpush2.xpose.msra.mxu0 0.0
    %7366 = vmatprep.subr.mxu0 0.0
    %7367 = vmatpush2.xpose.msra.mxu0 0.0
    %7368 = vmatprep.mubr.f32.mxu0 0.0
    %7369 = vmatmul.mubr.f32.gmra.mxu0 %v7280
    %v7370 = vpop.f32.mrf.mxu0
    %v7371 = vadd.f32 %v347, %v7370
    %v7372 = vpop.f32.mrf.mxu0
    %7373 = vmatprep.mubr.f32.mxu0 0.0
    %7374 = vmatmul.mubr.f32.gmra.mxu0 %v7283
    %v7375 = vpop.f32.mrf.mxu0
    %v7376 = vadd.f32 %v348, %v7375
    %v7377 = vpop.f32.mrf.mxu0
    %7378 = vmatprep.mubr.f32.mxu0 0.0
    %7379 = vmatmul.mubr.f32.gmra.mxu0 %v7286
    %v7380 = vpop.f32.mrf.mxu0
    %v7381 = vadd.f32 %v349, %v7380
    %v7382 = vpop.f32.mrf.mxu0
    %7383 = vmatprep.mubr.f32.mxu0 0.0
    %7384 = vmatmul.mubr.f32.gmra.mxu0 %v7289
    %v7385 = vpop.f32.mrf.mxu0
    %v7386 = vadd.f32 %v350, %v7385
    %v7387 = vpop.f32.mrf.mxu0
    %7388 = vmatprep.mubr.f32.mxu0 0.0
    %7389 = vmatmul.mubr.f32.gmra.mxu0 %v7292
    %v7390 = vpop.f32.mrf.mxu0
    %v7391 = vadd.f32 %v351, %v7390
    %v7392 = vpop.f32.mrf.mxu0
    %7393 = vdwg.mxu0
    %vm7394 = vcmask 326656
    %v7395 = vsel %vm7394, %v7371, -inf
    %7396 = vmax.xlane.f32.xlu0 %v7395
    %v7397 = vpop.xlane.xlu0 %7396
    %v7398 = vsel %vm7394, %v7376, -inf
    %7399 = vmax.xlane.f32.xlu0 %v7398
    %v7400 = vpop.xlane.xlu0 %7399
    %v7401 = vsel %vm7394, %v7381, -inf
    %7402 = vmax.xlane.f32.xlu0 %v7401
    %v7403 = vpop.xlane.xlu0 %7402
    %v7404 = vsel %vm7394, %v7386, -inf
    %7405 = vmax.xlane.f32.xlu0 %v7404
    %v7406 = vpop.xlane.xlu0 %7405
    %v7407 = vsel %vm7394, %v7391, -inf
    %7408 = vmax.xlane.f32.xlu0 %v7407
    %v7409 = vpop.xlane.xlu0 %7408
    %v7410 = vsub.f32 %v7371, %v7397
    %v7411 = vsub.f32 %v7376, %v7400
    %v7412 = vsub.f32 %v7381, %v7403
    %v7413 = vsub.f32 %v7386, %v7406
    %v7414 = vsub.f32 %v7391, %v7409
    %v7415 = vmul.f32 %v7410, 1.442695
    %v7416 = vpow.pop %v7415
    %v7417 = vmul.f32 %v7411, 1.442695
    %v7418 = vpow.pop %v7417
    %v7419 = vmul.f32 %v7412, 1.442695
    %v7420 = vpow.pop %v7419
    %v7421 = vmul.f32 %v7413, 1.442695
    %v7422 = vpow.pop %v7421
    %v7423 = vmul.f32 %v7414, 1.442695
    %v7424 = vpow.pop %v7423
    %v7425 = vsel %vm7394, %v7416, 0.0
    %7426 = vadd.xlane.f32.xlu0 %v7425
    %v7427 = vpop.xlane.xlu0 %7426
    %v7428 = vsel %vm7394, %v7418, 0.0
    %7429 = vadd.xlane.f32.xlu0 %v7428
    %v7430 = vpop.xlane.xlu0 %7429
    %v7431 = vsel %vm7394, %v7420, 0.0
    %7432 = vadd.xlane.f32.xlu0 %v7431
    %v7433 = vpop.xlane.xlu0 %7432
    %v7434 = vsel %vm7394, %v7422, 0.0
    %7435 = vadd.xlane.f32.xlu0 %v7434
    %v7436 = vpop.xlane.xlu0 %7435
    %v7437 = vsel %vm7394, %v7424, 0.0
    %7438 = vadd.xlane.f32.xlu0 %v7437
    %v7439 = vpop.xlane.xlu0 %7438
    %v7440 = vrcp.pop %v7427
    %v7441 = vmul.f32 %v7416, %v7440
    %v7442 = vrcp.pop %v7430
    %v7443 = vmul.f32 %v7418, %v7442
    %v7444 = vrcp.pop %v7433
    %v7445 = vmul.f32 %v7420, %v7444
    %v7446 = vrcp.pop %v7436
    %v7447 = vmul.f32 %v7422, %v7446
    %v7448 = vrcp.pop %v7439
    %v7449 = vmul.f32 %v7424, %v7448
    %v7451 = vsel %vm7394, %v7441, 0
    %v7454 = vsel %vm7394, %v7443, 0
    %v7457 = vsel %vm7394, %v7445, 0
    %v7460 = vsel %vm7394, %v7447, 0
    %v7463 = vsel %vm7394, %v7449, 0
    %7465 = vmatprep.subr.mxu0 0.0
    %7466 = vmatpush1.msra.mxu0 0.0
    %7467 = vmatprep.subr.mxu0 0.0
    %7468 = vmatpush1.msra.mxu0 0.0
    %7469 = vmatprep.subr.mxu0 0.0
    %7470 = vmatpush1.msra.mxu0 0.0
    %7471 = vmatprep.subr.mxu0 0.0
    %7472 = vmatpush1.msra.mxu0 0.0
    %7473 = vmatprep.subr.mxu0 0.0
    %7474 = vmatpush1.msra.mxu0 0.0
    %7475 = vmatprep.subr.mxu0 0.0
    %7476 = vmatpush1.msra.mxu0 0.0
    %7477 = vmatprep.subr.mxu0 0.0
    %7478 = vmatpush1.msra.mxu0 0.0
    %7479 = vmatprep.subr.mxu0 0.0
    %7480 = vmatpush1.msra.mxu0 0.0
    %7481 = vmatprep.subr.mxu0 0.0
    %7482 = vmatpush1.msra.mxu0 0.0
    %7483 = vmatprep.subr.mxu0 0.0
    %7484 = vmatpush1.msra.mxu0 0.0
    %7485 = vmatprep.subr.mxu0 0.0
    %7486 = vmatpush1.msra.mxu0 0.0
    %7487 = vmatprep.subr.mxu0 0.0
    %7488 = vmatpush1.msra.mxu0 %v7257
    %7489 = vmatprep.subr.mxu0 0.0
    %7490 = vmatpush1.msra.mxu0 %v7251
    %7491 = vmatprep.subr.mxu0 0.0
    %7492 = vmatpush1.msra.mxu0 %v7245
    %7493 = vmatprep.subr.mxu0 0.0
    %7494 = vmatpush1.msra.mxu0 %v7239
    %7495 = vmatprep.subr.mxu0 0.0
    %7496 = vmatpush1.msra.mxu0 %v7233
    %7497 = vmatprep.subr.mxu0 0.0
    %7498 = vmatpush2.msra.mxu0 0.0
    %7499 = vmatprep.subr.mxu0 0.0
    %7500 = vmatpush2.msra.mxu0 0.0
    %7501 = vmatprep.subr.mxu0 0.0
    %7502 = vmatpush2.msra.mxu0 0.0
    %7503 = vmatprep.subr.mxu0 0.0
    %7504 = vmatpush2.msra.mxu0 0.0
    %7505 = vmatprep.subr.mxu0 0.0
    %7506 = vmatpush2.msra.mxu0 0.0
    %7507 = vmatprep.subr.mxu0 0.0
    %7508 = vmatpush2.msra.mxu0 0.0
    %7509 = vmatprep.subr.mxu0 0.0
    %7510 = vmatpush2.msra.mxu0 0.0
    %7511 = vmatprep.subr.mxu0 0.0
    %7512 = vmatpush2.msra.mxu0 0.0
    %7513 = vmatprep.subr.mxu0 0.0
    %7514 = vmatpush2.msra.mxu0 0.0
    %7515 = vmatprep.subr.mxu0 0.0
    %7516 = vmatpush2.msra.mxu0 0.0
    %7517 = vmatprep.subr.mxu0 0.0
    %7518 = vmatpush2.msra.mxu0 0.0
    %7519 = vmatprep.subr.mxu0 0.0
    %7520 = vmatpush2.msra.mxu0 0.0
    %7521 = vmatprep.subr.mxu0 0.0
    %7522 = vmatpush2.msra.mxu0 0.0
    %7523 = vmatprep.subr.mxu0 0.0
    %7524 = vmatpush2.msra.mxu0 0.0
    %7525 = vmatprep.subr.mxu0 0.0
    %7526 = vmatpush2.msra.mxu0 0.0
    %7527 = vmatprep.subr.mxu0 0.0
    %7528 = vmatpush2.msra.mxu0 0.0
    %7529 = vmatprep.mubr.f32.mxu0 0.0
    %7530 = vmatmul.mubr.f32.gmra.mxu0 %v7451
    %v7531 = vpop.f32.mrf.mxu0
    %v7532 = vadd.f32 0.0, %v7531
    %v7533 = vpop.f32.mrf.mxu0
    %7534 = vmatprep.mubr.f32.mxu0 0.0
    %7535 = vmatmul.mubr.f32.gmra.mxu0 %v7454
    %v7536 = vpop.f32.mrf.mxu0
    %v7537 = vadd.f32 0.0, %v7536
    %v7538 = vpop.f32.mrf.mxu0
    %7539 = vmatprep.mubr.f32.mxu0 0.0
    %7540 = vmatmul.mubr.f32.gmra.mxu0 %v7457
    %v7541 = vpop.f32.mrf.mxu0
    %v7542 = vadd.f32 0.0, %v7541
    %v7543 = vpop.f32.mrf.mxu0
    %7544 = vmatprep.mubr.f32.mxu0 0.0
    %7545 = vmatmul.mubr.f32.gmra.mxu0 %v7460
    %v7546 = vpop.f32.mrf.mxu0
    %v7547 = vadd.f32 0.0, %v7546
    %v7548 = vpop.f32.mrf.mxu0
    %7549 = vmatprep.mubr.f32.mxu0 0.0
    %7550 = vmatmul.mubr.f32.gmra.mxu0 %v7463
    %v7551 = vpop.f32.mrf.mxu0
    %v7552 = vadd.f32 0.0, %v7551
    %v7553 = vpop.f32.mrf.mxu0
    %7554 = vdwg.mxu0
    %7555 = vrot.lane.b32.xlu0 %v7259, 112
    %v7556 = vpop.permute.xlu0 %7555
    %7557 = vrot.lane.b32.xlu0 %v7260, 112
    %v7558 = vpop.permute.xlu0 %7557
    %7559 = vrot.lane.b32.xlu0 %v7261, 112
    %v7560 = vpop.permute.xlu0 %7559
    %7561 = vrot.lane.b32.xlu0 %v7262, 112
    %v7562 = vpop.permute.xlu0 %7561
    %7563 = vrot.lane.b32.xlu0 %v7263, 112
    %v7564 = vpop.permute.xlu0 %7563
    %7565 = vrot.lane.b32.xlu0 %v7231, 48
    %v7566 = vpop.permute.xlu0 %7565
    %7567 = vrot.lane.b32.xlu0 %v7237, 48
    %v7568 = vpop.permute.xlu0 %7567
    %7569 = vrot.lane.b32.xlu0 %v7243, 48
    %v7570 = vpop.permute.xlu0 %7569
    %7571 = vrot.lane.b32.xlu0 %v7249, 48
    %v7572 = vpop.permute.xlu0 %7571
    %7573 = vrot.lane.b32.xlu0 %v7255, 48
    %v7574 = vpop.permute.xlu0 %7573
    %v7575 = vsel %vm815, %v7556, 0
    %v7577 = vsel %vm815, %v7558, 0
    %v7579 = vsel %vm815, %v7560, 0
    %v7581 = vsel %vm815, %v7562, 0
    %v7583 = vsel %vm815, %v7564, 0
    %v7585 = vsel %vm815, %v7566, 0
    %v7587 = vsel %vm815, %v7568, 0
    %v7589 = vsel %vm815, %v7570, 0
    %v7591 = vsel %vm815, %v7572, 0
    %v7593 = vsel %vm815, %v7574, 0
    %7595 = vmatprep.subr.mxu0 0.0
    %7596 = vmatpush1.xpose.msra.mxu0 0.0
    %7597 = vmatprep.subr.mxu0 0.0
    %7598 = vmatpush1.xpose.msra.mxu0 0.0
    %7599 = vmatprep.subr.mxu0 0.0
    %7600 = vmatpush1.xpose.msra.mxu0 0.0
    %7601 = vmatprep.subr.mxu0 0.0
    %7602 = vmatpush1.xpose.msra.mxu0 0.0
    %7603 = vmatprep.subr.mxu0 0.0
    %7604 = vmatpush1.xpose.msra.mxu0 0.0
    %7605 = vmatprep.subr.mxu0 0.0
    %7606 = vmatpush1.xpose.msra.mxu0 0.0
    %7607 = vmatprep.subr.mxu0 0.0
    %7608 = vmatpush1.xpose.msra.mxu0 0.0
    %7609 = vmatprep.subr.mxu0 0.0
    %7610 = vmatpush1.xpose.msra.mxu0 0.0
    %7611 = vmatprep.subr.mxu0 0.0
    %7612 = vmatpush1.xpose.msra.mxu0 0.0
    %7613 = vmatprep.subr.mxu0 0.0
    %7614 = vmatpush1.xpose.msra.mxu0 0.0
    %7615 = vmatprep.subr.mxu0 0.0
    %7616 = vmatpush1.xpose.msra.mxu0 0.0
    %7617 = vmatprep.subr.mxu0 0.0
    %7618 = vmatpush1.xpose.msra.mxu0 %v7593
    %7619 = vmatprep.subr.mxu0 0.0
    %7620 = vmatpush1.xpose.msra.mxu0 %v7591
    %7621 = vmatprep.subr.mxu0 0.0
    %7622 = vmatpush1.xpose.msra.mxu0 %v7589
    %7623 = vmatprep.subr.mxu0 0.0
    %7624 = vmatpush1.xpose.msra.mxu0 %v7587
    %7625 = vmatprep.subr.mxu0 0.0
    %7626 = vmatpush1.xpose.msra.mxu0 %v7585
    %7627 = vmatprep.subr.mxu0 0.0
    %7628 = vmatpush2.xpose.msra.mxu0 0.0
    %7629 = vmatprep.subr.mxu0 0.0
    %7630 = vmatpush2.xpose.msra.mxu0 0.0
    %7631 = vmatprep.subr.mxu0 0.0
    %7632 = vmatpush2.xpose.msra.mxu0 0.0
    %7633 = vmatprep.subr.mxu0 0.0
    %7634 = vmatpush2.xpose.msra.mxu0 0.0
    %7635 = vmatprep.subr.mxu0 0.0
    %7636 = vmatpush2.xpose.msra.mxu0 0.0
    %7637 = vmatprep.subr.mxu0 0.0
    %7638 = vmatpush2.xpose.msra.mxu0 0.0
    %7639 = vmatprep.subr.mxu0 0.0
    %7640 = vmatpush2.xpose.msra.mxu0 0.0
    %7641 = vmatprep.subr.mxu0 0.0
    %7642 = vmatpush2.xpose.msra.mxu0 0.0
    %7643 = vmatprep.subr.mxu0 0.0
    %7644 = vmatpush2.xpose.msra.mxu0 0.0
    %7645 = vmatprep.subr.mxu0 0.0
    %7646 = vmatpush2.xpose.msra.mxu0 0.0
    %7647 = vmatprep.subr.mxu0 0.0
    %7648 = vmatpush2.xpose.msra.mxu0 0.0
    %7649 = vmatprep.subr.mxu0 0.0
    %7650 = vmatpush2.xpose.msra.mxu0 0.0
    %7651 = vmatprep.subr.mxu0 0.0
    %7652 = vmatpush2.xpose.msra.mxu0 0.0
    %7653 = vmatprep.subr.mxu0 0.0
    %7654 = vmatpush2.xpose.msra.mxu0 0.0
    %7655 = vmatprep.subr.mxu0 0.0
    %7656 = vmatpush2.xpose.msra.mxu0 0.0
    %7657 = vmatprep.subr.mxu0 0.0
    %7658 = vmatpush2.xpose.msra.mxu0 0.0
    %7659 = vmatprep.mubr.f32.mxu0 0.0
    %7660 = vmatmul.mubr.f32.gmra.mxu0 %v7575
    %v7661 = vpop.f32.mrf.mxu0
    %v7662 = vadd.f32 %v347, %v7661
    %v7663 = vpop.f32.mrf.mxu0
    %7664 = vmatprep.mubr.f32.mxu0 0.0
    %7665 = vmatmul.mubr.f32.gmra.mxu0 %v7577
    %v7666 = vpop.f32.mrf.mxu0
    %v7667 = vadd.f32 %v348, %v7666
    %v7668 = vpop.f32.mrf.mxu0
    %7669 = vmatprep.mubr.f32.mxu0 0.0
    %7670 = vmatmul.mubr.f32.gmra.mxu0 %v7579
    %v7671 = vpop.f32.mrf.mxu0
    %v7672 = vadd.f32 %v349, %v7671
    %v7673 = vpop.f32.mrf.mxu0
    %7674 = vmatprep.mubr.f32.mxu0 0.0
    %7675 = vmatmul.mubr.f32.gmra.mxu0 %v7581
    %v7676 = vpop.f32.mrf.mxu0
    %v7677 = vadd.f32 %v350, %v7676
    %v7678 = vpop.f32.mrf.mxu0
    %7679 = vmatprep.mubr.f32.mxu0 0.0
    %7680 = vmatmul.mubr.f32.gmra.mxu0 %v7583
    %v7681 = vpop.f32.mrf.mxu0
    %v7682 = vadd.f32 %v351, %v7681
    %v7683 = vpop.f32.mrf.mxu0
    %7684 = vdwg.mxu0
    %v7685 = vsel %vm7394, %v7662, -inf
    %7686 = vmax.xlane.f32.xlu0 %v7685
    %v7687 = vpop.xlane.xlu0 %7686
    %v7688 = vsel %vm7394, %v7667, -inf
    %7689 = vmax.xlane.f32.xlu0 %v7688
    %v7690 = vpop.xlane.xlu0 %7689
    %v7691 = vsel %vm7394, %v7672, -inf
    %7692 = vmax.xlane.f32.xlu0 %v7691
    %v7693 = vpop.xlane.xlu0 %7692
    %v7694 = vsel %vm7394, %v7677, -inf
    %7695 = vmax.xlane.f32.xlu0 %v7694
    %v7696 = vpop.xlane.xlu0 %7695
    %v7697 = vsel %vm7394, %v7682, -inf
    %7698 = vmax.xlane.f32.xlu0 %v7697
    %v7699 = vpop.xlane.xlu0 %7698
    %v7700 = vsub.f32 %v7662, %v7687
    %v7701 = vsub.f32 %v7667, %v7690
    %v7702 = vsub.f32 %v7672, %v7693
    %v7703 = vsub.f32 %v7677, %v7696
    %v7704 = vsub.f32 %v7682, %v7699
    %v7705 = vmul.f32 %v7700, 1.442695
    %v7706 = vpow.pop %v7705
    %v7707 = vmul.f32 %v7701, 1.442695
    %v7708 = vpow.pop %v7707
    %v7709 = vmul.f32 %v7702, 1.442695
    %v7710 = vpow.pop %v7709
    %v7711 = vmul.f32 %v7703, 1.442695
    %v7712 = vpow.pop %v7711
    %v7713 = vmul.f32 %v7704, 1.442695
    %v7714 = vpow.pop %v7713
    %v7715 = vsel %vm7394, %v7706, 0.0
    %7716 = vadd.xlane.f32.xlu0 %v7715
    %v7717 = vpop.xlane.xlu0 %7716
    %v7718 = vsel %vm7394, %v7708, 0.0
    %7719 = vadd.xlane.f32.xlu0 %v7718
    %v7720 = vpop.xlane.xlu0 %7719
    %v7721 = vsel %vm7394, %v7710, 0.0
    %7722 = vadd.xlane.f32.xlu0 %v7721
    %v7723 = vpop.xlane.xlu0 %7722
    %v7724 = vsel %vm7394, %v7712, 0.0
    %7725 = vadd.xlane.f32.xlu0 %v7724
    %v7726 = vpop.xlane.xlu0 %7725
    %v7727 = vsel %vm7394, %v7714, 0.0
    %7728 = vadd.xlane.f32.xlu0 %v7727
    %v7729 = vpop.xlane.xlu0 %7728
    %v7730 = vrcp.pop %v7717
    %v7731 = vmul.f32 %v7706, %v7730
    %v7732 = vrcp.pop %v7720
    %v7733 = vmul.f32 %v7708, %v7732
    %v7734 = vrcp.pop %v7723
    %v7735 = vmul.f32 %v7710, %v7734
    %v7736 = vrcp.pop %v7726
    %v7737 = vmul.f32 %v7712, %v7736
    %v7738 = vrcp.pop %v7729
    %v7739 = vmul.f32 %v7714, %v7738
    %7745 = vrot.lane.b32.xlu0 %v7233, 112
    %v7746 = vpop.permute.xlu0 %7745
    %7747 = vrot.lane.b32.xlu0 %v7239, 112
    %v7748 = vpop.permute.xlu0 %7747
    %7749 = vrot.lane.b32.xlu0 %v7245, 112
    %v7750 = vpop.permute.xlu0 %7749
    %7751 = vrot.lane.b32.xlu0 %v7251, 112
    %v7752 = vpop.permute.xlu0 %7751
    %7753 = vrot.lane.b32.xlu0 %v7257, 112
    %v7754 = vpop.permute.xlu0 %7753
    %v7761 = vsel %vm7394, %v7731, 0
    %v7764 = vsel %vm7394, %v7733, 0
    %v7767 = vsel %vm7394, %v7735, 0
    %v7770 = vsel %vm7394, %v7737, 0
    %v7773 = vsel %vm7394, %v7739, 0
    %7775 = vmatprep.subr.mxu0 0.0
    %7776 = vmatpush1.msra.mxu0 0.0
    %7777 = vmatprep.subr.mxu0 0.0
    %7778 = vmatpush1.msra.mxu0 0.0
    %7779 = vmatprep.subr.mxu0 0.0
    %7780 = vmatpush1.msra.mxu0 0.0
    %7781 = vmatprep.subr.mxu0 0.0
    %7782 = vmatpush1.msra.mxu0 0.0
    %7783 = vmatprep.subr.mxu0 0.0
    %7784 = vmatpush1.msra.mxu0 0.0
    %7785 = vmatprep.subr.mxu0 0.0
    %7786 = vmatpush1.msra.mxu0 0.0
    %7787 = vmatprep.subr.mxu0 0.0
    %7788 = vmatpush1.msra.mxu0 0.0
    %7789 = vmatprep.subr.mxu0 0.0
    %7790 = vmatpush1.msra.mxu0 0.0
    %7791 = vmatprep.subr.mxu0 0.0
    %7792 = vmatpush1.msra.mxu0 0.0
    %7793 = vmatprep.subr.mxu0 0.0
    %7794 = vmatpush1.msra.mxu0 0.0
    %7795 = vmatprep.subr.mxu0 0.0
    %7796 = vmatpush1.msra.mxu0 0.0
    %7797 = vmatprep.subr.mxu0 0.0
    %7798 = vmatpush1.msra.mxu0 %v7754
    %7799 = vmatprep.subr.mxu0 0.0
    %7800 = vmatpush1.msra.mxu0 %v7752
    %7801 = vmatprep.subr.mxu0 0.0
    %7802 = vmatpush1.msra.mxu0 %v7750
    %7803 = vmatprep.subr.mxu0 0.0
    %7804 = vmatpush1.msra.mxu0 %v7748
    %7805 = vmatprep.subr.mxu0 0.0
    %7806 = vmatpush1.msra.mxu0 %v7746
    %7807 = vmatprep.subr.mxu0 0.0
    %7808 = vmatpush2.msra.mxu0 0.0
    %7809 = vmatprep.subr.mxu0 0.0
    %7810 = vmatpush2.msra.mxu0 0.0
    %7811 = vmatprep.subr.mxu0 0.0
    %7812 = vmatpush2.msra.mxu0 0.0
    %7813 = vmatprep.subr.mxu0 0.0
    %7814 = vmatpush2.msra.mxu0 0.0
    %7815 = vmatprep.subr.mxu0 0.0
    %7816 = vmatpush2.msra.mxu0 0.0
    %7817 = vmatprep.subr.mxu0 0.0
    %7818 = vmatpush2.msra.mxu0 0.0
    %7819 = vmatprep.subr.mxu0 0.0
    %7820 = vmatpush2.msra.mxu0 0.0
    %7821 = vmatprep.subr.mxu0 0.0
    %7822 = vmatpush2.msra.mxu0 0.0
    %7823 = vmatprep.subr.mxu0 0.0
    %7824 = vmatpush2.msra.mxu0 0.0
    %7825 = vmatprep.subr.mxu0 0.0
    %7826 = vmatpush2.msra.mxu0 0.0
    %7827 = vmatprep.subr.mxu0 0.0
    %7828 = vmatpush2.msra.mxu0 0.0
    %7829 = vmatprep.subr.mxu0 0.0
    %7830 = vmatpush2.msra.mxu0 0.0
    %7831 = vmatprep.subr.mxu0 0.0
    %7832 = vmatpush2.msra.mxu0 0.0
    %7833 = vmatprep.subr.mxu0 0.0
    %7834 = vmatpush2.msra.mxu0 0.0
    %7835 = vmatprep.subr.mxu0 0.0
    %7836 = vmatpush2.msra.mxu0 0.0
    %7837 = vmatprep.subr.mxu0 0.0
    %7838 = vmatpush2.msra.mxu0 0.0
    %7839 = vmatprep.mubr.f32.mxu0 0.0
    %7840 = vmatmul.mubr.f32.gmra.mxu0 %v7761
    %v7841 = vpop.f32.mrf.mxu0
    %v7842 = vadd.f32 0.0, %v7841
    %v7843 = vpop.f32.mrf.mxu0
    %7844 = vmatprep.mubr.f32.mxu0 0.0
    %7845 = vmatmul.mubr.f32.gmra.mxu0 %v7764
    %v7846 = vpop.f32.mrf.mxu0
    %v7847 = vadd.f32 0.0, %v7846
    %v7848 = vpop.f32.mrf.mxu0
    %7849 = vmatprep.mubr.f32.mxu0 0.0
    %7850 = vmatmul.mubr.f32.gmra.mxu0 %v7767
    %v7851 = vpop.f32.mrf.mxu0
    %v7852 = vadd.f32 0.0, %v7851
    %v7853 = vpop.f32.mrf.mxu0
    %7854 = vmatprep.mubr.f32.mxu0 0.0
    %7855 = vmatmul.mubr.f32.gmra.mxu0 %v7770
    %v7856 = vpop.f32.mrf.mxu0
    %v7857 = vadd.f32 0.0, %v7856
    %v7858 = vpop.f32.mrf.mxu0
    %7859 = vmatprep.mubr.f32.mxu0 0.0
    %7860 = vmatmul.mubr.f32.gmra.mxu0 %v7773
    %v7861 = vpop.f32.mrf.mxu0
    %v7862 = vadd.f32 0.0, %v7861
    %v7863 = vpop.f32.mrf.mxu0
    %7864 = vdwg.mxu0
    %7865 = vrot.lane.b32.xlu0 %v7259, 96
    %v7866 = vpop.permute.xlu0 %7865
    %7867 = vrot.lane.b32.xlu0 %v7260, 96
    %v7868 = vpop.permute.xlu0 %7867
    %7869 = vrot.lane.b32.xlu0 %v7261, 96
    %v7870 = vpop.permute.xlu0 %7869
    %7871 = vrot.lane.b32.xlu0 %v7262, 96
    %v7872 = vpop.permute.xlu0 %7871
    %7873 = vrot.lane.b32.xlu0 %v7263, 96
    %v7874 = vpop.permute.xlu0 %7873
    %7875 = vrot.lane.b32.xlu0 %v7231, 32
    %v7876 = vpop.permute.xlu0 %7875
    %7877 = vrot.lane.b32.xlu0 %v7237, 32
    %v7878 = vpop.permute.xlu0 %7877
    %7879 = vrot.lane.b32.xlu0 %v7243, 32
    %v7880 = vpop.permute.xlu0 %7879
    %7881 = vrot.lane.b32.xlu0 %v7249, 32
    %v7882 = vpop.permute.xlu0 %7881
    %7883 = vrot.lane.b32.xlu0 %v7255, 32
    %v7884 = vpop.permute.xlu0 %7883
    %v7885 = vsel %vm815, %v7866, 0
    %v7887 = vsel %vm815, %v7868, 0
    %v7889 = vsel %vm815, %v7870, 0
    %v7891 = vsel %vm815, %v7872, 0
    %v7893 = vsel %vm815, %v7874, 0
    %v7895 = vsel %vm815, %v7876, 0
    %v7897 = vsel %vm815, %v7878, 0
    %v7899 = vsel %vm815, %v7880, 0
    %v7901 = vsel %vm815, %v7882, 0
    %v7903 = vsel %vm815, %v7884, 0
    %7905 = vmatprep.subr.mxu0 0.0
    %7906 = vmatpush1.xpose.msra.mxu0 0.0
    %7907 = vmatprep.subr.mxu0 0.0
    %7908 = vmatpush1.xpose.msra.mxu0 0.0
    %7909 = vmatprep.subr.mxu0 0.0
    %7910 = vmatpush1.xpose.msra.mxu0 0.0
    %7911 = vmatprep.subr.mxu0 0.0
    %7912 = vmatpush1.xpose.msra.mxu0 0.0
    %7913 = vmatprep.subr.mxu0 0.0
    %7914 = vmatpush1.xpose.msra.mxu0 0.0
    %7915 = vmatprep.subr.mxu0 0.0
    %7916 = vmatpush1.xpose.msra.mxu0 0.0
    %7917 = vmatprep.subr.mxu0 0.0
    %7918 = vmatpush1.xpose.msra.mxu0 0.0
    %7919 = vmatprep.subr.mxu0 0.0
    %7920 = vmatpush1.xpose.msra.mxu0 0.0
    %7921 = vmatprep.subr.mxu0 0.0
    %7922 = vmatpush1.xpose.msra.mxu0 0.0
    %7923 = vmatprep.subr.mxu0 0.0
    %7924 = vmatpush1.xpose.msra.mxu0 0.0
    %7925 = vmatprep.subr.mxu0 0.0
    %7926 = vmatpush1.xpose.msra.mxu0 0.0
    %7927 = vmatprep.subr.mxu0 0.0
    %7928 = vmatpush1.xpose.msra.mxu0 %v7903
    %7929 = vmatprep.subr.mxu0 0.0
    %7930 = vmatpush1.xpose.msra.mxu0 %v7901
    %7931 = vmatprep.subr.mxu0 0.0
    %7932 = vmatpush1.xpose.msra.mxu0 %v7899
    %7933 = vmatprep.subr.mxu0 0.0
    %7934 = vmatpush1.xpose.msra.mxu0 %v7897
    %7935 = vmatprep.subr.mxu0 0.0
    %7936 = vmatpush1.xpose.msra.mxu0 %v7895
    %7937 = vmatprep.subr.mxu0 0.0
    %7938 = vmatpush2.xpose.msra.mxu0 0.0
    %7939 = vmatprep.subr.mxu0 0.0
    %7940 = vmatpush2.xpose.msra.mxu0 0.0
    %7941 = vmatprep.subr.mxu0 0.0
    %7942 = vmatpush2.xpose.msra.mxu0 0.0
    %7943 = vmatprep.subr.mxu0 0.0
    %7944 = vmatpush2.xpose.msra.mxu0 0.0
    %7945 = vmatprep.subr.mxu0 0.0
    %7946 = vmatpush2.xpose.msra.mxu0 0.0
    %7947 = vmatprep.subr.mxu0 0.0
    %7948 = vmatpush2.xpose.msra.mxu0 0.0
    %7949 = vmatprep.subr.mxu0 0.0
    %7950 = vmatpush2.xpose.msra.mxu0 0.0
    %7951 = vmatprep.subr.mxu0 0.0
    %7952 = vmatpush2.xpose.msra.mxu0 0.0
    %7953 = vmatprep.subr.mxu0 0.0
    %7954 = vmatpush2.xpose.msra.mxu0 0.0
    %7955 = vmatprep.subr.mxu0 0.0
    %7956 = vmatpush2.xpose.msra.mxu0 0.0
    %7957 = vmatprep.subr.mxu0 0.0
    %7958 = vmatpush2.xpose.msra.mxu0 0.0
    %7959 = vmatprep.subr.mxu0 0.0
    %7960 = vmatpush2.xpose.msra.mxu0 0.0
    %7961 = vmatprep.subr.mxu0 0.0
    %7962 = vmatpush2.xpose.msra.mxu0 0.0
    %7963 = vmatprep.subr.mxu0 0.0
    %7964 = vmatpush2.xpose.msra.mxu0 0.0
    %7965 = vmatprep.subr.mxu0 0.0
    %7966 = vmatpush2.xpose.msra.mxu0 0.0
    %7967 = vmatprep.subr.mxu0 0.0
    %7968 = vmatpush2.xpose.msra.mxu0 0.0
    %7969 = vmatprep.mubr.f32.mxu0 0.0
    %7970 = vmatmul.mubr.f32.gmra.mxu0 %v7885
    %v7971 = vpop.f32.mrf.mxu0
    %v7972 = vadd.f32 %v347, %v7971
    %v7973 = vpop.f32.mrf.mxu0
    %7974 = vmatprep.mubr.f32.mxu0 0.0
    %7975 = vmatmul.mubr.f32.gmra.mxu0 %v7887
    %v7976 = vpop.f32.mrf.mxu0
    %v7977 = vadd.f32 %v348, %v7976
    %v7978 = vpop.f32.mrf.mxu0
    %7979 = vmatprep.mubr.f32.mxu0 0.0
    %7980 = vmatmul.mubr.f32.gmra.mxu0 %v7889
    %v7981 = vpop.f32.mrf.mxu0
    %v7982 = vadd.f32 %v349, %v7981
    %v7983 = vpop.f32.mrf.mxu0
    %7984 = vmatprep.mubr.f32.mxu0 0.0
    %7985 = vmatmul.mubr.f32.gmra.mxu0 %v7891
    %v7986 = vpop.f32.mrf.mxu0
    %v7987 = vadd.f32 %v350, %v7986
    %v7988 = vpop.f32.mrf.mxu0
    %7989 = vmatprep.mubr.f32.mxu0 0.0
    %7990 = vmatmul.mubr.f32.gmra.mxu0 %v7893
    %v7991 = vpop.f32.mrf.mxu0
    %v7992 = vadd.f32 %v351, %v7991
    %v7993 = vpop.f32.mrf.mxu0
    %7994 = vdwg.mxu0
    %v7995 = vsel %vm7394, %v7972, -inf
    %7996 = vmax.xlane.f32.xlu0 %v7995
    %v7997 = vpop.xlane.xlu0 %7996
    %v7998 = vsel %vm7394, %v7977, -inf
    %7999 = vmax.xlane.f32.xlu0 %v7998
    %v8000 = vpop.xlane.xlu0 %7999
    %v8001 = vsel %vm7394, %v7982, -inf
    %8002 = vmax.xlane.f32.xlu0 %v8001
    %v8003 = vpop.xlane.xlu0 %8002
    %v8004 = vsel %vm7394, %v7987, -inf
    %8005 = vmax.xlane.f32.xlu0 %v8004
    %v8006 = vpop.xlane.xlu0 %8005
    %v8007 = vsel %vm7394, %v7992, -inf
    %8008 = vmax.xlane.f32.xlu0 %v8007
    %v8009 = vpop.xlane.xlu0 %8008
    %v8010 = vsub.f32 %v7972, %v7997
    %v8011 = vsub.f32 %v7977, %v8000
    %v8012 = vsub.f32 %v7982, %v8003
    %v8013 = vsub.f32 %v7987, %v8006
    %v8014 = vsub.f32 %v7992, %v8009
    %v8015 = vmul.f32 %v8010, 1.442695
    %v8016 = vpow.pop %v8015
    %v8017 = vmul.f32 %v8011, 1.442695
    %v8018 = vpow.pop %v8017
    %v8019 = vmul.f32 %v8012, 1.442695
    %v8020 = vpow.pop %v8019
    %v8021 = vmul.f32 %v8013, 1.442695
    %v8022 = vpow.pop %v8021
    %v8023 = vmul.f32 %v8014, 1.442695
    %v8024 = vpow.pop %v8023
    %v8025 = vsel %vm7394, %v8016, 0.0
    %8026 = vadd.xlane.f32.xlu0 %v8025
    %v8027 = vpop.xlane.xlu0 %8026
    %v8028 = vsel %vm7394, %v8018, 0.0
    %8029 = vadd.xlane.f32.xlu0 %v8028
    %v8030 = vpop.xlane.xlu0 %8029
    %v8031 = vsel %vm7394, %v8020, 0.0
    %8032 = vadd.xlane.f32.xlu0 %v8031
    %v8033 = vpop.xlane.xlu0 %8032
    %v8034 = vsel %vm7394, %v8022, 0.0
    %8035 = vadd.xlane.f32.xlu0 %v8034
    %v8036 = vpop.xlane.xlu0 %8035
    %v8037 = vsel %vm7394, %v8024, 0.0
    %8038 = vadd.xlane.f32.xlu0 %v8037
    %v8039 = vpop.xlane.xlu0 %8038
    %v8040 = vrcp.pop %v8027
    %v8041 = vmul.f32 %v8016, %v8040
    %v8042 = vrcp.pop %v8030
    %v8043 = vmul.f32 %v8018, %v8042
    %v8044 = vrcp.pop %v8033
    %v8045 = vmul.f32 %v8020, %v8044
    %v8046 = vrcp.pop %v8036
    %v8047 = vmul.f32 %v8022, %v8046
    %v8048 = vrcp.pop %v8039
    %v8049 = vmul.f32 %v8024, %v8048
    %8050 = vrot.lane.b32.xlu0 %v7233, 96
    %v8051 = vpop.permute.xlu0 %8050
    %8052 = vrot.lane.b32.xlu0 %v7239, 96
    %v8053 = vpop.permute.xlu0 %8052
    %8054 = vrot.lane.b32.xlu0 %v7245, 96
    %v8055 = vpop.permute.xlu0 %8054
    %8056 = vrot.lane.b32.xlu0 %v7251, 96
    %v8057 = vpop.permute.xlu0 %8056
    %8058 = vrot.lane.b32.xlu0 %v7257, 96
    %v8059 = vpop.permute.xlu0 %8058
    %v8066 = vsel %vm7394, %v8041, 0
    %v8069 = vsel %vm7394, %v8043, 0
    %v8072 = vsel %vm7394, %v8045, 0
    %v8075 = vsel %vm7394, %v8047, 0
    %v8078 = vsel %vm7394, %v8049, 0
    %8080 = vmatprep.subr.mxu0 0.0
    %8081 = vmatpush1.msra.mxu0 0.0
    %8082 = vmatprep.subr.mxu0 0.0
    %8083 = vmatpush1.msra.mxu0 0.0
    %8084 = vmatprep.subr.mxu0 0.0
    %8085 = vmatpush1.msra.mxu0 0.0
    %8086 = vmatprep.subr.mxu0 0.0
    %8087 = vmatpush1.msra.mxu0 0.0
    %8088 = vmatprep.subr.mxu0 0.0
    %8089 = vmatpush1.msra.mxu0 0.0
    %8090 = vmatprep.subr.mxu0 0.0
    %8091 = vmatpush1.msra.mxu0 0.0
    %8092 = vmatprep.subr.mxu0 0.0
    %8093 = vmatpush1.msra.mxu0 0.0
    %8094 = vmatprep.subr.mxu0 0.0
    %8095 = vmatpush1.msra.mxu0 0.0
    %8096 = vmatprep.subr.mxu0 0.0
    %8097 = vmatpush1.msra.mxu0 0.0
    %8098 = vmatprep.subr.mxu0 0.0
    %8099 = vmatpush1.msra.mxu0 0.0
    %8100 = vmatprep.subr.mxu0 0.0
    %8101 = vmatpush1.msra.mxu0 0.0
    %8102 = vmatprep.subr.mxu0 0.0
    %8103 = vmatpush1.msra.mxu0 %v8059
    %8104 = vmatprep.subr.mxu0 0.0
    %8105 = vmatpush1.msra.mxu0 %v8057
    %8106 = vmatprep.subr.mxu0 0.0
    %8107 = vmatpush1.msra.mxu0 %v8055
    %8108 = vmatprep.subr.mxu0 0.0
    %8109 = vmatpush1.msra.mxu0 %v8053
    %8110 = vmatprep.subr.mxu0 0.0
    %8111 = vmatpush1.msra.mxu0 %v8051
    %8112 = vmatprep.subr.mxu0 0.0
    %8113 = vmatpush2.msra.mxu0 0.0
    %8114 = vmatprep.subr.mxu0 0.0
    %8115 = vmatpush2.msra.mxu0 0.0
    %8116 = vmatprep.subr.mxu0 0.0
    %8117 = vmatpush2.msra.mxu0 0.0
    %8118 = vmatprep.subr.mxu0 0.0
    %8119 = vmatpush2.msra.mxu0 0.0
    %8120 = vmatprep.subr.mxu0 0.0
    %8121 = vmatpush2.msra.mxu0 0.0
    %8122 = vmatprep.subr.mxu0 0.0
    %8123 = vmatpush2.msra.mxu0 0.0
    %8124 = vmatprep.subr.mxu0 0.0
    %8125 = vmatpush2.msra.mxu0 0.0
    %8126 = vmatprep.subr.mxu0 0.0
    %8127 = vmatpush2.msra.mxu0 0.0
    %8128 = vmatprep.subr.mxu0 0.0
    %8129 = vmatpush2.msra.mxu0 0.0
    %8130 = vmatprep.subr.mxu0 0.0
    %8131 = vmatpush2.msra.mxu0 0.0
    %8132 = vmatprep.subr.mxu0 0.0
    %8133 = vmatpush2.msra.mxu0 0.0
    %8134 = vmatprep.subr.mxu0 0.0
    %8135 = vmatpush2.msra.mxu0 0.0
    %8136 = vmatprep.subr.mxu0 0.0
    %8137 = vmatpush2.msra.mxu0 0.0
    %8138 = vmatprep.subr.mxu0 0.0
    %8139 = vmatpush2.msra.mxu0 0.0
    %8140 = vmatprep.subr.mxu0 0.0
    %8141 = vmatpush2.msra.mxu0 0.0
    %8142 = vmatprep.subr.mxu0 0.0
    %8143 = vmatpush2.msra.mxu0 0.0
    %8144 = vmatprep.mubr.f32.mxu0 0.0
    %8145 = vmatmul.mubr.f32.gmra.mxu0 %v8066
    %v8146 = vpop.f32.mrf.mxu0
    %v8147 = vadd.f32 0.0, %v8146
    %v8148 = vpop.f32.mrf.mxu0
    %8149 = vmatprep.mubr.f32.mxu0 0.0
    %8150 = vmatmul.mubr.f32.gmra.mxu0 %v8069
    %v8151 = vpop.f32.mrf.mxu0
    %v8152 = vadd.f32 0.0, %v8151
    %v8153 = vpop.f32.mrf.mxu0
    %8154 = vmatprep.mubr.f32.mxu0 0.0
    %8155 = vmatmul.mubr.f32.gmra.mxu0 %v8072
    %v8156 = vpop.f32.mrf.mxu0
    %v8157 = vadd.f32 0.0, %v8156
    %v8158 = vpop.f32.mrf.mxu0
    %8159 = vmatprep.mubr.f32.mxu0 0.0
    %8160 = vmatmul.mubr.f32.gmra.mxu0 %v8075
    %v8161 = vpop.f32.mrf.mxu0
    %v8162 = vadd.f32 0.0, %v8161
    %v8163 = vpop.f32.mrf.mxu0
    %8164 = vmatprep.mubr.f32.mxu0 0.0
    %8165 = vmatmul.mubr.f32.gmra.mxu0 %v8078
    %v8166 = vpop.f32.mrf.mxu0
    %v8167 = vadd.f32 0.0, %v8166
    %v8168 = vpop.f32.mrf.mxu0
    %8169 = vdwg.mxu0
    %8170 = vrot.lane.b32.xlu0 %v7259, 80
    %v8171 = vpop.permute.xlu0 %8170
    %8172 = vrot.lane.b32.xlu0 %v7260, 80
    %v8173 = vpop.permute.xlu0 %8172
    %8174 = vrot.lane.b32.xlu0 %v7261, 80
    %v8175 = vpop.permute.xlu0 %8174
    %8176 = vrot.lane.b32.xlu0 %v7262, 80
    %v8177 = vpop.permute.xlu0 %8176
    %8178 = vrot.lane.b32.xlu0 %v7263, 80
    %v8179 = vpop.permute.xlu0 %8178
    %8180 = vrot.lane.b32.xlu0 %v7231, 16
    %v8181 = vpop.permute.xlu0 %8180
    %8182 = vrot.lane.b32.xlu0 %v7237, 16
    %v8183 = vpop.permute.xlu0 %8182
    %8184 = vrot.lane.b32.xlu0 %v7243, 16
    %v8185 = vpop.permute.xlu0 %8184
    %8186 = vrot.lane.b32.xlu0 %v7249, 16
    %v8187 = vpop.permute.xlu0 %8186
    %8188 = vrot.lane.b32.xlu0 %v7255, 16
    %v8189 = vpop.permute.xlu0 %8188
    %v8190 = vsel %vm815, %v8171, 0
    %v8192 = vsel %vm815, %v8173, 0
    %v8194 = vsel %vm815, %v8175, 0
    %v8196 = vsel %vm815, %v8177, 0
    %v8198 = vsel %vm815, %v8179, 0
    %v8200 = vsel %vm815, %v8181, 0
    %v8202 = vsel %vm815, %v8183, 0
    %v8204 = vsel %vm815, %v8185, 0
    %v8206 = vsel %vm815, %v8187, 0
    %v8208 = vsel %vm815, %v8189, 0
    %8210 = vmatprep.subr.mxu0 0.0
    %8211 = vmatpush1.xpose.msra.mxu0 0.0
    %8212 = vmatprep.subr.mxu0 0.0
    %8213 = vmatpush1.xpose.msra.mxu0 0.0
    %8214 = vmatprep.subr.mxu0 0.0
    %8215 = vmatpush1.xpose.msra.mxu0 0.0
    %8216 = vmatprep.subr.mxu0 0.0
    %8217 = vmatpush1.xpose.msra.mxu0 0.0
    %8218 = vmatprep.subr.mxu0 0.0
    %8219 = vmatpush1.xpose.msra.mxu0 0.0
    %8220 = vmatprep.subr.mxu0 0.0
    %8221 = vmatpush1.xpose.msra.mxu0 0.0
    %8222 = vmatprep.subr.mxu0 0.0
    %8223 = vmatpush1.xpose.msra.mxu0 0.0
    %8224 = vmatprep.subr.mxu0 0.0
    %8225 = vmatpush1.xpose.msra.mxu0 0.0
    %8226 = vmatprep.subr.mxu0 0.0
    %8227 = vmatpush1.xpose.msra.mxu0 0.0
    %8228 = vmatprep.subr.mxu0 0.0
    %8229 = vmatpush1.xpose.msra.mxu0 0.0
    %8230 = vmatprep.subr.mxu0 0.0
    %8231 = vmatpush1.xpose.msra.mxu0 0.0
    %8232 = vmatprep.subr.mxu0 0.0
    %8233 = vmatpush1.xpose.msra.mxu0 %v8208
    %8234 = vmatprep.subr.mxu0 0.0
    %8235 = vmatpush1.xpose.msra.mxu0 %v8206
    %8236 = vmatprep.subr.mxu0 0.0
    %8237 = vmatpush1.xpose.msra.mxu0 %v8204
    %8238 = vmatprep.subr.mxu0 0.0
    %8239 = vmatpush1.xpose.msra.mxu0 %v8202
    %8240 = vmatprep.subr.mxu0 0.0
    %8241 = vmatpush1.xpose.msra.mxu0 %v8200
    %8242 = vmatprep.subr.mxu0 0.0
    %8243 = vmatpush2.xpose.msra.mxu0 0.0
    %8244 = vmatprep.subr.mxu0 0.0
    %8245 = vmatpush2.xpose.msra.mxu0 0.0
    %8246 = vmatprep.subr.mxu0 0.0
    %8247 = vmatpush2.xpose.msra.mxu0 0.0
    %8248 = vmatprep.subr.mxu0 0.0
    %8249 = vmatpush2.xpose.msra.mxu0 0.0
    %8250 = vmatprep.subr.mxu0 0.0
    %8251 = vmatpush2.xpose.msra.mxu0 0.0
    %8252 = vmatprep.subr.mxu0 0.0
    %8253 = vmatpush2.xpose.msra.mxu0 0.0
    %8254 = vmatprep.subr.mxu0 0.0
    %8255 = vmatpush2.xpose.msra.mxu0 0.0
    %8256 = vmatprep.subr.mxu0 0.0
    %8257 = vmatpush2.xpose.msra.mxu0 0.0
    %8258 = vmatprep.subr.mxu0 0.0
    %8259 = vmatpush2.xpose.msra.mxu0 0.0
    %8260 = vmatprep.subr.mxu0 0.0
    %8261 = vmatpush2.xpose.msra.mxu0 0.0
    %8262 = vmatprep.subr.mxu0 0.0
    %8263 = vmatpush2.xpose.msra.mxu0 0.0
    %8264 = vmatprep.subr.mxu0 0.0
    %8265 = vmatpush2.xpose.msra.mxu0 0.0
    %8266 = vmatprep.subr.mxu0 0.0
    %8267 = vmatpush2.xpose.msra.mxu0 0.0
    %8268 = vmatprep.subr.mxu0 0.0
    %8269 = vmatpush2.xpose.msra.mxu0 0.0
    %8270 = vmatprep.subr.mxu0 0.0
    %8271 = vmatpush2.xpose.msra.mxu0 0.0
    %8272 = vmatprep.subr.mxu0 0.0
    %8273 = vmatpush2.xpose.msra.mxu0 0.0
    %8274 = vmatprep.mubr.f32.mxu0 0.0
    %8275 = vmatmul.mubr.f32.gmra.mxu0 %v8190
    %v8276 = vpop.f32.mrf.mxu0
    %v8277 = vadd.f32 %v347, %v8276
    %v8278 = vpop.f32.mrf.mxu0
    %8279 = vmatprep.mubr.f32.mxu0 0.0
    %8280 = vmatmul.mubr.f32.gmra.mxu0 %v8192
    %v8281 = vpop.f32.mrf.mxu0
    %v8282 = vadd.f32 %v348, %v8281
    %v8283 = vpop.f32.mrf.mxu0
    %8284 = vmatprep.mubr.f32.mxu0 0.0
    %8285 = vmatmul.mubr.f32.gmra.mxu0 %v8194
    %v8286 = vpop.f32.mrf.mxu0
    %v8287 = vadd.f32 %v349, %v8286
    %v8288 = vpop.f32.mrf.mxu0
    %8289 = vmatprep.mubr.f32.mxu0 0.0
    %8290 = vmatmul.mubr.f32.gmra.mxu0 %v8196
    %v8291 = vpop.f32.mrf.mxu0
    %v8292 = vadd.f32 %v350, %v8291
    %v8293 = vpop.f32.mrf.mxu0
    %8294 = vmatprep.mubr.f32.mxu0 0.0
    %8295 = vmatmul.mubr.f32.gmra.mxu0 %v8198
    %v8296 = vpop.f32.mrf.mxu0
    %v8297 = vadd.f32 %v351, %v8296
    %v8298 = vpop.f32.mrf.mxu0
    %8299 = vdwg.mxu0
    %v8300 = vsel %vm7394, %v8277, -inf
    %8301 = vmax.xlane.f32.xlu0 %v8300
    %v8302 = vpop.xlane.xlu0 %8301
    %v8303 = vsel %vm7394, %v8282, -inf
    %8304 = vmax.xlane.f32.xlu0 %v8303
    %v8305 = vpop.xlane.xlu0 %8304
    %v8306 = vsel %vm7394, %v8287, -inf
    %8307 = vmax.xlane.f32.xlu0 %v8306
    %v8308 = vpop.xlane.xlu0 %8307
    %v8309 = vsel %vm7394, %v8292, -inf
    %8310 = vmax.xlane.f32.xlu0 %v8309
    %v8311 = vpop.xlane.xlu0 %8310
    %v8312 = vsel %vm7394, %v8297, -inf
    %8313 = vmax.xlane.f32.xlu0 %v8312
    %v8314 = vpop.xlane.xlu0 %8313
    %v8315 = vsub.f32 %v8277, %v8302
    %v8316 = vsub.f32 %v8282, %v8305
    %v8317 = vsub.f32 %v8287, %v8308
    %v8318 = vsub.f32 %v8292, %v8311
    %v8319 = vsub.f32 %v8297, %v8314
    %v8320 = vmul.f32 %v8315, 1.442695
    %v8321 = vpow.pop %v8320
    %v8322 = vmul.f32 %v8316, 1.442695
    %v8323 = vpow.pop %v8322
    %v8324 = vmul.f32 %v8317, 1.442695
    %v8325 = vpow.pop %v8324
    %v8326 = vmul.f32 %v8318, 1.442695
    %v8327 = vpow.pop %v8326
    %v8328 = vmul.f32 %v8319, 1.442695
    %v8329 = vpow.pop %v8328
    %v8330 = vsel %vm7394, %v8321, 0.0
    %8331 = vadd.xlane.f32.xlu0 %v8330
    %v8332 = vpop.xlane.xlu0 %8331
    %v8333 = vsel %vm7394, %v8323, 0.0
    %8334 = vadd.xlane.f32.xlu0 %v8333
    %v8335 = vpop.xlane.xlu0 %8334
    %v8336 = vsel %vm7394, %v8325, 0.0
    %8337 = vadd.xlane.f32.xlu0 %v8336
    %v8338 = vpop.xlane.xlu0 %8337
    %v8339 = vsel %vm7394, %v8327, 0.0
    %8340 = vadd.xlane.f32.xlu0 %v8339
    %v8341 = vpop.xlane.xlu0 %8340
    %v8342 = vsel %vm7394, %v8329, 0.0
    %8343 = vadd.xlane.f32.xlu0 %v8342
    %v8344 = vpop.xlane.xlu0 %8343
    %v8345 = vrcp.pop %v8332
    %v8346 = vmul.f32 %v8321, %v8345
    %v8347 = vrcp.pop %v8335
    %v8348 = vmul.f32 %v8323, %v8347
    %v8349 = vrcp.pop %v8338
    %v8350 = vmul.f32 %v8325, %v8349
    %v8351 = vrcp.pop %v8341
    %v8352 = vmul.f32 %v8327, %v8351
    %v8353 = vrcp.pop %v8344
    %v8354 = vmul.f32 %v8329, %v8353
    %8355 = vrot.lane.b32.xlu0 %v7233, 80
    %v8356 = vpop.permute.xlu0 %8355
    %8357 = vrot.lane.b32.xlu0 %v7239, 80
    %v8358 = vpop.permute.xlu0 %8357
    %8359 = vrot.lane.b32.xlu0 %v7245, 80
    %v8360 = vpop.permute.xlu0 %8359
    %8361 = vrot.lane.b32.xlu0 %v7251, 80
    %v8362 = vpop.permute.xlu0 %8361
    %8363 = vrot.lane.b32.xlu0 %v7257, 80
    %v8364 = vpop.permute.xlu0 %8363
    %v8371 = vsel %vm7394, %v8346, 0
    %v8374 = vsel %vm7394, %v8348, 0
    %v8377 = vsel %vm7394, %v8350, 0
    %v8380 = vsel %vm7394, %v8352, 0
    %v8383 = vsel %vm7394, %v8354, 0
    %8385 = vmatprep.subr.mxu0 0.0
    %8386 = vmatpush1.msra.mxu0 0.0
    %8387 = vmatprep.subr.mxu0 0.0
    %8388 = vmatpush1.msra.mxu0 0.0
    %8389 = vmatprep.subr.mxu0 0.0
    %8390 = vmatpush1.msra.mxu0 0.0
    %8391 = vmatprep.subr.mxu0 0.0
    %8392 = vmatpush1.msra.mxu0 0.0
    %8393 = vmatprep.subr.mxu0 0.0
    %8394 = vmatpush1.msra.mxu0 0.0
    %8395 = vmatprep.subr.mxu0 0.0
    %8396 = vmatpush1.msra.mxu0 0.0
    %8397 = vmatprep.subr.mxu0 0.0
    %8398 = vmatpush1.msra.mxu0 0.0
    %8399 = vmatprep.subr.mxu0 0.0
    %8400 = vmatpush1.msra.mxu0 0.0
    %8401 = vmatprep.subr.mxu0 0.0
    %8402 = vmatpush1.msra.mxu0 0.0
    %8403 = vmatprep.subr.mxu0 0.0
    %8404 = vmatpush1.msra.mxu0 0.0
    %8405 = vmatprep.subr.mxu0 0.0
    %8406 = vmatpush1.msra.mxu0 0.0
    %8407 = vmatprep.subr.mxu0 0.0
    %8408 = vmatpush1.msra.mxu0 %v8364
    %8409 = vmatprep.subr.mxu0 0.0
    %8410 = vmatpush1.msra.mxu0 %v8362
    %8411 = vmatprep.subr.mxu0 0.0
    %8412 = vmatpush1.msra.mxu0 %v8360
    %8413 = vmatprep.subr.mxu0 0.0
    %8414 = vmatpush1.msra.mxu0 %v8358
    %8415 = vmatprep.subr.mxu0 0.0
    %8416 = vmatpush1.msra.mxu0 %v8356
    %8417 = vmatprep.subr.mxu0 0.0
    %8418 = vmatpush2.msra.mxu0 0.0
    %8419 = vmatprep.subr.mxu0 0.0
    %8420 = vmatpush2.msra.mxu0 0.0
    %8421 = vmatprep.subr.mxu0 0.0
    %8422 = vmatpush2.msra.mxu0 0.0
    %8423 = vmatprep.subr.mxu0 0.0
    %8424 = vmatpush2.msra.mxu0 0.0
    %8425 = vmatprep.subr.mxu0 0.0
    %8426 = vmatpush2.msra.mxu0 0.0
    %8427 = vmatprep.subr.mxu0 0.0
    %8428 = vmatpush2.msra.mxu0 0.0
    %8429 = vmatprep.subr.mxu0 0.0
    %8430 = vmatpush2.msra.mxu0 0.0
    %8431 = vmatprep.subr.mxu0 0.0
    %8432 = vmatpush2.msra.mxu0 0.0
    %8433 = vmatprep.subr.mxu0 0.0
    %8434 = vmatpush2.msra.mxu0 0.0
    %8435 = vmatprep.subr.mxu0 0.0
    %8436 = vmatpush2.msra.mxu0 0.0
    %8437 = vmatprep.subr.mxu0 0.0
    %8438 = vmatpush2.msra.mxu0 0.0
    %8439 = vmatprep.subr.mxu0 0.0
    %8440 = vmatpush2.msra.mxu0 0.0
    %8441 = vmatprep.subr.mxu0 0.0
    %8442 = vmatpush2.msra.mxu0 0.0
    %8443 = vmatprep.subr.mxu0 0.0
    %8444 = vmatpush2.msra.mxu0 0.0
    %8445 = vmatprep.subr.mxu0 0.0
    %8446 = vmatpush2.msra.mxu0 0.0
    %8447 = vmatprep.subr.mxu0 0.0
    %8448 = vmatpush2.msra.mxu0 0.0
    %8449 = vmatprep.mubr.f32.mxu0 0.0
    %8450 = vmatmul.mubr.f32.gmra.mxu0 %v8371
    %v8451 = vpop.f32.mrf.mxu0
    %v8452 = vadd.f32 0.0, %v8451
    %v8453 = vpop.f32.mrf.mxu0
    %8454 = vmatprep.mubr.f32.mxu0 0.0
    %8455 = vmatmul.mubr.f32.gmra.mxu0 %v8374
    %v8456 = vpop.f32.mrf.mxu0
    %v8457 = vadd.f32 0.0, %v8456
    %v8458 = vpop.f32.mrf.mxu0
    %8459 = vmatprep.mubr.f32.mxu0 0.0
    %8460 = vmatmul.mubr.f32.gmra.mxu0 %v8377
    %v8461 = vpop.f32.mrf.mxu0
    %v8462 = vadd.f32 0.0, %v8461
    %v8463 = vpop.f32.mrf.mxu0
    %8464 = vmatprep.mubr.f32.mxu0 0.0
    %8465 = vmatmul.mubr.f32.gmra.mxu0 %v8380
    %v8466 = vpop.f32.mrf.mxu0
    %v8467 = vadd.f32 0.0, %v8466
    %v8468 = vpop.f32.mrf.mxu0
    %8469 = vmatprep.mubr.f32.mxu0 0.0
    %8470 = vmatmul.mubr.f32.gmra.mxu0 %v8383
    %v8471 = vpop.f32.mrf.mxu0
    %v8472 = vadd.f32 0.0, %v8471
    %v8473 = vpop.f32.mrf.mxu0
    %8474 = vdwg.mxu0
    %8480 = vrot.lane.b32.xlu0 %v7842, 16
    %v8481 = vpop.permute.xlu0 %8480
    %8482 = vrot.lane.b32.xlu0 %v7847, 16
    %v8483 = vpop.permute.xlu0 %8482
    %8484 = vrot.lane.b32.xlu0 %v7852, 16
    %v8485 = vpop.permute.xlu0 %8484
    %8486 = vrot.lane.b32.xlu0 %v7857, 16
    %v8487 = vpop.permute.xlu0 %8486
    %8488 = vrot.lane.b32.xlu0 %v7862, 16
    %v8489 = vpop.permute.xlu0 %8488
    %8500 = vrot.lane.b32.xlu0 %v8147, 32
    %v8501 = vpop.permute.xlu0 %8500
    %8502 = vrot.lane.b32.xlu0 %v8152, 32
    %v8503 = vpop.permute.xlu0 %8502
    %8504 = vrot.lane.b32.xlu0 %v8157, 32
    %v8505 = vpop.permute.xlu0 %8504
    %8506 = vrot.lane.b32.xlu0 %v8162, 32
    %v8507 = vpop.permute.xlu0 %8506
    %8508 = vrot.lane.b32.xlu0 %v8167, 32
    %v8509 = vpop.permute.xlu0 %8508
    %8520 = vrot.lane.b32.xlu0 %v8452, 48
    %v8521 = vpop.permute.xlu0 %8520
    %8522 = vrot.lane.b32.xlu0 %v8457, 48
    %v8523 = vpop.permute.xlu0 %8522
    %8524 = vrot.lane.b32.xlu0 %v8462, 48
    %v8525 = vpop.permute.xlu0 %8524
    %8526 = vrot.lane.b32.xlu0 %v8467, 48
    %v8527 = vpop.permute.xlu0 %8526
    %8528 = vrot.lane.b32.xlu0 %v8472, 48
    %v8529 = vpop.permute.xlu0 %8528
    %v8535 = vsel %vm815, %v7532, %v8481
    %v8536 = vsel %vm815, %v7537, %v8483
    %v8537 = vsel %vm815, %v7542, %v8485
    %v8538 = vsel %vm815, %v7547, %v8487
    %v8539 = vsel %vm815, %v7552, %v8489
    %v8540 = vsel %vm2084, %v8535, %v8501
    %v8541 = vsel %vm2084, %v8536, %v8503
    %v8542 = vsel %vm2084, %v8537, %v8505
    %v8543 = vsel %vm2084, %v8538, %v8507
    %v8544 = vsel %vm2084, %v8539, %v8509
    %v8545 = vsel %vm2090, %v8540, %v8521
    %v8546 = vsel %vm2090, %v8541, %v8523
    %v8547 = vsel %vm2090, %v8542, %v8525
    %v8548 = vsel %vm2090, %v8543, %v8527
    %v8549 = vsel %vm2090, %v8544, %v8529
    %v8551 = vsel %vm399, %v8545, 0
    %v8554 = vsel %vm399, %v8546, 0
    %v8557 = vsel %vm399, %v8547, 0
    %v8560 = vsel %vm399, %v8548, 0
    %v8563 = vsel %vm399, %v8549, 0
    %8565 = vmatprep.subr.mxu0 0.0
    %8566 = vmatpush1.msra.mxu0 0.0
    %8567 = vmatprep.subr.mxu0 0.0
    %8568 = vmatpush1.msra.mxu0 0.0
    %8569 = vmatprep.subr.mxu0 0.0
    %8570 = vmatpush1.msra.mxu0 0.0
    %8571 = vmatprep.subr.mxu0 0.0
    %8572 = vmatpush1.msra.mxu0 0.0
    %8573 = vmatprep.subr.mxu0 0.0
    %8574 = vmatpush1.msra.mxu0 0.0
    %8575 = vmatprep.subr.mxu0 0.0
    %8576 = vmatpush1.msra.mxu0 0.0
    %8577 = vmatprep.subr.mxu0 0.0
    %8578 = vmatpush1.msra.mxu0 0.0
    %8579 = vmatprep.subr.mxu0 0.0
    %8580 = vmatpush1.msra.mxu0 0.0
    %8581 = vmatprep.subr.mxu0 0.0
    %8582 = vmatpush1.msra.mxu0 %v6997
    %8583 = vmatprep.subr.mxu0 0.0
    %8584 = vmatpush1.msra.mxu0 %v6996
    %8585 = vmatprep.subr.mxu0 0.0
    %8586 = vmatpush1.msra.mxu0 %v6995
    %8587 = vmatprep.subr.mxu0 0.0
    %8588 = vmatpush1.msra.mxu0 %v6994
    %8589 = vmatprep.subr.mxu0 0.0
    %8590 = vmatpush1.msra.mxu0 %v6993
    %8591 = vmatprep.subr.mxu0 0.0
    %8592 = vmatpush1.msra.mxu0 %v6992
    %8593 = vmatprep.subr.mxu0 0.0
    %8594 = vmatpush1.msra.mxu0 %v6991
    %8595 = vmatprep.subr.mxu0 0.0
    %8596 = vmatpush1.msra.mxu0 %v6990
    %8597 = vmatprep.subr.mxu0 0.0
    %8598 = vmatpush2.msra.mxu0 0.0
    %8599 = vmatprep.subr.mxu0 0.0
    %8600 = vmatpush2.msra.mxu0 0.0
    %8601 = vmatprep.subr.mxu0 0.0
    %8602 = vmatpush2.msra.mxu0 0.0
    %8603 = vmatprep.subr.mxu0 0.0
    %8604 = vmatpush2.msra.mxu0 0.0
    %8605 = vmatprep.subr.mxu0 0.0
    %8606 = vmatpush2.msra.mxu0 0.0
    %8607 = vmatprep.subr.mxu0 0.0
    %8608 = vmatpush2.msra.mxu0 0.0
    %8609 = vmatprep.subr.mxu0 0.0
    %8610 = vmatpush2.msra.mxu0 0.0
    %8611 = vmatprep.subr.mxu0 0.0
    %8612 = vmatpush2.msra.mxu0 0.0
    %8613 = vmatprep.subr.mxu0 0.0
    %8614 = vmatpush2.msra.mxu0 0.0
    %8615 = vmatprep.subr.mxu0 0.0
    %8616 = vmatpush2.msra.mxu0 0.0
    %8617 = vmatprep.subr.mxu0 0.0
    %8618 = vmatpush2.msra.mxu0 0.0
    %8619 = vmatprep.subr.mxu0 0.0
    %8620 = vmatpush2.msra.mxu0 0.0
    %8621 = vmatprep.subr.mxu0 0.0
    %8622 = vmatpush2.msra.mxu0 0.0
    %8623 = vmatprep.subr.mxu0 0.0
    %8624 = vmatpush2.msra.mxu0 0.0
    %8625 = vmatprep.subr.mxu0 0.0
    %8626 = vmatpush2.msra.mxu0 0.0
    %8627 = vmatprep.subr.mxu0 0.0
    %8628 = vmatpush2.msra.mxu0 0.0
    %8629 = vmatprep.mubr.f32.mxu0 0.0
    %8630 = vmatmul.mubr.f32.gmra.mxu0 %v8551
    %v8631 = vpop.f32.mrf.mxu0
    %v8632 = vadd.f32 0.0, %v8631
    %v8633 = vpop.f32.mrf.mxu0
    %8634 = vmatprep.mubr.f32.mxu0 0.0
    %8635 = vmatmul.mubr.f32.gmra.mxu0 %v8554
    %v8636 = vpop.f32.mrf.mxu0
    %v8637 = vadd.f32 0.0, %v8636
    %v8638 = vpop.f32.mrf.mxu0
    %8639 = vmatprep.mubr.f32.mxu0 0.0
    %8640 = vmatmul.mubr.f32.gmra.mxu0 %v8557
    %v8641 = vpop.f32.mrf.mxu0
    %v8642 = vadd.f32 0.0, %v8641
    %v8643 = vpop.f32.mrf.mxu0
    %8644 = vmatprep.mubr.f32.mxu0 0.0
    %8645 = vmatmul.mubr.f32.gmra.mxu0 %v8560
    %v8646 = vpop.f32.mrf.mxu0
    %v8647 = vadd.f32 0.0, %v8646
    %v8648 = vpop.f32.mrf.mxu0
    %8649 = vmatprep.mubr.f32.mxu0 0.0
    %8650 = vmatmul.mubr.f32.gmra.mxu0 %v8563
    %v8651 = vpop.f32.mrf.mxu0
    %v8652 = vadd.f32 0.0, %v8651
    %v8653 = vpop.f32.mrf.mxu0
    %8654 = vdwg.mxu0
    %v8655 = vadd.f32 %v6948, %v8632
    %v8656 = vadd.f32 %v6953, %v8637
    %v8657 = vadd.f32 %v6958, %v8642
    %v8658 = vadd.f32 %v6963, %v8647
    %v8659 = vadd.f32 %v6968, %v8652
    %v8661 = vlaneseq
    %v8662 = vshrl.u32 %v8661, 7
    %v8663 = vsub.s32 0, %v8662
    %v8664 = vrot.slane %v6998, %v8663
    %v8666 = vadd.f32 %v8655, %v8664
    %v8667 = vadd.f32 %v8656, %v8664
    %v8668 = vadd.f32 %v8657, %v8664
    %v8669 = vadd.f32 %v8658, %v8664
    %v8670 = vadd.f32 %v8659, %v8664
    %v8671 = vsel %vm399, %v8666, 0.0
    %8672 = vadd.xlane.f32.xlu0 %v8671
    %v8673 = vpop.xlane.xlu0 %8672
    %v8674 = vsel %vm399, %v8667, 0.0
    %8675 = vadd.xlane.f32.xlu0 %v8674
    %v8676 = vpop.xlane.xlu0 %8675
    %v8677 = vsel %vm399, %v8668, 0.0
    %8678 = vadd.xlane.f32.xlu0 %v8677
    %v8679 = vpop.xlane.xlu0 %8678
    %v8680 = vsel %vm399, %v8669, 0.0
    %8681 = vadd.xlane.f32.xlu0 %v8680
    %v8682 = vpop.xlane.xlu0 %8681
    %v8683 = vsel %vm399, %v8670, 0.0
    %8684 = vadd.xlane.f32.xlu0 %v8683
    %v8685 = vpop.xlane.xlu0 %8684
    %v8686 = vmul.f32 %v8673, %v601
    %v8687 = vmul.f32 %v8676, %v601
    %v8688 = vmul.f32 %v8679, %v601
    %v8689 = vmul.f32 %v8682, %v601
    %v8690 = vmul.f32 %v8685, %v601
    %v8691 = vsub.f32 %v8666, %v8686
    %v8692 = vsub.f32 %v8667, %v8687
    %v8693 = vsub.f32 %v8668, %v8688
    %v8694 = vsub.f32 %v8669, %v8689
    %v8695 = vsub.f32 %v8670, %v8690
    %v8696 = vmul.f32 %v8691, %v8691
    %v8697 = vmul.f32 %v8692, %v8692
    %v8698 = vmul.f32 %v8693, %v8693
    %v8699 = vmul.f32 %v8694, %v8694
    %v8700 = vmul.f32 %v8695, %v8695
    %v8701 = vsel %vm399, %v8696, 0.0
    %8702 = vadd.xlane.f32.xlu0 %v8701
    %v8703 = vpop.xlane.xlu0 %8702
    %v8704 = vsel %vm399, %v8697, 0.0
    %8705 = vadd.xlane.f32.xlu0 %v8704
    %v8706 = vpop.xlane.xlu0 %8705
    %v8707 = vsel %vm399, %v8698, 0.0
    %8708 = vadd.xlane.f32.xlu0 %v8707
    %v8709 = vpop.xlane.xlu0 %8708
    %v8710 = vsel %vm399, %v8699, 0.0
    %8711 = vadd.xlane.f32.xlu0 %v8710
    %v8712 = vpop.xlane.xlu0 %8711
    %v8713 = vsel %vm399, %v8700, 0.0
    %8714 = vadd.xlane.f32.xlu0 %v8713
    %v8715 = vpop.xlane.xlu0 %8714
    %v8716 = vmul.f32 %v8703, %v601
    %v8717 = vmul.f32 %v8706, %v601
    %v8718 = vmul.f32 %v8709, %v601
    %v8719 = vmul.f32 %v8712, %v601
    %v8720 = vmul.f32 %v8715, %v601
    %v8721 = vadd.f32 %v8716, 1e-06
    %v8722 = vadd.f32 %v8717, 1e-06
    %v8723 = vadd.f32 %v8718, 1e-06
    %v8724 = vadd.f32 %v8719, 1e-06
    %v8725 = vadd.f32 %v8720, 1e-06
    %v8726 = vrsqrt.pop %v8721
    %v8727 = vrsqrt.pop %v8722
    %v8728 = vrsqrt.pop %v8723
    %v8729 = vrsqrt.pop %v8724
    %v8730 = vrsqrt.pop %v8725
    %v8731 = vmul.f32 %v8691, %v8726
    %v8732 = vmul.f32 %v8692, %v8727
    %v8733 = vmul.f32 %v8693, %v8728
    %v8734 = vmul.f32 %v8694, %v8729
    %v8735 = vmul.f32 %v8695, %v8730
    %v8737 = vlaneseq
    %v8738 = vshrl.u32 %v8737, 7
    %v8739 = vsub.s32 0, %v8738
    %v8740 = vrot.slane %v6999, %v8739
    %v8742 = vmul.f32 %v8731, %v8740
    %v8743 = vmul.f32 %v8732, %v8740
    %v8744 = vmul.f32 %v8733, %v8740
    %v8745 = vmul.f32 %v8734, %v8740
    %v8746 = vmul.f32 %v8735, %v8740
    %v8748 = vlaneseq
    %v8749 = vshrl.u32 %v8748, 7
    %v8750 = vsub.s32 0, %v8749
    %v8751 = vrot.slane %v7000, %v8750
    %v8753 = vadd.f32 %v8742, %v8751
    %v8754 = vadd.f32 %v8743, %v8751
    %v8755 = vadd.f32 %v8744, %v8751
    %v8756 = vadd.f32 %v8745, %v8751
    %v8757 = vadd.f32 %v8746, %v8751
    %v8759 = vlaneseq
    %v8760 = vshrl.u32 %v8759, 7
    %v8761 = vsub.s32 0, %v8760
    %v8762 = vrot.slane %v7017, %v8761
    %v8763 = vlaneseq
    %v8764 = vshrl.u32 %v8763, 7
    %v8765 = vsub.s32 1, %v8764
    %v8766 = vrot.slane %v7017, %v8765
    %v8770 = vsel %vm399, %v8753, 0
    %v8773 = vsel %vm399, %v8754, 0
    %v8776 = vsel %vm399, %v8755, 0
    %v8779 = vsel %vm399, %v8756, 0
    %v8782 = vsel %vm399, %v8757, 0
    %8784 = vmatprep.subr.mxu0 0.0
    %8785 = vmatpush1.msra.mxu0 0.0
    %8786 = vmatprep.subr.mxu0 0.0
    %8787 = vmatpush1.msra.mxu0 0.0
    %8788 = vmatprep.subr.mxu0 0.0
    %8789 = vmatpush1.msra.mxu0 0.0
    %8790 = vmatprep.subr.mxu0 0.0
    %8791 = vmatpush1.msra.mxu0 0.0
    %8792 = vmatprep.subr.mxu0 0.0
    %8793 = vmatpush1.msra.mxu0 0.0
    %8794 = vmatprep.subr.mxu0 0.0
    %8795 = vmatpush1.msra.mxu0 0.0
    %8796 = vmatprep.subr.mxu0 0.0
    %8797 = vmatpush1.msra.mxu0 0.0
    %8798 = vmatprep.subr.mxu0 0.0
    %8799 = vmatpush1.msra.mxu0 0.0
    %8800 = vmatprep.subr.mxu0 %v7016
    %8801 = vmatpush1.msra.mxu0 %v7015
    %8802 = vmatprep.subr.mxu0 %v7014
    %8803 = vmatpush1.msra.mxu0 %v7013
    %8804 = vmatprep.subr.mxu0 %v7012
    %8805 = vmatpush1.msra.mxu0 %v7011
    %8806 = vmatprep.subr.mxu0 %v7010
    %8807 = vmatpush1.msra.mxu0 %v7009
    %8808 = vmatprep.subr.mxu0 %v7008
    %8809 = vmatpush1.msra.mxu0 %v7007
    %8810 = vmatprep.subr.mxu0 %v7006
    %8811 = vmatpush1.msra.mxu0 %v7005
    %8812 = vmatprep.subr.mxu0 %v7004
    %8813 = vmatpush1.msra.mxu0 %v7003
    %8814 = vmatprep.subr.mxu0 %v7002
    %8815 = vmatpush1.msra.mxu0 %v7001
    %8816 = vmatprep.subr.mxu0 0.0
    %8817 = vmatpush2.msra.mxu0 0.0
    %8818 = vmatprep.subr.mxu0 0.0
    %8819 = vmatpush2.msra.mxu0 0.0
    %8820 = vmatprep.subr.mxu0 0.0
    %8821 = vmatpush2.msra.mxu0 0.0
    %8822 = vmatprep.subr.mxu0 0.0
    %8823 = vmatpush2.msra.mxu0 0.0
    %8824 = vmatprep.subr.mxu0 0.0
    %8825 = vmatpush2.msra.mxu0 0.0
    %8826 = vmatprep.subr.mxu0 0.0
    %8827 = vmatpush2.msra.mxu0 0.0
    %8828 = vmatprep.subr.mxu0 0.0
    %8829 = vmatpush2.msra.mxu0 0.0
    %8830 = vmatprep.subr.mxu0 0.0
    %8831 = vmatpush2.msra.mxu0 0.0
    %8832 = vmatprep.subr.mxu0 0.0
    %8833 = vmatpush2.msra.mxu0 0.0
    %8834 = vmatprep.subr.mxu0 0.0
    %8835 = vmatpush2.msra.mxu0 0.0
    %8836 = vmatprep.subr.mxu0 0.0
    %8837 = vmatpush2.msra.mxu0 0.0
    %8838 = vmatprep.subr.mxu0 0.0
    %8839 = vmatpush2.msra.mxu0 0.0
    %8840 = vmatprep.subr.mxu0 0.0
    %8841 = vmatpush2.msra.mxu0 0.0
    %8842 = vmatprep.subr.mxu0 0.0
    %8843 = vmatpush2.msra.mxu0 0.0
    %8844 = vmatprep.subr.mxu0 0.0
    %8845 = vmatpush2.msra.mxu0 0.0
    %8846 = vmatprep.subr.mxu0 0.0
    %8847 = vmatpush2.msra.mxu0 0.0
    %8848 = vmatprep.mubr.f32.mxu0 0.0
    %8849 = vmatmul.mubr.f32.gmra.mxu0 %v8770
    %v8850 = vpop.f32.mrf.mxu0
    %v8851 = vadd.f32 %v8762, %v8850
    %v8852 = vpop.f32.mrf.mxu0
    %v8853 = vadd.f32 %v8766, %v8852
    %8854 = vmatprep.mubr.f32.mxu0 0.0
    %8855 = vmatmul.mubr.f32.gmra.mxu0 %v8773
    %v8856 = vpop.f32.mrf.mxu0
    %v8857 = vadd.f32 %v8762, %v8856
    %v8858 = vpop.f32.mrf.mxu0
    %v8859 = vadd.f32 %v8766, %v8858
    %8860 = vmatprep.mubr.f32.mxu0 0.0
    %8861 = vmatmul.mubr.f32.gmra.mxu0 %v8776
    %v8862 = vpop.f32.mrf.mxu0
    %v8863 = vadd.f32 %v8762, %v8862
    %v8864 = vpop.f32.mrf.mxu0
    %v8865 = vadd.f32 %v8766, %v8864
    %8866 = vmatprep.mubr.f32.mxu0 0.0
    %8867 = vmatmul.mubr.f32.gmra.mxu0 %v8779
    %v8868 = vpop.f32.mrf.mxu0
    %v8869 = vadd.f32 %v8762, %v8868
    %v8870 = vpop.f32.mrf.mxu0
    %v8871 = vadd.f32 %v8766, %v8870
    %8872 = vmatprep.mubr.f32.mxu0 0.0
    %8873 = vmatmul.mubr.f32.gmra.mxu0 %v8782
    %v8874 = vpop.f32.mrf.mxu0
    %v8875 = vadd.f32 %v8762, %v8874
    %v8876 = vpop.f32.mrf.mxu0
    %v8877 = vadd.f32 %v8766, %v8876
    %8878 = vdwg.mxu0
    %v8879 = vmul.f32 %v8851, %v8851
    %v8880 = vmul.f32 %v8853, %v8853
    %v8881 = vmul.f32 %v8857, %v8857
    %v8882 = vmul.f32 %v8859, %v8859
    %v8883 = vmul.f32 %v8863, %v8863
    %v8884 = vmul.f32 %v8865, %v8865
    %v8885 = vmul.f32 %v8869, %v8869
    %v8886 = vmul.f32 %v8871, %v8871
    %v8887 = vmul.f32 %v8875, %v8875
    %v8888 = vmul.f32 %v8877, %v8877
    %v8889 = vmul.f32 %v8851, %v8879
    %v8890 = vmul.f32 %v8853, %v8880
    %v8891 = vmul.f32 %v8857, %v8881
    %v8892 = vmul.f32 %v8859, %v8882
    %v8893 = vmul.f32 %v8863, %v8883
    %v8894 = vmul.f32 %v8865, %v8884
    %v8895 = vmul.f32 %v8869, %v8885
    %v8896 = vmul.f32 %v8871, %v8886
    %v8897 = vmul.f32 %v8875, %v8887
    %v8898 = vmul.f32 %v8877, %v8888
    %v8899 = vmul.f32 %v8889, 0.044715
    %v8900 = vmul.f32 %v8890, 0.044715
    %v8901 = vmul.f32 %v8891, 0.044715
    %v8902 = vmul.f32 %v8892, 0.044715
    %v8903 = vmul.f32 %v8893, 0.044715
    %v8904 = vmul.f32 %v8894, 0.044715
    %v8905 = vmul.f32 %v8895, 0.044715
    %v8906 = vmul.f32 %v8896, 0.044715
    %v8907 = vmul.f32 %v8897, 0.044715
    %v8908 = vmul.f32 %v8898, 0.044715
    %v8909 = vadd.f32 %v8851, %v8899
    %v8910 = vadd.f32 %v8853, %v8900
    %v8911 = vadd.f32 %v8857, %v8901
    %v8912 = vadd.f32 %v8859, %v8902
    %v8913 = vadd.f32 %v8863, %v8903
    %v8914 = vadd.f32 %v8865, %v8904
    %v8915 = vadd.f32 %v8869, %v8905
    %v8916 = vadd.f32 %v8871, %v8906
    %v8917 = vadd.f32 %v8875, %v8907
    %v8918 = vadd.f32 %v8877, %v8908
    %v8919 = vmul.f32 %v8909, 0.7978846
    %v8920 = vmul.f32 %v8910, 0.7978846
    %v8921 = vmul.f32 %v8911, 0.7978846
    %v8922 = vmul.f32 %v8912, 0.7978846
    %v8923 = vmul.f32 %v8913, 0.7978846
    %v8924 = vmul.f32 %v8914, 0.7978846
    %v8925 = vmul.f32 %v8915, 0.7978846
    %v8926 = vmul.f32 %v8916, 0.7978846
    %v8927 = vmul.f32 %v8917, 0.7978846
    %v8928 = vmul.f32 %v8918, 0.7978846
    %v8929 = vtanh.pop %v8919
    %v8930 = vtanh.pop %v8920
    %v8931 = vtanh.pop %v8921
    %v8932 = vtanh.pop %v8922
    %v8933 = vtanh.pop %v8923
    %v8934 = vtanh.pop %v8924
    %v8935 = vtanh.pop %v8925
    %v8936 = vtanh.pop %v8926
    %v8937 = vtanh.pop %v8927
    %v8938 = vtanh.pop %v8928
    %v8939 = vadd.f32 %v8929, 1.0
    %v8940 = vadd.f32 %v8930, 1.0
    %v8941 = vadd.f32 %v8931, 1.0
    %v8942 = vadd.f32 %v8932, 1.0
    %v8943 = vadd.f32 %v8933, 1.0
    %v8944 = vadd.f32 %v8934, 1.0
    %v8945 = vadd.f32 %v8935, 1.0
    %v8946 = vadd.f32 %v8936, 1.0
    %v8947 = vadd.f32 %v8937, 1.0
    %v8948 = vadd.f32 %v8938, 1.0
    %v8949 = vmul.f32 %v8939, 0.5
    %v8950 = vmul.f32 %v8940, 0.5
    %v8951 = vmul.f32 %v8941, 0.5
    %v8952 = vmul.f32 %v8942, 0.5
    %v8953 = vmul.f32 %v8943, 0.5
    %v8954 = vmul.f32 %v8944, 0.5
    %v8955 = vmul.f32 %v8945, 0.5
    %v8956 = vmul.f32 %v8946, 0.5
    %v8957 = vmul.f32 %v8947, 0.5
    %v8958 = vmul.f32 %v8948, 0.5
    %v8959 = vmul.f32 %v8851, %v8949
    %v8960 = vmul.f32 %v8853, %v8950
    %v8961 = vmul.f32 %v8857, %v8951
    %v8962 = vmul.f32 %v8859, %v8952
    %v8963 = vmul.f32 %v8863, %v8953
    %v8964 = vmul.f32 %v8865, %v8954
    %v8965 = vmul.f32 %v8869, %v8955
    %v8966 = vmul.f32 %v8871, %v8956
    %v8967 = vmul.f32 %v8875, %v8957
    %v8968 = vmul.f32 %v8877, %v8958
    %v8970 = vlaneseq
    %v8971 = vshrl.u32 %v8970, 7
    %v8972 = vsub.s32 0, %v8971
    %v8973 = vrot.slane %v7050, %v8972
    %8975 = vmatprep.subr.mxu0 0.0
    %8976 = vmatpush1.msra.mxu0 %v7033
    %8977 = vmatprep.subr.mxu0 0.0
    %8978 = vmatpush1.msra.mxu0 %v7032
    %8979 = vmatprep.subr.mxu0 0.0
    %8980 = vmatpush1.msra.mxu0 %v7031
    %8981 = vmatprep.subr.mxu0 0.0
    %8982 = vmatpush1.msra.mxu0 %v7030
    %8983 = vmatprep.subr.mxu0 0.0
    %8984 = vmatpush1.msra.mxu0 %v7029
    %8985 = vmatprep.subr.mxu0 0.0
    %8986 = vmatpush1.msra.mxu0 %v7028
    %8987 = vmatprep.subr.mxu0 0.0
    %8988 = vmatpush1.msra.mxu0 %v7027
    %8989 = vmatprep.subr.mxu0 0.0
    %8990 = vmatpush1.msra.mxu0 %v7026
    %8991 = vmatprep.subr.mxu0 0.0
    %8992 = vmatpush1.msra.mxu0 %v7025
    %8993 = vmatprep.subr.mxu0 0.0
    %8994 = vmatpush1.msra.mxu0 %v7024
    %8995 = vmatprep.subr.mxu0 0.0
    %8996 = vmatpush1.msra.mxu0 %v7023
    %8997 = vmatprep.subr.mxu0 0.0
    %8998 = vmatpush1.msra.mxu0 %v7022
    %8999 = vmatprep.subr.mxu0 0.0
    %9000 = vmatpush1.msra.mxu0 %v7021
    %9001 = vmatprep.subr.mxu0 0.0
    %9002 = vmatpush1.msra.mxu0 %v7020
    %9003 = vmatprep.subr.mxu0 0.0
    %9004 = vmatpush1.msra.mxu0 %v7019
    %9005 = vmatprep.subr.mxu0 0.0
    %9006 = vmatpush1.msra.mxu0 %v7018
    %9007 = vmatprep.subr.mxu0 0.0
    %9008 = vmatpush2.msra.mxu0 %v7049
    %9009 = vmatprep.subr.mxu0 0.0
    %9010 = vmatpush2.msra.mxu0 %v7048
    %9011 = vmatprep.subr.mxu0 0.0
    %9012 = vmatpush2.msra.mxu0 %v7047
    %9013 = vmatprep.subr.mxu0 0.0
    %9014 = vmatpush2.msra.mxu0 %v7046
    %9015 = vmatprep.subr.mxu0 0.0
    %9016 = vmatpush2.msra.mxu0 %v7045
    %9017 = vmatprep.subr.mxu0 0.0
    %9018 = vmatpush2.msra.mxu0 %v7044
    %9019 = vmatprep.subr.mxu0 0.0
    %9020 = vmatpush2.msra.mxu0 %v7043
    %9021 = vmatprep.subr.mxu0 0.0
    %9022 = vmatpush2.msra.mxu0 %v7042
    %9023 = vmatprep.subr.mxu0 0.0
    %9024 = vmatpush2.msra.mxu0 %v7041
    %9025 = vmatprep.subr.mxu0 0.0
    %9026 = vmatpush2.msra.mxu0 %v7040
    %9027 = vmatprep.subr.mxu0 0.0
    %9028 = vmatpush2.msra.mxu0 %v7039
    %9029 = vmatprep.subr.mxu0 0.0
    %9030 = vmatpush2.msra.mxu0 %v7038
    %9031 = vmatprep.subr.mxu0 0.0
    %9032 = vmatpush2.msra.mxu0 %v7037
    %9033 = vmatprep.subr.mxu0 0.0
    %9034 = vmatpush2.msra.mxu0 %v7036
    %9035 = vmatprep.subr.mxu0 0.0
    %9036 = vmatpush2.msra.mxu0 %v7035
    %9037 = vmatprep.subr.mxu0 0.0
    %9038 = vmatpush2.msra.mxu0 %v7034
    %9039 = vmatprep.mubr.f32.mxu0 %v8960
    %9040 = vmatmul.mubr.f32.gmra.mxu0 %v8959
    %v9041 = vpop.f32.mrf.mxu0
    %v9042 = vadd.f32 %v8973, %v9041
    %v9043 = vpop.f32.mrf.mxu0
    %9044 = vmatprep.mubr.f32.mxu0 %v8962
    %9045 = vmatmul.mubr.f32.gmra.mxu0 %v8961
    %v9046 = vpop.f32.mrf.mxu0
    %v9047 = vpop.f32.mrf.mxu0
    %9048 = vmatprep.mubr.f32.mxu0 %v8964
    %9049 = vmatmul.mubr.f32.gmra.mxu0 %v8963
    %v9050 = vpop.f32.mrf.mxu0
    %v9051 = vpop.f32.mrf.mxu0
    %9052 = vmatprep.mubr.f32.mxu0 %v8966
    %9053 = vmatmul.mubr.f32.gmra.mxu0 %v8965
    %v9054 = vpop.f32.mrf.mxu0
    %v9055 = vpop.f32.mrf.mxu0
    %9056 = vmatprep.mubr.f32.mxu0 %v8968
    %9057 = vmatmul.mubr.f32.gmra.mxu0 %v8967
    %v9058 = vpop.f32.mrf.mxu0
    %v9059 = vpop.f32.mrf.mxu0
    %9060 = vdwg.mxu0
    %v9061 = vadd.f32 %v8666, %v9042
    %v9062 = vld [vmem:[#allocation17] sm:$0x1]
    %v9063 = vld [vmem:[#allocation19] sm:$0x1]
    %v9064 = vsel %vm399, %v9061, 0.0
    %9065 = vadd.xlane.f32.xlu0 %v9064
    %v9066 = vpop.xlane.xlu0 %9065
    %v9067 = vmul.f32 %v9066, %v601
    %v9068 = vsub.f32 %v9061, %v9067
    %v9069 = vmul.f32 %v9068, %v9068
    %v9070 = vsel %vm399, %v9069, 0.0
    %9071 = vadd.xlane.f32.xlu0 %v9070
    %v9072 = vpop.xlane.xlu0 %9071
    %v9073 = vmul.f32 %v9072, %v601
    %v9074 = vadd.f32 %v9073, 1e-06
    %v9075 = vrsqrt.pop %v9074
    %v9076 = vmul.f32 %v9068, %v9075
    %v9078 = vlaneseq
    %v9079 = vshrl.u32 %v9078, 7
    %v9080 = vsub.s32 0, %v9079
    %v9081 = vrot.slane %v9062, %v9080
    %v9083 = vmul.f32 %v9076, %v9081
    %v9085 = vlaneseq
    %v9086 = vshrl.u32 %v9085, 7
    %v9087 = vsub.s32 0, %v9086
    %v9088 = vrot.slane %v9063, %v9087
    %v9090 = vadd.f32 %v9083, %v9088
    %v9091 = vld [vmem:[%s103] sm:$0x1f]
    %v9092 = vadd.f32 %v9091, 1e-05
    %v9093 = vrsqrt.pop %v9092
    %v9094 = vld [vmem:[%s97] sm:$0x1f]
    %v9095 = vmul.f32 %v9093, %v9094
    %v9096 = vld [vmem:[%s99] sm:$0x1f]
    %v9097 = vld [vmem:[%s101] sm:$0x1f]
    %v9098 = vmul.f32 %v9097, %v9095
    %v9099 = vsub.f32 %v9096, %v9098
    %v9100 = vlaneseq
    %v9101 = vshrl.u32 %v9100, 7
    %v9102 = vsub.s32 0, %v9101
    %v9103 = vrot.slane %v9095, %v9102
    %v9104 = vmul.f32 %v6857, %v9103
    %v9105 = vlaneseq
    %v9106 = vshrl.u32 %v9105, 7
    %v9107 = vsub.s32 0, %v9106
    %v9108 = vrot.slane %v9099, %v9107
    %v9109 = vadd.f32 %v9104, %v9108
    %v9110 = vlaneseq
    %v9111 = vshrl.u32 %v9110, 7
    %v9112 = vsub.s32 1, %v9111
    %v9113 = vrot.slane %v9095, %v9112
    %v9114 = vmul.f32 %v9090, %v9113
    %v9115 = vlaneseq
    %v9116 = vshrl.u32 %v9115, 7
    %v9117 = vsub.s32 1, %v9116
    %v9118 = vrot.slane %v9099, %v9117
    %v9119 = vadd.f32 %v9114, %v9118
    %v9120 = vmul.f32 %v9119, 0.25
    %v9121 = vlaneseq
    %v9122 = vshrl.u32 %v9121, 7
    %v9123 = vsub.s32 2, %v9122
    %v9124 = vrot.slane %v9095, %v9123
    %v9125 = vmul.f32 %v9090, %v9124
    %v9126 = vlaneseq
    %v9127 = vshrl.u32 %v9126, 7
    %v9128 = vsub.s32 2, %v9127
    %v9129 = vrot.slane %v9099, %v9128
    %v9130 = vadd.f32 %v9125, %v9129
    %v9131 = vmul.f32 %v9130, 0.25
    %v9132 = vlaneseq
    %v9133 = vshrl.u32 %v9132, 7
    %v9134 = vsub.s32 3, %v9133
    %v9135 = vrot.slane %v9095, %v9134
    %v9136 = vmul.f32 %v9090, %v9135
    %v9137 = vlaneseq
    %v9138 = vshrl.u32 %v9137, 7
    %v9139 = vsub.s32 3, %v9138
    %v9140 = vrot.slane %v9099, %v9139
    %v9141 = vadd.f32 %v9136, %v9140
    %v9142 = vmul.f32 %v9141, 0.25
    %v9143 = vlaneseq
    %v9144 = vshrl.u32 %v9143, 7
    %v9145 = vsub.s32 4, %v9144
    %v9146 = vrot.slane %v9095, %v9145
    %v9147 = vmul.f32 %v9090, %v9146
    %v9148 = vlaneseq
    %v9149 = vshrl.u32 %v9148, 7
    %v9150 = vsub.s32 4, %v9149
    %v9151 = vrot.slane %v9099, %v9150
    %v9152 = vadd.f32 %v9147, %v9151
    %v9153 = vmul.f32 %v9152, 0.25
    %9155 = vrot.lane.b32.xlu0 %v9120, 64
    %v9156 = vpop.permute.xlu0 %9155
    %v9159 = vrot.slane %v9131, 2
    %v9162 = vrot.slane %v9142, 4
    %9163 = vrot.lane.b32.xlu0 %v9162, 64
    %v9164 = vpop.permute.xlu0 %9163
    %v9167 = vrot.slane %v9153, 6
    %v9168 = vsel %vm399, %v9109, %v9156
    %v9169 = vsel %vm399, %v9159, %v9164
    %v9172 = vcombine.low %v9168, %v9169
    %v9174 = vunpack.c.l.s4 1983009808
    %v9175 = vunpack.c.0.s8 %v9174
    %v9176 = vlaneseq
    %v9177 = vshrl.u32 %v9176, 7
    %v9178 = vsub.s32 %v9175, %v9177
    %v9179 = vrot.slane %v9172, %v9178
    %v9181 = vunpack.c.l.s4 1983009808
    %v9182 = vunpack.c.0.s8 %v9181
    %v9183 = vlaneseq
    %v9184 = vshrl.u32 %v9183, 7
    %v9185 = vsub.s32 %v9182, %v9184
    %v9186 = vrot.slane %v9167, %v9185
    %v9187 = vcombine.low %v9179, %v9186
    %vm9189 = vcmask 1043458
    %vm9190 = vmor %vm9189, %vm1003
    %vm9191 = vcmask 521220
    %vm9192 = vmor %vm9191, %vm9190
    %9193 = vst.msk [vmem:[#allocation20] sm:$0x3f] %vm9192, %v9187
    // Predicated region
    $region254: #{model_forward.1} parent=1 // pred_check
      _
    $region255: #{model_forward.1} parent=1 // pred_check_branch
      %9195 = sbr.rel (0) target = $region257
    $region256: #{model_forward.1} parent=1 // pred_region
      %s9197 = ssub.s32 96, 96
      %9198 = vsyncadd [#allocation4], %s9197
      %s9200 = sshll.u32 [#allocation20], 4
      %s9201 = int_to_ptr.vmem [resolvable:$true] %s9200
      %9203 = dma.vmem_to_hbm [thread:$0]  %s9201, 96, %s105, [#allocation4]
    $region257: #{model_forward.1} parent=1 // pred_fallthru
      _
    // Predicated region
    $region258: #{model_forward.1} parent=1 // pred_check
      _
    $region259: #{model_forward.1} parent=1 // pred_check_branch
      %9205 = sbr.rel (0) target = $region261
    $region260: #{model_forward.1} parent=1 // pred_region
      %9206 = dma.done [#allocation4], 96
    $region261: #{model_forward.1} parent=1 // pred_fallthru
      _
    %9207 = vsyncpa [#allocation3], 1
    %9208 = vsyncpa [#allocation6], 1
    %9209 = vsyncpa [#allocation9], 1
    %9210 = vsyncpa [#allocation12], 1
    %9211 = vsyncpa [#allocation15], 1
    %9212 = vsyncpa [#allocation18], 1
    %9213 = vsyncpa [#allocation4], 1

</llo_original>
